<compile_context>
chip_gen: v7x
topology: tpu7x:2x2x1
jax: 0.10.0
libtpu: 0.0.40
codegen_flags: <defaults>
</compile_context>

<pallas_src>
import numpy as np

import jax
import jax.numpy as jnp
from jax.experimental import pallas as pl
from jax.experimental.pallas import tpu as pltpu


# ---------------------------------------------------------------------------
# Fused Pallas kernel: whole network for one batch tile (batch on lanes)
# ---------------------------------------------------------------------------

def lenet_fused_kernel(x_ref, w1_ref, b1_ref, w2_ref, b2_ref,
                       a3_ref, b3_ref, a4_ref, b4_ref, o_ref,
                       y1_ref, z_ref):
    # x_ref : (784, tb) f32   raw images, rows = pixel (i*28+j), lanes = batch
    # w1_ref: (4, 864, 280) bf16 conv1 band weights (one per 6-output-row group)
    # w2_ref: (4, 256, 432) bf16 conv2 band weights (one per pooled output row)
    # a3_ref: (112, 256) bf16 fc1 (rows padded 100->112, cols in (h,w,c) order)
    # a4_ref: (16, 112)  bf16 fc2 (padded)
    # b*_ref: (rows, 1) f32 biases;  o_ref: (16, tb) f32 logits (rows 0..9 real)
    # y1_ref: (864, tb) f32 scratch = pooled conv1 output, rows = (ip, jp, c)
    # z_ref : (256, tb) f32 scratch = pooled conv2 output, rows = (h, w, c2)

    # conv1: 4 banded MXU matmuls (output rows 6g..6g+5) + maxpool2 + bias + relu
    for g in range(4):
        xs = x_ref[168 * g:168 * g + 280, :].astype(jnp.bfloat16)        # (280, tb)
        y = jnp.dot(w1_ref[g], xs, preferred_element_type=jnp.float32)   # (864, tb)
        # rows ordered (di, dj, ip_local, jp, c): max over the 4 pool positions
        p = jnp.maximum(jnp.maximum(y[0:216], y[216:432]),
                        jnp.maximum(y[432:648], y[648:864]))             # (216, tb)
        p = jnp.maximum(p + b1_ref[216 * g:216 * g + 216, :], 0.0)
        y1_ref[216 * g:216 * g + 216, :] = p

    # conv2: 4 banded MXU matmuls (pooled output row m) + maxpool2 + bias + relu
    for m in range(4):
        ys = y1_ref[144 * m:144 * m + 432, :].astype(jnp.bfloat16)       # (432, tb)
        y = jnp.dot(w2_ref[m], ys, preferred_element_type=jnp.float32)   # (256, tb)
        p = jnp.maximum(jnp.maximum(y[0:64], y[64:128]),
                        jnp.maximum(y[128:192], y[192:256]))             # (64, tb)
        p = jnp.maximum(p + b2_ref[64 * m:64 * m + 64, :], 0.0)
        z_ref[64 * m:64 * m + 64, :] = p

    # fc1 + relu + fc2 (batch stays on lanes; flatten permutation is baked into a3)
    zb = z_ref[...].astype(jnp.bfloat16)                                 # (256, tb)
    h = jnp.dot(a3_ref[...], zb, preferred_element_type=jnp.float32)     # (112, tb)
    h = jnp.maximum(h + b3_ref[...], 0.0).astype(jnp.bfloat16)
    o = jnp.dot(a4_ref[...], h, preferred_element_type=jnp.float32)      # (16, tb)
    o_ref[...] = o + b4_ref[...]


# ---------------------------------------------------------------------------
# One-time parameter preparation (host-side, run once -- NOT per forward call)
# ---------------------------------------------------------------------------

def prepare_params(params):
    w1, b1, w2, b2, wf1, bf1, wf2, bf2 = [np.asarray(p, np.float32) for p in params]
    w1 = w1.reshape(5, 5, 6)                     # (kh, kw, out), in_channels == 1

    # conv1 band weights: split g handles conv output rows i in [6g, 6g+5]
    # (input rows 6g..6g+9 -> 280 columns).  Row order = (di, dj, ip_local, jp, c).
    w1s = np.zeros((4, 864, 280), np.float32)
    for g in range(4):
        for di in range(2):
            for dj in range(2):
                for ipl in range(3):
                    for jp in range(12):
                        row = di * 432 + dj * 216 + ipl * 72 + jp * 6
                        i_loc = 2 * ipl + di
                        j = 2 * jp + dj
                        for a in range(5):
                            for b in range(5):
                                col = (i_loc + a) * 28 + (j + b)
                                w1s[g, row:row + 6, col] = w1[a, b, :]
    b1v = np.tile(b1, 144).reshape(864, 1)       # rows = (ip, jp, c)

    # conv2 band weights: split m handles conv2 output rows {2m, 2m+1}
    # (pooled y1 rows 2m..2m+5 -> 432 columns).  Row order = (di, dj, jp2, c2).
    w2s = np.zeros((4, 256, 432), np.float32)
    for m in range(4):
        for di in range(2):
            for dj in range(2):
                for jp2 in range(4):
                    row0 = di * 128 + dj * 64 + jp2 * 16
                    for a in range(5):
                        for b in range(5):
                            col0 = (di + a) * 72 + (2 * jp2 + dj + b) * 6
                            w2s[m, row0:row0 + 16, col0:col0 + 6] = w2[a, b, :, :].T
    b2v = np.tile(b2, 16).reshape(256, 1)        # rows = (h, w, c2)

    # fc1: absorb PyTorch's (c, h, w) flatten into our (h, w, c) row order.
    perm = np.zeros(256, np.int64)
    for h in range(4):
        for w in range(4):
            for c in range(16):
                perm[h * 64 + w * 16 + c] = c * 16 + h * 4 + w
    a3 = np.zeros((112, 256), np.float32)
    a3[:100, :] = wf1[perm, :].T
    b3v = np.zeros((112, 1), np.float32)
    b3v[:100, 0] = bf1
    a4 = np.zeros((16, 112), np.float32)
    a4[:10, :100] = wf2.T
    b4v = np.zeros((16, 1), np.float32)
    b4v[:10, 0] = bf2

    bf16 = lambda v: jnp.asarray(v, jnp.bfloat16)
    f32 = lambda v: jnp.asarray(v, jnp.float32)
    return (bf16(w1s), f32(b1v), bf16(w2s), f32(b2v),
            bf16(a3), f32(b3v), bf16(a4), f32(b4v))


# ---------------------------------------------------------------------------
# Forward pass (jit-able)
# ---------------------------------------------------------------------------

def cnn_forward(x_nchw, prepared):
    w1s, b1v, w2s, b2v, a3, b3v, a4, b4v = prepared
    n = x_nchw.shape[0]
    tb = 128                                     # batch lanes per grid step
    grid = (n + tb - 1) // tb
    nt = grid * tb

    # Only glue: flatten + transpose (raw-sized, no im2col amplification).
    xt = x_nchw.reshape(n, 28 * 28).T            # (784, n) f32
    xt = jnp.pad(xt, ((0, 0), (0, nt - n)))

    out = pl.pallas_call(
        lenet_fused_kernel,
        out_shape=jax.ShapeDtypeStruct((16, nt), jnp.float32),
        grid=(grid,),
        in_specs=[
            pl.BlockSpec((784, tb), lambda i: (0, i)),
            pl.BlockSpec((4, 864, 280), lambda i: (0, 0, 0)),
            pl.BlockSpec((864, 1), lambda i: (0, 0)),
            pl.BlockSpec((4, 256, 432), lambda i: (0, 0, 0)),
            pl.BlockSpec((256, 1), lambda i: (0, 0)),
            pl.BlockSpec((112, 256), lambda i: (0, 0)),
            pl.BlockSpec((112, 1), lambda i: (0, 0)),
            pl.BlockSpec((16, 112), lambda i: (0, 0)),
            pl.BlockSpec((16, 1), lambda i: (0, 0)),
        ],
        out_specs=pl.BlockSpec((16, tb), lambda i: (0, i)),
        scratch_shapes=[pltpu.VMEM((864, tb), jnp.float32),
                        pltpu.VMEM((256, tb), jnp.float32)],
        compiler_params=pltpu.CompilerParams(
            dimension_semantics=("parallel",),
            vmem_limit_bytes=32 * 1024 * 1024),
    )(xt, w1s, b1v, w2s, b2v, a3, b3v, a4, b4v)

    return out[:10, :n].T                        # (n, 10) logits


# ---------------------------------------------------------------------------
# Pure-JAX reference (mirrors the PyTorch module exactly, f32)
# ---------------------------------------------------------------------------

def cnn_reference(x_nchw, params):
    w1, b1, w2, b2, wf1, bf1, wf2, bf2 = params
    dn = ('NHWC', 'HWIO', 'NHWC')
    x = jnp.transpose(x_nchw, (0, 2, 3, 1))
    y = jax.lax.conv_general_dilated(x, w1, (1, 1), 'VALID', dimension_numbers=dn) + b1
    y = jnp.maximum(y, 0.0)
    y = jax.lax.reduce_window(y, -jnp.inf, jax.lax.max, (1, 2, 2, 1), (1, 2, 2, 1), 'VALID')
    y = jax.lax.conv_general_dilated(y, w2, (1, 1), 'VALID', dimension_numbers=dn) + b2
    y = jnp.maximum(y, 0.0)
    y = jax.lax.reduce_window(y, -jnp.inf, jax.lax.max, (1, 2, 2, 1), (1, 2, 2, 1), 'VALID')
    z = jnp.transpose(y, (0, 3, 1, 2)).reshape(x.shape[0], 256)   # torch (c,h,w) flatten
    h = jnp.maximum(z @ wf1 + bf1, 0.0)
    return h @ wf2 + bf2


# ---------------------------------------------------------------------------
# Deterministic parameter init (PyTorch-style uniform(-1/sqrt(fan_in), ...))
# ---------------------------------------------------------------------------

def _uniform(key, shape, fan_in):
    bound = 1.0 / (fan_in ** 0.5)
    return jax.random.uniform(key, shape, jnp.float32, -bound, bound)


if __name__ == "__main__":
    key = jax.random.PRNGKey(0)
    ks = jax.random.split(key, 9)

    N = 2
    # The module's flatten (16*4*4) implies 28x28 single-channel inputs.
    x = jax.random.normal(ks[0], (N, 1, 28, 28), jnp.float32)     # NCHW

    params = (
        _uniform(ks[1], (5, 5, 1, 6), 1 * 5 * 5),    # conv1 weight (HWIO)
        _uniform(ks[2], (6,),          1 * 5 * 5),   # conv1 bias
        _uniform(ks[3], (5, 5, 6, 16), 6 * 5 * 5),   # conv2 weight (HWIO)
        _uniform(ks[4], (16,),         6 * 5 * 5),   # conv2 bias
        _uniform(ks[5], (256, 100), 256),            # fc1 weight (in, out)
        _uniform(ks[6], (100,),     256),            # fc1 bias
        _uniform(ks[7], (100, 10),  100),            # fc2 weight (in, out)
        _uniform(ks[8], (10,),      100),            # fc2 bias
    )

    prepared = prepare_params(params)                # one-time, host-side

    out = jax.jit(cnn_forward)(x, prepared)
    out = jax.block_until_ready(out)
    assert out.shape == (N, 10) and out.dtype == jnp.float32

    ref = jax.block_until_ready(cnn_reference(x, params))
    err = float(jnp.max(jnp.abs(out - ref)))
    assert err < 1e-1, f"max |kernel - reference| = {err}"

    print("KERNEL_OK")
</pallas_src>

<mosaic_0001>
module attributes {stable_mosaic.version = 11 : i64} {
  func.func @lenet_fused_kernel(%arg0: i32, %arg1: memref<784x128xf32, #tpu.memory_space<vmem>>, %arg2: memref<4x864x280xbf16, #tpu.memory_space<vmem>>, %arg3: memref<864x1xf32, #tpu.memory_space<vmem>>, %arg4: memref<4x256x432xbf16, #tpu.memory_space<vmem>>, %arg5: memref<256x1xf32, #tpu.memory_space<vmem>>, %arg6: memref<112x256xbf16, #tpu.memory_space<vmem>>, %arg7: memref<112x1xf32, #tpu.memory_space<vmem>>, %arg8: memref<16x112xbf16, #tpu.memory_space<vmem>>, %arg9: memref<16x1xf32, #tpu.memory_space<vmem>>, %arg10: memref<16x128xf32, #tpu.memory_space<vmem>>, %arg11: memref<864x128xf32, #tpu.memory_space<vmem>>, %arg12: memref<256x128xf32, #tpu.memory_space<vmem>>) attributes {dimension_semantics = [#tpu.dimension_semantics<parallel>], iteration_bounds = array<i64: 1>, scalar_prefetch = 0 : i64, scratch_operands = 2 : i64, tpu.core_type = #tpu.core_type<tc>, window_params = [{transform_indices = @transform_0, window_bounds = array<i64: 784, 128>}, {pipeline_mode = #tpu.pipeline_mode<synchronous>, transform_indices = @transform_1, window_bounds = array<i64: 4, 864, 280>}, {pipeline_mode = #tpu.pipeline_mode<synchronous>, transform_indices = @transform_2, window_bounds = array<i64: 864, 1>}, {pipeline_mode = #tpu.pipeline_mode<synchronous>, transform_indices = @transform_3, window_bounds = array<i64: 4, 256, 432>}, {pipeline_mode = #tpu.pipeline_mode<synchronous>, transform_indices = @transform_4, window_bounds = array<i64: 256, 1>}, {pipeline_mode = #tpu.pipeline_mode<synchronous>, transform_indices = @transform_5, window_bounds = array<i64: 112, 256>}, {pipeline_mode = #tpu.pipeline_mode<synchronous>, transform_indices = @transform_6, window_bounds = array<i64: 112, 1>}, {pipeline_mode = #tpu.pipeline_mode<synchronous>, transform_indices = @transform_7, window_bounds = array<i64: 16, 112>}, {pipeline_mode = #tpu.pipeline_mode<synchronous>, transform_indices = @transform_8, window_bounds = array<i64: 16, 1>}, {transform_indices = @transform_9, window_bounds = array<i64: 16, 128>}]} {
    %c0 = arith.constant 0 : index
    %c0_0 = arith.constant 0 : index
    %0 = vector.load %arg1[%c0, %c0_0] : memref<784x128xf32, #tpu.memory_space<vmem>>, vector<280x128xf32>
    %1 = arith.truncf %0 : vector<280x128xf32> to vector<280x128xbf16>
    %c0_1 = arith.constant 0 : index
    %c0_2 = arith.constant 0 : index
    %c0_3 = arith.constant 0 : index
    %2 = vector.load %arg2[%c0_1, %c0_2, %c0_3] : memref<4x864x280xbf16, #tpu.memory_space<vmem>>, vector<1x864x280xbf16>
    %3 = vector.shape_cast %2 : vector<1x864x280xbf16> to vector<864x280xbf16>
    %cst = arith.constant dense<0.000000e+00> : vector<864x128xf32>
    %4 = tpu.matmul %3, %1, %cst {dimension_numbers = #tpu.dot_dimension_numbers<[1], [0], [0], [1], [0, 0, 1, 1], [], []>} : vector<864x280xbf16>, vector<280x128xbf16>, vector<864x128xf32> -> vector<864x128xf32>
    %5 = vector.extract_strided_slice %4 {offsets = [0, 0], sizes = [216, 128], strides = [1, 1]} : vector<864x128xf32> to vector<216x128xf32>
    %6 = vector.extract_strided_slice %4 {offsets = [216, 0], sizes = [216, 128], strides = [1, 1]} : vector<864x128xf32> to vector<216x128xf32>
    %7 = arith.maximumf %5, %6 : vector<216x128xf32>
    %8 = vector.extract_strided_slice %4 {offsets = [432, 0], sizes = [216, 128], strides = [1, 1]} : vector<864x128xf32> to vector<216x128xf32>
    %9 = vector.extract_strided_slice %4 {offsets = [648, 0], sizes = [216, 128], strides = [1, 1]} : vector<864x128xf32> to vector<216x128xf32>
    %10 = arith.maximumf %8, %9 : vector<216x128xf32>
    %11 = arith.maximumf %7, %10 : vector<216x128xf32>
    %c0_4 = arith.constant 0 : index
    %c0_5 = arith.constant 0 : index
    %12 = vector.load %arg3[%c0_4, %c0_5] : memref<864x1xf32, #tpu.memory_space<vmem>>, vector<216x1xf32>
    %13 = vector.broadcast %12 : vector<216x1xf32> to vector<216x128xf32>
    %14 = arith.addf %11, %13 : vector<216x128xf32>
    %cst_6 = arith.constant 0.000000e+00 : f32
    %15 = vector.broadcast %cst_6 : f32 to vector<216x128xf32>
    %16 = arith.maximumf %14, %15 : vector<216x128xf32>
    %c0_7 = arith.constant 0 : index
    %c0_8 = arith.constant 0 : index
    %17 = vector.load %arg11[%c0_7, %c0_8] : memref<864x128xf32, #tpu.memory_space<vmem>>, vector<216x128xf32>
    tpu.vector_store %arg11[%c0_7, %c0_8], %16 {strides = array<i32>} : memref<864x128xf32, #tpu.memory_space<vmem>>, vector<216x128xf32>,
    %c168 = arith.constant 168 : index
    %c0_9 = arith.constant 0 : index
    %18 = vector.load %arg1[%c168, %c0_9] : memref<784x128xf32, #tpu.memory_space<vmem>>, vector<280x128xf32>
    %19 = arith.truncf %18 : vector<280x128xf32> to vector<280x128xbf16>
    %c1 = arith.constant 1 : index
    %c0_10 = arith.constant 0 : index
    %c0_11 = arith.constant 0 : index
    %20 = vector.load %arg2[%c1, %c0_10, %c0_11] : memref<4x864x280xbf16, #tpu.memory_space<vmem>>, vector<1x864x280xbf16>
    %21 = vector.shape_cast %20 : vector<1x864x280xbf16> to vector<864x280xbf16>
    %cst_12 = arith.constant dense<0.000000e+00> : vector<864x128xf32>
    %22 = tpu.matmul %21, %19, %cst_12 {dimension_numbers = #tpu.dot_dimension_numbers<[1], [0], [0], [1], [0, 0, 1, 1], [], []>} : vector<864x280xbf16>, vector<280x128xbf16>, vector<864x128xf32> -> vector<864x128xf32>
    %23 = vector.extract_strided_slice %22 {offsets = [0, 0], sizes = [216, 128], strides = [1, 1]} : vector<864x128xf32> to vector<216x128xf32>
    %24 = vector.extract_strided_slice %22 {offsets = [216, 0], sizes = [216, 128], strides = [1, 1]} : vector<864x128xf32> to vector<216x128xf32>
    %25 = arith.maximumf %23, %24 : vector<216x128xf32>
    %26 = vector.extract_strided_slice %22 {offsets = [432, 0], sizes = [216, 128], strides = [1, 1]} : vector<864x128xf32> to vector<216x128xf32>
    %27 = vector.extract_strided_slice %22 {offsets = [648, 0], sizes = [216, 128], strides = [1, 1]} : vector<864x128xf32> to vector<216x128xf32>
    %28 = arith.maximumf %26, %27 : vector<216x128xf32>
    %29 = arith.maximumf %25, %28 : vector<216x128xf32>
    %c216 = arith.constant 216 : index
    %c0_13 = arith.constant 0 : index
    %30 = vector.load %arg3[%c216, %c0_13] : memref<864x1xf32, #tpu.memory_space<vmem>>, vector<216x1xf32>
    %31 = vector.broadcast %30 : vector<216x1xf32> to vector<216x128xf32>
    %32 = arith.addf %29, %31 : vector<216x128xf32>
    %cst_14 = arith.constant 0.000000e+00 : f32
    %33 = vector.broadcast %cst_14 : f32 to vector<216x128xf32>
    %34 = arith.maximumf %32, %33 : vector<216x128xf32>
    %c216_15 = arith.constant 216 : index
    %c0_16 = arith.constant 0 : index
    %35 = vector.load %arg11[%c216_15, %c0_16] : memref<864x128xf32, #tpu.memory_space<vmem>>, vector<216x128xf32>
    tpu.vector_store %arg11[%c216_15, %c0_16], %34 {strides = array<i32>} : memref<864x128xf32, #tpu.memory_space<vmem>>, vector<216x128xf32>,
    %c336 = arith.constant 336 : index
    %c0_17 = arith.constant 0 : index
    %36 = vector.load %arg1[%c336, %c0_17] : memref<784x128xf32, #tpu.memory_space<vmem>>, vector<280x128xf32>
    %37 = arith.truncf %36 : vector<280x128xf32> to vector<280x128xbf16>
    %c2 = arith.constant 2 : index
    %c0_18 = arith.constant 0 : index
    %c0_19 = arith.constant 0 : index
    %38 = vector.load %arg2[%c2, %c0_18, %c0_19] : memref<4x864x280xbf16, #tpu.memory_space<vmem>>, vector<1x864x280xbf16>
    %39 = vector.shape_cast %38 : vector<1x864x280xbf16> to vector<864x280xbf16>
    %cst_20 = arith.constant dense<0.000000e+00> : vector<864x128xf32>
    %40 = tpu.matmul %39, %37, %cst_20 {dimension_numbers = #tpu.dot_dimension_numbers<[1], [0], [0], [1], [0, 0, 1, 1], [], []>} : vector<864x280xbf16>, vector<280x128xbf16>, vector<864x128xf32> -> vector<864x128xf32>
    %41 = vector.extract_strided_slice %40 {offsets = [0, 0], sizes = [216, 128], strides = [1, 1]} : vector<864x128xf32> to vector<216x128xf32>
    %42 = vector.extract_strided_slice %40 {offsets = [216, 0], sizes = [216, 128], strides = [1, 1]} : vector<864x128xf32> to vector<216x128xf32>
    %43 = arith.maximumf %41, %42 : vector<216x128xf32>
    %44 = vector.extract_strided_slice %40 {offsets = [432, 0], sizes = [216, 128], strides = [1, 1]} : vector<864x128xf32> to vector<216x128xf32>
    %45 = vector.extract_strided_slice %40 {offsets = [648, 0], sizes = [216, 128], strides = [1, 1]} : vector<864x128xf32> to vector<216x128xf32>
    %46 = arith.maximumf %44, %45 : vector<216x128xf32>
    %47 = arith.maximumf %43, %46 : vector<216x128xf32>
    %c432 = arith.constant 432 : index
    %c0_21 = arith.constant 0 : index
    %48 = vector.load %arg3[%c432, %c0_21] : memref<864x1xf32, #tpu.memory_space<vmem>>, vector<216x1xf32>
    %49 = vector.broadcast %48 : vector<216x1xf32> to vector<216x128xf32>
    %50 = arith.addf %47, %49 : vector<216x128xf32>
    %cst_22 = arith.constant 0.000000e+00 : f32
    %51 = vector.broadcast %cst_22 : f32 to vector<216x128xf32>
    %52 = arith.maximumf %50, %51 : vector<216x128xf32>
    %c432_23 = arith.constant 432 : index
    %c0_24 = arith.constant 0 : index
    %53 = vector.load %arg11[%c432_23, %c0_24] : memref<864x128xf32, #tpu.memory_space<vmem>>, vector<216x128xf32>
    tpu.vector_store %arg11[%c432_23, %c0_24], %52 {strides = array<i32>} : memref<864x128xf32, #tpu.memory_space<vmem>>, vector<216x128xf32>,
    %c504 = arith.constant 504 : index
    %c0_25 = arith.constant 0 : index
    %54 = vector.load %arg1[%c504, %c0_25] : memref<784x128xf32, #tpu.memory_space<vmem>>, vector<280x128xf32>
    %55 = arith.truncf %54 : vector<280x128xf32> to vector<280x128xbf16>
    %c3 = arith.constant 3 : index
    %c0_26 = arith.constant 0 : index
    %c0_27 = arith.constant 0 : index
    %56 = vector.load %arg2[%c3, %c0_26, %c0_27] : memref<4x864x280xbf16, #tpu.memory_space<vmem>>, vector<1x864x280xbf16>
    %57 = vector.shape_cast %56 : vector<1x864x280xbf16> to vector<864x280xbf16>
    %cst_28 = arith.constant dense<0.000000e+00> : vector<864x128xf32>
    %58 = tpu.matmul %57, %55, %cst_28 {dimension_numbers = #tpu.dot_dimension_numbers<[1], [0], [0], [1], [0, 0, 1, 1], [], []>} : vector<864x280xbf16>, vector<280x128xbf16>, vector<864x128xf32> -> vector<864x128xf32>
    %59 = vector.extract_strided_slice %58 {offsets = [0, 0], sizes = [216, 128], strides = [1, 1]} : vector<864x128xf32> to vector<216x128xf32>
    %60 = vector.extract_strided_slice %58 {offsets = [216, 0], sizes = [216, 128], strides = [1, 1]} : vector<864x128xf32> to vector<216x128xf32>
    %61 = arith.maximumf %59, %60 : vector<216x128xf32>
    %62 = vector.extract_strided_slice %58 {offsets = [432, 0], sizes = [216, 128], strides = [1, 1]} : vector<864x128xf32> to vector<216x128xf32>
    %63 = vector.extract_strided_slice %58 {offsets = [648, 0], sizes = [216, 128], strides = [1, 1]} : vector<864x128xf32> to vector<216x128xf32>
    %64 = arith.maximumf %62, %63 : vector<216x128xf32>
    %65 = arith.maximumf %61, %64 : vector<216x128xf32>
    %c648 = arith.constant 648 : index
    %c0_29 = arith.constant 0 : index
    %66 = vector.load %arg3[%c648, %c0_29] : memref<864x1xf32, #tpu.memory_space<vmem>>, vector<216x1xf32>
    %67 = vector.broadcast %66 : vector<216x1xf32> to vector<216x128xf32>
    %68 = arith.addf %65, %67 : vector<216x128xf32>
    %cst_30 = arith.constant 0.000000e+00 : f32
    %69 = vector.broadcast %cst_30 : f32 to vector<216x128xf32>
    %70 = arith.maximumf %68, %69 : vector<216x128xf32>
    %c648_31 = arith.constant 648 : index
    %c0_32 = arith.constant 0 : index
    %71 = vector.load %arg11[%c648_31, %c0_32] : memref<864x128xf32, #tpu.memory_space<vmem>>, vector<216x128xf32>
    tpu.vector_store %arg11[%c648_31, %c0_32], %70 {strides = array<i32>} : memref<864x128xf32, #tpu.memory_space<vmem>>, vector<216x128xf32>,
    %c0_33 = arith.constant 0 : index
    %c0_34 = arith.constant 0 : index
    %72 = vector.load %arg11[%c0_33, %c0_34] : memref<864x128xf32, #tpu.memory_space<vmem>>, vector<432x128xf32>
    %73 = arith.truncf %72 : vector<432x128xf32> to vector<432x128xbf16>
    %c0_35 = arith.constant 0 : index
    %c0_36 = arith.constant 0 : index
    %c0_37 = arith.constant 0 : index
    %74 = vector.load %arg4[%c0_35, %c0_36, %c0_37] : memref<4x256x432xbf16, #tpu.memory_space<vmem>>, vector<1x256x432xbf16>
    %75 = vector.shape_cast %74 : vector<1x256x432xbf16> to vector<256x432xbf16>
    %cst_38 = arith.constant dense<0.000000e+00> : vector<256x128xf32>
    %76 = tpu.matmul %75, %73, %cst_38 {dimension_numbers = #tpu.dot_dimension_numbers<[1], [0], [0], [1], [0, 0, 1, 1], [], []>} : vector<256x432xbf16>, vector<432x128xbf16>, vector<256x128xf32> -> vector<256x128xf32>
    %77 = vector.extract_strided_slice %76 {offsets = [0, 0], sizes = [64, 128], strides = [1, 1]} : vector<256x128xf32> to vector<64x128xf32>
    %78 = vector.extract_strided_slice %76 {offsets = [64, 0], sizes = [64, 128], strides = [1, 1]} : vector<256x128xf32> to vector<64x128xf32>
    %79 = arith.maximumf %77, %78 : vector<64x128xf32>
    %80 = vector.extract_strided_slice %76 {offsets = [128, 0], sizes = [64, 128], strides = [1, 1]} : vector<256x128xf32> to vector<64x128xf32>
    %81 = vector.extract_strided_slice %76 {offsets = [192, 0], sizes = [64, 128], strides = [1, 1]} : vector<256x128xf32> to vector<64x128xf32>
    %82 = arith.maximumf %80, %81 : vector<64x128xf32>
    %83 = arith.maximumf %79, %82 : vector<64x128xf32>
    %c0_39 = arith.constant 0 : index
    %c0_40 = arith.constant 0 : index
    %84 = vector.load %arg5[%c0_39, %c0_40] : memref<256x1xf32, #tpu.memory_space<vmem>>, vector<64x1xf32>
    %85 = vector.broadcast %84 : vector<64x1xf32> to vector<64x128xf32>
    %86 = arith.addf %83, %85 : vector<64x128xf32>
    %cst_41 = arith.constant 0.000000e+00 : f32
    %87 = vector.broadcast %cst_41 : f32 to vector<64x128xf32>
    %88 = arith.maximumf %86, %87 : vector<64x128xf32>
    %c0_42 = arith.constant 0 : index
    %c0_43 = arith.constant 0 : index
    %89 = vector.load %arg12[%c0_42, %c0_43] : memref<256x128xf32, #tpu.memory_space<vmem>>, vector<64x128xf32>
    tpu.vector_store %arg12[%c0_42, %c0_43], %88 {strides = array<i32>} : memref<256x128xf32, #tpu.memory_space<vmem>>, vector<64x128xf32>,
    %c144 = arith.constant 144 : index
    %c0_44 = arith.constant 0 : index
    %90 = vector.load %arg11[%c144, %c0_44] : memref<864x128xf32, #tpu.memory_space<vmem>>, vector<432x128xf32>
    %91 = arith.truncf %90 : vector<432x128xf32> to vector<432x128xbf16>
    %c1_45 = arith.constant 1 : index
    %c0_46 = arith.constant 0 : index
    %c0_47 = arith.constant 0 : index
    %92 = vector.load %arg4[%c1_45, %c0_46, %c0_47] : memref<4x256x432xbf16, #tpu.memory_space<vmem>>, vector<1x256x432xbf16>
    %93 = vector.shape_cast %92 : vector<1x256x432xbf16> to vector<256x432xbf16>
    %cst_48 = arith.constant dense<0.000000e+00> : vector<256x128xf32>
    %94 = tpu.matmul %93, %91, %cst_48 {dimension_numbers = #tpu.dot_dimension_numbers<[1], [0], [0], [1], [0, 0, 1, 1], [], []>} : vector<256x432xbf16>, vector<432x128xbf16>, vector<256x128xf32> -> vector<256x128xf32>
    %95 = vector.extract_strided_slice %94 {offsets = [0, 0], sizes = [64, 128], strides = [1, 1]} : vector<256x128xf32> to vector<64x128xf32>
    %96 = vector.extract_strided_slice %94 {offsets = [64, 0], sizes = [64, 128], strides = [1, 1]} : vector<256x128xf32> to vector<64x128xf32>
    %97 = arith.maximumf %95, %96 : vector<64x128xf32>
    %98 = vector.extract_strided_slice %94 {offsets = [128, 0], sizes = [64, 128], strides = [1, 1]} : vector<256x128xf32> to vector<64x128xf32>
    %99 = vector.extract_strided_slice %94 {offsets = [192, 0], sizes = [64, 128], strides = [1, 1]} : vector<256x128xf32> to vector<64x128xf32>
    %100 = arith.maximumf %98, %99 : vector<64x128xf32>
    %101 = arith.maximumf %97, %100 : vector<64x128xf32>
    %c64 = arith.constant 64 : index
    %c0_49 = arith.constant 0 : index
    %102 = vector.load %arg5[%c64, %c0_49] : memref<256x1xf32, #tpu.memory_space<vmem>>, vector<64x1xf32>
    %103 = vector.broadcast %102 : vector<64x1xf32> to vector<64x128xf32>
    %104 = arith.addf %101, %103 : vector<64x128xf32>
    %cst_50 = arith.constant 0.000000e+00 : f32
    %105 = vector.broadcast %cst_50 : f32 to vector<64x128xf32>
    %106 = arith.maximumf %104, %105 : vector<64x128xf32>
    %c64_51 = arith.constant 64 : index
    %c0_52 = arith.constant 0 : index
    %107 = vector.load %arg12[%c64_51, %c0_52] : memref<256x128xf32, #tpu.memory_space<vmem>>, vector<64x128xf32>
    tpu.vector_store %arg12[%c64_51, %c0_52], %106 {strides = array<i32>} : memref<256x128xf32, #tpu.memory_space<vmem>>, vector<64x128xf32>,
    %c288 = arith.constant 288 : index
    %c0_53 = arith.constant 0 : index
    %108 = vector.load %arg11[%c288, %c0_53] : memref<864x128xf32, #tpu.memory_space<vmem>>, vector<432x128xf32>
    %109 = arith.truncf %108 : vector<432x128xf32> to vector<432x128xbf16>
    %c2_54 = arith.constant 2 : index
    %c0_55 = arith.constant 0 : index
    %c0_56 = arith.constant 0 : index
    %110 = vector.load %arg4[%c2_54, %c0_55, %c0_56] : memref<4x256x432xbf16, #tpu.memory_space<vmem>>, vector<1x256x432xbf16>
    %111 = vector.shape_cast %110 : vector<1x256x432xbf16> to vector<256x432xbf16>
    %cst_57 = arith.constant dense<0.000000e+00> : vector<256x128xf32>
    %112 = tpu.matmul %111, %109, %cst_57 {dimension_numbers = #tpu.dot_dimension_numbers<[1], [0], [0], [1], [0, 0, 1, 1], [], []>} : vector<256x432xbf16>, vector<432x128xbf16>, vector<256x128xf32> -> vector<256x128xf32>
    %113 = vector.extract_strided_slice %112 {offsets = [0, 0], sizes = [64, 128], strides = [1, 1]} : vector<256x128xf32> to vector<64x128xf32>
    %114 = vector.extract_strided_slice %112 {offsets = [64, 0], sizes = [64, 128], strides = [1, 1]} : vector<256x128xf32> to vector<64x128xf32>
    %115 = arith.maximumf %113, %114 : vector<64x128xf32>
    %116 = vector.extract_strided_slice %112 {offsets = [128, 0], sizes = [64, 128], strides = [1, 1]} : vector<256x128xf32> to vector<64x128xf32>
    %117 = vector.extract_strided_slice %112 {offsets = [192, 0], sizes = [64, 128], strides = [1, 1]} : vector<256x128xf32> to vector<64x128xf32>
    %118 = arith.maximumf %116, %117 : vector<64x128xf32>
    %119 = arith.maximumf %115, %118 : vector<64x128xf32>
    %c128 = arith.constant 128 : index
    %c0_58 = arith.constant 0 : index
    %120 = vector.load %arg5[%c128, %c0_58] : memref<256x1xf32, #tpu.memory_space<vmem>>, vector<64x1xf32>
    %121 = vector.broadcast %120 : vector<64x1xf32> to vector<64x128xf32>
    %122 = arith.addf %119, %121 : vector<64x128xf32>
    %cst_59 = arith.constant 0.000000e+00 : f32
    %123 = vector.broadcast %cst_59 : f32 to vector<64x128xf32>
    %124 = arith.maximumf %122, %123 : vector<64x128xf32>
    %c128_60 = arith.constant 128 : index
    %c0_61 = arith.constant 0 : index
    %125 = vector.load %arg12[%c128_60, %c0_61] : memref<256x128xf32, #tpu.memory_space<vmem>>, vector<64x128xf32>
    tpu.vector_store %arg12[%c128_60, %c0_61], %124 {strides = array<i32>} : memref<256x128xf32, #tpu.memory_space<vmem>>, vector<64x128xf32>,
    %c432_62 = arith.constant 432 : index
    %c0_63 = arith.constant 0 : index
    %126 = vector.load %arg11[%c432_62, %c0_63] : memref<864x128xf32, #tpu.memory_space<vmem>>, vector<432x128xf32>
    %127 = arith.truncf %126 : vector<432x128xf32> to vector<432x128xbf16>
    %c3_64 = arith.constant 3 : index
    %c0_65 = arith.constant 0 : index
    %c0_66 = arith.constant 0 : index
    %128 = vector.load %arg4[%c3_64, %c0_65, %c0_66] : memref<4x256x432xbf16, #tpu.memory_space<vmem>>, vector<1x256x432xbf16>
    %129 = vector.shape_cast %128 : vector<1x256x432xbf16> to vector<256x432xbf16>
    %cst_67 = arith.constant dense<0.000000e+00> : vector<256x128xf32>
    %130 = tpu.matmul %129, %127, %cst_67 {dimension_numbers = #tpu.dot_dimension_numbers<[1], [0], [0], [1], [0, 0, 1, 1], [], []>} : vector<256x432xbf16>, vector<432x128xbf16>, vector<256x128xf32> -> vector<256x128xf32>
    %131 = vector.extract_strided_slice %130 {offsets = [0, 0], sizes = [64, 128], strides = [1, 1]} : vector<256x128xf32> to vector<64x128xf32>
    %132 = vector.extract_strided_slice %130 {offsets = [64, 0], sizes = [64, 128], strides = [1, 1]} : vector<256x128xf32> to vector<64x128xf32>
    %133 = arith.maximumf %131, %132 : vector<64x128xf32>
    %134 = vector.extract_strided_slice %130 {offsets = [128, 0], sizes = [64, 128], strides = [1, 1]} : vector<256x128xf32> to vector<64x128xf32>
    %135 = vector.extract_strided_slice %130 {offsets = [192, 0], sizes = [64, 128], strides = [1, 1]} : vector<256x128xf32> to vector<64x128xf32>
    %136 = arith.maximumf %134, %135 : vector<64x128xf32>
    %137 = arith.maximumf %133, %136 : vector<64x128xf32>
    %c192 = arith.constant 192 : index
    %c0_68 = arith.constant 0 : index
    %138 = vector.load %arg5[%c192, %c0_68] : memref<256x1xf32, #tpu.memory_space<vmem>>, vector<64x1xf32>
    %139 = vector.broadcast %138 : vector<64x1xf32> to vector<64x128xf32>
    %140 = arith.addf %137, %139 : vector<64x128xf32>
    %cst_69 = arith.constant 0.000000e+00 : f32
    %141 = vector.broadcast %cst_69 : f32 to vector<64x128xf32>
    %142 = arith.maximumf %140, %141 : vector<64x128xf32>
    %c192_70 = arith.constant 192 : index
    %c0_71 = arith.constant 0 : index
    %143 = vector.load %arg12[%c192_70, %c0_71] : memref<256x128xf32, #tpu.memory_space<vmem>>, vector<64x128xf32>
    tpu.vector_store %arg12[%c192_70, %c0_71], %142 {strides = array<i32>} : memref<256x128xf32, #tpu.memory_space<vmem>>, vector<64x128xf32>,
    %c0_72 = arith.constant 0 : index
    %c0_73 = arith.constant 0 : index
    %144 = vector.load %arg12[%c0_72, %c0_73] : memref<256x128xf32, #tpu.memory_space<vmem>>, vector<256x128xf32>
    %145 = arith.truncf %144 : vector<256x128xf32> to vector<256x128xbf16>
    %c0_74 = arith.constant 0 : index
    %c0_75 = arith.constant 0 : index
    %146 = vector.load %arg6[%c0_74, %c0_75] : memref<112x256xbf16, #tpu.memory_space<vmem>>, vector<112x256xbf16>
    %cst_76 = arith.constant dense<0.000000e+00> : vector<112x128xf32>
    %147 = tpu.matmul %146, %145, %cst_76 {dimension_numbers = #tpu.dot_dimension_numbers<[1], [0], [0], [1], [0, 0, 1, 1], [], []>} : vector<112x256xbf16>, vector<256x128xbf16>, vector<112x128xf32> -> vector<112x128xf32>
    %c0_77 = arith.constant 0 : index
    %c0_78 = arith.constant 0 : index
    %148 = vector.load %arg7[%c0_77, %c0_78] : memref<112x1xf32, #tpu.memory_space<vmem>>, vector<112x1xf32>
    %149 = vector.broadcast %148 : vector<112x1xf32> to vector<112x128xf32>
    %150 = arith.addf %147, %149 : vector<112x128xf32>
    %cst_79 = arith.constant 0.000000e+00 : f32
    %151 = vector.broadcast %cst_79 : f32 to vector<112x128xf32>
    %152 = arith.maximumf %150, %151 : vector<112x128xf32>
    %153 = arith.truncf %152 : vector<112x128xf32> to vector<112x128xbf16>
    %c0_80 = arith.constant 0 : index
    %c0_81 = arith.constant 0 : index
    %154 = vector.load %arg8[%c0_80, %c0_81] : memref<16x112xbf16, #tpu.memory_space<vmem>>, vector<16x112xbf16>
    %cst_82 = arith.constant dense<0.000000e+00> : vector<16x128xf32>
    %155 = tpu.matmul %154, %153, %cst_82 {dimension_numbers = #tpu.dot_dimension_numbers<[1], [0], [0], [1], [0, 0, 1, 1], [], []>} : vector<16x112xbf16>, vector<112x128xbf16>, vector<16x128xf32> -> vector<16x128xf32>
    %c0_83 = arith.constant 0 : index
    %c0_84 = arith.constant 0 : index
    %156 = vector.load %arg9[%c0_83, %c0_84] : memref<16x1xf32, #tpu.memory_space<vmem>>, vector<16x1xf32>
    %157 = vector.broadcast %156 : vector<16x1xf32> to vector<16x128xf32>
    %158 = arith.addf %155, %157 : vector<16x128xf32>
    %c0_85 = arith.constant 0 : index
    %c0_86 = arith.constant 0 : index
    %159 = vector.load %arg10[%c0_85, %c0_86] : memref<16x128xf32, #tpu.memory_space<vmem>>, vector<16x128xf32>
    tpu.vector_store %arg10[%c0_85, %c0_86], %158 {strides = array<i32>} : memref<16x128xf32, #tpu.memory_space<vmem>>, vector<16x128xf32>,
    return
  }
  func.func @transform_0(%arg0: i32) -> (i32, i32) {
    %c0_i32 = arith.constant 0 : i32
    %c0_i32_0 = arith.constant 0 : i32
    return %c0_i32, %arg0 : i32, i32
  }
  func.func @transform_1(%arg0: i32) -> (i32, i32, i32) {
    %c0_i32 = arith.constant 0 : i32
    %c0_i32_0 = arith.constant 0 : i32
    %c0_i32_1 = arith.constant 0 : i32
    %c0_i32_2 = arith.constant 0 : i32
    return %c0_i32, %c0_i32_0, %c0_i32_1 : i32, i32, i32
  }
  func.func @transform_2(%arg0: i32) -> (i32, i32) {
    %c0_i32 = arith.constant 0 : i32
    %c0_i32_0 = arith.constant 0 : i32
    %c0_i32_1 = arith.constant 0 : i32
    return %c0_i32, %c0_i32_0 : i32, i32
  }
  func.func @transform_3(%arg0: i32) -> (i32, i32, i32) {
    %c0_i32 = arith.constant 0 : i32
    %c0_i32_0 = arith.constant 0 : i32
    %c0_i32_1 = arith.constant 0 : i32
    %c0_i32_2 = arith.constant 0 : i32
    return %c0_i32, %c0_i32_0, %c0_i32_1 : i32, i32, i32
  }
  func.func @transform_4(%arg0: i32) -> (i32, i32) {
    %c0_i32 = arith.constant 0 : i32
    %c0_i32_0 = arith.constant 0 : i32
    %c0_i32_1 = arith.constant 0 : i32
    return %c0_i32, %c0_i32_0 : i32, i32
  }
  func.func @transform_5(%arg0: i32) -> (i32, i32) {
    %c0_i32 = arith.constant 0 : i32
    %c0_i32_0 = arith.constant 0 : i32
    %c0_i32_1 = arith.constant 0 : i32
    return %c0_i32, %c0_i32_0 : i32, i32
  }
  func.func @transform_6(%arg0: i32) -> (i32, i32) {
    %c0_i32 = arith.constant 0 : i32
    %c0_i32_0 = arith.constant 0 : i32
    %c0_i32_1 = arith.constant 0 : i32
    return %c0_i32, %c0_i32_0 : i32, i32
  }
  func.func @transform_7(%arg0: i32) -> (i32, i32) {
    %c0_i32 = arith.constant 0 : i32
    %c0_i32_0 = arith.constant 0 : i32
    %c0_i32_1 = arith.constant 0 : i32
    return %c0_i32, %c0_i32_0 : i32, i32
  }
  func.func @transform_8(%arg0: i32) -> (i32, i32) {
    %c0_i32 = arith.constant 0 : i32
    %c0_i32_0 = arith.constant 0 : i32
    %c0_i32_1 = arith.constant 0 : i32
    return %c0_i32, %c0_i32_0 : i32, i32
  }
  func.func @transform_9(%arg0: i32) -> (i32, i32) {
    %c0_i32 = arith.constant 0 : i32
    %c0_i32_0 = arith.constant 0 : i32
    return %c0_i32, %arg0 : i32, i32
  }
}

</mosaic_0001>

<llo_original>
// kernel: cnn_forward.1
$region0: #{cnn_forward.1}
  #allocation0 [shape = 'u32[]', space=smem, size = 0x4, offset = 0x4, fixed_abs, tag = 'smem constant byte address 0x4 - core index']
  #allocation1 [shape = 'u32[144,128]{1,0:T(1,128)}', space=vmem, size = 0x12000, scoped, tag = 'internal scratch']
  #allocation2 [shape = 'f32[864,128]{1,0:T(8,128)}', space=vmem, size = 0x6c000, scoped, tag = 'scratch operand']
  #allocation3 [shape = 'f32[256,128]{1,0:T(8,128)}', space=vmem, size = 0x20000, scoped, tag = 'scratch operand']
  %s0 = inlined_call_operand.vmem [shape: f32[784,128], index: 0, kind: input, shape index: {}]
  %s1 = inlined_call_operand.vmem [shape: bf16[4,864,280], index: 1, kind: input, shape index: {}]
  %s2 = inlined_call_operand.vmem [shape: f32[864,1], index: 2, kind: input, shape index: {}]
  %s3 = inlined_call_operand.vmem [shape: bf16[4,256,432], index: 3, kind: input, shape index: {}]
  %s4 = inlined_call_operand.vmem [shape: f32[256,1], index: 4, kind: input, shape index: {}]
  %s5 = inlined_call_operand.vmem [shape: bf16[112,256], index: 5, kind: input, shape index: {}]
  %s6 = inlined_call_operand.vmem [shape: f32[112,1], index: 6, kind: input, shape index: {}]
  %s7 = inlined_call_operand.vmem [shape: bf16[16,112], index: 7, kind: input, shape index: {}]
  %s8 = inlined_call_operand.vmem [shape: f32[16,1], index: 8, kind: input, shape index: {}]
  %s9 = inlined_call_operand.vmem [shape: f32[16,128], index: 9, kind: output, shape index: {}]
  %s10 = sld [smem:[#allocation0]]
  $region46: #{cnn_forward.1} parent=0
    _
  %s12 = ssub.s32 1, %s10
  %s13 = scalar_select 0, %s12, %s10
  // Predicated region
  $region2: #{cnn_forward.1} parent=0 // pred_check
    _
  $region3: #{cnn_forward.1} parent=0 // pred_check_branch
    %15 = sbr.rel (0) target = $region5
  $region4: #{cnn_forward.1} parent=0 // pred_region
    _
  $region5: #{cnn_forward.1} parent=0 // pred_fallthru
    _
  // Predicated region
  $region6: #{cnn_forward.1} parent=0 // pred_check
    _
  $region7: #{cnn_forward.1} parent=0 // pred_check_branch
    %17 = sbr.rel (0) target = $region9
  $region8: #{cnn_forward.1} parent=0 // pred_region
    _
  $region9: #{cnn_forward.1} parent=0 // pred_fallthru
    _
  // Predicated region
  $region10: #{cnn_forward.1} parent=0 // pred_check
    _
  $region11: #{cnn_forward.1} parent=0 // pred_check_branch
    %19 = sbr.rel (0) target = $region13
  $region12: #{cnn_forward.1} parent=0 // pred_region
    _
  $region13: #{cnn_forward.1} parent=0 // pred_fallthru
    _
  // Predicated region
  $region14: #{cnn_forward.1} parent=0 // pred_check
    _
  $region15: #{cnn_forward.1} parent=0 // pred_check_branch
    %21 = sbr.rel (0) target = $region17
  $region16: #{cnn_forward.1} parent=0 // pred_region
    _
  $region17: #{cnn_forward.1} parent=0 // pred_fallthru
    _
  // Predicated region
  $region18: #{cnn_forward.1} parent=0 // pred_check
    _
  $region19: #{cnn_forward.1} parent=0 // pred_check_branch
    %23 = sbr.rel (0) target = $region21
  $region20: #{cnn_forward.1} parent=0 // pred_region
    _
  $region21: #{cnn_forward.1} parent=0 // pred_fallthru
    _
  // Predicated region
  $region22: #{cnn_forward.1} parent=0 // pred_check
    _
  $region23: #{cnn_forward.1} parent=0 // pred_check_branch
    %25 = sbr.rel (0) target = $region25
  $region24: #{cnn_forward.1} parent=0 // pred_region
    _
  $region25: #{cnn_forward.1} parent=0 // pred_fallthru
    _
  // Predicated region
  $region26: #{cnn_forward.1} parent=0 // pred_check
    _
  $region27: #{cnn_forward.1} parent=0 // pred_check_branch
    %27 = sbr.rel (0) target = $region29
  $region28: #{cnn_forward.1} parent=0 // pred_region
    _
  $region29: #{cnn_forward.1} parent=0 // pred_fallthru
    _
  // Predicated region
  $region30: #{cnn_forward.1} parent=0 // pred_check
    _
  $region31: #{cnn_forward.1} parent=0 // pred_check_branch
    %29 = sbr.rel (0) target = $region33
  $region32: #{cnn_forward.1} parent=0 // pred_region
    _
  $region33: #{cnn_forward.1} parent=0 // pred_fallthru
    _
  // Predicated region
  $region34: #{cnn_forward.1} parent=0 // pred_check
    _
  $region35: #{cnn_forward.1} parent=0 // pred_check_branch
    %31 = sbr.rel (0) target = $region37
  $region36: #{cnn_forward.1} parent=0 // pred_region
    _
  $region37: #{cnn_forward.1} parent=0 // pred_fallthru
    _
  %v33 = vld [vmem:[%s0] sm:$0xff]
  %v34 = vld [vmem:[%s0 + $0x8] sm:$0xff]
  %v35 = vld [vmem:[%s0 + $0x10] sm:$0xff]
  %v36 = vld [vmem:[%s0 + $0x18] sm:$0xff]
  %v37 = vld [vmem:[%s0 + $0x20] sm:$0xff]
  %v38 = vld [vmem:[%s0 + $0x28] sm:$0xff]
  %v39 = vld [vmem:[%s0 + $0x30] sm:$0xff]
  %v40 = vld [vmem:[%s0 + $0x38] sm:$0xff]
  %v41 = vld [vmem:[%s0 + $0x40] sm:$0xff]
  %v42 = vld [vmem:[%s0 + $0x48] sm:$0xff]
  %v43 = vld [vmem:[%s0 + $0x50] sm:$0xff]
  %v44 = vld [vmem:[%s0 + $0x58] sm:$0xff]
  %v45 = vld [vmem:[%s0 + $0x60] sm:$0xff]
  %v46 = vld [vmem:[%s0 + $0x68] sm:$0xff]
  %v47 = vld [vmem:[%s0 + $0x70] sm:$0xff]
  %v48 = vld [vmem:[%s0 + $0x78] sm:$0xff]
  %v49 = vld [vmem:[%s0 + $0x80] sm:$0xff]
  %v50 = vld [vmem:[%s0 + $0x88] sm:$0xff]
  %v51 = vld [vmem:[%s0 + $0x90] sm:$0xff]
  %v52 = vld [vmem:[%s0 + $0x98] sm:$0xff]
  %v53 = vld [vmem:[%s0 + $0xa0] sm:$0xff]
  %v54 = vld [vmem:[%s0 + $0xa8] sm:$0xff]
  %v55 = vld [vmem:[%s0 + $0xb0] sm:$0xff]
  %v56 = vld [vmem:[%s0 + $0xb8] sm:$0xff]
  %v57 = vld [vmem:[%s0 + $0xc0] sm:$0xff]
  %v58 = vld [vmem:[%s0 + $0xc8] sm:$0xff]
  %v59 = vld [vmem:[%s0 + $0xd0] sm:$0xff]
  %v60 = vld [vmem:[%s0 + $0xd8] sm:$0xff]
  %v61 = vld [vmem:[%s0 + $0xe0] sm:$0xff]
  %v62 = vld [vmem:[%s0 + $0xe8] sm:$0xff]
  %v63 = vld [vmem:[%s0 + $0xf0] sm:$0xff]
  %v64 = vld [vmem:[%s0 + $0xf8] sm:$0xff]
  %v65 = vld [vmem:[%s0 + $0x100] sm:$0xff]
  %v66 = vld [vmem:[%s0 + $0x108] sm:$0xff]
  %v67 = vld [vmem:[%s0 + $0x110] sm:$0xff]
  %v68 = vpack.c.bf16 %v34, %v33
  %v69 = vpack.c.bf16 %v36, %v35
  %v70 = vpack.c.bf16 %v38, %v37
  %v71 = vpack.c.bf16 %v40, %v39
  %v72 = vpack.c.bf16 %v42, %v41
  %v73 = vpack.c.bf16 %v44, %v43
  %v74 = vpack.c.bf16 %v46, %v45
  %v75 = vpack.c.bf16 %v48, %v47
  %v76 = vpack.c.bf16 %v50, %v49
  %v77 = vpack.c.bf16 %v52, %v51
  %v78 = vpack.c.bf16 %v54, %v53
  %v79 = vpack.c.bf16 %v56, %v55
  %v80 = vpack.c.bf16 %v58, %v57
  %v81 = vpack.c.bf16 %v60, %v59
  %v82 = vpack.c.bf16 %v62, %v61
  %v83 = vpack.c.bf16 %v64, %v63
  %v84 = vpack.c.bf16 %v66, %v65
  %v85 = vpack.c.bf16 %v67, %v67
  %v86 = vld [vmem:[%s1] sm:$0xff]
  %v87 = vld [vmem:[%s1 + $0x8] sm:$0xf]
  %v88 = vld [vmem:[%s1 + $0xc] sm:$0xff]
  %v89 = vld [vmem:[%s1 + $0x14] sm:$0xf]
  %v90 = vld [vmem:[%s1 + $0x18] sm:$0xff]
  %v91 = vld [vmem:[%s1 + $0x20] sm:$0xf]
  %v92 = vld [vmem:[%s1 + $0x24] sm:$0xff]
  %v93 = vld [vmem:[%s1 + $0x2c] sm:$0xf]
  %v94 = vld [vmem:[%s1 + $0x30] sm:$0xff]
  %v95 = vld [vmem:[%s1 + $0x38] sm:$0xf]
  %v96 = vld [vmem:[%s1 + $0x3c] sm:$0xff]
  %v97 = vld [vmem:[%s1 + $0x44] sm:$0xf]
  %v98 = vld [vmem:[%s1 + $0x48] sm:$0xff]
  %v99 = vld [vmem:[%s1 + $0x50] sm:$0xf]
  %v100 = vld [vmem:[%s1 + $0x54] sm:$0xff]
  %v101 = vld [vmem:[%s1 + $0x5c] sm:$0xf]
  %v102 = vld [vmem:[%s1 + $0x60] sm:$0xff]
  %v103 = vld [vmem:[%s1 + $0x68] sm:$0xf]
  %v104 = vld [vmem:[%s1 + $0x6c] sm:$0xff]
  %v105 = vld [vmem:[%s1 + $0x74] sm:$0xf]
  %v106 = vld [vmem:[%s1 + $0x78] sm:$0xff]
  %v107 = vld [vmem:[%s1 + $0x80] sm:$0xf]
  %v108 = vld [vmem:[%s1 + $0x84] sm:$0xff]
  %v109 = vld [vmem:[%s1 + $0x8c] sm:$0xf]
  %v110 = vld [vmem:[%s1 + $0x90] sm:$0xff]
  %v111 = vld [vmem:[%s1 + $0x98] sm:$0xf]
  %v112 = vld [vmem:[%s1 + $0x9c] sm:$0xff]
  %v113 = vld [vmem:[%s1 + $0xa4] sm:$0xf]
  %v114 = vld [vmem:[%s1 + $0xa8] sm:$0xff]
  %v115 = vld [vmem:[%s1 + $0xb0] sm:$0xf]
  %v116 = vld [vmem:[%s1 + $0xb4] sm:$0xff]
  %v117 = vld [vmem:[%s1 + $0xbc] sm:$0xf]
  %v118 = vld [vmem:[%s1 + $0xc0] sm:$0xff]
  %v119 = vld [vmem:[%s1 + $0xc8] sm:$0xf]
  %v120 = vld [vmem:[%s1 + $0xcc] sm:$0xff]
  %v121 = vld [vmem:[%s1 + $0xd4] sm:$0xf]
  %v122 = vld [vmem:[%s1 + $0xd8] sm:$0xff]
  %v123 = vld [vmem:[%s1 + $0xe0] sm:$0xf]
  %v124 = vld [vmem:[%s1 + $0xe4] sm:$0xff]
  %v125 = vld [vmem:[%s1 + $0xec] sm:$0xf]
  %v126 = vld [vmem:[%s1 + $0xf0] sm:$0xff]
  %v127 = vld [vmem:[%s1 + $0xf8] sm:$0xf]
  %v128 = vld [vmem:[%s1 + $0xfc] sm:$0xff]
  %v129 = vld [vmem:[%s1 + $0x104] sm:$0xf]
  %v130 = vld [vmem:[%s1 + $0x108] sm:$0xff]
  %v131 = vld [vmem:[%s1 + $0x110] sm:$0xf]
  %v132 = vld [vmem:[%s1 + $0x114] sm:$0xff]
  %v133 = vld [vmem:[%s1 + $0x11c] sm:$0xf]
  %v134 = vld [vmem:[%s1 + $0x120] sm:$0xff]
  %v135 = vld [vmem:[%s1 + $0x128] sm:$0xf]
  %v136 = vld [vmem:[%s1 + $0x12c] sm:$0xff]
  %v137 = vld [vmem:[%s1 + $0x134] sm:$0xf]
  %v138 = vld [vmem:[%s1 + $0x138] sm:$0xff]
  %v139 = vld [vmem:[%s1 + $0x140] sm:$0xf]
  %v140 = vld [vmem:[%s1 + $0x144] sm:$0xff]
  %v141 = vld [vmem:[%s1 + $0x14c] sm:$0xf]
  %v142 = vld [vmem:[%s1 + $0x150] sm:$0xff]
  %v143 = vld [vmem:[%s1 + $0x158] sm:$0xf]
  %v144 = vld [vmem:[%s1 + $0x15c] sm:$0xff]
  %v145 = vld [vmem:[%s1 + $0x164] sm:$0xf]
  %v146 = vld [vmem:[%s1 + $0x168] sm:$0xff]
  %v147 = vld [vmem:[%s1 + $0x170] sm:$0xf]
  %v148 = vld [vmem:[%s1 + $0x174] sm:$0xff]
  %v149 = vld [vmem:[%s1 + $0x17c] sm:$0xf]
  %v150 = vld [vmem:[%s1 + $0x180] sm:$0xff]
  %v151 = vld [vmem:[%s1 + $0x188] sm:$0xf]
  %v152 = vld [vmem:[%s1 + $0x18c] sm:$0xff]
  %v153 = vld [vmem:[%s1 + $0x194] sm:$0xf]
  %v154 = vld [vmem:[%s1 + $0x198] sm:$0xff]
  %v155 = vld [vmem:[%s1 + $0x1a0] sm:$0xf]
  %v156 = vld [vmem:[%s1 + $0x1a4] sm:$0xff]
  %v157 = vld [vmem:[%s1 + $0x1ac] sm:$0xf]
  %v158 = vld [vmem:[%s1 + $0x1b0] sm:$0xff]
  %v159 = vld [vmem:[%s1 + $0x1b8] sm:$0xf]
  %v160 = vld [vmem:[%s1 + $0x1bc] sm:$0xff]
  %v161 = vld [vmem:[%s1 + $0x1c4] sm:$0xf]
  %v162 = vld [vmem:[%s1 + $0x1c8] sm:$0xff]
  %v163 = vld [vmem:[%s1 + $0x1d0] sm:$0xf]
  %v164 = vld [vmem:[%s1 + $0x1d4] sm:$0xff]
  %v165 = vld [vmem:[%s1 + $0x1dc] sm:$0xf]
  %v166 = vld [vmem:[%s1 + $0x1e0] sm:$0xff]
  %v167 = vld [vmem:[%s1 + $0x1e8] sm:$0xf]
  %v168 = vld [vmem:[%s1 + $0x1ec] sm:$0xff]
  %v169 = vld [vmem:[%s1 + $0x1f4] sm:$0xf]
  %v170 = vld [vmem:[%s1 + $0x1f8] sm:$0xff]
  %v171 = vld [vmem:[%s1 + $0x200] sm:$0xf]
  %v172 = vld [vmem:[%s1 + $0x204] sm:$0xff]
  %v173 = vld [vmem:[%s1 + $0x20c] sm:$0xf]
  %v174 = vld [vmem:[%s1 + $0x210] sm:$0xff]
  %v175 = vld [vmem:[%s1 + $0x218] sm:$0xf]
  %v176 = vld [vmem:[%s1 + $0x21c] sm:$0xff]
  %v177 = vld [vmem:[%s1 + $0x224] sm:$0xf]
  %v178 = vld [vmem:[%s1 + $0x228] sm:$0xff]
  %v179 = vld [vmem:[%s1 + $0x230] sm:$0xf]
  %v180 = vld [vmem:[%s1 + $0x234] sm:$0xff]
  %v181 = vld [vmem:[%s1 + $0x23c] sm:$0xf]
  %v182 = vld [vmem:[%s1 + $0x240] sm:$0xff]
  %v183 = vld [vmem:[%s1 + $0x248] sm:$0xf]
  %v184 = vld [vmem:[%s1 + $0x24c] sm:$0xff]
  %v185 = vld [vmem:[%s1 + $0x254] sm:$0xf]
  %v186 = vld [vmem:[%s1 + $0x258] sm:$0xff]
  %v187 = vld [vmem:[%s1 + $0x260] sm:$0xf]
  %v188 = vld [vmem:[%s1 + $0x264] sm:$0xff]
  %v189 = vld [vmem:[%s1 + $0x26c] sm:$0xf]
  %v190 = vld [vmem:[%s1 + $0x270] sm:$0xff]
  %v191 = vld [vmem:[%s1 + $0x278] sm:$0xf]
  %v192 = vld [vmem:[%s1 + $0x27c] sm:$0xff]
  %v193 = vld [vmem:[%s1 + $0x284] sm:$0xf]
  %v194 = vld [vmem:[%s1 + $0x288] sm:$0xff]
  %v195 = vld [vmem:[%s1 + $0x290] sm:$0xf]
  %v196 = vld [vmem:[%s1 + $0x294] sm:$0xff]
  %v197 = vld [vmem:[%s1 + $0x29c] sm:$0xf]
  %v198 = vld [vmem:[%s1 + $0x2a0] sm:$0xff]
  %v199 = vld [vmem:[%s1 + $0x2a8] sm:$0xf]
  %v200 = vld [vmem:[%s1 + $0x2ac] sm:$0xff]
  %v201 = vld [vmem:[%s1 + $0x2b4] sm:$0xf]
  %v202 = vld [vmem:[%s1 + $0x2b8] sm:$0xff]
  %v203 = vld [vmem:[%s1 + $0x2c0] sm:$0xf]
  %v204 = vld [vmem:[%s1 + $0x2c4] sm:$0xff]
  %v205 = vld [vmem:[%s1 + $0x2cc] sm:$0xf]
  %v206 = vld [vmem:[%s1 + $0x2d0] sm:$0xff]
  %v207 = vld [vmem:[%s1 + $0x2d8] sm:$0xf]
  %v208 = vld [vmem:[%s1 + $0x2dc] sm:$0xff]
  %v209 = vld [vmem:[%s1 + $0x2e4] sm:$0xf]
  %v210 = vld [vmem:[%s1 + $0x2e8] sm:$0xff]
  %v211 = vld [vmem:[%s1 + $0x2f0] sm:$0xf]
  %v212 = vld [vmem:[%s1 + $0x2f4] sm:$0xff]
  %v213 = vld [vmem:[%s1 + $0x2fc] sm:$0xf]
  %v214 = vld [vmem:[%s1 + $0x300] sm:$0xff]
  %v215 = vld [vmem:[%s1 + $0x308] sm:$0xf]
  %v216 = vld [vmem:[%s1 + $0x30c] sm:$0xff]
  %v217 = vld [vmem:[%s1 + $0x314] sm:$0xf]
  %v218 = vld [vmem:[%s1 + $0x318] sm:$0xff]
  %v219 = vld [vmem:[%s1 + $0x320] sm:$0xf]
  %v220 = vld [vmem:[%s1 + $0x324] sm:$0xff]
  %v221 = vld [vmem:[%s1 + $0x32c] sm:$0xf]
  %v222 = vld [vmem:[%s1 + $0x330] sm:$0xff]
  %v223 = vld [vmem:[%s1 + $0x338] sm:$0xf]
  %v224 = vld [vmem:[%s1 + $0x33c] sm:$0xff]
  %v225 = vld [vmem:[%s1 + $0x344] sm:$0xf]
  %v226 = vld [vmem:[%s1 + $0x348] sm:$0xff]
  %v227 = vld [vmem:[%s1 + $0x350] sm:$0xf]
  %v228 = vld [vmem:[%s1 + $0x354] sm:$0xff]
  %v229 = vld [vmem:[%s1 + $0x35c] sm:$0xf]
  %v230 = vld [vmem:[%s1 + $0x360] sm:$0xff]
  %v231 = vld [vmem:[%s1 + $0x368] sm:$0xf]
  %v232 = vld [vmem:[%s1 + $0x36c] sm:$0xff]
  %v233 = vld [vmem:[%s1 + $0x374] sm:$0xf]
  %v234 = vld [vmem:[%s1 + $0x378] sm:$0xff]
  %v235 = vld [vmem:[%s1 + $0x380] sm:$0xf]
  %v236 = vld [vmem:[%s1 + $0x384] sm:$0xff]
  %v237 = vld [vmem:[%s1 + $0x38c] sm:$0xf]
  %v238 = vld [vmem:[%s1 + $0x390] sm:$0xff]
  %v239 = vld [vmem:[%s1 + $0x398] sm:$0xf]
  %v240 = vld [vmem:[%s1 + $0x39c] sm:$0xff]
  %v241 = vld [vmem:[%s1 + $0x3a4] sm:$0xf]
  %v242 = vld [vmem:[%s1 + $0x3a8] sm:$0xff]
  %v243 = vld [vmem:[%s1 + $0x3b0] sm:$0xf]
  %v244 = vld [vmem:[%s1 + $0x3b4] sm:$0xff]
  %v245 = vld [vmem:[%s1 + $0x3bc] sm:$0xf]
  %v246 = vld [vmem:[%s1 + $0x3c0] sm:$0xff]
  %v247 = vld [vmem:[%s1 + $0x3c8] sm:$0xf]
  %v248 = vld [vmem:[%s1 + $0x3cc] sm:$0xff]
  %v249 = vld [vmem:[%s1 + $0x3d4] sm:$0xf]
  %v250 = vld [vmem:[%s1 + $0x3d8] sm:$0xff]
  %v251 = vld [vmem:[%s1 + $0x3e0] sm:$0xf]
  %v252 = vld [vmem:[%s1 + $0x3e4] sm:$0xff]
  %v253 = vld [vmem:[%s1 + $0x3ec] sm:$0xf]
  %v254 = vld [vmem:[%s1 + $0x3f0] sm:$0xff]
  %v255 = vld [vmem:[%s1 + $0x3f8] sm:$0xf]
  %v256 = vld [vmem:[%s1 + $0x3fc] sm:$0xff]
  %v257 = vld [vmem:[%s1 + $0x404] sm:$0xf]
  %v258 = vld [vmem:[%s1 + $0x408] sm:$0xff]
  %v259 = vld [vmem:[%s1 + $0x410] sm:$0xf]
  %v260 = vld [vmem:[%s1 + $0x414] sm:$0xff]
  %v261 = vld [vmem:[%s1 + $0x41c] sm:$0xf]
  %v262 = vld [vmem:[%s1 + $0x420] sm:$0xff]
  %v263 = vld [vmem:[%s1 + $0x428] sm:$0xf]
  %v264 = vld [vmem:[%s1 + $0x42c] sm:$0xff]
  %v265 = vld [vmem:[%s1 + $0x434] sm:$0xf]
  %v266 = vld [vmem:[%s1 + $0x438] sm:$0xff]
  %v267 = vld [vmem:[%s1 + $0x440] sm:$0xf]
  %v268 = vld [vmem:[%s1 + $0x444] sm:$0xff]
  %v269 = vld [vmem:[%s1 + $0x44c] sm:$0xf]
  %v270 = vld [vmem:[%s1 + $0x450] sm:$0xff]
  %v271 = vld [vmem:[%s1 + $0x458] sm:$0xf]
  %v272 = vld [vmem:[%s1 + $0x45c] sm:$0xff]
  %v273 = vld [vmem:[%s1 + $0x464] sm:$0xf]
  %v274 = vld [vmem:[%s1 + $0x468] sm:$0xff]
  %v275 = vld [vmem:[%s1 + $0x470] sm:$0xf]
  %v276 = vld [vmem:[%s1 + $0x474] sm:$0xff]
  %v277 = vld [vmem:[%s1 + $0x47c] sm:$0xf]
  %v278 = vld [vmem:[%s1 + $0x480] sm:$0xff]
  %v279 = vld [vmem:[%s1 + $0x488] sm:$0xf]
  %v280 = vld [vmem:[%s1 + $0x48c] sm:$0xff]
  %v281 = vld [vmem:[%s1 + $0x494] sm:$0xf]
  %v282 = vld [vmem:[%s1 + $0x498] sm:$0xff]
  %v283 = vld [vmem:[%s1 + $0x4a0] sm:$0xf]
  %v284 = vld [vmem:[%s1 + $0x4a4] sm:$0xff]
  %v285 = vld [vmem:[%s1 + $0x4ac] sm:$0xf]
  %v286 = vld [vmem:[%s1 + $0x4b0] sm:$0xff]
  %v287 = vld [vmem:[%s1 + $0x4b8] sm:$0xf]
  %v288 = vld [vmem:[%s1 + $0x4bc] sm:$0xff]
  %v289 = vld [vmem:[%s1 + $0x4c4] sm:$0xf]
  %v290 = vld [vmem:[%s1 + $0x4c8] sm:$0xff]
  %v291 = vld [vmem:[%s1 + $0x4d0] sm:$0xf]
  %v292 = vld [vmem:[%s1 + $0x4d4] sm:$0xff]
  %v293 = vld [vmem:[%s1 + $0x4dc] sm:$0xf]
  %v294 = vld [vmem:[%s1 + $0x4e0] sm:$0xff]
  %v295 = vld [vmem:[%s1 + $0x4e8] sm:$0xf]
  %v296 = vld [vmem:[%s1 + $0x4ec] sm:$0xff]
  %v297 = vld [vmem:[%s1 + $0x4f4] sm:$0xf]
  %v298 = vld [vmem:[%s1 + $0x4f8] sm:$0xff]
  %v299 = vld [vmem:[%s1 + $0x500] sm:$0xf]
  %v300 = vld [vmem:[%s1 + $0x504] sm:$0xff]
  %v301 = vld [vmem:[%s1 + $0x50c] sm:$0xf]
  %v518 = vunpack.c.l.b16 %v86
  %v519 = vunpack.c.h.b16 %v86
  %v520 = vunpack.c.l.b16 %v87
  %v521 = vunpack.c.l.b16 %v88
  %v522 = vunpack.c.h.b16 %v88
  %v523 = vunpack.c.l.b16 %v89
  %v524 = vunpack.c.l.b16 %v90
  %v525 = vunpack.c.h.b16 %v90
  %v526 = vunpack.c.l.b16 %v91
  %v527 = vunpack.c.l.b16 %v92
  %v528 = vunpack.c.h.b16 %v92
  %v529 = vunpack.c.l.b16 %v93
  %v530 = vunpack.c.l.b16 %v94
  %v531 = vunpack.c.h.b16 %v94
  %v532 = vunpack.c.l.b16 %v95
  %v533 = vunpack.c.l.b16 %v96
  %v534 = vunpack.c.h.b16 %v96
  %v535 = vunpack.c.l.b16 %v97
  %v536 = vunpack.c.l.b16 %v98
  %v537 = vunpack.c.h.b16 %v98
  %v538 = vunpack.c.l.b16 %v99
  %v539 = vunpack.c.l.b16 %v100
  %v540 = vunpack.c.h.b16 %v100
  %v541 = vunpack.c.l.b16 %v101
  %v542 = vunpack.c.l.b16 %v102
  %v543 = vunpack.c.h.b16 %v102
  %v544 = vunpack.c.l.b16 %v103
  %v545 = vunpack.c.l.b16 %v104
  %v546 = vunpack.c.h.b16 %v104
  %v547 = vunpack.c.l.b16 %v105
  %v548 = vunpack.c.l.b16 %v106
  %v549 = vunpack.c.h.b16 %v106
  %v550 = vunpack.c.l.b16 %v107
  %v551 = vunpack.c.l.b16 %v108
  %v552 = vunpack.c.h.b16 %v108
  %v553 = vunpack.c.l.b16 %v109
  %v554 = vunpack.c.l.b16 %v110
  %v555 = vunpack.c.h.b16 %v110
  %v556 = vunpack.c.l.b16 %v111
  %v557 = vunpack.c.l.b16 %v112
  %v558 = vunpack.c.h.b16 %v112
  %v559 = vunpack.c.l.b16 %v113
  %v560 = vunpack.c.l.b16 %v114
  %v561 = vunpack.c.h.b16 %v114
  %v562 = vunpack.c.l.b16 %v115
  %v563 = vunpack.c.l.b16 %v116
  %v564 = vunpack.c.h.b16 %v116
  %v565 = vunpack.c.l.b16 %v117
  %v566 = vunpack.c.l.b16 %v118
  %v567 = vunpack.c.h.b16 %v118
  %v568 = vunpack.c.l.b16 %v119
  %v569 = vunpack.c.l.b16 %v120
  %v570 = vunpack.c.h.b16 %v120
  %v571 = vunpack.c.l.b16 %v121
  %v572 = vunpack.c.l.b16 %v122
  %v573 = vunpack.c.h.b16 %v122
  %v574 = vunpack.c.l.b16 %v123
  %v575 = vunpack.c.l.b16 %v124
  %v576 = vunpack.c.h.b16 %v124
  %v577 = vunpack.c.l.b16 %v125
  %v578 = vunpack.c.l.b16 %v126
  %v579 = vunpack.c.h.b16 %v126
  %v580 = vunpack.c.l.b16 %v127
  %v581 = vunpack.c.l.b16 %v128
  %v582 = vunpack.c.h.b16 %v128
  %v583 = vunpack.c.l.b16 %v129
  %v584 = vunpack.c.l.b16 %v130
  %v585 = vunpack.c.h.b16 %v130
  %v586 = vunpack.c.l.b16 %v131
  %v587 = vunpack.c.l.b16 %v132
  %v588 = vunpack.c.h.b16 %v132
  %v589 = vunpack.c.l.b16 %v133
  %v590 = vunpack.c.l.b16 %v134
  %v591 = vunpack.c.h.b16 %v134
  %v592 = vunpack.c.l.b16 %v135
  %v593 = vunpack.c.l.b16 %v136
  %v594 = vunpack.c.h.b16 %v136
  %v595 = vunpack.c.l.b16 %v137
  %v596 = vunpack.c.l.b16 %v138
  %v597 = vunpack.c.h.b16 %v138
  %v598 = vunpack.c.l.b16 %v139
  %v599 = vunpack.c.l.b16 %v140
  %v600 = vunpack.c.h.b16 %v140
  %v601 = vunpack.c.l.b16 %v141
  %v602 = vunpack.c.l.b16 %v142
  %v603 = vunpack.c.h.b16 %v142
  %v604 = vunpack.c.l.b16 %v143
  %v605 = vunpack.c.l.b16 %v144
  %v606 = vunpack.c.h.b16 %v144
  %v607 = vunpack.c.l.b16 %v145
  %v608 = vunpack.c.l.b16 %v146
  %v609 = vunpack.c.h.b16 %v146
  %v610 = vunpack.c.l.b16 %v147
  %v611 = vunpack.c.l.b16 %v148
  %v612 = vunpack.c.h.b16 %v148
  %v613 = vunpack.c.l.b16 %v149
  %v614 = vunpack.c.l.b16 %v150
  %v615 = vunpack.c.h.b16 %v150
  %v616 = vunpack.c.l.b16 %v151
  %v617 = vunpack.c.l.b16 %v152
  %v618 = vunpack.c.h.b16 %v152
  %v619 = vunpack.c.l.b16 %v153
  %v620 = vunpack.c.l.b16 %v154
  %v621 = vunpack.c.h.b16 %v154
  %v622 = vunpack.c.l.b16 %v155
  %v623 = vunpack.c.l.b16 %v156
  %v624 = vunpack.c.h.b16 %v156
  %v625 = vunpack.c.l.b16 %v157
  %v626 = vunpack.c.l.b16 %v158
  %v627 = vunpack.c.h.b16 %v158
  %v628 = vunpack.c.l.b16 %v159
  %v629 = vunpack.c.l.b16 %v160
  %v630 = vunpack.c.h.b16 %v160
  %v631 = vunpack.c.l.b16 %v161
  %v632 = vunpack.c.l.b16 %v162
  %v633 = vunpack.c.h.b16 %v162
  %v634 = vunpack.c.l.b16 %v163
  %v635 = vunpack.c.l.b16 %v164
  %v636 = vunpack.c.h.b16 %v164
  %v637 = vunpack.c.l.b16 %v165
  %v638 = vunpack.c.l.b16 %v166
  %v639 = vunpack.c.h.b16 %v166
  %v640 = vunpack.c.l.b16 %v167
  %v641 = vunpack.c.l.b16 %v168
  %v642 = vunpack.c.h.b16 %v168
  %v643 = vunpack.c.l.b16 %v169
  %v644 = vunpack.c.l.b16 %v170
  %v645 = vunpack.c.h.b16 %v170
  %v646 = vunpack.c.l.b16 %v171
  %v647 = vunpack.c.l.b16 %v172
  %v648 = vunpack.c.h.b16 %v172
  %v649 = vunpack.c.l.b16 %v173
  %v650 = vunpack.c.l.b16 %v174
  %v651 = vunpack.c.h.b16 %v174
  %v652 = vunpack.c.l.b16 %v175
  %v653 = vunpack.c.l.b16 %v176
  %v654 = vunpack.c.h.b16 %v176
  %v655 = vunpack.c.l.b16 %v177
  %v656 = vunpack.c.l.b16 %v178
  %v657 = vunpack.c.h.b16 %v178
  %v658 = vunpack.c.l.b16 %v179
  %v659 = vunpack.c.l.b16 %v180
  %v660 = vunpack.c.h.b16 %v180
  %v661 = vunpack.c.l.b16 %v181
  %v662 = vunpack.c.l.b16 %v182
  %v663 = vunpack.c.h.b16 %v182
  %v664 = vunpack.c.l.b16 %v183
  %v665 = vunpack.c.l.b16 %v184
  %v666 = vunpack.c.h.b16 %v184
  %v667 = vunpack.c.l.b16 %v185
  %v668 = vunpack.c.l.b16 %v186
  %v669 = vunpack.c.h.b16 %v186
  %v670 = vunpack.c.l.b16 %v187
  %v671 = vunpack.c.l.b16 %v188
  %v672 = vunpack.c.h.b16 %v188
  %v673 = vunpack.c.l.b16 %v189
  %v674 = vunpack.c.l.b16 %v190
  %v675 = vunpack.c.h.b16 %v190
  %v676 = vunpack.c.l.b16 %v191
  %v677 = vunpack.c.l.b16 %v192
  %v678 = vunpack.c.h.b16 %v192
  %v679 = vunpack.c.l.b16 %v193
  %v680 = vunpack.c.l.b16 %v194
  %v681 = vunpack.c.h.b16 %v194
  %v682 = vunpack.c.l.b16 %v195
  %v683 = vunpack.c.l.b16 %v196
  %v684 = vunpack.c.h.b16 %v196
  %v685 = vunpack.c.l.b16 %v197
  %v686 = vunpack.c.l.b16 %v198
  %v687 = vunpack.c.h.b16 %v198
  %v688 = vunpack.c.l.b16 %v199
  %v689 = vunpack.c.l.b16 %v200
  %v690 = vunpack.c.h.b16 %v200
  %v691 = vunpack.c.l.b16 %v201
  %v692 = vunpack.c.l.b16 %v202
  %v693 = vunpack.c.h.b16 %v202
  %v694 = vunpack.c.l.b16 %v203
  %v695 = vunpack.c.l.b16 %v204
  %v696 = vunpack.c.h.b16 %v204
  %v697 = vunpack.c.l.b16 %v205
  %v698 = vunpack.c.l.b16 %v206
  %v699 = vunpack.c.h.b16 %v206
  %v700 = vunpack.c.l.b16 %v207
  %v701 = vunpack.c.l.b16 %v208
  %v702 = vunpack.c.h.b16 %v208
  %v703 = vunpack.c.l.b16 %v209
  %v704 = vunpack.c.l.b16 %v210
  %v705 = vunpack.c.h.b16 %v210
  %v706 = vunpack.c.l.b16 %v211
  %v707 = vunpack.c.l.b16 %v212
  %v708 = vunpack.c.h.b16 %v212
  %v709 = vunpack.c.l.b16 %v213
  %v710 = vunpack.c.l.b16 %v214
  %v711 = vunpack.c.h.b16 %v214
  %v712 = vunpack.c.l.b16 %v215
  %v713 = vunpack.c.l.b16 %v216
  %v714 = vunpack.c.h.b16 %v216
  %v715 = vunpack.c.l.b16 %v217
  %v716 = vunpack.c.l.b16 %v218
  %v717 = vunpack.c.h.b16 %v218
  %v718 = vunpack.c.l.b16 %v219
  %v719 = vunpack.c.l.b16 %v220
  %v720 = vunpack.c.h.b16 %v220
  %v721 = vunpack.c.l.b16 %v221
  %v722 = vunpack.c.l.b16 %v222
  %v723 = vunpack.c.h.b16 %v222
  %v724 = vunpack.c.l.b16 %v223
  %v725 = vunpack.c.l.b16 %v224
  %v726 = vunpack.c.h.b16 %v224
  %v727 = vunpack.c.l.b16 %v225
  %v728 = vunpack.c.l.b16 %v226
  %v729 = vunpack.c.h.b16 %v226
  %v730 = vunpack.c.l.b16 %v227
  %v731 = vunpack.c.l.b16 %v228
  %v732 = vunpack.c.h.b16 %v228
  %v733 = vunpack.c.l.b16 %v229
  %v734 = vunpack.c.l.b16 %v230
  %v735 = vunpack.c.h.b16 %v230
  %v736 = vunpack.c.l.b16 %v231
  %v737 = vunpack.c.l.b16 %v232
  %v738 = vunpack.c.h.b16 %v232
  %v739 = vunpack.c.l.b16 %v233
  %v740 = vunpack.c.l.b16 %v234
  %v741 = vunpack.c.h.b16 %v234
  %v742 = vunpack.c.l.b16 %v235
  %v743 = vunpack.c.l.b16 %v236
  %v744 = vunpack.c.h.b16 %v236
  %v745 = vunpack.c.l.b16 %v237
  %v746 = vunpack.c.l.b16 %v238
  %v747 = vunpack.c.h.b16 %v238
  %v748 = vunpack.c.l.b16 %v239
  %v749 = vunpack.c.l.b16 %v240
  %v750 = vunpack.c.h.b16 %v240
  %v751 = vunpack.c.l.b16 %v241
  %v752 = vunpack.c.l.b16 %v242
  %v753 = vunpack.c.h.b16 %v242
  %v754 = vunpack.c.l.b16 %v243
  %v755 = vunpack.c.l.b16 %v244
  %v756 = vunpack.c.h.b16 %v244
  %v757 = vunpack.c.l.b16 %v245
  %v758 = vunpack.c.l.b16 %v246
  %v759 = vunpack.c.h.b16 %v246
  %v760 = vunpack.c.l.b16 %v247
  %v761 = vunpack.c.l.b16 %v248
  %v762 = vunpack.c.h.b16 %v248
  %v763 = vunpack.c.l.b16 %v249
  %v764 = vunpack.c.l.b16 %v250
  %v765 = vunpack.c.h.b16 %v250
  %v766 = vunpack.c.l.b16 %v251
  %v767 = vunpack.c.l.b16 %v252
  %v768 = vunpack.c.h.b16 %v252
  %v769 = vunpack.c.l.b16 %v253
  %v770 = vunpack.c.l.b16 %v254
  %v771 = vunpack.c.h.b16 %v254
  %v772 = vunpack.c.l.b16 %v255
  %v773 = vunpack.c.l.b16 %v256
  %v774 = vunpack.c.h.b16 %v256
  %v775 = vunpack.c.l.b16 %v257
  %v776 = vunpack.c.l.b16 %v258
  %v777 = vunpack.c.h.b16 %v258
  %v778 = vunpack.c.l.b16 %v259
  %v779 = vunpack.c.l.b16 %v260
  %v780 = vunpack.c.h.b16 %v260
  %v781 = vunpack.c.l.b16 %v261
  %v782 = vunpack.c.l.b16 %v262
  %v783 = vunpack.c.h.b16 %v262
  %v784 = vunpack.c.l.b16 %v263
  %v785 = vunpack.c.l.b16 %v264
  %v786 = vunpack.c.h.b16 %v264
  %v787 = vunpack.c.l.b16 %v265
  %v788 = vunpack.c.l.b16 %v266
  %v789 = vunpack.c.h.b16 %v266
  %v790 = vunpack.c.l.b16 %v267
  %v791 = vunpack.c.l.b16 %v268
  %v792 = vunpack.c.h.b16 %v268
  %v793 = vunpack.c.l.b16 %v269
  %v794 = vunpack.c.l.b16 %v270
  %v795 = vunpack.c.h.b16 %v270
  %v796 = vunpack.c.l.b16 %v271
  %v797 = vunpack.c.l.b16 %v272
  %v798 = vunpack.c.h.b16 %v272
  %v799 = vunpack.c.l.b16 %v273
  %v800 = vunpack.c.l.b16 %v274
  %v801 = vunpack.c.h.b16 %v274
  %v802 = vunpack.c.l.b16 %v275
  %v803 = vunpack.c.l.b16 %v276
  %v804 = vunpack.c.h.b16 %v276
  %v805 = vunpack.c.l.b16 %v277
  %v806 = vunpack.c.l.b16 %v278
  %v807 = vunpack.c.h.b16 %v278
  %v808 = vunpack.c.l.b16 %v279
  %v809 = vunpack.c.l.b16 %v280
  %v810 = vunpack.c.h.b16 %v280
  %v811 = vunpack.c.l.b16 %v281
  %v812 = vunpack.c.l.b16 %v282
  %v813 = vunpack.c.h.b16 %v282
  %v814 = vunpack.c.l.b16 %v283
  %v815 = vunpack.c.l.b16 %v284
  %v816 = vunpack.c.h.b16 %v284
  %v817 = vunpack.c.l.b16 %v285
  %v818 = vunpack.c.l.b16 %v286
  %v819 = vunpack.c.h.b16 %v286
  %v820 = vunpack.c.l.b16 %v287
  %v821 = vunpack.c.l.b16 %v288
  %v822 = vunpack.c.h.b16 %v288
  %v823 = vunpack.c.l.b16 %v289
  %v824 = vunpack.c.l.b16 %v290
  %v825 = vunpack.c.h.b16 %v290
  %v826 = vunpack.c.l.b16 %v291
  %v827 = vunpack.c.l.b16 %v292
  %v828 = vunpack.c.h.b16 %v292
  %v829 = vunpack.c.l.b16 %v293
  %v830 = vunpack.c.l.b16 %v294
  %v831 = vunpack.c.h.b16 %v294
  %v832 = vunpack.c.l.b16 %v295
  %v833 = vunpack.c.l.b16 %v296
  %v834 = vunpack.c.h.b16 %v296
  %v835 = vunpack.c.l.b16 %v297
  %v836 = vunpack.c.l.b16 %v298
  %v837 = vunpack.c.h.b16 %v298
  %v838 = vunpack.c.l.b16 %v299
  %v839 = vunpack.c.l.b16 %v300
  %v840 = vunpack.c.h.b16 %v300
  %v841 = vunpack.c.l.b16 %v301
  %v842 = vpack.c.b16 %v521, %v518
  %v843 = vpack.c.b16 %v522, %v519
  %v844 = vpack.c.b16 %v523, %v520
  %v845 = vpack.c.b16 %v527, %v524
  %v846 = vpack.c.b16 %v528, %v525
  %v847 = vpack.c.b16 %v529, %v526
  %v848 = vpack.c.b16 %v533, %v530
  %v849 = vpack.c.b16 %v534, %v531
  %v850 = vpack.c.b16 %v535, %v532
  %v851 = vpack.c.b16 %v539, %v536
  %v852 = vpack.c.b16 %v540, %v537
  %v853 = vpack.c.b16 %v541, %v538
  %v854 = vpack.c.b16 %v545, %v542
  %v855 = vpack.c.b16 %v546, %v543
  %v856 = vpack.c.b16 %v547, %v544
  %v857 = vpack.c.b16 %v551, %v548
  %v858 = vpack.c.b16 %v552, %v549
  %v859 = vpack.c.b16 %v553, %v550
  %v860 = vpack.c.b16 %v557, %v554
  %v861 = vpack.c.b16 %v558, %v555
  %v862 = vpack.c.b16 %v559, %v556
  %v863 = vpack.c.b16 %v563, %v560
  %v864 = vpack.c.b16 %v564, %v561
  %v865 = vpack.c.b16 %v565, %v562
  %v866 = vpack.c.b16 %v569, %v566
  %v867 = vpack.c.b16 %v570, %v567
  %v868 = vpack.c.b16 %v571, %v568
  %v869 = vpack.c.b16 %v575, %v572
  %v870 = vpack.c.b16 %v576, %v573
  %v871 = vpack.c.b16 %v577, %v574
  %v872 = vpack.c.b16 %v581, %v578
  %v873 = vpack.c.b16 %v582, %v579
  %v874 = vpack.c.b16 %v583, %v580
  %v875 = vpack.c.b16 %v587, %v584
  %v876 = vpack.c.b16 %v588, %v585
  %v877 = vpack.c.b16 %v589, %v586
  %v878 = vpack.c.b16 %v593, %v590
  %v879 = vpack.c.b16 %v594, %v591
  %v880 = vpack.c.b16 %v595, %v592
  %v881 = vpack.c.b16 %v599, %v596
  %v882 = vpack.c.b16 %v600, %v597
  %v883 = vpack.c.b16 %v601, %v598
  %v884 = vpack.c.b16 %v605, %v602
  %v885 = vpack.c.b16 %v606, %v603
  %v886 = vpack.c.b16 %v607, %v604
  %v887 = vpack.c.b16 %v611, %v608
  %v888 = vpack.c.b16 %v612, %v609
  %v889 = vpack.c.b16 %v613, %v610
  %v890 = vpack.c.b16 %v617, %v614
  %v891 = vpack.c.b16 %v618, %v615
  %v892 = vpack.c.b16 %v619, %v616
  %v893 = vpack.c.b16 %v623, %v620
  %v894 = vpack.c.b16 %v624, %v621
  %v895 = vpack.c.b16 %v625, %v622
  %v896 = vpack.c.b16 %v629, %v626
  %v897 = vpack.c.b16 %v630, %v627
  %v898 = vpack.c.b16 %v631, %v628
  %v899 = vpack.c.b16 %v635, %v632
  %v900 = vpack.c.b16 %v636, %v633
  %v901 = vpack.c.b16 %v637, %v634
  %v902 = vpack.c.b16 %v641, %v638
  %v903 = vpack.c.b16 %v642, %v639
  %v904 = vpack.c.b16 %v643, %v640
  %v905 = vpack.c.b16 %v647, %v644
  %v906 = vpack.c.b16 %v648, %v645
  %v907 = vpack.c.b16 %v649, %v646
  %v908 = vpack.c.b16 %v653, %v650
  %v909 = vpack.c.b16 %v654, %v651
  %v910 = vpack.c.b16 %v655, %v652
  %v911 = vpack.c.b16 %v659, %v656
  %v912 = vpack.c.b16 %v660, %v657
  %v913 = vpack.c.b16 %v661, %v658
  %v914 = vpack.c.b16 %v665, %v662
  %v915 = vpack.c.b16 %v666, %v663
  %v916 = vpack.c.b16 %v667, %v664
  %v917 = vpack.c.b16 %v671, %v668
  %v918 = vpack.c.b16 %v672, %v669
  %v919 = vpack.c.b16 %v673, %v670
  %v920 = vpack.c.b16 %v677, %v674
  %v921 = vpack.c.b16 %v678, %v675
  %v922 = vpack.c.b16 %v679, %v676
  %v923 = vpack.c.b16 %v683, %v680
  %v924 = vpack.c.b16 %v684, %v681
  %v925 = vpack.c.b16 %v685, %v682
  %v926 = vpack.c.b16 %v689, %v686
  %v927 = vpack.c.b16 %v690, %v687
  %v928 = vpack.c.b16 %v691, %v688
  %v929 = vpack.c.b16 %v695, %v692
  %v930 = vpack.c.b16 %v696, %v693
  %v931 = vpack.c.b16 %v697, %v694
  %v932 = vpack.c.b16 %v701, %v698
  %v933 = vpack.c.b16 %v702, %v699
  %v934 = vpack.c.b16 %v703, %v700
  %v935 = vpack.c.b16 %v707, %v704
  %v936 = vpack.c.b16 %v708, %v705
  %v937 = vpack.c.b16 %v709, %v706
  %v938 = vpack.c.b16 %v713, %v710
  %v939 = vpack.c.b16 %v714, %v711
  %v940 = vpack.c.b16 %v715, %v712
  %v941 = vpack.c.b16 %v719, %v716
  %v942 = vpack.c.b16 %v720, %v717
  %v943 = vpack.c.b16 %v721, %v718
  %v944 = vpack.c.b16 %v725, %v722
  %v945 = vpack.c.b16 %v726, %v723
  %v946 = vpack.c.b16 %v727, %v724
  %v947 = vpack.c.b16 %v731, %v728
  %v948 = vpack.c.b16 %v732, %v729
  %v949 = vpack.c.b16 %v733, %v730
  %v950 = vpack.c.b16 %v737, %v734
  %v951 = vpack.c.b16 %v738, %v735
  %v952 = vpack.c.b16 %v739, %v736
  %v953 = vpack.c.b16 %v743, %v740
  %v954 = vpack.c.b16 %v744, %v741
  %v955 = vpack.c.b16 %v745, %v742
  %v956 = vpack.c.b16 %v749, %v746
  %v957 = vpack.c.b16 %v750, %v747
  %v958 = vpack.c.b16 %v751, %v748
  %v959 = vpack.c.b16 %v755, %v752
  %v960 = vpack.c.b16 %v756, %v753
  %v961 = vpack.c.b16 %v757, %v754
  %v962 = vpack.c.b16 %v761, %v758
  %v963 = vpack.c.b16 %v762, %v759
  %v964 = vpack.c.b16 %v763, %v760
  %v965 = vpack.c.b16 %v767, %v764
  %v966 = vpack.c.b16 %v768, %v765
  %v967 = vpack.c.b16 %v769, %v766
  %v968 = vpack.c.b16 %v773, %v770
  %v969 = vpack.c.b16 %v774, %v771
  %v970 = vpack.c.b16 %v775, %v772
  %v971 = vpack.c.b16 %v779, %v776
  %v972 = vpack.c.b16 %v780, %v777
  %v973 = vpack.c.b16 %v781, %v778
  %v974 = vpack.c.b16 %v785, %v782
  %v975 = vpack.c.b16 %v786, %v783
  %v976 = vpack.c.b16 %v787, %v784
  %v977 = vpack.c.b16 %v791, %v788
  %v978 = vpack.c.b16 %v792, %v789
  %v979 = vpack.c.b16 %v793, %v790
  %v980 = vpack.c.b16 %v797, %v794
  %v981 = vpack.c.b16 %v798, %v795
  %v982 = vpack.c.b16 %v799, %v796
  %v983 = vpack.c.b16 %v803, %v800
  %v984 = vpack.c.b16 %v804, %v801
  %v985 = vpack.c.b16 %v805, %v802
  %v986 = vpack.c.b16 %v809, %v806
  %v987 = vpack.c.b16 %v810, %v807
  %v988 = vpack.c.b16 %v811, %v808
  %v989 = vpack.c.b16 %v815, %v812
  %v990 = vpack.c.b16 %v816, %v813
  %v991 = vpack.c.b16 %v817, %v814
  %v992 = vpack.c.b16 %v821, %v818
  %v993 = vpack.c.b16 %v822, %v819
  %v994 = vpack.c.b16 %v823, %v820
  %v995 = vpack.c.b16 %v827, %v824
  %v996 = vpack.c.b16 %v828, %v825
  %v997 = vpack.c.b16 %v829, %v826
  %v998 = vpack.c.b16 %v833, %v830
  %v999 = vpack.c.b16 %v834, %v831
  %v1000 = vpack.c.b16 %v835, %v832
  %v1001 = vpack.c.b16 %v839, %v836
  %v1002 = vpack.c.b16 %v840, %v837
  %v1003 = vpack.c.b16 %v841, %v838
  %vm1112 = vcmask 195584
  %v1114 = vsel %vm1112, %v844, 0
  %v1117 = vsel %vm1112, %v847, 0
  %v1120 = vsel %vm1112, %v850, 0
  %v1123 = vsel %vm1112, %v853, 0
  %v1126 = vsel %vm1112, %v856, 0
  %v1129 = vsel %vm1112, %v859, 0
  %v1132 = vsel %vm1112, %v862, 0
  %v1135 = vsel %vm1112, %v865, 0
  %v1138 = vsel %vm1112, %v868, 0
  %v1141 = vsel %vm1112, %v871, 0
  %v1144 = vsel %vm1112, %v874, 0
  %v1147 = vsel %vm1112, %v877, 0
  %v1150 = vsel %vm1112, %v880, 0
  %v1153 = vsel %vm1112, %v883, 0
  %v1156 = vsel %vm1112, %v886, 0
  %v1159 = vsel %vm1112, %v889, 0
  %v1162 = vsel %vm1112, %v892, 0
  %v1165 = vsel %vm1112, %v895, 0
  %v1168 = vsel %vm1112, %v898, 0
  %v1171 = vsel %vm1112, %v901, 0
  %v1174 = vsel %vm1112, %v904, 0
  %v1177 = vsel %vm1112, %v907, 0
  %v1180 = vsel %vm1112, %v910, 0
  %v1183 = vsel %vm1112, %v913, 0
  %v1186 = vsel %vm1112, %v916, 0
  %v1189 = vsel %vm1112, %v919, 0
  %v1192 = vsel %vm1112, %v922, 0
  %v1195 = vsel %vm1112, %v925, 0
  %v1198 = vsel %vm1112, %v928, 0
  %v1201 = vsel %vm1112, %v931, 0
  %v1204 = vsel %vm1112, %v934, 0
  %v1207 = vsel %vm1112, %v937, 0
  %v1210 = vsel %vm1112, %v940, 0
  %v1213 = vsel %vm1112, %v943, 0
  %v1216 = vsel %vm1112, %v946, 0
  %v1219 = vsel %vm1112, %v949, 0
  %v1222 = vsel %vm1112, %v952, 0
  %v1225 = vsel %vm1112, %v955, 0
  %v1228 = vsel %vm1112, %v958, 0
  %v1231 = vsel %vm1112, %v961, 0
  %v1234 = vsel %vm1112, %v964, 0
  %v1237 = vsel %vm1112, %v967, 0
  %v1240 = vsel %vm1112, %v970, 0
  %v1243 = vsel %vm1112, %v973, 0
  %v1246 = vsel %vm1112, %v976, 0
  %v1249 = vsel %vm1112, %v979, 0
  %v1252 = vsel %vm1112, %v982, 0
  %v1255 = vsel %vm1112, %v985, 0
  %v1258 = vsel %vm1112, %v988, 0
  %v1261 = vsel %vm1112, %v991, 0
  %v1264 = vsel %vm1112, %v994, 0
  %v1267 = vsel %vm1112, %v997, 0
  %v1270 = vsel %vm1112, %v1000, 0
  %v1273 = vsel %vm1112, %v1003, 0
  %vm1275 = vcmask 1043456
  %v1277 = vsel %vm1275, %v85, 0
  %1279 = vmatprep.subr.bf16.mxu0 0
  %1280 = vmatpush1.bf16.msra.mxu0 %v68
  %1281 = vmatprep.subr.bf16.mxu0 0
  %1282 = vmatpush1.bf16.msra.mxu0 %v69
  %1283 = vmatprep.subr.bf16.mxu0 0
  %1284 = vmatpush1.bf16.msra.mxu0 %v70
  %1285 = vmatprep.subr.bf16.mxu0 0
  %1286 = vmatpush1.bf16.msra.mxu0 %v71
  %1287 = vmatprep.subr.bf16.mxu0 0
  %1288 = vmatpush1.bf16.msra.mxu0 %v72
  %1289 = vmatprep.subr.bf16.mxu0 0
  %1290 = vmatpush1.bf16.msra.mxu0 %v73
  %1291 = vmatprep.subr.bf16.mxu0 0
  %1292 = vmatpush1.bf16.msra.mxu0 %v74
  %1293 = vmatprep.subr.bf16.mxu0 0
  %1294 = vmatpush1.bf16.msra.mxu0 %v75
  %1295 = vmatprep.subr.bf16.mxu0 0
  %1296 = vmatpush1.bf16.msra.mxu0 %v76
  %1297 = vmatprep.subr.bf16.mxu0 0
  %1298 = vmatpush1.bf16.msra.mxu0 %v77
  %1299 = vmatprep.subr.bf16.mxu0 0
  %1300 = vmatpush1.bf16.msra.mxu0 %v78
  %1301 = vmatprep.subr.bf16.mxu0 0
  %1302 = vmatpush1.bf16.msra.mxu0 %v79
  %1303 = vmatprep.subr.bf16.mxu0 0
  %1304 = vmatpush1.bf16.msra.mxu0 %v80
  %1305 = vmatprep.subr.bf16.mxu0 0
  %1306 = vmatpush1.bf16.msra.mxu0 %v81
  %1307 = vmatprep.subr.bf16.mxu0 0
  %1308 = vmatpush1.bf16.msra.mxu0 %v82
  %1309 = vmatprep.subr.bf16.mxu0 0
  %1310 = vmatpush1.bf16.msra.mxu0 %v83
  %1311 = vmatprep.mubr.bf16.mxu0 %v843
  %1312 = vmatmul.mubr.bf16.gmra.mrb[0].mxu0 %v842
  %v1313 = vpop.f32.mrb[0].mxu0
  %v1314 = vadd.f32 0.0, %v1313
  %v1315 = vpop.f32.mrb[0].mxu0
  %v1316 = vpop.f32.mrb[0].mxu0
  %v1317 = vadd.f32 0.0, %v1316
  %v1318 = vpop.f32.mrb[0].mxu0
  %1319 = vmatprep.mubr.bf16.mxu0 %v846
  %1320 = vmatmul.mubr.bf16.gmra.mrb[0].mxu0 %v845
  %v1321 = vpop.f32.mrb[0].mxu0
  %v1322 = vadd.f32 0.0, %v1321
  %v1323 = vpop.f32.mrb[0].mxu0
  %v1324 = vpop.f32.mrb[0].mxu0
  %v1325 = vadd.f32 0.0, %v1324
  %v1326 = vpop.f32.mrb[0].mxu0
  %1327 = vmatprep.mubr.bf16.mxu0 %v849
  %1328 = vmatmul.mubr.bf16.gmra.mrb[0].mxu0 %v848
  %v1329 = vpop.f32.mrb[0].mxu0
  %v1330 = vadd.f32 0.0, %v1329
  %v1331 = vpop.f32.mrb[0].mxu0
  %v1332 = vpop.f32.mrb[0].mxu0
  %v1333 = vadd.f32 0.0, %v1332
  %v1334 = vpop.f32.mrb[0].mxu0
  %1335 = vmatprep.mubr.bf16.mxu0 %v852
  %1336 = vmatmul.mubr.bf16.gmra.mrb[0].mxu0 %v851
  %v1337 = vpop.f32.mrb[0].mxu0
  %v1338 = vadd.f32 0.0, %v1337
  %v1339 = vpop.f32.mrb[0].mxu0
  %v1340 = vpop.f32.mrb[0].mxu0
  %v1341 = vadd.f32 0.0, %v1340
  %v1342 = vpop.f32.mrb[0].mxu0
  %1343 = vmatprep.mubr.bf16.mxu0 %v855
  %1344 = vmatmul.mubr.bf16.gmra.mrb[0].mxu0 %v854
  %v1345 = vpop.f32.mrb[0].mxu0
  %v1346 = vadd.f32 0.0, %v1345
  %v1347 = vpop.f32.mrb[0].mxu0
  %v1348 = vpop.f32.mrb[0].mxu0
  %v1349 = vadd.f32 0.0, %v1348
  %v1350 = vpop.f32.mrb[0].mxu0
  %1351 = vmatprep.mubr.bf16.mxu0 %v858
  %1352 = vmatmul.mubr.bf16.gmra.mrb[0].mxu0 %v857
  %v1353 = vpop.f32.mrb[0].mxu0
  %v1354 = vadd.f32 0.0, %v1353
  %v1355 = vpop.f32.mrb[0].mxu0
  %v1356 = vpop.f32.mrb[0].mxu0
  %v1357 = vadd.f32 0.0, %v1356
  %v1358 = vpop.f32.mrb[0].mxu0
  %1359 = vmatprep.mubr.bf16.mxu0 %v861
  %1360 = vmatmul.mubr.bf16.gmra.mrb[0].mxu0 %v860
  %v1361 = vpop.f32.mrb[0].mxu0
  %v1362 = vadd.f32 0.0, %v1361
  %v1363 = vpop.f32.mrb[0].mxu0
  %v1364 = vpop.f32.mrb[0].mxu0
  %v1365 = vadd.f32 0.0, %v1364
  %v1366 = vpop.f32.mrb[0].mxu0
  %1367 = vmatprep.mubr.bf16.mxu0 %v864
  %1368 = vmatmul.mubr.bf16.gmra.mrb[0].mxu0 %v863
  %v1369 = vpop.f32.mrb[0].mxu0
  %v1370 = vadd.f32 0.0, %v1369
  %v1371 = vpop.f32.mrb[0].mxu0
  %v1372 = vpop.f32.mrb[0].mxu0
  %v1373 = vadd.f32 0.0, %v1372
  %v1374 = vpop.f32.mrb[0].mxu0
  %1375 = vmatprep.mubr.bf16.mxu0 %v867
  %1376 = vmatmul.mubr.bf16.gmra.mrb[0].mxu0 %v866
  %v1377 = vpop.f32.mrb[0].mxu0
  %v1378 = vadd.f32 0.0, %v1377
  %v1379 = vpop.f32.mrb[0].mxu0
  %v1380 = vpop.f32.mrb[0].mxu0
  %v1381 = vadd.f32 0.0, %v1380
  %v1382 = vpop.f32.mrb[0].mxu0
  %1383 = vmatprep.mubr.bf16.mxu0 %v870
  %1384 = vmatmul.mubr.bf16.gmra.mrb[0].mxu0 %v869
  %v1385 = vpop.f32.mrb[0].mxu0
  %v1386 = vadd.f32 0.0, %v1385
  %v1387 = vpop.f32.mrb[0].mxu0
  %v1388 = vpop.f32.mrb[0].mxu0
  %v1389 = vadd.f32 0.0, %v1388
  %v1390 = vpop.f32.mrb[0].mxu0
  %1391 = vmatprep.mubr.bf16.mxu0 %v873
  %1392 = vmatmul.mubr.bf16.gmra.mrb[0].mxu0 %v872
  %v1393 = vpop.f32.mrb[0].mxu0
  %v1394 = vadd.f32 0.0, %v1393
  %v1395 = vpop.f32.mrb[0].mxu0
  %v1396 = vpop.f32.mrb[0].mxu0
  %v1397 = vadd.f32 0.0, %v1396
  %v1398 = vpop.f32.mrb[0].mxu0
  %1399 = vmatprep.mubr.bf16.mxu0 %v876
  %1400 = vmatmul.mubr.bf16.gmra.mrb[0].mxu0 %v875
  %v1401 = vpop.f32.mrb[0].mxu0
  %v1402 = vadd.f32 0.0, %v1401
  %v1403 = vpop.f32.mrb[0].mxu0
  %v1404 = vpop.f32.mrb[0].mxu0
  %v1405 = vadd.f32 0.0, %v1404
  %v1406 = vpop.f32.mrb[0].mxu0
  %1407 = vmatprep.mubr.bf16.mxu0 %v879
  %1408 = vmatmul.mubr.bf16.gmra.mrb[0].mxu0 %v878
  %v1409 = vpop.f32.mrb[0].mxu0
  %v1410 = vadd.f32 0.0, %v1409
  %v1411 = vpop.f32.mrb[0].mxu0
  %v1412 = vpop.f32.mrb[0].mxu0
  %v1413 = vadd.f32 0.0, %v1412
  %v1414 = vpop.f32.mrb[0].mxu0
  %1415 = vmatprep.mubr.bf16.mxu0 %v882
  %1416 = vmatmul.mubr.bf16.gmra.mrb[0].mxu0 %v881
  %v1417 = vpop.f32.mrb[0].mxu0
  %v1418 = vadd.f32 0.0, %v1417
  %v1419 = vpop.f32.mrb[0].mxu0
  %v1420 = vpop.f32.mrb[0].mxu0
  %v1421 = vadd.f32 0.0, %v1420
  %v1422 = vpop.f32.mrb[0].mxu0
  %1423 = vmatprep.mubr.bf16.mxu0 %v885
  %1424 = vmatmul.mubr.bf16.gmra.mrb[0].mxu0 %v884
  %v1425 = vpop.f32.mrb[0].mxu0
  %v1426 = vadd.f32 0.0, %v1425
  %v1427 = vpop.f32.mrb[0].mxu0
  %v1428 = vpop.f32.mrb[0].mxu0
  %v1429 = vadd.f32 0.0, %v1428
  %v1430 = vpop.f32.mrb[0].mxu0
  %1431 = vmatprep.mubr.bf16.mxu0 %v888
  %1432 = vmatmul.mubr.bf16.gmra.mrb[0].mxu0 %v887
  %v1433 = vpop.f32.mrb[0].mxu0
  %v1434 = vadd.f32 0.0, %v1433
  %v1435 = vpop.f32.mrb[0].mxu0
  %v1436 = vpop.f32.mrb[0].mxu0
  %v1437 = vadd.f32 0.0, %v1436
  %v1438 = vpop.f32.mrb[0].mxu0
  %1439 = vmatprep.mubr.bf16.mxu0 %v891
  %1440 = vmatmul.mubr.bf16.gmra.mrb[0].mxu0 %v890
  %v1441 = vpop.f32.mrb[0].mxu0
  %v1442 = vadd.f32 0.0, %v1441
  %v1443 = vpop.f32.mrb[0].mxu0
  %v1444 = vpop.f32.mrb[0].mxu0
  %v1445 = vadd.f32 0.0, %v1444
  %v1446 = vpop.f32.mrb[0].mxu0
  %1447 = vmatprep.mubr.bf16.mxu0 %v894
  %1448 = vmatmul.mubr.bf16.gmra.mrb[0].mxu0 %v893
  %v1449 = vpop.f32.mrb[0].mxu0
  %v1450 = vadd.f32 0.0, %v1449
  %v1451 = vpop.f32.mrb[0].mxu0
  %v1452 = vpop.f32.mrb[0].mxu0
  %v1453 = vadd.f32 0.0, %v1452
  %v1454 = vpop.f32.mrb[0].mxu0
  %1455 = vmatprep.mubr.bf16.mxu0 %v897
  %1456 = vmatmul.mubr.bf16.gmra.mrb[0].mxu0 %v896
  %v1457 = vpop.f32.mrb[0].mxu0
  %v1458 = vadd.f32 0.0, %v1457
  %v1459 = vpop.f32.mrb[0].mxu0
  %v1460 = vpop.f32.mrb[0].mxu0
  %v1461 = vadd.f32 0.0, %v1460
  %v1462 = vpop.f32.mrb[0].mxu0
  %1463 = vmatprep.mubr.bf16.mxu0 %v900
  %1464 = vmatmul.mubr.bf16.gmra.mrb[0].mxu0 %v899
  %v1465 = vpop.f32.mrb[0].mxu0
  %v1466 = vadd.f32 0.0, %v1465
  %v1467 = vpop.f32.mrb[0].mxu0
  %v1468 = vpop.f32.mrb[0].mxu0
  %v1469 = vadd.f32 0.0, %v1468
  %v1470 = vpop.f32.mrb[0].mxu0
  %1471 = vmatprep.mubr.bf16.mxu0 %v903
  %1472 = vmatmul.mubr.bf16.gmra.mrb[0].mxu0 %v902
  %v1473 = vpop.f32.mrb[0].mxu0
  %v1474 = vadd.f32 0.0, %v1473
  %v1475 = vpop.f32.mrb[0].mxu0
  %v1476 = vpop.f32.mrb[0].mxu0
  %v1477 = vadd.f32 0.0, %v1476
  %v1478 = vpop.f32.mrb[0].mxu0
  %1479 = vmatprep.mubr.bf16.mxu0 %v906
  %1480 = vmatmul.mubr.bf16.gmra.mrb[0].mxu0 %v905
  %v1481 = vpop.f32.mrb[0].mxu0
  %v1482 = vadd.f32 0.0, %v1481
  %v1483 = vpop.f32.mrb[0].mxu0
  %v1484 = vpop.f32.mrb[0].mxu0
  %v1485 = vadd.f32 0.0, %v1484
  %v1486 = vpop.f32.mrb[0].mxu0
  %1487 = vmatprep.mubr.bf16.mxu0 %v909
  %1488 = vmatmul.mubr.bf16.gmra.mrb[0].mxu0 %v908
  %v1489 = vpop.f32.mrb[0].mxu0
  %v1490 = vadd.f32 0.0, %v1489
  %v1491 = vpop.f32.mrb[0].mxu0
  %v1492 = vpop.f32.mrb[0].mxu0
  %v1493 = vadd.f32 0.0, %v1492
  %v1494 = vpop.f32.mrb[0].mxu0
  %1495 = vmatprep.mubr.bf16.mxu0 %v912
  %1496 = vmatmul.mubr.bf16.gmra.mrb[0].mxu0 %v911
  %v1497 = vpop.f32.mrb[0].mxu0
  %v1498 = vadd.f32 0.0, %v1497
  %v1499 = vpop.f32.mrb[0].mxu0
  %v1500 = vpop.f32.mrb[0].mxu0
  %v1501 = vadd.f32 0.0, %v1500
  %v1502 = vpop.f32.mrb[0].mxu0
  %1503 = vmatprep.mubr.bf16.mxu0 %v915
  %1504 = vmatmul.mubr.bf16.gmra.mrb[0].mxu0 %v914
  %v1505 = vpop.f32.mrb[0].mxu0
  %v1506 = vadd.f32 0.0, %v1505
  %v1507 = vpop.f32.mrb[0].mxu0
  %v1508 = vpop.f32.mrb[0].mxu0
  %v1509 = vadd.f32 0.0, %v1508
  %v1510 = vpop.f32.mrb[0].mxu0
  %1511 = vmatprep.mubr.bf16.mxu0 %v918
  %1512 = vmatmul.mubr.bf16.gmra.mrb[0].mxu0 %v917
  %v1513 = vpop.f32.mrb[0].mxu0
  %v1514 = vadd.f32 0.0, %v1513
  %v1515 = vpop.f32.mrb[0].mxu0
  %v1516 = vpop.f32.mrb[0].mxu0
  %v1517 = vadd.f32 0.0, %v1516
  %v1518 = vpop.f32.mrb[0].mxu0
  %1519 = vmatprep.mubr.bf16.mxu0 %v921
  %1520 = vmatmul.mubr.bf16.gmra.mrb[0].mxu0 %v920
  %v1521 = vpop.f32.mrb[0].mxu0
  %v1522 = vadd.f32 0.0, %v1521
  %v1523 = vpop.f32.mrb[0].mxu0
  %v1524 = vpop.f32.mrb[0].mxu0
  %v1525 = vadd.f32 0.0, %v1524
  %v1526 = vpop.f32.mrb[0].mxu0
  %1527 = vmatprep.mubr.bf16.mxu0 %v924
  %1528 = vmatmul.mubr.bf16.gmra.mrb[0].mxu0 %v923
  %v1529 = vpop.f32.mrb[0].mxu0
  %v1530 = vadd.f32 0.0, %v1529
  %v1531 = vpop.f32.mrb[0].mxu0
  %v1532 = vpop.f32.mrb[0].mxu0
  %v1533 = vadd.f32 0.0, %v1532
  %v1534 = vpop.f32.mrb[0].mxu0
  %1535 = vmatprep.mubr.bf16.mxu0 %v927
  %1536 = vmatmul.mubr.bf16.gmra.mrb[0].mxu0 %v926
  %v1537 = vpop.f32.mrb[0].mxu0
  %v1538 = vadd.f32 0.0, %v1537
  %v1539 = vpop.f32.mrb[0].mxu0
  %v1540 = vpop.f32.mrb[0].mxu0
  %v1541 = vadd.f32 0.0, %v1540
  %v1542 = vpop.f32.mrb[0].mxu0
  %1543 = vmatprep.mubr.bf16.mxu0 %v930
  %1544 = vmatmul.mubr.bf16.gmra.mrb[0].mxu0 %v929
  %v1545 = vpop.f32.mrb[0].mxu0
  %v1546 = vadd.f32 0.0, %v1545
  %v1547 = vpop.f32.mrb[0].mxu0
  %v1548 = vpop.f32.mrb[0].mxu0
  %v1549 = vadd.f32 0.0, %v1548
  %v1550 = vpop.f32.mrb[0].mxu0
  %1551 = vmatprep.mubr.bf16.mxu0 %v933
  %1552 = vmatmul.mubr.bf16.gmra.mrb[0].mxu0 %v932
  %v1553 = vpop.f32.mrb[0].mxu0
  %v1554 = vadd.f32 0.0, %v1553
  %v1555 = vpop.f32.mrb[0].mxu0
  %v1556 = vpop.f32.mrb[0].mxu0
  %v1557 = vadd.f32 0.0, %v1556
  %v1558 = vpop.f32.mrb[0].mxu0
  %1559 = vmatprep.mubr.bf16.mxu0 %v936
  %1560 = vmatmul.mubr.bf16.gmra.mrb[0].mxu0 %v935
  %v1561 = vpop.f32.mrb[0].mxu0
  %v1562 = vadd.f32 0.0, %v1561
  %v1563 = vpop.f32.mrb[0].mxu0
  %v1564 = vpop.f32.mrb[0].mxu0
  %v1565 = vadd.f32 0.0, %v1564
  %v1566 = vpop.f32.mrb[0].mxu0
  %1567 = vmatprep.mubr.bf16.mxu0 %v939
  %1568 = vmatmul.mubr.bf16.gmra.mrb[0].mxu0 %v938
  %v1569 = vpop.f32.mrb[0].mxu0
  %v1570 = vadd.f32 0.0, %v1569
  %v1571 = vpop.f32.mrb[0].mxu0
  %v1572 = vpop.f32.mrb[0].mxu0
  %v1573 = vadd.f32 0.0, %v1572
  %v1574 = vpop.f32.mrb[0].mxu0
  %1575 = vmatprep.mubr.bf16.mxu0 %v942
  %1576 = vmatmul.mubr.bf16.gmra.mrb[0].mxu0 %v941
  %v1577 = vpop.f32.mrb[0].mxu0
  %v1578 = vadd.f32 0.0, %v1577
  %v1579 = vpop.f32.mrb[0].mxu0
  %v1580 = vpop.f32.mrb[0].mxu0
  %v1581 = vadd.f32 0.0, %v1580
  %v1582 = vpop.f32.mrb[0].mxu0
  %1583 = vmatprep.mubr.bf16.mxu0 %v945
  %1584 = vmatmul.mubr.bf16.gmra.mrb[0].mxu0 %v944
  %v1585 = vpop.f32.mrb[0].mxu0
  %v1586 = vadd.f32 0.0, %v1585
  %v1587 = vpop.f32.mrb[0].mxu0
  %v1588 = vpop.f32.mrb[0].mxu0
  %v1589 = vadd.f32 0.0, %v1588
  %v1590 = vpop.f32.mrb[0].mxu0
  %1591 = vmatprep.mubr.bf16.mxu0 %v948
  %1592 = vmatmul.mubr.bf16.gmra.mrb[0].mxu0 %v947
  %v1593 = vpop.f32.mrb[0].mxu0
  %v1594 = vadd.f32 0.0, %v1593
  %v1595 = vpop.f32.mrb[0].mxu0
  %v1596 = vpop.f32.mrb[0].mxu0
  %v1597 = vadd.f32 0.0, %v1596
  %v1598 = vpop.f32.mrb[0].mxu0
  %1599 = vmatprep.mubr.bf16.mxu0 %v951
  %1600 = vmatmul.mubr.bf16.gmra.mrb[0].mxu0 %v950
  %v1601 = vpop.f32.mrb[0].mxu0
  %v1602 = vadd.f32 0.0, %v1601
  %v1603 = vpop.f32.mrb[0].mxu0
  %v1604 = vpop.f32.mrb[0].mxu0
  %v1605 = vadd.f32 0.0, %v1604
  %v1606 = vpop.f32.mrb[0].mxu0
  %1607 = vmatprep.mubr.bf16.mxu0 %v954
  %1608 = vmatmul.mubr.bf16.gmra.mrb[0].mxu0 %v953
  %v1609 = vpop.f32.mrb[0].mxu0
  %v1610 = vadd.f32 0.0, %v1609
  %v1611 = vpop.f32.mrb[0].mxu0
  %v1612 = vpop.f32.mrb[0].mxu0
  %v1613 = vadd.f32 0.0, %v1612
  %v1614 = vpop.f32.mrb[0].mxu0
  %1615 = vmatprep.mubr.bf16.mxu0 %v957
  %1616 = vmatmul.mubr.bf16.gmra.mrb[0].mxu0 %v956
  %v1617 = vpop.f32.mrb[0].mxu0
  %v1618 = vadd.f32 0.0, %v1617
  %v1619 = vpop.f32.mrb[0].mxu0
  %v1620 = vpop.f32.mrb[0].mxu0
  %v1621 = vadd.f32 0.0, %v1620
  %v1622 = vpop.f32.mrb[0].mxu0
  %1623 = vmatprep.mubr.bf16.mxu0 %v960
  %1624 = vmatmul.mubr.bf16.gmra.mrb[0].mxu0 %v959
  %v1625 = vpop.f32.mrb[0].mxu0
  %v1626 = vadd.f32 0.0, %v1625
  %v1627 = vpop.f32.mrb[0].mxu0
  %v1628 = vpop.f32.mrb[0].mxu0
  %v1629 = vadd.f32 0.0, %v1628
  %v1630 = vpop.f32.mrb[0].mxu0
  %1631 = vmatprep.mubr.bf16.mxu0 %v963
  %1632 = vmatmul.mubr.bf16.gmra.mrb[0].mxu0 %v962
  %v1633 = vpop.f32.mrb[0].mxu0
  %v1634 = vadd.f32 0.0, %v1633
  %v1635 = vpop.f32.mrb[0].mxu0
  %v1636 = vpop.f32.mrb[0].mxu0
  %v1637 = vadd.f32 0.0, %v1636
  %v1638 = vpop.f32.mrb[0].mxu0
  %1639 = vmatprep.mubr.bf16.mxu0 %v966
  %1640 = vmatmul.mubr.bf16.gmra.mrb[0].mxu0 %v965
  %v1641 = vpop.f32.mrb[0].mxu0
  %v1642 = vadd.f32 0.0, %v1641
  %v1643 = vpop.f32.mrb[0].mxu0
  %v1644 = vpop.f32.mrb[0].mxu0
  %v1645 = vadd.f32 0.0, %v1644
  %v1646 = vpop.f32.mrb[0].mxu0
  %1647 = vmatprep.mubr.bf16.mxu0 %v969
  %1648 = vmatmul.mubr.bf16.gmra.mrb[0].mxu0 %v968
  %v1649 = vpop.f32.mrb[0].mxu0
  %v1650 = vadd.f32 0.0, %v1649
  %v1651 = vpop.f32.mrb[0].mxu0
  %v1652 = vpop.f32.mrb[0].mxu0
  %v1653 = vadd.f32 0.0, %v1652
  %v1654 = vpop.f32.mrb[0].mxu0
  %1655 = vmatprep.mubr.bf16.mxu0 %v972
  %1656 = vmatmul.mubr.bf16.gmra.mrb[0].mxu0 %v971
  %v1657 = vpop.f32.mrb[0].mxu0
  %v1658 = vadd.f32 0.0, %v1657
  %v1659 = vpop.f32.mrb[0].mxu0
  %v1660 = vpop.f32.mrb[0].mxu0
  %v1661 = vadd.f32 0.0, %v1660
  %v1662 = vpop.f32.mrb[0].mxu0
  %1663 = vmatprep.mubr.bf16.mxu0 %v975
  %1664 = vmatmul.mubr.bf16.gmra.mrb[0].mxu0 %v974
  %v1665 = vpop.f32.mrb[0].mxu0
  %v1666 = vadd.f32 0.0, %v1665
  %v1667 = vpop.f32.mrb[0].mxu0
  %v1668 = vpop.f32.mrb[0].mxu0
  %v1669 = vadd.f32 0.0, %v1668
  %v1670 = vpop.f32.mrb[0].mxu0
  %1671 = vmatprep.mubr.bf16.mxu0 %v978
  %1672 = vmatmul.mubr.bf16.gmra.mrb[0].mxu0 %v977
  %v1673 = vpop.f32.mrb[0].mxu0
  %v1674 = vadd.f32 0.0, %v1673
  %v1675 = vpop.f32.mrb[0].mxu0
  %v1676 = vpop.f32.mrb[0].mxu0
  %v1677 = vadd.f32 0.0, %v1676
  %v1678 = vpop.f32.mrb[0].mxu0
  %1679 = vmatprep.mubr.bf16.mxu0 %v981
  %1680 = vmatmul.mubr.bf16.gmra.mrb[0].mxu0 %v980
  %v1681 = vpop.f32.mrb[0].mxu0
  %v1682 = vadd.f32 0.0, %v1681
  %v1683 = vpop.f32.mrb[0].mxu0
  %v1684 = vpop.f32.mrb[0].mxu0
  %v1685 = vadd.f32 0.0, %v1684
  %v1686 = vpop.f32.mrb[0].mxu0
  %1687 = vmatprep.mubr.bf16.mxu0 %v984
  %1688 = vmatmul.mubr.bf16.gmra.mrb[0].mxu0 %v983
  %v1689 = vpop.f32.mrb[0].mxu0
  %v1690 = vadd.f32 0.0, %v1689
  %v1691 = vpop.f32.mrb[0].mxu0
  %v1692 = vpop.f32.mrb[0].mxu0
  %v1693 = vadd.f32 0.0, %v1692
  %v1694 = vpop.f32.mrb[0].mxu0
  %1695 = vmatprep.mubr.bf16.mxu0 %v987
  %1696 = vmatmul.mubr.bf16.gmra.mrb[0].mxu0 %v986
  %v1697 = vpop.f32.mrb[0].mxu0
  %v1698 = vadd.f32 0.0, %v1697
  %v1699 = vpop.f32.mrb[0].mxu0
  %v1700 = vpop.f32.mrb[0].mxu0
  %v1701 = vadd.f32 0.0, %v1700
  %v1702 = vpop.f32.mrb[0].mxu0
  %1703 = vmatprep.mubr.bf16.mxu0 %v990
  %1704 = vmatmul.mubr.bf16.gmra.mrb[0].mxu0 %v989
  %v1705 = vpop.f32.mrb[0].mxu0
  %v1706 = vadd.f32 0.0, %v1705
  %v1707 = vpop.f32.mrb[0].mxu0
  %v1708 = vpop.f32.mrb[0].mxu0
  %v1709 = vadd.f32 0.0, %v1708
  %v1710 = vpop.f32.mrb[0].mxu0
  %1711 = vmatprep.mubr.bf16.mxu0 %v993
  %1712 = vmatmul.mubr.bf16.gmra.mrb[0].mxu0 %v992
  %v1713 = vpop.f32.mrb[0].mxu0
  %v1714 = vadd.f32 0.0, %v1713
  %v1715 = vpop.f32.mrb[0].mxu0
  %v1716 = vpop.f32.mrb[0].mxu0
  %v1717 = vadd.f32 0.0, %v1716
  %v1718 = vpop.f32.mrb[0].mxu0
  %1719 = vmatprep.mubr.bf16.mxu0 %v996
  %1720 = vmatmul.mubr.bf16.gmra.mrb[0].mxu0 %v995
  %v1721 = vpop.f32.mrb[0].mxu0
  %v1722 = vadd.f32 0.0, %v1721
  %v1723 = vpop.f32.mrb[0].mxu0
  %v1724 = vpop.f32.mrb[0].mxu0
  %v1725 = vadd.f32 0.0, %v1724
  %v1726 = vpop.f32.mrb[0].mxu0
  %1727 = vmatprep.mubr.bf16.mxu0 %v999
  %1728 = vmatmul.mubr.bf16.gmra.mrb[0].mxu0 %v998
  %v1729 = vpop.f32.mrb[0].mxu0
  %v1730 = vadd.f32 0.0, %v1729
  %v1731 = vpop.f32.mrb[0].mxu0
  %v1732 = vpop.f32.mrb[0].mxu0
  %v1733 = vadd.f32 0.0, %v1732
  %v1734 = vpop.f32.mrb[0].mxu0
  %1735 = vmatprep.mubr.bf16.mxu0 %v1002
  %1736 = vmatmul.mubr.bf16.gmra.mrb[0].mxu0 %v1001
  %v1737 = vpop.f32.mrb[0].mxu0
  %v1738 = vadd.f32 0.0, %v1737
  %v1739 = vpop.f32.mrb[0].mxu0
  %v1740 = vpop.f32.mrb[0].mxu0
  %v1741 = vadd.f32 0.0, %v1740
  %v1742 = vpop.f32.mrb[0].mxu0
  %1743 = vdwg.mxu0
  %1744 = vmatprep.subr.bf16.mxu0 0
  %1745 = vmatpush1.bf16.msra.mxu0 %v84
  %1746 = vmatprep.subr.bf16.mxu0 0
  %1747 = vmatpush1.bf16.msra.mxu0 %v1277
  %1748 = vmatprep.subr.bf16.mxu0 0
  %1749 = vmatpush1.bf16.msra.mxu0 0
  %1750 = vmatprep.subr.bf16.mxu0 0
  %1751 = vmatpush1.bf16.msra.mxu0 0
  %1752 = vmatprep.subr.bf16.mxu0 0
  %1753 = vmatpush1.bf16.msra.mxu0 0
  %1754 = vmatprep.subr.bf16.mxu0 0
  %1755 = vmatpush1.bf16.msra.mxu0 0
  %1756 = vmatprep.subr.bf16.mxu0 0
  %1757 = vmatpush1.bf16.msra.mxu0 0
  %1758 = vmatprep.subr.bf16.mxu0 0
  %1759 = vmatpush1.bf16.msra.mxu0 0
  %1760 = vmatprep.subr.bf16.mxu0 0
  %1761 = vmatpush1.bf16.msra.mxu0 0
  %1762 = vmatprep.subr.bf16.mxu0 0
  %1763 = vmatpush1.bf16.msra.mxu0 0
  %1764 = vmatprep.subr.bf16.mxu0 0
  %1765 = vmatpush1.bf16.msra.mxu0 0
  %1766 = vmatprep.subr.bf16.mxu0 0
  %1767 = vmatpush1.bf16.msra.mxu0 0
  %1768 = vmatprep.subr.bf16.mxu0 0
  %1769 = vmatpush1.bf16.msra.mxu0 0
  %1770 = vmatprep.subr.bf16.mxu0 0
  %1771 = vmatpush1.bf16.msra.mxu0 0
  %1772 = vmatprep.subr.bf16.mxu0 0
  %1773 = vmatpush1.bf16.msra.mxu0 0
  %1774 = vmatprep.subr.bf16.mxu0 0
  %1775 = vmatpush1.bf16.msra.mxu0 0
  %1776 = vmatprep.mubr.bf16.mxu0 0
  %1777 = vmatmul.mubr.bf16.gmra.mrb[0].mxu0 %v1114
  %v1778 = vpop.f32.mrb[0].mxu0
  %v1779 = vadd.f32 %v1314, %v1778
  %v1780 = vpop.f32.mrb[0].mxu0
  %v1781 = vpop.f32.mrb[0].mxu0
  %v1782 = vadd.f32 %v1317, %v1781
  %v1783 = vpop.f32.mrb[0].mxu0
  %1784 = vmatprep.mubr.bf16.mxu0 0
  %1785 = vmatmul.mubr.bf16.gmra.mrb[0].mxu0 %v1117
  %v1786 = vpop.f32.mrb[0].mxu0
  %v1787 = vadd.f32 %v1322, %v1786
  %v1788 = vpop.f32.mrb[0].mxu0
  %v1789 = vpop.f32.mrb[0].mxu0
  %v1790 = vadd.f32 %v1325, %v1789
  %v1791 = vpop.f32.mrb[0].mxu0
  %1792 = vmatprep.mubr.bf16.mxu0 0
  %1793 = vmatmul.mubr.bf16.gmra.mrb[0].mxu0 %v1120
  %v1794 = vpop.f32.mrb[0].mxu0
  %v1795 = vadd.f32 %v1330, %v1794
  %v1796 = vpop.f32.mrb[0].mxu0
  %v1797 = vpop.f32.mrb[0].mxu0
  %v1798 = vadd.f32 %v1333, %v1797
  %v1799 = vpop.f32.mrb[0].mxu0
  %1800 = vmatprep.mubr.bf16.mxu0 0
  %1801 = vmatmul.mubr.bf16.gmra.mrb[0].mxu0 %v1123
  %v1802 = vpop.f32.mrb[0].mxu0
  %v1803 = vadd.f32 %v1338, %v1802
  %v1804 = vpop.f32.mrb[0].mxu0
  %v1805 = vpop.f32.mrb[0].mxu0
  %v1806 = vadd.f32 %v1341, %v1805
  %v1807 = vpop.f32.mrb[0].mxu0
  %1808 = vmatprep.mubr.bf16.mxu0 0
  %1809 = vmatmul.mubr.bf16.gmra.mrb[0].mxu0 %v1126
  %v1810 = vpop.f32.mrb[0].mxu0
  %v1811 = vadd.f32 %v1346, %v1810
  %v1812 = vpop.f32.mrb[0].mxu0
  %v1813 = vpop.f32.mrb[0].mxu0
  %v1814 = vadd.f32 %v1349, %v1813
  %v1815 = vpop.f32.mrb[0].mxu0
  %1816 = vmatprep.mubr.bf16.mxu0 0
  %1817 = vmatmul.mubr.bf16.gmra.mrb[0].mxu0 %v1129
  %v1818 = vpop.f32.mrb[0].mxu0
  %v1819 = vadd.f32 %v1354, %v1818
  %v1820 = vpop.f32.mrb[0].mxu0
  %v1821 = vpop.f32.mrb[0].mxu0
  %v1822 = vadd.f32 %v1357, %v1821
  %v1823 = vpop.f32.mrb[0].mxu0
  %1824 = vmatprep.mubr.bf16.mxu0 0
  %1825 = vmatmul.mubr.bf16.gmra.mrb[0].mxu0 %v1132
  %v1826 = vpop.f32.mrb[0].mxu0
  %v1827 = vadd.f32 %v1362, %v1826
  %v1828 = vpop.f32.mrb[0].mxu0
  %v1829 = vpop.f32.mrb[0].mxu0
  %v1830 = vadd.f32 %v1365, %v1829
  %v1831 = vpop.f32.mrb[0].mxu0
  %1832 = vmatprep.mubr.bf16.mxu0 0
  %1833 = vmatmul.mubr.bf16.gmra.mrb[0].mxu0 %v1135
  %v1834 = vpop.f32.mrb[0].mxu0
  %v1835 = vadd.f32 %v1370, %v1834
  %v1836 = vpop.f32.mrb[0].mxu0
  %v1837 = vpop.f32.mrb[0].mxu0
  %v1838 = vadd.f32 %v1373, %v1837
  %v1839 = vpop.f32.mrb[0].mxu0
  %1840 = vmatprep.mubr.bf16.mxu0 0
  %1841 = vmatmul.mubr.bf16.gmra.mrb[0].mxu0 %v1138
  %v1842 = vpop.f32.mrb[0].mxu0
  %v1843 = vadd.f32 %v1378, %v1842
  %v1844 = vpop.f32.mrb[0].mxu0
  %v1845 = vpop.f32.mrb[0].mxu0
  %v1846 = vadd.f32 %v1381, %v1845
  %v1847 = vpop.f32.mrb[0].mxu0
  %1848 = vmatprep.mubr.bf16.mxu0 0
  %1849 = vmatmul.mubr.bf16.gmra.mrb[0].mxu0 %v1141
  %v1850 = vpop.f32.mrb[0].mxu0
  %v1851 = vadd.f32 %v1386, %v1850
  %v1852 = vpop.f32.mrb[0].mxu0
  %v1853 = vpop.f32.mrb[0].mxu0
  %v1854 = vadd.f32 %v1389, %v1853
  %v1855 = vpop.f32.mrb[0].mxu0
  %1856 = vmatprep.mubr.bf16.mxu0 0
  %1857 = vmatmul.mubr.bf16.gmra.mrb[0].mxu0 %v1144
  %v1858 = vpop.f32.mrb[0].mxu0
  %v1859 = vadd.f32 %v1394, %v1858
  %v1860 = vpop.f32.mrb[0].mxu0
  %v1861 = vpop.f32.mrb[0].mxu0
  %v1862 = vadd.f32 %v1397, %v1861
  %v1863 = vpop.f32.mrb[0].mxu0
  %1864 = vmatprep.mubr.bf16.mxu0 0
  %1865 = vmatmul.mubr.bf16.gmra.mrb[0].mxu0 %v1147
  %v1866 = vpop.f32.mrb[0].mxu0
  %v1867 = vadd.f32 %v1402, %v1866
  %v1868 = vpop.f32.mrb[0].mxu0
  %v1869 = vpop.f32.mrb[0].mxu0
  %v1870 = vadd.f32 %v1405, %v1869
  %v1871 = vpop.f32.mrb[0].mxu0
  %1872 = vmatprep.mubr.bf16.mxu0 0
  %1873 = vmatmul.mubr.bf16.gmra.mrb[0].mxu0 %v1150
  %v1874 = vpop.f32.mrb[0].mxu0
  %v1875 = vadd.f32 %v1410, %v1874
  %v1876 = vpop.f32.mrb[0].mxu0
  %v1877 = vpop.f32.mrb[0].mxu0
  %v1878 = vadd.f32 %v1413, %v1877
  %v1879 = vpop.f32.mrb[0].mxu0
  %1880 = vmatprep.mubr.bf16.mxu0 0
  %1881 = vmatmul.mubr.bf16.gmra.mrb[0].mxu0 %v1153
  %v1882 = vpop.f32.mrb[0].mxu0
  %v1883 = vadd.f32 %v1418, %v1882
  %v1884 = vpop.f32.mrb[0].mxu0
  %v1885 = vpop.f32.mrb[0].mxu0
  %v1886 = vadd.f32 %v1421, %v1885
  %v1887 = vpop.f32.mrb[0].mxu0
  %1888 = vmatprep.mubr.bf16.mxu0 0
  %1889 = vmatmul.mubr.bf16.gmra.mrb[0].mxu0 %v1156
  %v1890 = vpop.f32.mrb[0].mxu0
  %v1891 = vadd.f32 %v1426, %v1890
  %v1892 = vpop.f32.mrb[0].mxu0
  %v1893 = vpop.f32.mrb[0].mxu0
  %v1894 = vadd.f32 %v1429, %v1893
  %v1895 = vpop.f32.mrb[0].mxu0
  %1896 = vmatprep.mubr.bf16.mxu0 0
  %1897 = vmatmul.mubr.bf16.gmra.mrb[0].mxu0 %v1159
  %v1898 = vpop.f32.mrb[0].mxu0
  %v1899 = vadd.f32 %v1434, %v1898
  %v1900 = vpop.f32.mrb[0].mxu0
  %v1901 = vpop.f32.mrb[0].mxu0
  %v1902 = vadd.f32 %v1437, %v1901
  %v1903 = vpop.f32.mrb[0].mxu0
  %1904 = vmatprep.mubr.bf16.mxu0 0
  %1905 = vmatmul.mubr.bf16.gmra.mrb[0].mxu0 %v1162
  %v1906 = vpop.f32.mrb[0].mxu0
  %v1907 = vadd.f32 %v1442, %v1906
  %v1908 = vpop.f32.mrb[0].mxu0
  %v1909 = vpop.f32.mrb[0].mxu0
  %v1910 = vadd.f32 %v1445, %v1909
  %v1911 = vpop.f32.mrb[0].mxu0
  %1912 = vmatprep.mubr.bf16.mxu0 0
  %1913 = vmatmul.mubr.bf16.gmra.mrb[0].mxu0 %v1165
  %v1914 = vpop.f32.mrb[0].mxu0
  %v1915 = vadd.f32 %v1450, %v1914
  %v1916 = vpop.f32.mrb[0].mxu0
  %v1917 = vpop.f32.mrb[0].mxu0
  %v1918 = vadd.f32 %v1453, %v1917
  %v1919 = vpop.f32.mrb[0].mxu0
  %1920 = vmatprep.mubr.bf16.mxu0 0
  %1921 = vmatmul.mubr.bf16.gmra.mrb[0].mxu0 %v1168
  %v1922 = vpop.f32.mrb[0].mxu0
  %v1923 = vadd.f32 %v1458, %v1922
  %v1924 = vpop.f32.mrb[0].mxu0
  %v1925 = vpop.f32.mrb[0].mxu0
  %v1926 = vadd.f32 %v1461, %v1925
  %v1927 = vpop.f32.mrb[0].mxu0
  %1928 = vmatprep.mubr.bf16.mxu0 0
  %1929 = vmatmul.mubr.bf16.gmra.mrb[0].mxu0 %v1171
  %v1930 = vpop.f32.mrb[0].mxu0
  %v1931 = vadd.f32 %v1466, %v1930
  %v1932 = vpop.f32.mrb[0].mxu0
  %v1933 = vpop.f32.mrb[0].mxu0
  %v1934 = vadd.f32 %v1469, %v1933
  %v1935 = vpop.f32.mrb[0].mxu0
  %1936 = vmatprep.mubr.bf16.mxu0 0
  %1937 = vmatmul.mubr.bf16.gmra.mrb[0].mxu0 %v1174
  %v1938 = vpop.f32.mrb[0].mxu0
  %v1939 = vadd.f32 %v1474, %v1938
  %v1940 = vpop.f32.mrb[0].mxu0
  %v1941 = vpop.f32.mrb[0].mxu0
  %v1942 = vadd.f32 %v1477, %v1941
  %v1943 = vpop.f32.mrb[0].mxu0
  %1944 = vmatprep.mubr.bf16.mxu0 0
  %1945 = vmatmul.mubr.bf16.gmra.mrb[0].mxu0 %v1177
  %v1946 = vpop.f32.mrb[0].mxu0
  %v1947 = vadd.f32 %v1482, %v1946
  %v1948 = vpop.f32.mrb[0].mxu0
  %v1949 = vpop.f32.mrb[0].mxu0
  %v1950 = vadd.f32 %v1485, %v1949
  %v1951 = vpop.f32.mrb[0].mxu0
  %1952 = vmatprep.mubr.bf16.mxu0 0
  %1953 = vmatmul.mubr.bf16.gmra.mrb[0].mxu0 %v1180
  %v1954 = vpop.f32.mrb[0].mxu0
  %v1955 = vadd.f32 %v1490, %v1954
  %v1956 = vpop.f32.mrb[0].mxu0
  %v1957 = vpop.f32.mrb[0].mxu0
  %v1958 = vadd.f32 %v1493, %v1957
  %v1959 = vpop.f32.mrb[0].mxu0
  %1960 = vmatprep.mubr.bf16.mxu0 0
  %1961 = vmatmul.mubr.bf16.gmra.mrb[0].mxu0 %v1183
  %v1962 = vpop.f32.mrb[0].mxu0
  %v1963 = vadd.f32 %v1498, %v1962
  %v1964 = vpop.f32.mrb[0].mxu0
  %v1965 = vpop.f32.mrb[0].mxu0
  %v1966 = vadd.f32 %v1501, %v1965
  %v1967 = vpop.f32.mrb[0].mxu0
  %1968 = vmatprep.mubr.bf16.mxu0 0
  %1969 = vmatmul.mubr.bf16.gmra.mrb[0].mxu0 %v1186
  %v1970 = vpop.f32.mrb[0].mxu0
  %v1971 = vadd.f32 %v1506, %v1970
  %v1972 = vpop.f32.mrb[0].mxu0
  %v1973 = vpop.f32.mrb[0].mxu0
  %v1974 = vadd.f32 %v1509, %v1973
  %v1975 = vpop.f32.mrb[0].mxu0
  %1976 = vmatprep.mubr.bf16.mxu0 0
  %1977 = vmatmul.mubr.bf16.gmra.mrb[0].mxu0 %v1189
  %v1978 = vpop.f32.mrb[0].mxu0
  %v1979 = vadd.f32 %v1514, %v1978
  %v1980 = vpop.f32.mrb[0].mxu0
  %v1981 = vpop.f32.mrb[0].mxu0
  %v1982 = vadd.f32 %v1517, %v1981
  %v1983 = vpop.f32.mrb[0].mxu0
  %1984 = vmatprep.mubr.bf16.mxu0 0
  %1985 = vmatmul.mubr.bf16.gmra.mrb[0].mxu0 %v1192
  %v1986 = vpop.f32.mrb[0].mxu0
  %v1987 = vadd.f32 %v1522, %v1986
  %v1988 = vpop.f32.mrb[0].mxu0
  %v1989 = vpop.f32.mrb[0].mxu0
  %v1990 = vadd.f32 %v1525, %v1989
  %v1991 = vpop.f32.mrb[0].mxu0
  %1992 = vmatprep.mubr.bf16.mxu0 0
  %1993 = vmatmul.mubr.bf16.gmra.mrb[0].mxu0 %v1195
  %v1994 = vpop.f32.mrb[0].mxu0
  %v1995 = vadd.f32 %v1530, %v1994
  %v1996 = vpop.f32.mrb[0].mxu0
  %v1997 = vpop.f32.mrb[0].mxu0
  %v1998 = vadd.f32 %v1533, %v1997
  %v1999 = vpop.f32.mrb[0].mxu0
  %2000 = vmatprep.mubr.bf16.mxu0 0
  %2001 = vmatmul.mubr.bf16.gmra.mrb[0].mxu0 %v1198
  %v2002 = vpop.f32.mrb[0].mxu0
  %v2003 = vadd.f32 %v1538, %v2002
  %v2004 = vpop.f32.mrb[0].mxu0
  %v2005 = vpop.f32.mrb[0].mxu0
  %v2006 = vadd.f32 %v1541, %v2005
  %v2007 = vpop.f32.mrb[0].mxu0
  %2008 = vmatprep.mubr.bf16.mxu0 0
  %2009 = vmatmul.mubr.bf16.gmra.mrb[0].mxu0 %v1201
  %v2010 = vpop.f32.mrb[0].mxu0
  %v2011 = vadd.f32 %v1546, %v2010
  %v2012 = vpop.f32.mrb[0].mxu0
  %v2013 = vpop.f32.mrb[0].mxu0
  %v2014 = vadd.f32 %v1549, %v2013
  %v2015 = vpop.f32.mrb[0].mxu0
  %2016 = vmatprep.mubr.bf16.mxu0 0
  %2017 = vmatmul.mubr.bf16.gmra.mrb[0].mxu0 %v1204
  %v2018 = vpop.f32.mrb[0].mxu0
  %v2019 = vadd.f32 %v1554, %v2018
  %v2020 = vpop.f32.mrb[0].mxu0
  %v2021 = vpop.f32.mrb[0].mxu0
  %v2022 = vadd.f32 %v1557, %v2021
  %v2023 = vpop.f32.mrb[0].mxu0
  %2024 = vmatprep.mubr.bf16.mxu0 0
  %2025 = vmatmul.mubr.bf16.gmra.mrb[0].mxu0 %v1207
  %v2026 = vpop.f32.mrb[0].mxu0
  %v2027 = vadd.f32 %v1562, %v2026
  %v2028 = vpop.f32.mrb[0].mxu0
  %v2029 = vpop.f32.mrb[0].mxu0
  %v2030 = vadd.f32 %v1565, %v2029
  %v2031 = vpop.f32.mrb[0].mxu0
  %2032 = vmatprep.mubr.bf16.mxu0 0
  %2033 = vmatmul.mubr.bf16.gmra.mrb[0].mxu0 %v1210
  %v2034 = vpop.f32.mrb[0].mxu0
  %v2035 = vadd.f32 %v1570, %v2034
  %v2036 = vpop.f32.mrb[0].mxu0
  %v2037 = vpop.f32.mrb[0].mxu0
  %v2038 = vadd.f32 %v1573, %v2037
  %v2039 = vpop.f32.mrb[0].mxu0
  %2040 = vmatprep.mubr.bf16.mxu0 0
  %2041 = vmatmul.mubr.bf16.gmra.mrb[0].mxu0 %v1213
  %v2042 = vpop.f32.mrb[0].mxu0
  %v2043 = vadd.f32 %v1578, %v2042
  %v2044 = vpop.f32.mrb[0].mxu0
  %v2045 = vpop.f32.mrb[0].mxu0
  %v2046 = vadd.f32 %v1581, %v2045
  %v2047 = vpop.f32.mrb[0].mxu0
  %2048 = vmatprep.mubr.bf16.mxu0 0
  %2049 = vmatmul.mubr.bf16.gmra.mrb[0].mxu0 %v1216
  %v2050 = vpop.f32.mrb[0].mxu0
  %v2051 = vadd.f32 %v1586, %v2050
  %v2052 = vpop.f32.mrb[0].mxu0
  %v2053 = vpop.f32.mrb[0].mxu0
  %v2054 = vadd.f32 %v1589, %v2053
  %v2055 = vpop.f32.mrb[0].mxu0
  %2056 = vmatprep.mubr.bf16.mxu0 0
  %2057 = vmatmul.mubr.bf16.gmra.mrb[0].mxu0 %v1219
  %v2058 = vpop.f32.mrb[0].mxu0
  %v2059 = vadd.f32 %v1594, %v2058
  %v2060 = vpop.f32.mrb[0].mxu0
  %v2061 = vpop.f32.mrb[0].mxu0
  %v2062 = vadd.f32 %v1597, %v2061
  %v2063 = vpop.f32.mrb[0].mxu0
  %2064 = vmatprep.mubr.bf16.mxu0 0
  %2065 = vmatmul.mubr.bf16.gmra.mrb[0].mxu0 %v1222
  %v2066 = vpop.f32.mrb[0].mxu0
  %v2067 = vadd.f32 %v1602, %v2066
  %v2068 = vpop.f32.mrb[0].mxu0
  %v2069 = vpop.f32.mrb[0].mxu0
  %v2070 = vadd.f32 %v1605, %v2069
  %v2071 = vpop.f32.mrb[0].mxu0
  %2072 = vmatprep.mubr.bf16.mxu0 0
  %2073 = vmatmul.mubr.bf16.gmra.mrb[0].mxu0 %v1225
  %v2074 = vpop.f32.mrb[0].mxu0
  %v2075 = vadd.f32 %v1610, %v2074
  %v2076 = vpop.f32.mrb[0].mxu0
  %v2077 = vpop.f32.mrb[0].mxu0
  %v2078 = vadd.f32 %v1613, %v2077
  %v2079 = vpop.f32.mrb[0].mxu0
  %2080 = vmatprep.mubr.bf16.mxu0 0
  %2081 = vmatmul.mubr.bf16.gmra.mrb[0].mxu0 %v1228
  %v2082 = vpop.f32.mrb[0].mxu0
  %v2083 = vadd.f32 %v1618, %v2082
  %v2084 = vpop.f32.mrb[0].mxu0
  %v2085 = vpop.f32.mrb[0].mxu0
  %v2086 = vadd.f32 %v1621, %v2085
  %v2087 = vpop.f32.mrb[0].mxu0
  %2088 = vmatprep.mubr.bf16.mxu0 0
  %2089 = vmatmul.mubr.bf16.gmra.mrb[0].mxu0 %v1231
  %v2090 = vpop.f32.mrb[0].mxu0
  %v2091 = vadd.f32 %v1626, %v2090
  %v2092 = vpop.f32.mrb[0].mxu0
  %v2093 = vpop.f32.mrb[0].mxu0
  %v2094 = vadd.f32 %v1629, %v2093
  %v2095 = vpop.f32.mrb[0].mxu0
  %2096 = vmatprep.mubr.bf16.mxu0 0
  %2097 = vmatmul.mubr.bf16.gmra.mrb[0].mxu0 %v1234
  %v2098 = vpop.f32.mrb[0].mxu0
  %v2099 = vadd.f32 %v1634, %v2098
  %v2100 = vpop.f32.mrb[0].mxu0
  %v2101 = vpop.f32.mrb[0].mxu0
  %v2102 = vadd.f32 %v1637, %v2101
  %v2103 = vpop.f32.mrb[0].mxu0
  %2104 = vmatprep.mubr.bf16.mxu0 0
  %2105 = vmatmul.mubr.bf16.gmra.mrb[0].mxu0 %v1237
  %v2106 = vpop.f32.mrb[0].mxu0
  %v2107 = vadd.f32 %v1642, %v2106
  %v2108 = vpop.f32.mrb[0].mxu0
  %v2109 = vpop.f32.mrb[0].mxu0
  %v2110 = vadd.f32 %v1645, %v2109
  %v2111 = vpop.f32.mrb[0].mxu0
  %2112 = vmatprep.mubr.bf16.mxu0 0
  %2113 = vmatmul.mubr.bf16.gmra.mrb[0].mxu0 %v1240
  %v2114 = vpop.f32.mrb[0].mxu0
  %v2115 = vadd.f32 %v1650, %v2114
  %v2116 = vpop.f32.mrb[0].mxu0
  %v2117 = vpop.f32.mrb[0].mxu0
  %v2118 = vadd.f32 %v1653, %v2117
  %v2119 = vpop.f32.mrb[0].mxu0
  %2120 = vmatprep.mubr.bf16.mxu0 0
  %2121 = vmatmul.mubr.bf16.gmra.mrb[0].mxu0 %v1243
  %v2122 = vpop.f32.mrb[0].mxu0
  %v2123 = vadd.f32 %v1658, %v2122
  %v2124 = vpop.f32.mrb[0].mxu0
  %v2125 = vpop.f32.mrb[0].mxu0
  %v2126 = vadd.f32 %v1661, %v2125
  %v2127 = vpop.f32.mrb[0].mxu0
  %2128 = vmatprep.mubr.bf16.mxu0 0
  %2129 = vmatmul.mubr.bf16.gmra.mrb[0].mxu0 %v1246
  %v2130 = vpop.f32.mrb[0].mxu0
  %v2131 = vadd.f32 %v1666, %v2130
  %v2132 = vpop.f32.mrb[0].mxu0
  %v2133 = vpop.f32.mrb[0].mxu0
  %v2134 = vadd.f32 %v1669, %v2133
  %v2135 = vpop.f32.mrb[0].mxu0
  %2136 = vmatprep.mubr.bf16.mxu0 0
  %2137 = vmatmul.mubr.bf16.gmra.mrb[0].mxu0 %v1249
  %v2138 = vpop.f32.mrb[0].mxu0
  %v2139 = vadd.f32 %v1674, %v2138
  %v2140 = vpop.f32.mrb[0].mxu0
  %v2141 = vpop.f32.mrb[0].mxu0
  %v2142 = vadd.f32 %v1677, %v2141
  %v2143 = vpop.f32.mrb[0].mxu0
  %2144 = vmatprep.mubr.bf16.mxu0 0
  %2145 = vmatmul.mubr.bf16.gmra.mrb[0].mxu0 %v1252
  %v2146 = vpop.f32.mrb[0].mxu0
  %v2147 = vadd.f32 %v1682, %v2146
  %v2148 = vpop.f32.mrb[0].mxu0
  %v2149 = vpop.f32.mrb[0].mxu0
  %v2150 = vadd.f32 %v1685, %v2149
  %v2151 = vpop.f32.mrb[0].mxu0
  %2152 = vmatprep.mubr.bf16.mxu0 0
  %2153 = vmatmul.mubr.bf16.gmra.mrb[0].mxu0 %v1255
  %v2154 = vpop.f32.mrb[0].mxu0
  %v2155 = vadd.f32 %v1690, %v2154
  %v2156 = vpop.f32.mrb[0].mxu0
  %v2157 = vpop.f32.mrb[0].mxu0
  %v2158 = vadd.f32 %v1693, %v2157
  %v2159 = vpop.f32.mrb[0].mxu0
  %2160 = vmatprep.mubr.bf16.mxu0 0
  %2161 = vmatmul.mubr.bf16.gmra.mrb[0].mxu0 %v1258
  %v2162 = vpop.f32.mrb[0].mxu0
  %v2163 = vadd.f32 %v1698, %v2162
  %v2164 = vpop.f32.mrb[0].mxu0
  %v2165 = vpop.f32.mrb[0].mxu0
  %v2166 = vadd.f32 %v1701, %v2165
  %v2167 = vpop.f32.mrb[0].mxu0
  %2168 = vmatprep.mubr.bf16.mxu0 0
  %2169 = vmatmul.mubr.bf16.gmra.mrb[0].mxu0 %v1261
  %v2170 = vpop.f32.mrb[0].mxu0
  %v2171 = vadd.f32 %v1706, %v2170
  %v2172 = vpop.f32.mrb[0].mxu0
  %v2173 = vpop.f32.mrb[0].mxu0
  %v2174 = vadd.f32 %v1709, %v2173
  %v2175 = vpop.f32.mrb[0].mxu0
  %2176 = vmatprep.mubr.bf16.mxu0 0
  %2177 = vmatmul.mubr.bf16.gmra.mrb[0].mxu0 %v1264
  %v2178 = vpop.f32.mrb[0].mxu0
  %v2179 = vadd.f32 %v1714, %v2178
  %v2180 = vpop.f32.mrb[0].mxu0
  %v2181 = vpop.f32.mrb[0].mxu0
  %v2182 = vadd.f32 %v1717, %v2181
  %v2183 = vpop.f32.mrb[0].mxu0
  %2184 = vmatprep.mubr.bf16.mxu0 0
  %2185 = vmatmul.mubr.bf16.gmra.mrb[0].mxu0 %v1267
  %v2186 = vpop.f32.mrb[0].mxu0
  %v2187 = vadd.f32 %v1722, %v2186
  %v2188 = vpop.f32.mrb[0].mxu0
  %v2189 = vpop.f32.mrb[0].mxu0
  %v2190 = vadd.f32 %v1725, %v2189
  %v2191 = vpop.f32.mrb[0].mxu0
  %2192 = vmatprep.mubr.bf16.mxu0 0
  %2193 = vmatmul.mubr.bf16.gmra.mrb[0].mxu0 %v1270
  %v2194 = vpop.f32.mrb[0].mxu0
  %v2195 = vadd.f32 %v1730, %v2194
  %v2196 = vpop.f32.mrb[0].mxu0
  %v2197 = vpop.f32.mrb[0].mxu0
  %v2198 = vadd.f32 %v1733, %v2197
  %v2199 = vpop.f32.mrb[0].mxu0
  %2200 = vmatprep.mubr.bf16.mxu0 0
  %2201 = vmatmul.mubr.bf16.gmra.mrb[0].mxu0 %v1273
  %v2202 = vpop.f32.mrb[0].mxu0
  %v2203 = vadd.f32 %v1738, %v2202
  %v2204 = vpop.f32.mrb[0].mxu0
  %v2205 = vpop.f32.mrb[0].mxu0
  %v2206 = vadd.f32 %v1741, %v2205
  %v2207 = vpop.f32.mrb[0].mxu0
  %2208 = vdwg.mxu0
  %v2209 = vmax.f32 %v1779, %v1886
  %v2210 = vmax.f32 %v1782, %v1891
  %v2211 = vmax.f32 %v1787, %v1894
  %v2212 = vmax.f32 %v1790, %v1899
  %v2213 = vmax.f32 %v1795, %v1902
  %v2214 = vmax.f32 %v1798, %v1907
  %v2215 = vmax.f32 %v1803, %v1910
  %v2216 = vmax.f32 %v1806, %v1915
  %v2217 = vmax.f32 %v1811, %v1918
  %v2218 = vmax.f32 %v1814, %v1923
  %v2219 = vmax.f32 %v1819, %v1926
  %v2220 = vmax.f32 %v1822, %v1931
  %v2221 = vmax.f32 %v1827, %v1934
  %v2222 = vmax.f32 %v1830, %v1939
  %v2223 = vmax.f32 %v1835, %v1942
  %v2224 = vmax.f32 %v1838, %v1947
  %v2225 = vmax.f32 %v1843, %v1950
  %v2226 = vmax.f32 %v1846, %v1955
  %v2227 = vmax.f32 %v1851, %v1958
  %v2228 = vmax.f32 %v1854, %v1963
  %v2229 = vmax.f32 %v1859, %v1966
  %v2230 = vmax.f32 %v1862, %v1971
  %v2231 = vmax.f32 %v1867, %v1974
  %v2232 = vmax.f32 %v1870, %v1979
  %v2233 = vmax.f32 %v1875, %v1982
  %v2234 = vmax.f32 %v1878, %v1987
  %v2235 = vmax.f32 %v1883, %v1990
  %v2236 = vmax.f32 %v1995, %v2102
  %v2237 = vmax.f32 %v1998, %v2107
  %v2238 = vmax.f32 %v2003, %v2110
  %v2239 = vmax.f32 %v2006, %v2115
  %v2240 = vmax.f32 %v2011, %v2118
  %v2241 = vmax.f32 %v2014, %v2123
  %v2242 = vmax.f32 %v2019, %v2126
  %v2243 = vmax.f32 %v2022, %v2131
  %v2244 = vmax.f32 %v2027, %v2134
  %v2245 = vmax.f32 %v2030, %v2139
  %v2246 = vmax.f32 %v2035, %v2142
  %v2247 = vmax.f32 %v2038, %v2147
  %v2248 = vmax.f32 %v2043, %v2150
  %v2249 = vmax.f32 %v2046, %v2155
  %v2250 = vmax.f32 %v2051, %v2158
  %v2251 = vmax.f32 %v2054, %v2163
  %v2252 = vmax.f32 %v2059, %v2166
  %v2253 = vmax.f32 %v2062, %v2171
  %v2254 = vmax.f32 %v2067, %v2174
  %v2255 = vmax.f32 %v2070, %v2179
  %v2256 = vmax.f32 %v2075, %v2182
  %v2257 = vmax.f32 %v2078, %v2187
  %v2258 = vmax.f32 %v2083, %v2190
  %v2259 = vmax.f32 %v2086, %v2195
  %v2260 = vmax.f32 %v2091, %v2198
  %v2261 = vmax.f32 %v2094, %v2203
  %v2262 = vmax.f32 %v2099, %v2206
  %v2263 = vmax.f32 %v2209, %v2236
  %v2264 = vmax.f32 %v2210, %v2237
  %v2265 = vmax.f32 %v2211, %v2238
  %v2266 = vmax.f32 %v2212, %v2239
  %v2267 = vmax.f32 %v2213, %v2240
  %v2268 = vmax.f32 %v2214, %v2241
  %v2269 = vmax.f32 %v2215, %v2242
  %v2270 = vmax.f32 %v2216, %v2243
  %v2271 = vmax.f32 %v2217, %v2244
  %v2272 = vmax.f32 %v2218, %v2245
  %v2273 = vmax.f32 %v2219, %v2246
  %v2274 = vmax.f32 %v2220, %v2247
  %v2275 = vmax.f32 %v2221, %v2248
  %v2276 = vmax.f32 %v2222, %v2249
  %v2277 = vmax.f32 %v2223, %v2250
  %v2278 = vmax.f32 %v2224, %v2251
  %v2279 = vmax.f32 %v2225, %v2252
  %v2280 = vmax.f32 %v2226, %v2253
  %v2281 = vmax.f32 %v2227, %v2254
  %v2282 = vmax.f32 %v2228, %v2255
  %v2283 = vmax.f32 %v2229, %v2256
  %v2284 = vmax.f32 %v2230, %v2257
  %v2285 = vmax.f32 %v2231, %v2258
  %v2286 = vmax.f32 %v2232, %v2259
  %v2287 = vmax.f32 %v2233, %v2260
  %v2288 = vmax.f32 %v2234, %v2261
  %v2289 = vmax.f32 %v2235, %v2262
  %v2290 = vld [vmem:[%s2] sm:$0xff]
  %v2291 = vld [vmem:[%s2 + $0x8] sm:$0xff]
  %v2292 = vld [vmem:[%s2 + $0x10] sm:$0xff]
  %v2293 = vld [vmem:[%s2 + $0x18] sm:$0xff]
  %v2294 = vld [vmem:[%s2 + $0x20] sm:$0xff]
  %v2295 = vld [vmem:[%s2 + $0x28] sm:$0xff]
  %v2296 = vld [vmem:[%s2 + $0x30] sm:$0xff]
  %v2297 = vld [vmem:[%s2 + $0x38] sm:$0xff]
  %v2298 = vld [vmem:[%s2 + $0x40] sm:$0xff]
  %v2299 = vld [vmem:[%s2 + $0x48] sm:$0xff]
  %v2300 = vld [vmem:[%s2 + $0x50] sm:$0xff]
  %v2301 = vld [vmem:[%s2 + $0x58] sm:$0xff]
  %v2302 = vld [vmem:[%s2 + $0x60] sm:$0xff]
  %v2303 = vld [vmem:[%s2 + $0x68] sm:$0xff]
  %v2304 = vld [vmem:[%s2 + $0x70] sm:$0xff]
  %v2305 = vld [vmem:[%s2 + $0x78] sm:$0xff]
  %v2306 = vld [vmem:[%s2 + $0x80] sm:$0xff]
  %v2307 = vld [vmem:[%s2 + $0x88] sm:$0xff]
  %v2308 = vld [vmem:[%s2 + $0x90] sm:$0xff]
  %v2309 = vld [vmem:[%s2 + $0x98] sm:$0xff]
  %v2310 = vld [vmem:[%s2 + $0xa0] sm:$0xff]
  %v2311 = vld [vmem:[%s2 + $0xa8] sm:$0xff]
  %v2312 = vld [vmem:[%s2 + $0xb0] sm:$0xff]
  %v2313 = vld [vmem:[%s2 + $0xb8] sm:$0xff]
  %v2314 = vld [vmem:[%s2 + $0xc0] sm:$0xff]
  %v2315 = vld [vmem:[%s2 + $0xc8] sm:$0xff]
  %v2316 = vld [vmem:[%s2 + $0xd0] sm:$0xff]
  %2318 = vset.pattern.permute.xlu0 0
  %2319 = vperm.xlu0 %2318, %v2290
  %v2320 = vpop.permute.xlu0 %2319
  %2323 = vset.pattern.permute.xlu0 0
  %2324 = vperm.xlu0 %2323, %v2291
  %v2325 = vpop.permute.xlu0 %2324
  %2328 = vset.pattern.permute.xlu0 0
  %2329 = vperm.xlu0 %2328, %v2292
  %v2330 = vpop.permute.xlu0 %2329
  %2333 = vset.pattern.permute.xlu0 0
  %2334 = vperm.xlu0 %2333, %v2293
  %v2335 = vpop.permute.xlu0 %2334
  %2338 = vset.pattern.permute.xlu0 0
  %2339 = vperm.xlu0 %2338, %v2294
  %v2340 = vpop.permute.xlu0 %2339
  %2343 = vset.pattern.permute.xlu0 0
  %2344 = vperm.xlu0 %2343, %v2295
  %v2345 = vpop.permute.xlu0 %2344
  %2348 = vset.pattern.permute.xlu0 0
  %2349 = vperm.xlu0 %2348, %v2296
  %v2350 = vpop.permute.xlu0 %2349
  %2353 = vset.pattern.permute.xlu0 0
  %2354 = vperm.xlu0 %2353, %v2297
  %v2355 = vpop.permute.xlu0 %2354
  %2358 = vset.pattern.permute.xlu0 0
  %2359 = vperm.xlu0 %2358, %v2298
  %v2360 = vpop.permute.xlu0 %2359
  %2363 = vset.pattern.permute.xlu0 0
  %2364 = vperm.xlu0 %2363, %v2299
  %v2365 = vpop.permute.xlu0 %2364
  %2368 = vset.pattern.permute.xlu0 0
  %2369 = vperm.xlu0 %2368, %v2300
  %v2370 = vpop.permute.xlu0 %2369
  %2373 = vset.pattern.permute.xlu0 0
  %2374 = vperm.xlu0 %2373, %v2301
  %v2375 = vpop.permute.xlu0 %2374
  %2378 = vset.pattern.permute.xlu0 0
  %2379 = vperm.xlu0 %2378, %v2302
  %v2380 = vpop.permute.xlu0 %2379
  %2383 = vset.pattern.permute.xlu0 0
  %2384 = vperm.xlu0 %2383, %v2303
  %v2385 = vpop.permute.xlu0 %2384
  %2388 = vset.pattern.permute.xlu0 0
  %2389 = vperm.xlu0 %2388, %v2304
  %v2390 = vpop.permute.xlu0 %2389
  %2393 = vset.pattern.permute.xlu0 0
  %2394 = vperm.xlu0 %2393, %v2305
  %v2395 = vpop.permute.xlu0 %2394
  %2398 = vset.pattern.permute.xlu0 0
  %2399 = vperm.xlu0 %2398, %v2306
  %v2400 = vpop.permute.xlu0 %2399
  %2403 = vset.pattern.permute.xlu0 0
  %2404 = vperm.xlu0 %2403, %v2307
  %v2405 = vpop.permute.xlu0 %2404
  %2408 = vset.pattern.permute.xlu0 0
  %2409 = vperm.xlu0 %2408, %v2308
  %v2410 = vpop.permute.xlu0 %2409
  %2413 = vset.pattern.permute.xlu0 0
  %2414 = vperm.xlu0 %2413, %v2309
  %v2415 = vpop.permute.xlu0 %2414
  %2418 = vset.pattern.permute.xlu0 0
  %2419 = vperm.xlu0 %2418, %v2310
  %v2420 = vpop.permute.xlu0 %2419
  %2423 = vset.pattern.permute.xlu0 0
  %2424 = vperm.xlu0 %2423, %v2311
  %v2425 = vpop.permute.xlu0 %2424
  %2428 = vset.pattern.permute.xlu0 0
  %2429 = vperm.xlu0 %2428, %v2312
  %v2430 = vpop.permute.xlu0 %2429
  %2433 = vset.pattern.permute.xlu0 0
  %2434 = vperm.xlu0 %2433, %v2313
  %v2435 = vpop.permute.xlu0 %2434
  %2438 = vset.pattern.permute.xlu0 0
  %2439 = vperm.xlu0 %2438, %v2314
  %v2440 = vpop.permute.xlu0 %2439
  %2443 = vset.pattern.permute.xlu0 0
  %2444 = vperm.xlu0 %2443, %v2315
  %v2445 = vpop.permute.xlu0 %2444
  %2448 = vset.pattern.permute.xlu0 0
  %2449 = vperm.xlu0 %2448, %v2316
  %v2450 = vpop.permute.xlu0 %2449
  %v2452 = vadd.f32 %v2263, %v2320
  %v2453 = vadd.f32 %v2264, %v2325
  %v2454 = vadd.f32 %v2265, %v2330
  %v2455 = vadd.f32 %v2266, %v2335
  %v2456 = vadd.f32 %v2267, %v2340
  %v2457 = vadd.f32 %v2268, %v2345
  %v2458 = vadd.f32 %v2269, %v2350
  %v2459 = vadd.f32 %v2270, %v2355
  %v2460 = vadd.f32 %v2271, %v2360
  %v2461 = vadd.f32 %v2272, %v2365
  %v2462 = vadd.f32 %v2273, %v2370
  %v2463 = vadd.f32 %v2274, %v2375
  %v2464 = vadd.f32 %v2275, %v2380
  %v2465 = vadd.f32 %v2276, %v2385
  %v2466 = vadd.f32 %v2277, %v2390
  %v2467 = vadd.f32 %v2278, %v2395
  %v2468 = vadd.f32 %v2279, %v2400
  %v2469 = vadd.f32 %v2280, %v2405
  %v2470 = vadd.f32 %v2281, %v2410
  %v2471 = vadd.f32 %v2282, %v2415
  %v2472 = vadd.f32 %v2283, %v2420
  %v2473 = vadd.f32 %v2284, %v2425
  %v2474 = vadd.f32 %v2285, %v2430
  %v2475 = vadd.f32 %v2286, %v2435
  %v2476 = vadd.f32 %v2287, %v2440
  %v2477 = vadd.f32 %v2288, %v2445
  %v2478 = vadd.f32 %v2289, %v2450
  %v2479 = vmax.f32 %v2452, 0.0
  %v2480 = vmax.f32 %v2453, 0.0
  %v2481 = vmax.f32 %v2454, 0.0
  %v2482 = vmax.f32 %v2455, 0.0
  %v2483 = vmax.f32 %v2456, 0.0
  %v2484 = vmax.f32 %v2457, 0.0
  %v2485 = vmax.f32 %v2458, 0.0
  %v2486 = vmax.f32 %v2459, 0.0
  %v2487 = vmax.f32 %v2460, 0.0
  %v2488 = vmax.f32 %v2461, 0.0
  %v2489 = vmax.f32 %v2462, 0.0
  %v2490 = vmax.f32 %v2463, 0.0
  %v2491 = vmax.f32 %v2464, 0.0
  %v2492 = vmax.f32 %v2465, 0.0
  %v2493 = vmax.f32 %v2466, 0.0
  %v2494 = vmax.f32 %v2467, 0.0
  %v2495 = vmax.f32 %v2468, 0.0
  %v2496 = vmax.f32 %v2469, 0.0
  %v2497 = vmax.f32 %v2470, 0.0
  %v2498 = vmax.f32 %v2471, 0.0
  %v2499 = vmax.f32 %v2472, 0.0
  %v2500 = vmax.f32 %v2473, 0.0
  %v2501 = vmax.f32 %v2474, 0.0
  %v2502 = vmax.f32 %v2475, 0.0
  %v2503 = vmax.f32 %v2476, 0.0
  %v2504 = vmax.f32 %v2477, 0.0
  %v2505 = vmax.f32 %v2478, 0.0
  %2506 = vst [vmem:[#allocation2] sm:$0xff] %v2479
  %2507 = vst [vmem:[#allocation2 + $0x8] sm:$0xff] %v2480
  %2508 = vst [vmem:[#allocation2 + $0x10] sm:$0xff] %v2481
  %2509 = vst [vmem:[#allocation2 + $0x18] sm:$0xff] %v2482
  %2510 = vst [vmem:[#allocation2 + $0x20] sm:$0xff] %v2483
  %2511 = vst [vmem:[#allocation2 + $0x28] sm:$0xff] %v2484
  %2512 = vst [vmem:[#allocation2 + $0x30] sm:$0xff] %v2485
  %2513 = vst [vmem:[#allocation2 + $0x38] sm:$0xff] %v2486
  %2514 = vst [vmem:[#allocation2 + $0x40] sm:$0xff] %v2487
  %2515 = vst [vmem:[#allocation2 + $0x48] sm:$0xff] %v2488
  %2516 = vst [vmem:[#allocation2 + $0x50] sm:$0xff] %v2489
  %2517 = vst [vmem:[#allocation2 + $0x58] sm:$0xff] %v2490
  %2518 = vst [vmem:[#allocation2 + $0x60] sm:$0xff] %v2491
  %2519 = vst [vmem:[#allocation2 + $0x68] sm:$0xff] %v2492
  %2520 = vst [vmem:[#allocation2 + $0x70] sm:$0xff] %v2493
  %2521 = vst [vmem:[#allocation2 + $0x78] sm:$0xff] %v2494
  %2522 = vst [vmem:[#allocation2 + $0x80] sm:$0xff] %v2495
  %2523 = vst [vmem:[#allocation2 + $0x88] sm:$0xff] %v2496
  %2524 = vst [vmem:[#allocation2 + $0x90] sm:$0xff] %v2497
  %2525 = vst [vmem:[#allocation2 + $0x98] sm:$0xff] %v2498
  %2526 = vst [vmem:[#allocation2 + $0xa0] sm:$0xff] %v2499
  %2527 = vst [vmem:[#allocation2 + $0xa8] sm:$0xff] %v2500
  %2528 = vst [vmem:[#allocation2 + $0xb0] sm:$0xff] %v2501
  %2529 = vst [vmem:[#allocation2 + $0xb8] sm:$0xff] %v2502
  %2530 = vst [vmem:[#allocation2 + $0xc0] sm:$0xff] %v2503
  %2531 = vst [vmem:[#allocation2 + $0xc8] sm:$0xff] %v2504
  %2532 = vst [vmem:[#allocation2 + $0xd0] sm:$0xff] %v2505
  %v2533 = vld [vmem:[%s0 + $0xa8] sm:$0xff]
  %v2534 = vld [vmem:[%s0 + $0xb0] sm:$0xff]
  %v2535 = vld [vmem:[%s0 + $0xb8] sm:$0xff]
  %v2536 = vld [vmem:[%s0 + $0xc0] sm:$0xff]
  %v2537 = vld [vmem:[%s0 + $0xc8] sm:$0xff]
  %v2538 = vld [vmem:[%s0 + $0xd0] sm:$0xff]
  %v2539 = vld [vmem:[%s0 + $0xd8] sm:$0xff]
  %v2540 = vld [vmem:[%s0 + $0xe0] sm:$0xff]
  %v2541 = vld [vmem:[%s0 + $0xe8] sm:$0xff]
  %v2542 = vld [vmem:[%s0 + $0xf0] sm:$0xff]
  %v2543 = vld [vmem:[%s0 + $0xf8] sm:$0xff]
  %v2544 = vld [vmem:[%s0 + $0x100] sm:$0xff]
  %v2545 = vld [vmem:[%s0 + $0x108] sm:$0xff]
  %v2546 = vld [vmem:[%s0 + $0x110] sm:$0xff]
  %v2547 = vld [vmem:[%s0 + $0x118] sm:$0xff]
  %v2548 = vld [vmem:[%s0 + $0x120] sm:$0xff]
  %v2549 = vld [vmem:[%s0 + $0x128] sm:$0xff]
  %v2550 = vld [vmem:[%s0 + $0x130] sm:$0xff]
  %v2551 = vld [vmem:[%s0 + $0x138] sm:$0xff]
  %v2552 = vld [vmem:[%s0 + $0x140] sm:$0xff]
  %v2553 = vld [vmem:[%s0 + $0x148] sm:$0xff]
  %v2554 = vld [vmem:[%s0 + $0x150] sm:$0xff]
  %v2555 = vld [vmem:[%s0 + $0x158] sm:$0xff]
  %v2556 = vld [vmem:[%s0 + $0x160] sm:$0xff]
  %v2557 = vld [vmem:[%s0 + $0x168] sm:$0xff]
  %v2558 = vld [vmem:[%s0 + $0x170] sm:$0xff]
  %v2559 = vld [vmem:[%s0 + $0x178] sm:$0xff]
  %v2560 = vld [vmem:[%s0 + $0x180] sm:$0xff]
  %v2561 = vld [vmem:[%s0 + $0x188] sm:$0xff]
  %v2562 = vld [vmem:[%s0 + $0x190] sm:$0xff]
  %v2563 = vld [vmem:[%s0 + $0x198] sm:$0xff]
  %v2564 = vld [vmem:[%s0 + $0x1a0] sm:$0xff]
  %v2565 = vld [vmem:[%s0 + $0x1a8] sm:$0xff]
  %v2566 = vld [vmem:[%s0 + $0x1b0] sm:$0xff]
  %v2567 = vld [vmem:[%s0 + $0x1b8] sm:$0xff]
  %v2568 = vpack.c.bf16 %v2534, %v2533
  %v2569 = vpack.c.bf16 %v2536, %v2535
  %v2570 = vpack.c.bf16 %v2538, %v2537
  %v2571 = vpack.c.bf16 %v2540, %v2539
  %v2572 = vpack.c.bf16 %v2542, %v2541
  %v2573 = vpack.c.bf16 %v2544, %v2543
  %v2574 = vpack.c.bf16 %v2546, %v2545
  %v2575 = vpack.c.bf16 %v2548, %v2547
  %v2576 = vpack.c.bf16 %v2550, %v2549
  %v2577 = vpack.c.bf16 %v2552, %v2551
  %v2578 = vpack.c.bf16 %v2554, %v2553
  %v2579 = vpack.c.bf16 %v2556, %v2555
  %v2580 = vpack.c.bf16 %v2558, %v2557
  %v2581 = vpack.c.bf16 %v2560, %v2559
  %v2582 = vpack.c.bf16 %v2562, %v2561
  %v2583 = vpack.c.bf16 %v2564, %v2563
  %v2584 = vpack.c.bf16 %v2566, %v2565
  %v2585 = vpack.c.bf16 %v2567, %v2567
  %s2586 = scalar_lea.vmem %s1, 1296
  %v2587 = vld [vmem:[%s2586] sm:$0xff]
  %v2588 = vld [vmem:[%s2586 + $0x8] sm:$0xf]
  %v2589 = vld [vmem:[%s2586 + $0xc] sm:$0xff]
  %v2590 = vld [vmem:[%s2586 + $0x14] sm:$0xf]
  %v2591 = vld [vmem:[%s2586 + $0x18] sm:$0xff]
  %v2592 = vld [vmem:[%s2586 + $0x20] sm:$0xf]
  %v2593 = vld [vmem:[%s2586 + $0x24] sm:$0xff]
  %v2594 = vld [vmem:[%s2586 + $0x2c] sm:$0xf]
  %v2595 = vld [vmem:[%s2586 + $0x30] sm:$0xff]
  %v2596 = vld [vmem:[%s2586 + $0x38] sm:$0xf]
  %v2597 = vld [vmem:[%s2586 + $0x3c] sm:$0xff]
  %v2598 = vld [vmem:[%s2586 + $0x44] sm:$0xf]
  %v2599 = vld [vmem:[%s2586 + $0x48] sm:$0xff]
  %v2600 = vld [vmem:[%s2586 + $0x50] sm:$0xf]
  %v2601 = vld [vmem:[%s2586 + $0x54] sm:$0xff]
  %v2602 = vld [vmem:[%s2586 + $0x5c] sm:$0xf]
  %v2603 = vld [vmem:[%s2586 + $0x60] sm:$0xff]
  %v2604 = vld [vmem:[%s2586 + $0x68] sm:$0xf]
  %v2605 = vld [vmem:[%s2586 + $0x6c] sm:$0xff]
  %v2606 = vld [vmem:[%s2586 + $0x74] sm:$0xf]
  %v2607 = vld [vmem:[%s2586 + $0x78] sm:$0xff]
  %v2608 = vld [vmem:[%s2586 + $0x80] sm:$0xf]
  %v2609 = vld [vmem:[%s2586 + $0x84] sm:$0xff]
  %v2610 = vld [vmem:[%s2586 + $0x8c] sm:$0xf]
  %v2611 = vld [vmem:[%s2586 + $0x90] sm:$0xff]
  %v2612 = vld [vmem:[%s2586 + $0x98] sm:$0xf]
  %v2613 = vld [vmem:[%s2586 + $0x9c] sm:$0xff]
  %v2614 = vld [vmem:[%s2586 + $0xa4] sm:$0xf]
  %v2615 = vld [vmem:[%s2586 + $0xa8] sm:$0xff]
  %v2616 = vld [vmem:[%s2586 + $0xb0] sm:$0xf]
  %v2617 = vld [vmem:[%s2586 + $0xb4] sm:$0xff]
  %v2618 = vld [vmem:[%s2586 + $0xbc] sm:$0xf]
  %v2619 = vld [vmem:[%s2586 + $0xc0] sm:$0xff]
  %v2620 = vld [vmem:[%s2586 + $0xc8] sm:$0xf]
  %v2621 = vld [vmem:[%s2586 + $0xcc] sm:$0xff]
  %v2622 = vld [vmem:[%s2586 + $0xd4] sm:$0xf]
  %v2623 = vld [vmem:[%s2586 + $0xd8] sm:$0xff]
  %v2624 = vld [vmem:[%s2586 + $0xe0] sm:$0xf]
  %v2625 = vld [vmem:[%s2586 + $0xe4] sm:$0xff]
  %v2626 = vld [vmem:[%s2586 + $0xec] sm:$0xf]
  %v2627 = vld [vmem:[%s2586 + $0xf0] sm:$0xff]
  %v2628 = vld [vmem:[%s2586 + $0xf8] sm:$0xf]
  %v2629 = vld [vmem:[%s2586 + $0xfc] sm:$0xff]
  %v2630 = vld [vmem:[%s2586 + $0x104] sm:$0xf]
  %v2631 = vld [vmem:[%s2586 + $0x108] sm:$0xff]
  %v2632 = vld [vmem:[%s2586 + $0x110] sm:$0xf]
  %v2633 = vld [vmem:[%s2586 + $0x114] sm:$0xff]
  %v2634 = vld [vmem:[%s2586 + $0x11c] sm:$0xf]
  %v2635 = vld [vmem:[%s2586 + $0x120] sm:$0xff]
  %v2636 = vld [vmem:[%s2586 + $0x128] sm:$0xf]
  %v2637 = vld [vmem:[%s2586 + $0x12c] sm:$0xff]
  %v2638 = vld [vmem:[%s2586 + $0x134] sm:$0xf]
  %v2639 = vld [vmem:[%s2586 + $0x138] sm:$0xff]
  %v2640 = vld [vmem:[%s2586 + $0x140] sm:$0xf]
  %v2641 = vld [vmem:[%s2586 + $0x144] sm:$0xff]
  %v2642 = vld [vmem:[%s2586 + $0x14c] sm:$0xf]
  %v2643 = vld [vmem:[%s2586 + $0x150] sm:$0xff]
  %v2644 = vld [vmem:[%s2586 + $0x158] sm:$0xf]
  %v2645 = vld [vmem:[%s2586 + $0x15c] sm:$0xff]
  %v2646 = vld [vmem:[%s2586 + $0x164] sm:$0xf]
  %v2647 = vld [vmem:[%s2586 + $0x168] sm:$0xff]
  %v2648 = vld [vmem:[%s2586 + $0x170] sm:$0xf]
  %v2649 = vld [vmem:[%s2586 + $0x174] sm:$0xff]
  %v2650 = vld [vmem:[%s2586 + $0x17c] sm:$0xf]
  %v2651 = vld [vmem:[%s2586 + $0x180] sm:$0xff]
  %v2652 = vld [vmem:[%s2586 + $0x188] sm:$0xf]
  %v2653 = vld [vmem:[%s2586 + $0x18c] sm:$0xff]
  %v2654 = vld [vmem:[%s2586 + $0x194] sm:$0xf]
  %v2655 = vld [vmem:[%s2586 + $0x198] sm:$0xff]
  %v2656 = vld [vmem:[%s2586 + $0x1a0] sm:$0xf]
  %v2657 = vld [vmem:[%s2586 + $0x1a4] sm:$0xff]
  %v2658 = vld [vmem:[%s2586 + $0x1ac] sm:$0xf]
  %v2659 = vld [vmem:[%s2586 + $0x1b0] sm:$0xff]
  %v2660 = vld [vmem:[%s2586 + $0x1b8] sm:$0xf]
  %v2661 = vld [vmem:[%s2586 + $0x1bc] sm:$0xff]
  %v2662 = vld [vmem:[%s2586 + $0x1c4] sm:$0xf]
  %v2663 = vld [vmem:[%s2586 + $0x1c8] sm:$0xff]
  %v2664 = vld [vmem:[%s2586 + $0x1d0] sm:$0xf]
  %v2665 = vld [vmem:[%s2586 + $0x1d4] sm:$0xff]
  %v2666 = vld [vmem:[%s2586 + $0x1dc] sm:$0xf]
  %v2667 = vld [vmem:[%s2586 + $0x1e0] sm:$0xff]
  %v2668 = vld [vmem:[%s2586 + $0x1e8] sm:$0xf]
  %v2669 = vld [vmem:[%s2586 + $0x1ec] sm:$0xff]
  %v2670 = vld [vmem:[%s2586 + $0x1f4] sm:$0xf]
  %v2671 = vld [vmem:[%s2586 + $0x1f8] sm:$0xff]
  %v2672 = vld [vmem:[%s2586 + $0x200] sm:$0xf]
  %v2673 = vld [vmem:[%s2586 + $0x204] sm:$0xff]
  %v2674 = vld [vmem:[%s2586 + $0x20c] sm:$0xf]
  %v2675 = vld [vmem:[%s2586 + $0x210] sm:$0xff]
  %v2676 = vld [vmem:[%s2586 + $0x218] sm:$0xf]
  %v2677 = vld [vmem:[%s2586 + $0x21c] sm:$0xff]
  %v2678 = vld [vmem:[%s2586 + $0x224] sm:$0xf]
  %v2679 = vld [vmem:[%s2586 + $0x228] sm:$0xff]
  %v2680 = vld [vmem:[%s2586 + $0x230] sm:$0xf]
  %v2681 = vld [vmem:[%s2586 + $0x234] sm:$0xff]
  %v2682 = vld [vmem:[%s2586 + $0x23c] sm:$0xf]
  %v2683 = vld [vmem:[%s2586 + $0x240] sm:$0xff]
  %v2684 = vld [vmem:[%s2586 + $0x248] sm:$0xf]
  %v2685 = vld [vmem:[%s2586 + $0x24c] sm:$0xff]
  %v2686 = vld [vmem:[%s2586 + $0x254] sm:$0xf]
  %v2687 = vld [vmem:[%s2586 + $0x258] sm:$0xff]
  %v2688 = vld [vmem:[%s2586 + $0x260] sm:$0xf]
  %v2689 = vld [vmem:[%s2586 + $0x264] sm:$0xff]
  %v2690 = vld [vmem:[%s2586 + $0x26c] sm:$0xf]
  %v2691 = vld [vmem:[%s2586 + $0x270] sm:$0xff]
  %v2692 = vld [vmem:[%s2586 + $0x278] sm:$0xf]
  %v2693 = vld [vmem:[%s2586 + $0x27c] sm:$0xff]
  %v2694 = vld [vmem:[%s2586 + $0x284] sm:$0xf]
  %v2695 = vld [vmem:[%s2586 + $0x288] sm:$0xff]
  %v2696 = vld [vmem:[%s2586 + $0x290] sm:$0xf]
  %v2697 = vld [vmem:[%s2586 + $0x294] sm:$0xff]
  %v2698 = vld [vmem:[%s2586 + $0x29c] sm:$0xf]
  %v2699 = vld [vmem:[%s2586 + $0x2a0] sm:$0xff]
  %v2700 = vld [vmem:[%s2586 + $0x2a8] sm:$0xf]
  %v2701 = vld [vmem:[%s2586 + $0x2ac] sm:$0xff]
  %v2702 = vld [vmem:[%s2586 + $0x2b4] sm:$0xf]
  %v2703 = vld [vmem:[%s2586 + $0x2b8] sm:$0xff]
  %v2704 = vld [vmem:[%s2586 + $0x2c0] sm:$0xf]
  %v2705 = vld [vmem:[%s2586 + $0x2c4] sm:$0xff]
  %v2706 = vld [vmem:[%s2586 + $0x2cc] sm:$0xf]
  %v2707 = vld [vmem:[%s2586 + $0x2d0] sm:$0xff]
  %v2708 = vld [vmem:[%s2586 + $0x2d8] sm:$0xf]
  %v2709 = vld [vmem:[%s2586 + $0x2dc] sm:$0xff]
  %v2710 = vld [vmem:[%s2586 + $0x2e4] sm:$0xf]
  %v2711 = vld [vmem:[%s2586 + $0x2e8] sm:$0xff]
  %v2712 = vld [vmem:[%s2586 + $0x2f0] sm:$0xf]
  %v2713 = vld [vmem:[%s2586 + $0x2f4] sm:$0xff]
  %v2714 = vld [vmem:[%s2586 + $0x2fc] sm:$0xf]
  %v2715 = vld [vmem:[%s2586 + $0x300] sm:$0xff]
  %v2716 = vld [vmem:[%s2586 + $0x308] sm:$0xf]
  %v2717 = vld [vmem:[%s2586 + $0x30c] sm:$0xff]
  %v2718 = vld [vmem:[%s2586 + $0x314] sm:$0xf]
  %v2719 = vld [vmem:[%s2586 + $0x318] sm:$0xff]
  %v2720 = vld [vmem:[%s2586 + $0x320] sm:$0xf]
  %v2721 = vld [vmem:[%s2586 + $0x324] sm:$0xff]
  %v2722 = vld [vmem:[%s2586 + $0x32c] sm:$0xf]
  %v2723 = vld [vmem:[%s2586 + $0x330] sm:$0xff]
  %v2724 = vld [vmem:[%s2586 + $0x338] sm:$0xf]
  %v2725 = vld [vmem:[%s2586 + $0x33c] sm:$0xff]
  %v2726 = vld [vmem:[%s2586 + $0x344] sm:$0xf]
  %v2727 = vld [vmem:[%s2586 + $0x348] sm:$0xff]
  %v2728 = vld [vmem:[%s2586 + $0x350] sm:$0xf]
  %v2729 = vld [vmem:[%s2586 + $0x354] sm:$0xff]
  %v2730 = vld [vmem:[%s2586 + $0x35c] sm:$0xf]
  %v2731 = vld [vmem:[%s2586 + $0x360] sm:$0xff]
  %v2732 = vld [vmem:[%s2586 + $0x368] sm:$0xf]
  %v2733 = vld [vmem:[%s2586 + $0x36c] sm:$0xff]
  %v2734 = vld [vmem:[%s2586 + $0x374] sm:$0xf]
  %v2735 = vld [vmem:[%s2586 + $0x378] sm:$0xff]
  %v2736 = vld [vmem:[%s2586 + $0x380] sm:$0xf]
  %v2737 = vld [vmem:[%s2586 + $0x384] sm:$0xff]
  %v2738 = vld [vmem:[%s2586 + $0x38c] sm:$0xf]
  %v2739 = vld [vmem:[%s2586 + $0x390] sm:$0xff]
  %v2740 = vld [vmem:[%s2586 + $0x398] sm:$0xf]
  %v2741 = vld [vmem:[%s2586 + $0x39c] sm:$0xff]
  %v2742 = vld [vmem:[%s2586 + $0x3a4] sm:$0xf]
  %v2743 = vld [vmem:[%s2586 + $0x3a8] sm:$0xff]
  %v2744 = vld [vmem:[%s2586 + $0x3b0] sm:$0xf]
  %v2745 = vld [vmem:[%s2586 + $0x3b4] sm:$0xff]
  %v2746 = vld [vmem:[%s2586 + $0x3bc] sm:$0xf]
  %v2747 = vld [vmem:[%s2586 + $0x3c0] sm:$0xff]
  %v2748 = vld [vmem:[%s2586 + $0x3c8] sm:$0xf]
  %v2749 = vld [vmem:[%s2586 + $0x3cc] sm:$0xff]
  %v2750 = vld [vmem:[%s2586 + $0x3d4] sm:$0xf]
  %v2751 = vld [vmem:[%s2586 + $0x3d8] sm:$0xff]
  %v2752 = vld [vmem:[%s2586 + $0x3e0] sm:$0xf]
  %v2753 = vld [vmem:[%s2586 + $0x3e4] sm:$0xff]
  %v2754 = vld [vmem:[%s2586 + $0x3ec] sm:$0xf]
  %v2755 = vld [vmem:[%s2586 + $0x3f0] sm:$0xff]
  %v2756 = vld [vmem:[%s2586 + $0x3f8] sm:$0xf]
  %v2757 = vld [vmem:[%s2586 + $0x3fc] sm:$0xff]
  %v2758 = vld [vmem:[%s2586 + $0x404] sm:$0xf]
  %v2759 = vld [vmem:[%s2586 + $0x408] sm:$0xff]
  %v2760 = vld [vmem:[%s2586 + $0x410] sm:$0xf]
  %v2761 = vld [vmem:[%s2586 + $0x414] sm:$0xff]
  %v2762 = vld [vmem:[%s2586 + $0x41c] sm:$0xf]
  %v2763 = vld [vmem:[%s2586 + $0x420] sm:$0xff]
  %v2764 = vld [vmem:[%s2586 + $0x428] sm:$0xf]
  %v2765 = vld [vmem:[%s2586 + $0x42c] sm:$0xff]
  %v2766 = vld [vmem:[%s2586 + $0x434] sm:$0xf]
  %v2767 = vld [vmem:[%s2586 + $0x438] sm:$0xff]
  %v2768 = vld [vmem:[%s2586 + $0x440] sm:$0xf]
  %v2769 = vld [vmem:[%s2586 + $0x444] sm:$0xff]
  %v2770 = vld [vmem:[%s2586 + $0x44c] sm:$0xf]
  %v2771 = vld [vmem:[%s2586 + $0x450] sm:$0xff]
  %v2772 = vld [vmem:[%s2586 + $0x458] sm:$0xf]
  %v2773 = vld [vmem:[%s2586 + $0x45c] sm:$0xff]
  %v2774 = vld [vmem:[%s2586 + $0x464] sm:$0xf]
  %v2775 = vld [vmem:[%s2586 + $0x468] sm:$0xff]
  %v2776 = vld [vmem:[%s2586 + $0x470] sm:$0xf]
  %v2777 = vld [vmem:[%s2586 + $0x474] sm:$0xff]
  %v2778 = vld [vmem:[%s2586 + $0x47c] sm:$0xf]
  %v2779 = vld [vmem:[%s2586 + $0x480] sm:$0xff]
  %v2780 = vld [vmem:[%s2586 + $0x488] sm:$0xf]
  %v2781 = vld [vmem:[%s2586 + $0x48c] sm:$0xff]
  %v2782 = vld [vmem:[%s2586 + $0x494] sm:$0xf]
  %v2783 = vld [vmem:[%s2586 + $0x498] sm:$0xff]
  %v2784 = vld [vmem:[%s2586 + $0x4a0] sm:$0xf]
  %v2785 = vld [vmem:[%s2586 + $0x4a4] sm:$0xff]
  %v2786 = vld [vmem:[%s2586 + $0x4ac] sm:$0xf]
  %v2787 = vld [vmem:[%s2586 + $0x4b0] sm:$0xff]
  %v2788 = vld [vmem:[%s2586 + $0x4b8] sm:$0xf]
  %v2789 = vld [vmem:[%s2586 + $0x4bc] sm:$0xff]
  %v2790 = vld [vmem:[%s2586 + $0x4c4] sm:$0xf]
  %v2791 = vld [vmem:[%s2586 + $0x4c8] sm:$0xff]
  %v2792 = vld [vmem:[%s2586 + $0x4d0] sm:$0xf]
  %v2793 = vld [vmem:[%s2586 + $0x4d4] sm:$0xff]
  %v2794 = vld [vmem:[%s2586 + $0x4dc] sm:$0xf]
  %v2795 = vld [vmem:[%s2586 + $0x4e0] sm:$0xff]
  %v2796 = vld [vmem:[%s2586 + $0x4e8] sm:$0xf]
  %v2797 = vld [vmem:[%s2586 + $0x4ec] sm:$0xff]
  %v2798 = vld [vmem:[%s2586 + $0x4f4] sm:$0xf]
  %v2799 = vld [vmem:[%s2586 + $0x4f8] sm:$0xff]
  %v2800 = vld [vmem:[%s2586 + $0x500] sm:$0xf]
  %v2801 = vld [vmem:[%s2586 + $0x504] sm:$0xff]
  %v2802 = vld [vmem:[%s2586 + $0x50c] sm:$0xf]
  %v3019 = vunpack.c.l.b16 %v2587
  %v3020 = vunpack.c.h.b16 %v2587
  %v3021 = vunpack.c.l.b16 %v2588
  %v3022 = vunpack.c.l.b16 %v2589
  %v3023 = vunpack.c.h.b16 %v2589
  %v3024 = vunpack.c.l.b16 %v2590
  %v3025 = vunpack.c.l.b16 %v2591
  %v3026 = vunpack.c.h.b16 %v2591
  %v3027 = vunpack.c.l.b16 %v2592
  %v3028 = vunpack.c.l.b16 %v2593
  %v3029 = vunpack.c.h.b16 %v2593
  %v3030 = vunpack.c.l.b16 %v2594
  %v3031 = vunpack.c.l.b16 %v2595
  %v3032 = vunpack.c.h.b16 %v2595
  %v3033 = vunpack.c.l.b16 %v2596
  %v3034 = vunpack.c.l.b16 %v2597
  %v3035 = vunpack.c.h.b16 %v2597
  %v3036 = vunpack.c.l.b16 %v2598
  %v3037 = vunpack.c.l.b16 %v2599
  %v3038 = vunpack.c.h.b16 %v2599
  %v3039 = vunpack.c.l.b16 %v2600
  %v3040 = vunpack.c.l.b16 %v2601
  %v3041 = vunpack.c.h.b16 %v2601
  %v3042 = vunpack.c.l.b16 %v2602
  %v3043 = vunpack.c.l.b16 %v2603
  %v3044 = vunpack.c.h.b16 %v2603
  %v3045 = vunpack.c.l.b16 %v2604
  %v3046 = vunpack.c.l.b16 %v2605
  %v3047 = vunpack.c.h.b16 %v2605
  %v3048 = vunpack.c.l.b16 %v2606
  %v3049 = vunpack.c.l.b16 %v2607
  %v3050 = vunpack.c.h.b16 %v2607
  %v3051 = vunpack.c.l.b16 %v2608
  %v3052 = vunpack.c.l.b16 %v2609
  %v3053 = vunpack.c.h.b16 %v2609
  %v3054 = vunpack.c.l.b16 %v2610
  %v3055 = vunpack.c.l.b16 %v2611
  %v3056 = vunpack.c.h.b16 %v2611
  %v3057 = vunpack.c.l.b16 %v2612
  %v3058 = vunpack.c.l.b16 %v2613
  %v3059 = vunpack.c.h.b16 %v2613
  %v3060 = vunpack.c.l.b16 %v2614
  %v3061 = vunpack.c.l.b16 %v2615
  %v3062 = vunpack.c.h.b16 %v2615
  %v3063 = vunpack.c.l.b16 %v2616
  %v3064 = vunpack.c.l.b16 %v2617
  %v3065 = vunpack.c.h.b16 %v2617
  %v3066 = vunpack.c.l.b16 %v2618
  %v3067 = vunpack.c.l.b16 %v2619
  %v3068 = vunpack.c.h.b16 %v2619
  %v3069 = vunpack.c.l.b16 %v2620
  %v3070 = vunpack.c.l.b16 %v2621
  %v3071 = vunpack.c.h.b16 %v2621
  %v3072 = vunpack.c.l.b16 %v2622
  %v3073 = vunpack.c.l.b16 %v2623
  %v3074 = vunpack.c.h.b16 %v2623
  %v3075 = vunpack.c.l.b16 %v2624
  %v3076 = vunpack.c.l.b16 %v2625
  %v3077 = vunpack.c.h.b16 %v2625
  %v3078 = vunpack.c.l.b16 %v2626
  %v3079 = vunpack.c.l.b16 %v2627
  %v3080 = vunpack.c.h.b16 %v2627
  %v3081 = vunpack.c.l.b16 %v2628
  %v3082 = vunpack.c.l.b16 %v2629
  %v3083 = vunpack.c.h.b16 %v2629
  %v3084 = vunpack.c.l.b16 %v2630
  %v3085 = vunpack.c.l.b16 %v2631
  %v3086 = vunpack.c.h.b16 %v2631
  %v3087 = vunpack.c.l.b16 %v2632
  %v3088 = vunpack.c.l.b16 %v2633
  %v3089 = vunpack.c.h.b16 %v2633
  %v3090 = vunpack.c.l.b16 %v2634
  %v3091 = vunpack.c.l.b16 %v2635
  %v3092 = vunpack.c.h.b16 %v2635
  %v3093 = vunpack.c.l.b16 %v2636
  %v3094 = vunpack.c.l.b16 %v2637
  %v3095 = vunpack.c.h.b16 %v2637
  %v3096 = vunpack.c.l.b16 %v2638
  %v3097 = vunpack.c.l.b16 %v2639
  %v3098 = vunpack.c.h.b16 %v2639
  %v3099 = vunpack.c.l.b16 %v2640
  %v3100 = vunpack.c.l.b16 %v2641
  %v3101 = vunpack.c.h.b16 %v2641
  %v3102 = vunpack.c.l.b16 %v2642
  %v3103 = vunpack.c.l.b16 %v2643
  %v3104 = vunpack.c.h.b16 %v2643
  %v3105 = vunpack.c.l.b16 %v2644
  %v3106 = vunpack.c.l.b16 %v2645
  %v3107 = vunpack.c.h.b16 %v2645
  %v3108 = vunpack.c.l.b16 %v2646
  %v3109 = vunpack.c.l.b16 %v2647
  %v3110 = vunpack.c.h.b16 %v2647
  %v3111 = vunpack.c.l.b16 %v2648
  %v3112 = vunpack.c.l.b16 %v2649
  %v3113 = vunpack.c.h.b16 %v2649
  %v3114 = vunpack.c.l.b16 %v2650
  %v3115 = vunpack.c.l.b16 %v2651
  %v3116 = vunpack.c.h.b16 %v2651
  %v3117 = vunpack.c.l.b16 %v2652
  %v3118 = vunpack.c.l.b16 %v2653
  %v3119 = vunpack.c.h.b16 %v2653
  %v3120 = vunpack.c.l.b16 %v2654
  %v3121 = vunpack.c.l.b16 %v2655
  %v3122 = vunpack.c.h.b16 %v2655
  %v3123 = vunpack.c.l.b16 %v2656
  %v3124 = vunpack.c.l.b16 %v2657
  %v3125 = vunpack.c.h.b16 %v2657
  %v3126 = vunpack.c.l.b16 %v2658
  %v3127 = vunpack.c.l.b16 %v2659
  %v3128 = vunpack.c.h.b16 %v2659
  %v3129 = vunpack.c.l.b16 %v2660
  %v3130 = vunpack.c.l.b16 %v2661
  %v3131 = vunpack.c.h.b16 %v2661
  %v3132 = vunpack.c.l.b16 %v2662
  %v3133 = vunpack.c.l.b16 %v2663
  %v3134 = vunpack.c.h.b16 %v2663
  %v3135 = vunpack.c.l.b16 %v2664
  %v3136 = vunpack.c.l.b16 %v2665
  %v3137 = vunpack.c.h.b16 %v2665
  %v3138 = vunpack.c.l.b16 %v2666
  %v3139 = vunpack.c.l.b16 %v2667
  %v3140 = vunpack.c.h.b16 %v2667
  %v3141 = vunpack.c.l.b16 %v2668
  %v3142 = vunpack.c.l.b16 %v2669
  %v3143 = vunpack.c.h.b16 %v2669
  %v3144 = vunpack.c.l.b16 %v2670
  %v3145 = vunpack.c.l.b16 %v2671
  %v3146 = vunpack.c.h.b16 %v2671
  %v3147 = vunpack.c.l.b16 %v2672
  %v3148 = vunpack.c.l.b16 %v2673
  %v3149 = vunpack.c.h.b16 %v2673
  %v3150 = vunpack.c.l.b16 %v2674
  %v3151 = vunpack.c.l.b16 %v2675
  %v3152 = vunpack.c.h.b16 %v2675
  %v3153 = vunpack.c.l.b16 %v2676
  %v3154 = vunpack.c.l.b16 %v2677
  %v3155 = vunpack.c.h.b16 %v2677
  %v3156 = vunpack.c.l.b16 %v2678
  %v3157 = vunpack.c.l.b16 %v2679
  %v3158 = vunpack.c.h.b16 %v2679
  %v3159 = vunpack.c.l.b16 %v2680
  %v3160 = vunpack.c.l.b16 %v2681
  %v3161 = vunpack.c.h.b16 %v2681
  %v3162 = vunpack.c.l.b16 %v2682
  %v3163 = vunpack.c.l.b16 %v2683
  %v3164 = vunpack.c.h.b16 %v2683
  %v3165 = vunpack.c.l.b16 %v2684
  %v3166 = vunpack.c.l.b16 %v2685
  %v3167 = vunpack.c.h.b16 %v2685
  %v3168 = vunpack.c.l.b16 %v2686
  %v3169 = vunpack.c.l.b16 %v2687
  %v3170 = vunpack.c.h.b16 %v2687
  %v3171 = vunpack.c.l.b16 %v2688
  %v3172 = vunpack.c.l.b16 %v2689
  %v3173 = vunpack.c.h.b16 %v2689
  %v3174 = vunpack.c.l.b16 %v2690
  %v3175 = vunpack.c.l.b16 %v2691
  %v3176 = vunpack.c.h.b16 %v2691
  %v3177 = vunpack.c.l.b16 %v2692
  %v3178 = vunpack.c.l.b16 %v2693
  %v3179 = vunpack.c.h.b16 %v2693
  %v3180 = vunpack.c.l.b16 %v2694
  %v3181 = vunpack.c.l.b16 %v2695
  %v3182 = vunpack.c.h.b16 %v2695
  %v3183 = vunpack.c.l.b16 %v2696
  %v3184 = vunpack.c.l.b16 %v2697
  %v3185 = vunpack.c.h.b16 %v2697
  %v3186 = vunpack.c.l.b16 %v2698
  %v3187 = vunpack.c.l.b16 %v2699
  %v3188 = vunpack.c.h.b16 %v2699
  %v3189 = vunpack.c.l.b16 %v2700
  %v3190 = vunpack.c.l.b16 %v2701
  %v3191 = vunpack.c.h.b16 %v2701
  %v3192 = vunpack.c.l.b16 %v2702
  %v3193 = vunpack.c.l.b16 %v2703
  %v3194 = vunpack.c.h.b16 %v2703
  %v3195 = vunpack.c.l.b16 %v2704
  %v3196 = vunpack.c.l.b16 %v2705
  %v3197 = vunpack.c.h.b16 %v2705
  %v3198 = vunpack.c.l.b16 %v2706
  %v3199 = vunpack.c.l.b16 %v2707
  %v3200 = vunpack.c.h.b16 %v2707
  %v3201 = vunpack.c.l.b16 %v2708
  %v3202 = vunpack.c.l.b16 %v2709
  %v3203 = vunpack.c.h.b16 %v2709
  %v3204 = vunpack.c.l.b16 %v2710
  %v3205 = vunpack.c.l.b16 %v2711
  %v3206 = vunpack.c.h.b16 %v2711
  %v3207 = vunpack.c.l.b16 %v2712
  %v3208 = vunpack.c.l.b16 %v2713
  %v3209 = vunpack.c.h.b16 %v2713
  %v3210 = vunpack.c.l.b16 %v2714
  %v3211 = vunpack.c.l.b16 %v2715
  %v3212 = vunpack.c.h.b16 %v2715
  %v3213 = vunpack.c.l.b16 %v2716
  %v3214 = vunpack.c.l.b16 %v2717
  %v3215 = vunpack.c.h.b16 %v2717
  %v3216 = vunpack.c.l.b16 %v2718
  %v3217 = vunpack.c.l.b16 %v2719
  %v3218 = vunpack.c.h.b16 %v2719
  %v3219 = vunpack.c.l.b16 %v2720
  %v3220 = vunpack.c.l.b16 %v2721
  %v3221 = vunpack.c.h.b16 %v2721
  %v3222 = vunpack.c.l.b16 %v2722
  %v3223 = vunpack.c.l.b16 %v2723
  %v3224 = vunpack.c.h.b16 %v2723
  %v3225 = vunpack.c.l.b16 %v2724
  %v3226 = vunpack.c.l.b16 %v2725
  %v3227 = vunpack.c.h.b16 %v2725
  %v3228 = vunpack.c.l.b16 %v2726
  %v3229 = vunpack.c.l.b16 %v2727
  %v3230 = vunpack.c.h.b16 %v2727
  %v3231 = vunpack.c.l.b16 %v2728
  %v3232 = vunpack.c.l.b16 %v2729
  %v3233 = vunpack.c.h.b16 %v2729
  %v3234 = vunpack.c.l.b16 %v2730
  %v3235 = vunpack.c.l.b16 %v2731
  %v3236 = vunpack.c.h.b16 %v2731
  %v3237 = vunpack.c.l.b16 %v2732
  %v3238 = vunpack.c.l.b16 %v2733
  %v3239 = vunpack.c.h.b16 %v2733
  %v3240 = vunpack.c.l.b16 %v2734
  %v3241 = vunpack.c.l.b16 %v2735
  %v3242 = vunpack.c.h.b16 %v2735
  %v3243 = vunpack.c.l.b16 %v2736
  %v3244 = vunpack.c.l.b16 %v2737
  %v3245 = vunpack.c.h.b16 %v2737
  %v3246 = vunpack.c.l.b16 %v2738
  %v3247 = vunpack.c.l.b16 %v2739
  %v3248 = vunpack.c.h.b16 %v2739
  %v3249 = vunpack.c.l.b16 %v2740
  %v3250 = vunpack.c.l.b16 %v2741
  %v3251 = vunpack.c.h.b16 %v2741
  %v3252 = vunpack.c.l.b16 %v2742
  %v3253 = vunpack.c.l.b16 %v2743
  %v3254 = vunpack.c.h.b16 %v2743
  %v3255 = vunpack.c.l.b16 %v2744
  %v3256 = vunpack.c.l.b16 %v2745
  %v3257 = vunpack.c.h.b16 %v2745
  %v3258 = vunpack.c.l.b16 %v2746
  %v3259 = vunpack.c.l.b16 %v2747
  %v3260 = vunpack.c.h.b16 %v2747
  %v3261 = vunpack.c.l.b16 %v2748
  %v3262 = vunpack.c.l.b16 %v2749
  %v3263 = vunpack.c.h.b16 %v2749
  %v3264 = vunpack.c.l.b16 %v2750
  %v3265 = vunpack.c.l.b16 %v2751
  %v3266 = vunpack.c.h.b16 %v2751
  %v3267 = vunpack.c.l.b16 %v2752
  %v3268 = vunpack.c.l.b16 %v2753
  %v3269 = vunpack.c.h.b16 %v2753
  %v3270 = vunpack.c.l.b16 %v2754
  %v3271 = vunpack.c.l.b16 %v2755
  %v3272 = vunpack.c.h.b16 %v2755
  %v3273 = vunpack.c.l.b16 %v2756
  %v3274 = vunpack.c.l.b16 %v2757
  %v3275 = vunpack.c.h.b16 %v2757
  %v3276 = vunpack.c.l.b16 %v2758
  %v3277 = vunpack.c.l.b16 %v2759
  %v3278 = vunpack.c.h.b16 %v2759
  %v3279 = vunpack.c.l.b16 %v2760
  %v3280 = vunpack.c.l.b16 %v2761
  %v3281 = vunpack.c.h.b16 %v2761
  %v3282 = vunpack.c.l.b16 %v2762
  %v3283 = vunpack.c.l.b16 %v2763
  %v3284 = vunpack.c.h.b16 %v2763
  %v3285 = vunpack.c.l.b16 %v2764
  %v3286 = vunpack.c.l.b16 %v2765
  %v3287 = vunpack.c.h.b16 %v2765
  %v3288 = vunpack.c.l.b16 %v2766
  %v3289 = vunpack.c.l.b16 %v2767
  %v3290 = vunpack.c.h.b16 %v2767
  %v3291 = vunpack.c.l.b16 %v2768
  %v3292 = vunpack.c.l.b16 %v2769
  %v3293 = vunpack.c.h.b16 %v2769
  %v3294 = vunpack.c.l.b16 %v2770
  %v3295 = vunpack.c.l.b16 %v2771
  %v3296 = vunpack.c.h.b16 %v2771
  %v3297 = vunpack.c.l.b16 %v2772
  %v3298 = vunpack.c.l.b16 %v2773
  %v3299 = vunpack.c.h.b16 %v2773
  %v3300 = vunpack.c.l.b16 %v2774
  %v3301 = vunpack.c.l.b16 %v2775
  %v3302 = vunpack.c.h.b16 %v2775
  %v3303 = vunpack.c.l.b16 %v2776
  %v3304 = vunpack.c.l.b16 %v2777
  %v3305 = vunpack.c.h.b16 %v2777
  %v3306 = vunpack.c.l.b16 %v2778
  %v3307 = vunpack.c.l.b16 %v2779
  %v3308 = vunpack.c.h.b16 %v2779
  %v3309 = vunpack.c.l.b16 %v2780
  %v3310 = vunpack.c.l.b16 %v2781
  %v3311 = vunpack.c.h.b16 %v2781
  %v3312 = vunpack.c.l.b16 %v2782
  %v3313 = vunpack.c.l.b16 %v2783
  %v3314 = vunpack.c.h.b16 %v2783
  %v3315 = vunpack.c.l.b16 %v2784
  %v3316 = vunpack.c.l.b16 %v2785
  %v3317 = vunpack.c.h.b16 %v2785
  %v3318 = vunpack.c.l.b16 %v2786
  %v3319 = vunpack.c.l.b16 %v2787
  %v3320 = vunpack.c.h.b16 %v2787
  %v3321 = vunpack.c.l.b16 %v2788
  %v3322 = vunpack.c.l.b16 %v2789
  %v3323 = vunpack.c.h.b16 %v2789
  %v3324 = vunpack.c.l.b16 %v2790
  %v3325 = vunpack.c.l.b16 %v2791
  %v3326 = vunpack.c.h.b16 %v2791
  %v3327 = vunpack.c.l.b16 %v2792
  %v3328 = vunpack.c.l.b16 %v2793
  %v3329 = vunpack.c.h.b16 %v2793
  %v3330 = vunpack.c.l.b16 %v2794
  %v3331 = vunpack.c.l.b16 %v2795
  %v3332 = vunpack.c.h.b16 %v2795
  %v3333 = vunpack.c.l.b16 %v2796
  %v3334 = vunpack.c.l.b16 %v2797
  %v3335 = vunpack.c.h.b16 %v2797
  %v3336 = vunpack.c.l.b16 %v2798
  %v3337 = vunpack.c.l.b16 %v2799
  %v3338 = vunpack.c.h.b16 %v2799
  %v3339 = vunpack.c.l.b16 %v2800
  %v3340 = vunpack.c.l.b16 %v2801
  %v3341 = vunpack.c.h.b16 %v2801
  %v3342 = vunpack.c.l.b16 %v2802
  %v3343 = vpack.c.b16 %v3022, %v3019
  %v3344 = vpack.c.b16 %v3023, %v3020
  %v3345 = vpack.c.b16 %v3024, %v3021
  %v3346 = vpack.c.b16 %v3028, %v3025
  %v3347 = vpack.c.b16 %v3029, %v3026
  %v3348 = vpack.c.b16 %v3030, %v3027
  %v3349 = vpack.c.b16 %v3034, %v3031
  %v3350 = vpack.c.b16 %v3035, %v3032
  %v3351 = vpack.c.b16 %v3036, %v3033
  %v3352 = vpack.c.b16 %v3040, %v3037
  %v3353 = vpack.c.b16 %v3041, %v3038
  %v3354 = vpack.c.b16 %v3042, %v3039
  %v3355 = vpack.c.b16 %v3046, %v3043
  %v3356 = vpack.c.b16 %v3047, %v3044
  %v3357 = vpack.c.b16 %v3048, %v3045
  %v3358 = vpack.c.b16 %v3052, %v3049
  %v3359 = vpack.c.b16 %v3053, %v3050
  %v3360 = vpack.c.b16 %v3054, %v3051
  %v3361 = vpack.c.b16 %v3058, %v3055
  %v3362 = vpack.c.b16 %v3059, %v3056
  %v3363 = vpack.c.b16 %v3060, %v3057
  %v3364 = vpack.c.b16 %v3064, %v3061
  %v3365 = vpack.c.b16 %v3065, %v3062
  %v3366 = vpack.c.b16 %v3066, %v3063
  %v3367 = vpack.c.b16 %v3070, %v3067
  %v3368 = vpack.c.b16 %v3071, %v3068
  %v3369 = vpack.c.b16 %v3072, %v3069
  %v3370 = vpack.c.b16 %v3076, %v3073
  %v3371 = vpack.c.b16 %v3077, %v3074
  %v3372 = vpack.c.b16 %v3078, %v3075
  %v3373 = vpack.c.b16 %v3082, %v3079
  %v3374 = vpack.c.b16 %v3083, %v3080
  %v3375 = vpack.c.b16 %v3084, %v3081
  %v3376 = vpack.c.b16 %v3088, %v3085
  %v3377 = vpack.c.b16 %v3089, %v3086
  %v3378 = vpack.c.b16 %v3090, %v3087
  %v3379 = vpack.c.b16 %v3094, %v3091
  %v3380 = vpack.c.b16 %v3095, %v3092
  %v3381 = vpack.c.b16 %v3096, %v3093
  %v3382 = vpack.c.b16 %v3100, %v3097
  %v3383 = vpack.c.b16 %v3101, %v3098
  %v3384 = vpack.c.b16 %v3102, %v3099
  %v3385 = vpack.c.b16 %v3106, %v3103
  %v3386 = vpack.c.b16 %v3107, %v3104
  %v3387 = vpack.c.b16 %v3108, %v3105
  %v3388 = vpack.c.b16 %v3112, %v3109
  %v3389 = vpack.c.b16 %v3113, %v3110
  %v3390 = vpack.c.b16 %v3114, %v3111
  %v3391 = vpack.c.b16 %v3118, %v3115
  %v3392 = vpack.c.b16 %v3119, %v3116
  %v3393 = vpack.c.b16 %v3120, %v3117
  %v3394 = vpack.c.b16 %v3124, %v3121
  %v3395 = vpack.c.b16 %v3125, %v3122
  %v3396 = vpack.c.b16 %v3126, %v3123
  %v3397 = vpack.c.b16 %v3130, %v3127
  %v3398 = vpack.c.b16 %v3131, %v3128
  %v3399 = vpack.c.b16 %v3132, %v3129
  %v3400 = vpack.c.b16 %v3136, %v3133
  %v3401 = vpack.c.b16 %v3137, %v3134
  %v3402 = vpack.c.b16 %v3138, %v3135
  %v3403 = vpack.c.b16 %v3142, %v3139
  %v3404 = vpack.c.b16 %v3143, %v3140
  %v3405 = vpack.c.b16 %v3144, %v3141
  %v3406 = vpack.c.b16 %v3148, %v3145
  %v3407 = vpack.c.b16 %v3149, %v3146
  %v3408 = vpack.c.b16 %v3150, %v3147
  %v3409 = vpack.c.b16 %v3154, %v3151
  %v3410 = vpack.c.b16 %v3155, %v3152
  %v3411 = vpack.c.b16 %v3156, %v3153
  %v3412 = vpack.c.b16 %v3160, %v3157
  %v3413 = vpack.c.b16 %v3161, %v3158
  %v3414 = vpack.c.b16 %v3162, %v3159
  %v3415 = vpack.c.b16 %v3166, %v3163
  %v3416 = vpack.c.b16 %v3167, %v3164
  %v3417 = vpack.c.b16 %v3168, %v3165
  %v3418 = vpack.c.b16 %v3172, %v3169
  %v3419 = vpack.c.b16 %v3173, %v3170
  %v3420 = vpack.c.b16 %v3174, %v3171
  %v3421 = vpack.c.b16 %v3178, %v3175
  %v3422 = vpack.c.b16 %v3179, %v3176
  %v3423 = vpack.c.b16 %v3180, %v3177
  %v3424 = vpack.c.b16 %v3184, %v3181
  %v3425 = vpack.c.b16 %v3185, %v3182
  %v3426 = vpack.c.b16 %v3186, %v3183
  %v3427 = vpack.c.b16 %v3190, %v3187
  %v3428 = vpack.c.b16 %v3191, %v3188
  %v3429 = vpack.c.b16 %v3192, %v3189
  %v3430 = vpack.c.b16 %v3196, %v3193
  %v3431 = vpack.c.b16 %v3197, %v3194
  %v3432 = vpack.c.b16 %v3198, %v3195
  %v3433 = vpack.c.b16 %v3202, %v3199
  %v3434 = vpack.c.b16 %v3203, %v3200
  %v3435 = vpack.c.b16 %v3204, %v3201
  %v3436 = vpack.c.b16 %v3208, %v3205
  %v3437 = vpack.c.b16 %v3209, %v3206
  %v3438 = vpack.c.b16 %v3210, %v3207
  %v3439 = vpack.c.b16 %v3214, %v3211
  %v3440 = vpack.c.b16 %v3215, %v3212
  %v3441 = vpack.c.b16 %v3216, %v3213
  %v3442 = vpack.c.b16 %v3220, %v3217
  %v3443 = vpack.c.b16 %v3221, %v3218
  %v3444 = vpack.c.b16 %v3222, %v3219
  %v3445 = vpack.c.b16 %v3226, %v3223
  %v3446 = vpack.c.b16 %v3227, %v3224
  %v3447 = vpack.c.b16 %v3228, %v3225
  %v3448 = vpack.c.b16 %v3232, %v3229
  %v3449 = vpack.c.b16 %v3233, %v3230
  %v3450 = vpack.c.b16 %v3234, %v3231
  %v3451 = vpack.c.b16 %v3238, %v3235
  %v3452 = vpack.c.b16 %v3239, %v3236
  %v3453 = vpack.c.b16 %v3240, %v3237
  %v3454 = vpack.c.b16 %v3244, %v3241
  %v3455 = vpack.c.b16 %v3245, %v3242
  %v3456 = vpack.c.b16 %v3246, %v3243
  %v3457 = vpack.c.b16 %v3250, %v3247
  %v3458 = vpack.c.b16 %v3251, %v3248
  %v3459 = vpack.c.b16 %v3252, %v3249
  %v3460 = vpack.c.b16 %v3256, %v3253
  %v3461 = vpack.c.b16 %v3257, %v3254
  %v3462 = vpack.c.b16 %v3258, %v3255
  %v3463 = vpack.c.b16 %v3262, %v3259
  %v3464 = vpack.c.b16 %v3263, %v3260
  %v3465 = vpack.c.b16 %v3264, %v3261
  %v3466 = vpack.c.b16 %v3268, %v3265
  %v3467 = vpack.c.b16 %v3269, %v3266
  %v3468 = vpack.c.b16 %v3270, %v3267
  %v3469 = vpack.c.b16 %v3274, %v3271
  %v3470 = vpack.c.b16 %v3275, %v3272
  %v3471 = vpack.c.b16 %v3276, %v3273
  %v3472 = vpack.c.b16 %v3280, %v3277
  %v3473 = vpack.c.b16 %v3281, %v3278
  %v3474 = vpack.c.b16 %v3282, %v3279
  %v3475 = vpack.c.b16 %v3286, %v3283
  %v3476 = vpack.c.b16 %v3287, %v3284
  %v3477 = vpack.c.b16 %v3288, %v3285
  %v3478 = vpack.c.b16 %v3292, %v3289
  %v3479 = vpack.c.b16 %v3293, %v3290
  %v3480 = vpack.c.b16 %v3294, %v3291
  %v3481 = vpack.c.b16 %v3298, %v3295
  %v3482 = vpack.c.b16 %v3299, %v3296
  %v3483 = vpack.c.b16 %v3300, %v3297
  %v3484 = vpack.c.b16 %v3304, %v3301
  %v3485 = vpack.c.b16 %v3305, %v3302
  %v3486 = vpack.c.b16 %v3306, %v3303
  %v3487 = vpack.c.b16 %v3310, %v3307
  %v3488 = vpack.c.b16 %v3311, %v3308
  %v3489 = vpack.c.b16 %v3312, %v3309
  %v3490 = vpack.c.b16 %v3316, %v3313
  %v3491 = vpack.c.b16 %v3317, %v3314
  %v3492 = vpack.c.b16 %v3318, %v3315
  %v3493 = vpack.c.b16 %v3322, %v3319
  %v3494 = vpack.c.b16 %v3323, %v3320
  %v3495 = vpack.c.b16 %v3324, %v3321
  %v3496 = vpack.c.b16 %v3328, %v3325
  %v3497 = vpack.c.b16 %v3329, %v3326
  %v3498 = vpack.c.b16 %v3330, %v3327
  %v3499 = vpack.c.b16 %v3334, %v3331
  %v3500 = vpack.c.b16 %v3335, %v3332
  %v3501 = vpack.c.b16 %v3336, %v3333
  %v3502 = vpack.c.b16 %v3340, %v3337
  %v3503 = vpack.c.b16 %v3341, %v3338
  %v3504 = vpack.c.b16 %v3342, %v3339
  %v3614 = vsel %vm1112, %v3345, 0
  %v3617 = vsel %vm1112, %v3348, 0
  %v3620 = vsel %vm1112, %v3351, 0
  %v3623 = vsel %vm1112, %v3354, 0
  %v3626 = vsel %vm1112, %v3357, 0
  %v3629 = vsel %vm1112, %v3360, 0
  %v3632 = vsel %vm1112, %v3363, 0
  %v3635 = vsel %vm1112, %v3366, 0
  %v3638 = vsel %vm1112, %v3369, 0
  %v3641 = vsel %vm1112, %v3372, 0
  %v3644 = vsel %vm1112, %v3375, 0
  %v3647 = vsel %vm1112, %v3378, 0
  %v3650 = vsel %vm1112, %v3381, 0
  %v3653 = vsel %vm1112, %v3384, 0
  %v3656 = vsel %vm1112, %v3387, 0
  %v3659 = vsel %vm1112, %v3390, 0
  %v3662 = vsel %vm1112, %v3393, 0
  %v3665 = vsel %vm1112, %v3396, 0
  %v3668 = vsel %vm1112, %v3399, 0
  %v3671 = vsel %vm1112, %v3402, 0
  %v3674 = vsel %vm1112, %v3405, 0
  %v3677 = vsel %vm1112, %v3408, 0
  %v3680 = vsel %vm1112, %v3411, 0
  %v3683 = vsel %vm1112, %v3414, 0
  %v3686 = vsel %vm1112, %v3417, 0
  %v3689 = vsel %vm1112, %v3420, 0
  %v3692 = vsel %vm1112, %v3423, 0
  %v3695 = vsel %vm1112, %v3426, 0
  %v3698 = vsel %vm1112, %v3429, 0
  %v3701 = vsel %vm1112, %v3432, 0
  %v3704 = vsel %vm1112, %v3435, 0
  %v3707 = vsel %vm1112, %v3438, 0
  %v3710 = vsel %vm1112, %v3441, 0
  %v3713 = vsel %vm1112, %v3444, 0
  %v3716 = vsel %vm1112, %v3447, 0
  %v3719 = vsel %vm1112, %v3450, 0
  %v3722 = vsel %vm1112, %v3453, 0
  %v3725 = vsel %vm1112, %v3456, 0
  %v3728 = vsel %vm1112, %v3459, 0
  %v3731 = vsel %vm1112, %v3462, 0
  %v3734 = vsel %vm1112, %v3465, 0
  %v3737 = vsel %vm1112, %v3468, 0
  %v3740 = vsel %vm1112, %v3471, 0
  %v3743 = vsel %vm1112, %v3474, 0
  %v3746 = vsel %vm1112, %v3477, 0
  %v3749 = vsel %vm1112, %v3480, 0
  %v3752 = vsel %vm1112, %v3483, 0
  %v3755 = vsel %vm1112, %v3486, 0
  %v3758 = vsel %vm1112, %v3489, 0
  %v3761 = vsel %vm1112, %v3492, 0
  %v3764 = vsel %vm1112, %v3495, 0
  %v3767 = vsel %vm1112, %v3498, 0
  %v3770 = vsel %vm1112, %v3501, 0
  %v3773 = vsel %vm1112, %v3504, 0
  %v3776 = vsel %vm1275, %v2585, 0
  %3778 = vmatprep.subr.bf16.mxu0 0
  %3779 = vmatpush1.bf16.msra.mxu0 %v2568
  %3780 = vmatprep.subr.bf16.mxu0 0
  %3781 = vmatpush1.bf16.msra.mxu0 %v2569
  %3782 = vmatprep.subr.bf16.mxu0 0
  %3783 = vmatpush1.bf16.msra.mxu0 %v2570
  %3784 = vmatprep.subr.bf16.mxu0 0
  %3785 = vmatpush1.bf16.msra.mxu0 %v2571
  %3786 = vmatprep.subr.bf16.mxu0 0
  %3787 = vmatpush1.bf16.msra.mxu0 %v2572
  %3788 = vmatprep.subr.bf16.mxu0 0
  %3789 = vmatpush1.bf16.msra.mxu0 %v2573
  %3790 = vmatprep.subr.bf16.mxu0 0
  %3791 = vmatpush1.bf16.msra.mxu0 %v2574
  %3792 = vmatprep.subr.bf16.mxu0 0
  %3793 = vmatpush1.bf16.msra.mxu0 %v2575
  %3794 = vmatprep.subr.bf16.mxu0 0
  %3795 = vmatpush1.bf16.msra.mxu0 %v2576
  %3796 = vmatprep.subr.bf16.mxu0 0
  %3797 = vmatpush1.bf16.msra.mxu0 %v2577
  %3798 = vmatprep.subr.bf16.mxu0 0
  %3799 = vmatpush1.bf16.msra.mxu0 %v2578
  %3800 = vmatprep.subr.bf16.mxu0 0
  %3801 = vmatpush1.bf16.msra.mxu0 %v2579
  %3802 = vmatprep.subr.bf16.mxu0 0
  %3803 = vmatpush1.bf16.msra.mxu0 %v2580
  %3804 = vmatprep.subr.bf16.mxu0 0
  %3805 = vmatpush1.bf16.msra.mxu0 %v2581
  %3806 = vmatprep.subr.bf16.mxu0 0
  %3807 = vmatpush1.bf16.msra.mxu0 %v2582
  %3808 = vmatprep.subr.bf16.mxu0 0
  %3809 = vmatpush1.bf16.msra.mxu0 %v2583
  %3810 = vmatprep.mubr.bf16.mxu0 %v3344
  %3811 = vmatmul.mubr.bf16.gmra.mrb[0].mxu0 %v3343
  %v3812 = vpop.f32.mrb[0].mxu0
  %v3813 = vadd.f32 0.0, %v3812
  %v3814 = vpop.f32.mrb[0].mxu0
  %v3815 = vpop.f32.mrb[0].mxu0
  %v3816 = vadd.f32 0.0, %v3815
  %v3817 = vpop.f32.mrb[0].mxu0
  %3818 = vmatprep.mubr.bf16.mxu0 %v3347
  %3819 = vmatmul.mubr.bf16.gmra.mrb[0].mxu0 %v3346
  %v3820 = vpop.f32.mrb[0].mxu0
  %v3821 = vadd.f32 0.0, %v3820
  %v3822 = vpop.f32.mrb[0].mxu0
  %v3823 = vpop.f32.mrb[0].mxu0
  %v3824 = vadd.f32 0.0, %v3823
  %v3825 = vpop.f32.mrb[0].mxu0
  %3826 = vmatprep.mubr.bf16.mxu0 %v3350
  %3827 = vmatmul.mubr.bf16.gmra.mrb[0].mxu0 %v3349
  %v3828 = vpop.f32.mrb[0].mxu0
  %v3829 = vadd.f32 0.0, %v3828
  %v3830 = vpop.f32.mrb[0].mxu0
  %v3831 = vpop.f32.mrb[0].mxu0
  %v3832 = vadd.f32 0.0, %v3831
  %v3833 = vpop.f32.mrb[0].mxu0
  %3834 = vmatprep.mubr.bf16.mxu0 %v3353
  %3835 = vmatmul.mubr.bf16.gmra.mrb[0].mxu0 %v3352
  %v3836 = vpop.f32.mrb[0].mxu0
  %v3837 = vadd.f32 0.0, %v3836
  %v3838 = vpop.f32.mrb[0].mxu0
  %v3839 = vpop.f32.mrb[0].mxu0
  %v3840 = vadd.f32 0.0, %v3839
  %v3841 = vpop.f32.mrb[0].mxu0
  %3842 = vmatprep.mubr.bf16.mxu0 %v3356
  %3843 = vmatmul.mubr.bf16.gmra.mrb[0].mxu0 %v3355
  %v3844 = vpop.f32.mrb[0].mxu0
  %v3845 = vadd.f32 0.0, %v3844
  %v3846 = vpop.f32.mrb[0].mxu0
  %v3847 = vpop.f32.mrb[0].mxu0
  %v3848 = vadd.f32 0.0, %v3847
  %v3849 = vpop.f32.mrb[0].mxu0
  %3850 = vmatprep.mubr.bf16.mxu0 %v3359
  %3851 = vmatmul.mubr.bf16.gmra.mrb[0].mxu0 %v3358
  %v3852 = vpop.f32.mrb[0].mxu0
  %v3853 = vadd.f32 0.0, %v3852
  %v3854 = vpop.f32.mrb[0].mxu0
  %v3855 = vpop.f32.mrb[0].mxu0
  %v3856 = vadd.f32 0.0, %v3855
  %v3857 = vpop.f32.mrb[0].mxu0
  %3858 = vmatprep.mubr.bf16.mxu0 %v3362
  %3859 = vmatmul.mubr.bf16.gmra.mrb[0].mxu0 %v3361
  %v3860 = vpop.f32.mrb[0].mxu0
  %v3861 = vadd.f32 0.0, %v3860
  %v3862 = vpop.f32.mrb[0].mxu0
  %v3863 = vpop.f32.mrb[0].mxu0
  %v3864 = vadd.f32 0.0, %v3863
  %v3865 = vpop.f32.mrb[0].mxu0
  %3866 = vmatprep.mubr.bf16.mxu0 %v3365
  %3867 = vmatmul.mubr.bf16.gmra.mrb[0].mxu0 %v3364
  %v3868 = vpop.f32.mrb[0].mxu0
  %v3869 = vadd.f32 0.0, %v3868
  %v3870 = vpop.f32.mrb[0].mxu0
  %v3871 = vpop.f32.mrb[0].mxu0
  %v3872 = vadd.f32 0.0, %v3871
  %v3873 = vpop.f32.mrb[0].mxu0
  %3874 = vmatprep.mubr.bf16.mxu0 %v3368
  %3875 = vmatmul.mubr.bf16.gmra.mrb[0].mxu0 %v3367
  %v3876 = vpop.f32.mrb[0].mxu0
  %v3877 = vadd.f32 0.0, %v3876
  %v3878 = vpop.f32.mrb[0].mxu0
  %v3879 = vpop.f32.mrb[0].mxu0
  %v3880 = vadd.f32 0.0, %v3879
  %v3881 = vpop.f32.mrb[0].mxu0
  %3882 = vmatprep.mubr.bf16.mxu0 %v3371
  %3883 = vmatmul.mubr.bf16.gmra.mrb[0].mxu0 %v3370
  %v3884 = vpop.f32.mrb[0].mxu0
  %v3885 = vadd.f32 0.0, %v3884
  %v3886 = vpop.f32.mrb[0].mxu0
  %v3887 = vpop.f32.mrb[0].mxu0
  %v3888 = vadd.f32 0.0, %v3887
  %v3889 = vpop.f32.mrb[0].mxu0
  %3890 = vmatprep.mubr.bf16.mxu0 %v3374
  %3891 = vmatmul.mubr.bf16.gmra.mrb[0].mxu0 %v3373
  %v3892 = vpop.f32.mrb[0].mxu0
  %v3893 = vadd.f32 0.0, %v3892
  %v3894 = vpop.f32.mrb[0].mxu0
  %v3895 = vpop.f32.mrb[0].mxu0
  %v3896 = vadd.f32 0.0, %v3895
  %v3897 = vpop.f32.mrb[0].mxu0
  %3898 = vmatprep.mubr.bf16.mxu0 %v3377
  %3899 = vmatmul.mubr.bf16.gmra.mrb[0].mxu0 %v3376
  %v3900 = vpop.f32.mrb[0].mxu0
  %v3901 = vadd.f32 0.0, %v3900
  %v3902 = vpop.f32.mrb[0].mxu0
  %v3903 = vpop.f32.mrb[0].mxu0
  %v3904 = vadd.f32 0.0, %v3903
  %v3905 = vpop.f32.mrb[0].mxu0
  %3906 = vmatprep.mubr.bf16.mxu0 %v3380
  %3907 = vmatmul.mubr.bf16.gmra.mrb[0].mxu0 %v3379
  %v3908 = vpop.f32.mrb[0].mxu0
  %v3909 = vadd.f32 0.0, %v3908
  %v3910 = vpop.f32.mrb[0].mxu0
  %v3911 = vpop.f32.mrb[0].mxu0
  %v3912 = vadd.f32 0.0, %v3911
  %v3913 = vpop.f32.mrb[0].mxu0
  %3914 = vmatprep.mubr.bf16.mxu0 %v3383
  %3915 = vmatmul.mubr.bf16.gmra.mrb[0].mxu0 %v3382
  %v3916 = vpop.f32.mrb[0].mxu0
  %v3917 = vadd.f32 0.0, %v3916
  %v3918 = vpop.f32.mrb[0].mxu0
  %v3919 = vpop.f32.mrb[0].mxu0
  %v3920 = vadd.f32 0.0, %v3919
  %v3921 = vpop.f32.mrb[0].mxu0
  %3922 = vmatprep.mubr.bf16.mxu0 %v3386
  %3923 = vmatmul.mubr.bf16.gmra.mrb[0].mxu0 %v3385
  %v3924 = vpop.f32.mrb[0].mxu0
  %v3925 = vadd.f32 0.0, %v3924
  %v3926 = vpop.f32.mrb[0].mxu0
  %v3927 = vpop.f32.mrb[0].mxu0
  %v3928 = vadd.f32 0.0, %v3927
  %v3929 = vpop.f32.mrb[0].mxu0
  %3930 = vmatprep.mubr.bf16.mxu0 %v3389
  %3931 = vmatmul.mubr.bf16.gmra.mrb[0].mxu0 %v3388
  %v3932 = vpop.f32.mrb[0].mxu0
  %v3933 = vadd.f32 0.0, %v3932
  %v3934 = vpop.f32.mrb[0].mxu0
  %v3935 = vpop.f32.mrb[0].mxu0
  %v3936 = vadd.f32 0.0, %v3935
  %v3937 = vpop.f32.mrb[0].mxu0
  %3938 = vmatprep.mubr.bf16.mxu0 %v3392
  %3939 = vmatmul.mubr.bf16.gmra.mrb[0].mxu0 %v3391
  %v3940 = vpop.f32.mrb[0].mxu0
  %v3941 = vadd.f32 0.0, %v3940
  %v3942 = vpop.f32.mrb[0].mxu0
  %v3943 = vpop.f32.mrb[0].mxu0
  %v3944 = vadd.f32 0.0, %v3943
  %v3945 = vpop.f32.mrb[0].mxu0
  %3946 = vmatprep.mubr.bf16.mxu0 %v3395
  %3947 = vmatmul.mubr.bf16.gmra.mrb[0].mxu0 %v3394
  %v3948 = vpop.f32.mrb[0].mxu0
  %v3949 = vadd.f32 0.0, %v3948
  %v3950 = vpop.f32.mrb[0].mxu0
  %v3951 = vpop.f32.mrb[0].mxu0
  %v3952 = vadd.f32 0.0, %v3951
  %v3953 = vpop.f32.mrb[0].mxu0
  %3954 = vmatprep.mubr.bf16.mxu0 %v3398
  %3955 = vmatmul.mubr.bf16.gmra.mrb[0].mxu0 %v3397
  %v3956 = vpop.f32.mrb[0].mxu0
  %v3957 = vadd.f32 0.0, %v3956
  %v3958 = vpop.f32.mrb[0].mxu0
  %v3959 = vpop.f32.mrb[0].mxu0
  %v3960 = vadd.f32 0.0, %v3959
  %v3961 = vpop.f32.mrb[0].mxu0
  %3962 = vmatprep.mubr.bf16.mxu0 %v3401
  %3963 = vmatmul.mubr.bf16.gmra.mrb[0].mxu0 %v3400
  %v3964 = vpop.f32.mrb[0].mxu0
  %v3965 = vadd.f32 0.0, %v3964
  %v3966 = vpop.f32.mrb[0].mxu0
  %v3967 = vpop.f32.mrb[0].mxu0
  %v3968 = vadd.f32 0.0, %v3967
  %v3969 = vpop.f32.mrb[0].mxu0
  %3970 = vmatprep.mubr.bf16.mxu0 %v3404
  %3971 = vmatmul.mubr.bf16.gmra.mrb[0].mxu0 %v3403
  %v3972 = vpop.f32.mrb[0].mxu0
  %v3973 = vadd.f32 0.0, %v3972
  %v3974 = vpop.f32.mrb[0].mxu0
  %v3975 = vpop.f32.mrb[0].mxu0
  %v3976 = vadd.f32 0.0, %v3975
  %v3977 = vpop.f32.mrb[0].mxu0
  %3978 = vmatprep.mubr.bf16.mxu0 %v3407
  %3979 = vmatmul.mubr.bf16.gmra.mrb[0].mxu0 %v3406
  %v3980 = vpop.f32.mrb[0].mxu0
  %v3981 = vadd.f32 0.0, %v3980
  %v3982 = vpop.f32.mrb[0].mxu0
  %v3983 = vpop.f32.mrb[0].mxu0
  %v3984 = vadd.f32 0.0, %v3983
  %v3985 = vpop.f32.mrb[0].mxu0
  %3986 = vmatprep.mubr.bf16.mxu0 %v3410
  %3987 = vmatmul.mubr.bf16.gmra.mrb[0].mxu0 %v3409
  %v3988 = vpop.f32.mrb[0].mxu0
  %v3989 = vadd.f32 0.0, %v3988
  %v3990 = vpop.f32.mrb[0].mxu0
  %v3991 = vpop.f32.mrb[0].mxu0
  %v3992 = vadd.f32 0.0, %v3991
  %v3993 = vpop.f32.mrb[0].mxu0
  %3994 = vmatprep.mubr.bf16.mxu0 %v3413
  %3995 = vmatmul.mubr.bf16.gmra.mrb[0].mxu0 %v3412
  %v3996 = vpop.f32.mrb[0].mxu0
  %v3997 = vadd.f32 0.0, %v3996
  %v3998 = vpop.f32.mrb[0].mxu0
  %v3999 = vpop.f32.mrb[0].mxu0
  %v4000 = vadd.f32 0.0, %v3999
  %v4001 = vpop.f32.mrb[0].mxu0
  %4002 = vmatprep.mubr.bf16.mxu0 %v3416
  %4003 = vmatmul.mubr.bf16.gmra.mrb[0].mxu0 %v3415
  %v4004 = vpop.f32.mrb[0].mxu0
  %v4005 = vadd.f32 0.0, %v4004
  %v4006 = vpop.f32.mrb[0].mxu0
  %v4007 = vpop.f32.mrb[0].mxu0
  %v4008 = vadd.f32 0.0, %v4007
  %v4009 = vpop.f32.mrb[0].mxu0
  %4010 = vmatprep.mubr.bf16.mxu0 %v3419
  %4011 = vmatmul.mubr.bf16.gmra.mrb[0].mxu0 %v3418
  %v4012 = vpop.f32.mrb[0].mxu0
  %v4013 = vadd.f32 0.0, %v4012
  %v4014 = vpop.f32.mrb[0].mxu0
  %v4015 = vpop.f32.mrb[0].mxu0
  %v4016 = vadd.f32 0.0, %v4015
  %v4017 = vpop.f32.mrb[0].mxu0
  %4018 = vmatprep.mubr.bf16.mxu0 %v3422
  %4019 = vmatmul.mubr.bf16.gmra.mrb[0].mxu0 %v3421
  %v4020 = vpop.f32.mrb[0].mxu0
  %v4021 = vadd.f32 0.0, %v4020
  %v4022 = vpop.f32.mrb[0].mxu0
  %v4023 = vpop.f32.mrb[0].mxu0
  %v4024 = vadd.f32 0.0, %v4023
  %v4025 = vpop.f32.mrb[0].mxu0
  %4026 = vmatprep.mubr.bf16.mxu0 %v3425
  %4027 = vmatmul.mubr.bf16.gmra.mrb[0].mxu0 %v3424
  %v4028 = vpop.f32.mrb[0].mxu0
  %v4029 = vadd.f32 0.0, %v4028
  %v4030 = vpop.f32.mrb[0].mxu0
  %v4031 = vpop.f32.mrb[0].mxu0
  %v4032 = vadd.f32 0.0, %v4031
  %v4033 = vpop.f32.mrb[0].mxu0
  %4034 = vmatprep.mubr.bf16.mxu0 %v3428
  %4035 = vmatmul.mubr.bf16.gmra.mrb[0].mxu0 %v3427
  %v4036 = vpop.f32.mrb[0].mxu0
  %v4037 = vadd.f32 0.0, %v4036
  %v4038 = vpop.f32.mrb[0].mxu0
  %v4039 = vpop.f32.mrb[0].mxu0
  %v4040 = vadd.f32 0.0, %v4039
  %v4041 = vpop.f32.mrb[0].mxu0
  %4042 = vmatprep.mubr.bf16.mxu0 %v3431
  %4043 = vmatmul.mubr.bf16.gmra.mrb[0].mxu0 %v3430
  %v4044 = vpop.f32.mrb[0].mxu0
  %v4045 = vadd.f32 0.0, %v4044
  %v4046 = vpop.f32.mrb[0].mxu0
  %v4047 = vpop.f32.mrb[0].mxu0
  %v4048 = vadd.f32 0.0, %v4047
  %v4049 = vpop.f32.mrb[0].mxu0
  %4050 = vmatprep.mubr.bf16.mxu0 %v3434
  %4051 = vmatmul.mubr.bf16.gmra.mrb[0].mxu0 %v3433
  %v4052 = vpop.f32.mrb[0].mxu0
  %v4053 = vadd.f32 0.0, %v4052
  %v4054 = vpop.f32.mrb[0].mxu0
  %v4055 = vpop.f32.mrb[0].mxu0
  %v4056 = vadd.f32 0.0, %v4055
  %v4057 = vpop.f32.mrb[0].mxu0
  %4058 = vmatprep.mubr.bf16.mxu0 %v3437
  %4059 = vmatmul.mubr.bf16.gmra.mrb[0].mxu0 %v3436
  %v4060 = vpop.f32.mrb[0].mxu0
  %v4061 = vadd.f32 0.0, %v4060
  %v4062 = vpop.f32.mrb[0].mxu0
  %v4063 = vpop.f32.mrb[0].mxu0
  %v4064 = vadd.f32 0.0, %v4063
  %v4065 = vpop.f32.mrb[0].mxu0
  %4066 = vmatprep.mubr.bf16.mxu0 %v3440
  %4067 = vmatmul.mubr.bf16.gmra.mrb[0].mxu0 %v3439
  %v4068 = vpop.f32.mrb[0].mxu0
  %v4069 = vadd.f32 0.0, %v4068
  %v4070 = vpop.f32.mrb[0].mxu0
  %v4071 = vpop.f32.mrb[0].mxu0
  %v4072 = vadd.f32 0.0, %v4071
  %v4073 = vpop.f32.mrb[0].mxu0
  %4074 = vmatprep.mubr.bf16.mxu0 %v3443
  %4075 = vmatmul.mubr.bf16.gmra.mrb[0].mxu0 %v3442
  %v4076 = vpop.f32.mrb[0].mxu0
  %v4077 = vadd.f32 0.0, %v4076
  %v4078 = vpop.f32.mrb[0].mxu0
  %v4079 = vpop.f32.mrb[0].mxu0
  %v4080 = vadd.f32 0.0, %v4079
  %v4081 = vpop.f32.mrb[0].mxu0
  %4082 = vmatprep.mubr.bf16.mxu0 %v3446
  %4083 = vmatmul.mubr.bf16.gmra.mrb[0].mxu0 %v3445
  %v4084 = vpop.f32.mrb[0].mxu0
  %v4085 = vadd.f32 0.0, %v4084
  %v4086 = vpop.f32.mrb[0].mxu0
  %v4087 = vpop.f32.mrb[0].mxu0
  %v4088 = vadd.f32 0.0, %v4087
  %v4089 = vpop.f32.mrb[0].mxu0
  %4090 = vmatprep.mubr.bf16.mxu0 %v3449
  %4091 = vmatmul.mubr.bf16.gmra.mrb[0].mxu0 %v3448
  %v4092 = vpop.f32.mrb[0].mxu0
  %v4093 = vadd.f32 0.0, %v4092
  %v4094 = vpop.f32.mrb[0].mxu0
  %v4095 = vpop.f32.mrb[0].mxu0
  %v4096 = vadd.f32 0.0, %v4095
  %v4097 = vpop.f32.mrb[0].mxu0
  %4098 = vmatprep.mubr.bf16.mxu0 %v3452
  %4099 = vmatmul.mubr.bf16.gmra.mrb[0].mxu0 %v3451
  %v4100 = vpop.f32.mrb[0].mxu0
  %v4101 = vadd.f32 0.0, %v4100
  %v4102 = vpop.f32.mrb[0].mxu0
  %v4103 = vpop.f32.mrb[0].mxu0
  %v4104 = vadd.f32 0.0, %v4103
  %v4105 = vpop.f32.mrb[0].mxu0
  %4106 = vmatprep.mubr.bf16.mxu0 %v3455
  %4107 = vmatmul.mubr.bf16.gmra.mrb[0].mxu0 %v3454
  %v4108 = vpop.f32.mrb[0].mxu0
  %v4109 = vadd.f32 0.0, %v4108
  %v4110 = vpop.f32.mrb[0].mxu0
  %v4111 = vpop.f32.mrb[0].mxu0
  %v4112 = vadd.f32 0.0, %v4111
  %v4113 = vpop.f32.mrb[0].mxu0
  %4114 = vmatprep.mubr.bf16.mxu0 %v3458
  %4115 = vmatmul.mubr.bf16.gmra.mrb[0].mxu0 %v3457
  %v4116 = vpop.f32.mrb[0].mxu0
  %v4117 = vadd.f32 0.0, %v4116
  %v4118 = vpop.f32.mrb[0].mxu0
  %v4119 = vpop.f32.mrb[0].mxu0
  %v4120 = vadd.f32 0.0, %v4119
  %v4121 = vpop.f32.mrb[0].mxu0
  %4122 = vmatprep.mubr.bf16.mxu0 %v3461
  %4123 = vmatmul.mubr.bf16.gmra.mrb[0].mxu0 %v3460
  %v4124 = vpop.f32.mrb[0].mxu0
  %v4125 = vadd.f32 0.0, %v4124
  %v4126 = vpop.f32.mrb[0].mxu0
  %v4127 = vpop.f32.mrb[0].mxu0
  %v4128 = vadd.f32 0.0, %v4127
  %v4129 = vpop.f32.mrb[0].mxu0
  %4130 = vmatprep.mubr.bf16.mxu0 %v3464
  %4131 = vmatmul.mubr.bf16.gmra.mrb[0].mxu0 %v3463
  %v4132 = vpop.f32.mrb[0].mxu0
  %v4133 = vadd.f32 0.0, %v4132
  %v4134 = vpop.f32.mrb[0].mxu0
  %v4135 = vpop.f32.mrb[0].mxu0
  %v4136 = vadd.f32 0.0, %v4135
  %v4137 = vpop.f32.mrb[0].mxu0
  %4138 = vmatprep.mubr.bf16.mxu0 %v3467
  %4139 = vmatmul.mubr.bf16.gmra.mrb[0].mxu0 %v3466
  %v4140 = vpop.f32.mrb[0].mxu0
  %v4141 = vadd.f32 0.0, %v4140
  %v4142 = vpop.f32.mrb[0].mxu0
  %v4143 = vpop.f32.mrb[0].mxu0
  %v4144 = vadd.f32 0.0, %v4143
  %v4145 = vpop.f32.mrb[0].mxu0
  %4146 = vmatprep.mubr.bf16.mxu0 %v3470
  %4147 = vmatmul.mubr.bf16.gmra.mrb[0].mxu0 %v3469
  %v4148 = vpop.f32.mrb[0].mxu0
  %v4149 = vadd.f32 0.0, %v4148
  %v4150 = vpop.f32.mrb[0].mxu0
  %v4151 = vpop.f32.mrb[0].mxu0
  %v4152 = vadd.f32 0.0, %v4151
  %v4153 = vpop.f32.mrb[0].mxu0
  %4154 = vmatprep.mubr.bf16.mxu0 %v3473
  %4155 = vmatmul.mubr.bf16.gmra.mrb[0].mxu0 %v3472
  %v4156 = vpop.f32.mrb[0].mxu0
  %v4157 = vadd.f32 0.0, %v4156
  %v4158 = vpop.f32.mrb[0].mxu0
  %v4159 = vpop.f32.mrb[0].mxu0
  %v4160 = vadd.f32 0.0, %v4159
  %v4161 = vpop.f32.mrb[0].mxu0
  %4162 = vmatprep.mubr.bf16.mxu0 %v3476
  %4163 = vmatmul.mubr.bf16.gmra.mrb[0].mxu0 %v3475
  %v4164 = vpop.f32.mrb[0].mxu0
  %v4165 = vadd.f32 0.0, %v4164
  %v4166 = vpop.f32.mrb[0].mxu0
  %v4167 = vpop.f32.mrb[0].mxu0
  %v4168 = vadd.f32 0.0, %v4167
  %v4169 = vpop.f32.mrb[0].mxu0
  %4170 = vmatprep.mubr.bf16.mxu0 %v3479
  %4171 = vmatmul.mubr.bf16.gmra.mrb[0].mxu0 %v3478
  %v4172 = vpop.f32.mrb[0].mxu0
  %v4173 = vadd.f32 0.0, %v4172
  %v4174 = vpop.f32.mrb[0].mxu0
  %v4175 = vpop.f32.mrb[0].mxu0
  %v4176 = vadd.f32 0.0, %v4175
  %v4177 = vpop.f32.mrb[0].mxu0
  %4178 = vmatprep.mubr.bf16.mxu0 %v3482
  %4179 = vmatmul.mubr.bf16.gmra.mrb[0].mxu0 %v3481
  %v4180 = vpop.f32.mrb[0].mxu0
  %v4181 = vadd.f32 0.0, %v4180
  %v4182 = vpop.f32.mrb[0].mxu0
  %v4183 = vpop.f32.mrb[0].mxu0
  %v4184 = vadd.f32 0.0, %v4183
  %v4185 = vpop.f32.mrb[0].mxu0
  %4186 = vmatprep.mubr.bf16.mxu0 %v3485
  %4187 = vmatmul.mubr.bf16.gmra.mrb[0].mxu0 %v3484
  %v4188 = vpop.f32.mrb[0].mxu0
  %v4189 = vadd.f32 0.0, %v4188
  %v4190 = vpop.f32.mrb[0].mxu0
  %v4191 = vpop.f32.mrb[0].mxu0
  %v4192 = vadd.f32 0.0, %v4191
  %v4193 = vpop.f32.mrb[0].mxu0
  %4194 = vmatprep.mubr.bf16.mxu0 %v3488
  %4195 = vmatmul.mubr.bf16.gmra.mrb[0].mxu0 %v3487
  %v4196 = vpop.f32.mrb[0].mxu0
  %v4197 = vadd.f32 0.0, %v4196
  %v4198 = vpop.f32.mrb[0].mxu0
  %v4199 = vpop.f32.mrb[0].mxu0
  %v4200 = vadd.f32 0.0, %v4199
  %v4201 = vpop.f32.mrb[0].mxu0
  %4202 = vmatprep.mubr.bf16.mxu0 %v3491
  %4203 = vmatmul.mubr.bf16.gmra.mrb[0].mxu0 %v3490
  %v4204 = vpop.f32.mrb[0].mxu0
  %v4205 = vadd.f32 0.0, %v4204
  %v4206 = vpop.f32.mrb[0].mxu0
  %v4207 = vpop.f32.mrb[0].mxu0
  %v4208 = vadd.f32 0.0, %v4207
  %v4209 = vpop.f32.mrb[0].mxu0
  %4210 = vmatprep.mubr.bf16.mxu0 %v3494
  %4211 = vmatmul.mubr.bf16.gmra.mrb[0].mxu0 %v3493
  %v4212 = vpop.f32.mrb[0].mxu0
  %v4213 = vadd.f32 0.0, %v4212
  %v4214 = vpop.f32.mrb[0].mxu0
  %v4215 = vpop.f32.mrb[0].mxu0
  %v4216 = vadd.f32 0.0, %v4215
  %v4217 = vpop.f32.mrb[0].mxu0
  %4218 = vmatprep.mubr.bf16.mxu0 %v3497
  %4219 = vmatmul.mubr.bf16.gmra.mrb[0].mxu0 %v3496
  %v4220 = vpop.f32.mrb[0].mxu0
  %v4221 = vadd.f32 0.0, %v4220
  %v4222 = vpop.f32.mrb[0].mxu0
  %v4223 = vpop.f32.mrb[0].mxu0
  %v4224 = vadd.f32 0.0, %v4223
  %v4225 = vpop.f32.mrb[0].mxu0
  %4226 = vmatprep.mubr.bf16.mxu0 %v3500
  %4227 = vmatmul.mubr.bf16.gmra.mrb[0].mxu0 %v3499
  %v4228 = vpop.f32.mrb[0].mxu0
  %v4229 = vadd.f32 0.0, %v4228
  %v4230 = vpop.f32.mrb[0].mxu0
  %v4231 = vpop.f32.mrb[0].mxu0
  %v4232 = vadd.f32 0.0, %v4231
  %v4233 = vpop.f32.mrb[0].mxu0
  %4234 = vmatprep.mubr.bf16.mxu0 %v3503
  %4235 = vmatmul.mubr.bf16.gmra.mrb[0].mxu0 %v3502
  %v4236 = vpop.f32.mrb[0].mxu0
  %v4237 = vadd.f32 0.0, %v4236
  %v4238 = vpop.f32.mrb[0].mxu0
  %v4239 = vpop.f32.mrb[0].mxu0
  %v4240 = vadd.f32 0.0, %v4239
  %v4241 = vpop.f32.mrb[0].mxu0
  %4242 = vdwg.mxu0
  %4243 = vmatprep.subr.bf16.mxu0 0
  %4244 = vmatpush1.bf16.msra.mxu0 %v2584
  %4245 = vmatprep.subr.bf16.mxu0 0
  %4246 = vmatpush1.bf16.msra.mxu0 %v3776
  %4247 = vmatprep.subr.bf16.mxu0 0
  %4248 = vmatpush1.bf16.msra.mxu0 0
  %4249 = vmatprep.subr.bf16.mxu0 0
  %4250 = vmatpush1.bf16.msra.mxu0 0
  %4251 = vmatprep.subr.bf16.mxu0 0
  %4252 = vmatpush1.bf16.msra.mxu0 0
  %4253 = vmatprep.subr.bf16.mxu0 0
  %4254 = vmatpush1.bf16.msra.mxu0 0
  %4255 = vmatprep.subr.bf16.mxu0 0
  %4256 = vmatpush1.bf16.msra.mxu0 0
  %4257 = vmatprep.subr.bf16.mxu0 0
  %4258 = vmatpush1.bf16.msra.mxu0 0
  %4259 = vmatprep.subr.bf16.mxu0 0
  %4260 = vmatpush1.bf16.msra.mxu0 0
  %4261 = vmatprep.subr.bf16.mxu0 0
  %4262 = vmatpush1.bf16.msra.mxu0 0
  %4263 = vmatprep.subr.bf16.mxu0 0
  %4264 = vmatpush1.bf16.msra.mxu0 0
  %4265 = vmatprep.subr.bf16.mxu0 0
  %4266 = vmatpush1.bf16.msra.mxu0 0
  %4267 = vmatprep.subr.bf16.mxu0 0
  %4268 = vmatpush1.bf16.msra.mxu0 0
  %4269 = vmatprep.subr.bf16.mxu0 0
  %4270 = vmatpush1.bf16.msra.mxu0 0
  %4271 = vmatprep.subr.bf16.mxu0 0
  %4272 = vmatpush1.bf16.msra.mxu0 0
  %4273 = vmatprep.subr.bf16.mxu0 0
  %4274 = vmatpush1.bf16.msra.mxu0 0
  %4275 = vmatprep.mubr.bf16.mxu0 0
  %4276 = vmatmul.mubr.bf16.gmra.mrb[0].mxu0 %v3614
  %v4277 = vpop.f32.mrb[0].mxu0
  %v4278 = vadd.f32 %v3813, %v4277
  %v4279 = vpop.f32.mrb[0].mxu0
  %v4280 = vpop.f32.mrb[0].mxu0
  %v4281 = vadd.f32 %v3816, %v4280
  %v4282 = vpop.f32.mrb[0].mxu0
  %4283 = vmatprep.mubr.bf16.mxu0 0
  %4284 = vmatmul.mubr.bf16.gmra.mrb[0].mxu0 %v3617
  %v4285 = vpop.f32.mrb[0].mxu0
  %v4286 = vadd.f32 %v3821, %v4285
  %v4287 = vpop.f32.mrb[0].mxu0
  %v4288 = vpop.f32.mrb[0].mxu0
  %v4289 = vadd.f32 %v3824, %v4288
  %v4290 = vpop.f32.mrb[0].mxu0
  %4291 = vmatprep.mubr.bf16.mxu0 0
  %4292 = vmatmul.mubr.bf16.gmra.mrb[0].mxu0 %v3620
  %v4293 = vpop.f32.mrb[0].mxu0
  %v4294 = vadd.f32 %v3829, %v4293
  %v4295 = vpop.f32.mrb[0].mxu0
  %v4296 = vpop.f32.mrb[0].mxu0
  %v4297 = vadd.f32 %v3832, %v4296
  %v4298 = vpop.f32.mrb[0].mxu0
  %4299 = vmatprep.mubr.bf16.mxu0 0
  %4300 = vmatmul.mubr.bf16.gmra.mrb[0].mxu0 %v3623
  %v4301 = vpop.f32.mrb[0].mxu0
  %v4302 = vadd.f32 %v3837, %v4301
  %v4303 = vpop.f32.mrb[0].mxu0
  %v4304 = vpop.f32.mrb[0].mxu0
  %v4305 = vadd.f32 %v3840, %v4304
  %v4306 = vpop.f32.mrb[0].mxu0
  %4307 = vmatprep.mubr.bf16.mxu0 0
  %4308 = vmatmul.mubr.bf16.gmra.mrb[0].mxu0 %v3626
  %v4309 = vpop.f32.mrb[0].mxu0
  %v4310 = vadd.f32 %v3845, %v4309
  %v4311 = vpop.f32.mrb[0].mxu0
  %v4312 = vpop.f32.mrb[0].mxu0
  %v4313 = vadd.f32 %v3848, %v4312
  %v4314 = vpop.f32.mrb[0].mxu0
  %4315 = vmatprep.mubr.bf16.mxu0 0
  %4316 = vmatmul.mubr.bf16.gmra.mrb[0].mxu0 %v3629
  %v4317 = vpop.f32.mrb[0].mxu0
  %v4318 = vadd.f32 %v3853, %v4317
  %v4319 = vpop.f32.mrb[0].mxu0
  %v4320 = vpop.f32.mrb[0].mxu0
  %v4321 = vadd.f32 %v3856, %v4320
  %v4322 = vpop.f32.mrb[0].mxu0
  %4323 = vmatprep.mubr.bf16.mxu0 0
  %4324 = vmatmul.mubr.bf16.gmra.mrb[0].mxu0 %v3632
  %v4325 = vpop.f32.mrb[0].mxu0
  %v4326 = vadd.f32 %v3861, %v4325
  %v4327 = vpop.f32.mrb[0].mxu0
  %v4328 = vpop.f32.mrb[0].mxu0
  %v4329 = vadd.f32 %v3864, %v4328
  %v4330 = vpop.f32.mrb[0].mxu0
  %4331 = vmatprep.mubr.bf16.mxu0 0
  %4332 = vmatmul.mubr.bf16.gmra.mrb[0].mxu0 %v3635
  %v4333 = vpop.f32.mrb[0].mxu0
  %v4334 = vadd.f32 %v3869, %v4333
  %v4335 = vpop.f32.mrb[0].mxu0
  %v4336 = vpop.f32.mrb[0].mxu0
  %v4337 = vadd.f32 %v3872, %v4336
  %v4338 = vpop.f32.mrb[0].mxu0
  %4339 = vmatprep.mubr.bf16.mxu0 0
  %4340 = vmatmul.mubr.bf16.gmra.mrb[0].mxu0 %v3638
  %v4341 = vpop.f32.mrb[0].mxu0
  %v4342 = vadd.f32 %v3877, %v4341
  %v4343 = vpop.f32.mrb[0].mxu0
  %v4344 = vpop.f32.mrb[0].mxu0
  %v4345 = vadd.f32 %v3880, %v4344
  %v4346 = vpop.f32.mrb[0].mxu0
  %4347 = vmatprep.mubr.bf16.mxu0 0
  %4348 = vmatmul.mubr.bf16.gmra.mrb[0].mxu0 %v3641
  %v4349 = vpop.f32.mrb[0].mxu0
  %v4350 = vadd.f32 %v3885, %v4349
  %v4351 = vpop.f32.mrb[0].mxu0
  %v4352 = vpop.f32.mrb[0].mxu0
  %v4353 = vadd.f32 %v3888, %v4352
  %v4354 = vpop.f32.mrb[0].mxu0
  %4355 = vmatprep.mubr.bf16.mxu0 0
  %4356 = vmatmul.mubr.bf16.gmra.mrb[0].mxu0 %v3644
  %v4357 = vpop.f32.mrb[0].mxu0
  %v4358 = vadd.f32 %v3893, %v4357
  %v4359 = vpop.f32.mrb[0].mxu0
  %v4360 = vpop.f32.mrb[0].mxu0
  %v4361 = vadd.f32 %v3896, %v4360
  %v4362 = vpop.f32.mrb[0].mxu0
  %4363 = vmatprep.mubr.bf16.mxu0 0
  %4364 = vmatmul.mubr.bf16.gmra.mrb[0].mxu0 %v3647
  %v4365 = vpop.f32.mrb[0].mxu0
  %v4366 = vadd.f32 %v3901, %v4365
  %v4367 = vpop.f32.mrb[0].mxu0
  %v4368 = vpop.f32.mrb[0].mxu0
  %v4369 = vadd.f32 %v3904, %v4368
  %v4370 = vpop.f32.mrb[0].mxu0
  %4371 = vmatprep.mubr.bf16.mxu0 0
  %4372 = vmatmul.mubr.bf16.gmra.mrb[0].mxu0 %v3650
  %v4373 = vpop.f32.mrb[0].mxu0
  %v4374 = vadd.f32 %v3909, %v4373
  %v4375 = vpop.f32.mrb[0].mxu0
  %v4376 = vpop.f32.mrb[0].mxu0
  %v4377 = vadd.f32 %v3912, %v4376
  %v4378 = vpop.f32.mrb[0].mxu0
  %4379 = vmatprep.mubr.bf16.mxu0 0
  %4380 = vmatmul.mubr.bf16.gmra.mrb[0].mxu0 %v3653
  %v4381 = vpop.f32.mrb[0].mxu0
  %v4382 = vadd.f32 %v3917, %v4381
  %v4383 = vpop.f32.mrb[0].mxu0
  %v4384 = vpop.f32.mrb[0].mxu0
  %v4385 = vadd.f32 %v3920, %v4384
  %v4386 = vpop.f32.mrb[0].mxu0
  %4387 = vmatprep.mubr.bf16.mxu0 0
  %4388 = vmatmul.mubr.bf16.gmra.mrb[0].mxu0 %v3656
  %v4389 = vpop.f32.mrb[0].mxu0
  %v4390 = vadd.f32 %v3925, %v4389
  %v4391 = vpop.f32.mrb[0].mxu0
  %v4392 = vpop.f32.mrb[0].mxu0
  %v4393 = vadd.f32 %v3928, %v4392
  %v4394 = vpop.f32.mrb[0].mxu0
  %4395 = vmatprep.mubr.bf16.mxu0 0
  %4396 = vmatmul.mubr.bf16.gmra.mrb[0].mxu0 %v3659
  %v4397 = vpop.f32.mrb[0].mxu0
  %v4398 = vadd.f32 %v3933, %v4397
  %v4399 = vpop.f32.mrb[0].mxu0
  %v4400 = vpop.f32.mrb[0].mxu0
  %v4401 = vadd.f32 %v3936, %v4400
  %v4402 = vpop.f32.mrb[0].mxu0
  %4403 = vmatprep.mubr.bf16.mxu0 0
  %4404 = vmatmul.mubr.bf16.gmra.mrb[0].mxu0 %v3662
  %v4405 = vpop.f32.mrb[0].mxu0
  %v4406 = vadd.f32 %v3941, %v4405
  %v4407 = vpop.f32.mrb[0].mxu0
  %v4408 = vpop.f32.mrb[0].mxu0
  %v4409 = vadd.f32 %v3944, %v4408
  %v4410 = vpop.f32.mrb[0].mxu0
  %4411 = vmatprep.mubr.bf16.mxu0 0
  %4412 = vmatmul.mubr.bf16.gmra.mrb[0].mxu0 %v3665
  %v4413 = vpop.f32.mrb[0].mxu0
  %v4414 = vadd.f32 %v3949, %v4413
  %v4415 = vpop.f32.mrb[0].mxu0
  %v4416 = vpop.f32.mrb[0].mxu0
  %v4417 = vadd.f32 %v3952, %v4416
  %v4418 = vpop.f32.mrb[0].mxu0
  %4419 = vmatprep.mubr.bf16.mxu0 0
  %4420 = vmatmul.mubr.bf16.gmra.mrb[0].mxu0 %v3668
  %v4421 = vpop.f32.mrb[0].mxu0
  %v4422 = vadd.f32 %v3957, %v4421
  %v4423 = vpop.f32.mrb[0].mxu0
  %v4424 = vpop.f32.mrb[0].mxu0
  %v4425 = vadd.f32 %v3960, %v4424
  %v4426 = vpop.f32.mrb[0].mxu0
  %4427 = vmatprep.mubr.bf16.mxu0 0
  %4428 = vmatmul.mubr.bf16.gmra.mrb[0].mxu0 %v3671
  %v4429 = vpop.f32.mrb[0].mxu0
  %v4430 = vadd.f32 %v3965, %v4429
  %v4431 = vpop.f32.mrb[0].mxu0
  %v4432 = vpop.f32.mrb[0].mxu0
  %v4433 = vadd.f32 %v3968, %v4432
  %v4434 = vpop.f32.mrb[0].mxu0
  %4435 = vmatprep.mubr.bf16.mxu0 0
  %4436 = vmatmul.mubr.bf16.gmra.mrb[0].mxu0 %v3674
  %v4437 = vpop.f32.mrb[0].mxu0
  %v4438 = vadd.f32 %v3973, %v4437
  %v4439 = vpop.f32.mrb[0].mxu0
  %v4440 = vpop.f32.mrb[0].mxu0
  %v4441 = vadd.f32 %v3976, %v4440
  %v4442 = vpop.f32.mrb[0].mxu0
  %4443 = vmatprep.mubr.bf16.mxu0 0
  %4444 = vmatmul.mubr.bf16.gmra.mrb[0].mxu0 %v3677
  %v4445 = vpop.f32.mrb[0].mxu0
  %v4446 = vadd.f32 %v3981, %v4445
  %v4447 = vpop.f32.mrb[0].mxu0
  %v4448 = vpop.f32.mrb[0].mxu0
  %v4449 = vadd.f32 %v3984, %v4448
  %v4450 = vpop.f32.mrb[0].mxu0
  %4451 = vmatprep.mubr.bf16.mxu0 0
  %4452 = vmatmul.mubr.bf16.gmra.mrb[0].mxu0 %v3680
  %v4453 = vpop.f32.mrb[0].mxu0
  %v4454 = vadd.f32 %v3989, %v4453
  %v4455 = vpop.f32.mrb[0].mxu0
  %v4456 = vpop.f32.mrb[0].mxu0
  %v4457 = vadd.f32 %v3992, %v4456
  %v4458 = vpop.f32.mrb[0].mxu0
  %4459 = vmatprep.mubr.bf16.mxu0 0
  %4460 = vmatmul.mubr.bf16.gmra.mrb[0].mxu0 %v3683
  %v4461 = vpop.f32.mrb[0].mxu0
  %v4462 = vadd.f32 %v3997, %v4461
  %v4463 = vpop.f32.mrb[0].mxu0
  %v4464 = vpop.f32.mrb[0].mxu0
  %v4465 = vadd.f32 %v4000, %v4464
  %v4466 = vpop.f32.mrb[0].mxu0
  %4467 = vmatprep.mubr.bf16.mxu0 0
  %4468 = vmatmul.mubr.bf16.gmra.mrb[0].mxu0 %v3686
  %v4469 = vpop.f32.mrb[0].mxu0
  %v4470 = vadd.f32 %v4005, %v4469
  %v4471 = vpop.f32.mrb[0].mxu0
  %v4472 = vpop.f32.mrb[0].mxu0
  %v4473 = vadd.f32 %v4008, %v4472
  %v4474 = vpop.f32.mrb[0].mxu0
  %4475 = vmatprep.mubr.bf16.mxu0 0
  %4476 = vmatmul.mubr.bf16.gmra.mrb[0].mxu0 %v3689
  %v4477 = vpop.f32.mrb[0].mxu0
  %v4478 = vadd.f32 %v4013, %v4477
  %v4479 = vpop.f32.mrb[0].mxu0
  %v4480 = vpop.f32.mrb[0].mxu0
  %v4481 = vadd.f32 %v4016, %v4480
  %v4482 = vpop.f32.mrb[0].mxu0
  %4483 = vmatprep.mubr.bf16.mxu0 0
  %4484 = vmatmul.mubr.bf16.gmra.mrb[0].mxu0 %v3692
  %v4485 = vpop.f32.mrb[0].mxu0
  %v4486 = vadd.f32 %v4021, %v4485
  %v4487 = vpop.f32.mrb[0].mxu0
  %v4488 = vpop.f32.mrb[0].mxu0
  %v4489 = vadd.f32 %v4024, %v4488
  %v4490 = vpop.f32.mrb[0].mxu0
  %4491 = vmatprep.mubr.bf16.mxu0 0
  %4492 = vmatmul.mubr.bf16.gmra.mrb[0].mxu0 %v3695
  %v4493 = vpop.f32.mrb[0].mxu0
  %v4494 = vadd.f32 %v4029, %v4493
  %v4495 = vpop.f32.mrb[0].mxu0
  %v4496 = vpop.f32.mrb[0].mxu0
  %v4497 = vadd.f32 %v4032, %v4496
  %v4498 = vpop.f32.mrb[0].mxu0
  %4499 = vmatprep.mubr.bf16.mxu0 0
  %4500 = vmatmul.mubr.bf16.gmra.mrb[0].mxu0 %v3698
  %v4501 = vpop.f32.mrb[0].mxu0
  %v4502 = vadd.f32 %v4037, %v4501
  %v4503 = vpop.f32.mrb[0].mxu0
  %v4504 = vpop.f32.mrb[0].mxu0
  %v4505 = vadd.f32 %v4040, %v4504
  %v4506 = vpop.f32.mrb[0].mxu0
  %4507 = vmatprep.mubr.bf16.mxu0 0
  %4508 = vmatmul.mubr.bf16.gmra.mrb[0].mxu0 %v3701
  %v4509 = vpop.f32.mrb[0].mxu0
  %v4510 = vadd.f32 %v4045, %v4509
  %v4511 = vpop.f32.mrb[0].mxu0
  %v4512 = vpop.f32.mrb[0].mxu0
  %v4513 = vadd.f32 %v4048, %v4512
  %v4514 = vpop.f32.mrb[0].mxu0
  %4515 = vmatprep.mubr.bf16.mxu0 0
  %4516 = vmatmul.mubr.bf16.gmra.mrb[0].mxu0 %v3704
  %v4517 = vpop.f32.mrb[0].mxu0
  %v4518 = vadd.f32 %v4053, %v4517
  %v4519 = vpop.f32.mrb[0].mxu0
  %v4520 = vpop.f32.mrb[0].mxu0
  %v4521 = vadd.f32 %v4056, %v4520
  %v4522 = vpop.f32.mrb[0].mxu0
  %4523 = vmatprep.mubr.bf16.mxu0 0
  %4524 = vmatmul.mubr.bf16.gmra.mrb[0].mxu0 %v3707
  %v4525 = vpop.f32.mrb[0].mxu0
  %v4526 = vadd.f32 %v4061, %v4525
  %v4527 = vpop.f32.mrb[0].mxu0
  %v4528 = vpop.f32.mrb[0].mxu0
  %v4529 = vadd.f32 %v4064, %v4528
  %v4530 = vpop.f32.mrb[0].mxu0
  %4531 = vmatprep.mubr.bf16.mxu0 0
  %4532 = vmatmul.mubr.bf16.gmra.mrb[0].mxu0 %v3710
  %v4533 = vpop.f32.mrb[0].mxu0
  %v4534 = vadd.f32 %v4069, %v4533
  %v4535 = vpop.f32.mrb[0].mxu0
  %v4536 = vpop.f32.mrb[0].mxu0
  %v4537 = vadd.f32 %v4072, %v4536
  %v4538 = vpop.f32.mrb[0].mxu0
  %4539 = vmatprep.mubr.bf16.mxu0 0
  %4540 = vmatmul.mubr.bf16.gmra.mrb[0].mxu0 %v3713
  %v4541 = vpop.f32.mrb[0].mxu0
  %v4542 = vadd.f32 %v4077, %v4541
  %v4543 = vpop.f32.mrb[0].mxu0
  %v4544 = vpop.f32.mrb[0].mxu0
  %v4545 = vadd.f32 %v4080, %v4544
  %v4546 = vpop.f32.mrb[0].mxu0
  %4547 = vmatprep.mubr.bf16.mxu0 0
  %4548 = vmatmul.mubr.bf16.gmra.mrb[0].mxu0 %v3716
  %v4549 = vpop.f32.mrb[0].mxu0
  %v4550 = vadd.f32 %v4085, %v4549
  %v4551 = vpop.f32.mrb[0].mxu0
  %v4552 = vpop.f32.mrb[0].mxu0
  %v4553 = vadd.f32 %v4088, %v4552
  %v4554 = vpop.f32.mrb[0].mxu0
  %4555 = vmatprep.mubr.bf16.mxu0 0
  %4556 = vmatmul.mubr.bf16.gmra.mrb[0].mxu0 %v3719
  %v4557 = vpop.f32.mrb[0].mxu0
  %v4558 = vadd.f32 %v4093, %v4557
  %v4559 = vpop.f32.mrb[0].mxu0
  %v4560 = vpop.f32.mrb[0].mxu0
  %v4561 = vadd.f32 %v4096, %v4560
  %v4562 = vpop.f32.mrb[0].mxu0
  %4563 = vmatprep.mubr.bf16.mxu0 0
  %4564 = vmatmul.mubr.bf16.gmra.mrb[0].mxu0 %v3722
  %v4565 = vpop.f32.mrb[0].mxu0
  %v4566 = vadd.f32 %v4101, %v4565
  %v4567 = vpop.f32.mrb[0].mxu0
  %v4568 = vpop.f32.mrb[0].mxu0
  %v4569 = vadd.f32 %v4104, %v4568
  %v4570 = vpop.f32.mrb[0].mxu0
  %4571 = vmatprep.mubr.bf16.mxu0 0
  %4572 = vmatmul.mubr.bf16.gmra.mrb[0].mxu0 %v3725
  %v4573 = vpop.f32.mrb[0].mxu0
  %v4574 = vadd.f32 %v4109, %v4573
  %v4575 = vpop.f32.mrb[0].mxu0
  %v4576 = vpop.f32.mrb[0].mxu0
  %v4577 = vadd.f32 %v4112, %v4576
  %v4578 = vpop.f32.mrb[0].mxu0
  %4579 = vmatprep.mubr.bf16.mxu0 0
  %4580 = vmatmul.mubr.bf16.gmra.mrb[0].mxu0 %v3728
  %v4581 = vpop.f32.mrb[0].mxu0
  %v4582 = vadd.f32 %v4117, %v4581
  %v4583 = vpop.f32.mrb[0].mxu0
  %v4584 = vpop.f32.mrb[0].mxu0
  %v4585 = vadd.f32 %v4120, %v4584
  %v4586 = vpop.f32.mrb[0].mxu0
  %4587 = vmatprep.mubr.bf16.mxu0 0
  %4588 = vmatmul.mubr.bf16.gmra.mrb[0].mxu0 %v3731
  %v4589 = vpop.f32.mrb[0].mxu0
  %v4590 = vadd.f32 %v4125, %v4589
  %v4591 = vpop.f32.mrb[0].mxu0
  %v4592 = vpop.f32.mrb[0].mxu0
  %v4593 = vadd.f32 %v4128, %v4592
  %v4594 = vpop.f32.mrb[0].mxu0
  %4595 = vmatprep.mubr.bf16.mxu0 0
  %4596 = vmatmul.mubr.bf16.gmra.mrb[0].mxu0 %v3734
  %v4597 = vpop.f32.mrb[0].mxu0
  %v4598 = vadd.f32 %v4133, %v4597
  %v4599 = vpop.f32.mrb[0].mxu0
  %v4600 = vpop.f32.mrb[0].mxu0
  %v4601 = vadd.f32 %v4136, %v4600
  %v4602 = vpop.f32.mrb[0].mxu0
  %4603 = vmatprep.mubr.bf16.mxu0 0
  %4604 = vmatmul.mubr.bf16.gmra.mrb[0].mxu0 %v3737
  %v4605 = vpop.f32.mrb[0].mxu0
  %v4606 = vadd.f32 %v4141, %v4605
  %v4607 = vpop.f32.mrb[0].mxu0
  %v4608 = vpop.f32.mrb[0].mxu0
  %v4609 = vadd.f32 %v4144, %v4608
  %v4610 = vpop.f32.mrb[0].mxu0
  %4611 = vmatprep.mubr.bf16.mxu0 0
  %4612 = vmatmul.mubr.bf16.gmra.mrb[0].mxu0 %v3740
  %v4613 = vpop.f32.mrb[0].mxu0
  %v4614 = vadd.f32 %v4149, %v4613
  %v4615 = vpop.f32.mrb[0].mxu0
  %v4616 = vpop.f32.mrb[0].mxu0
  %v4617 = vadd.f32 %v4152, %v4616
  %v4618 = vpop.f32.mrb[0].mxu0
  %4619 = vmatprep.mubr.bf16.mxu0 0
  %4620 = vmatmul.mubr.bf16.gmra.mrb[0].mxu0 %v3743
  %v4621 = vpop.f32.mrb[0].mxu0
  %v4622 = vadd.f32 %v4157, %v4621
  %v4623 = vpop.f32.mrb[0].mxu0
  %v4624 = vpop.f32.mrb[0].mxu0
  %v4625 = vadd.f32 %v4160, %v4624
  %v4626 = vpop.f32.mrb[0].mxu0
  %4627 = vmatprep.mubr.bf16.mxu0 0
  %4628 = vmatmul.mubr.bf16.gmra.mrb[0].mxu0 %v3746
  %v4629 = vpop.f32.mrb[0].mxu0
  %v4630 = vadd.f32 %v4165, %v4629
  %v4631 = vpop.f32.mrb[0].mxu0
  %v4632 = vpop.f32.mrb[0].mxu0
  %v4633 = vadd.f32 %v4168, %v4632
  %v4634 = vpop.f32.mrb[0].mxu0
  %4635 = vmatprep.mubr.bf16.mxu0 0
  %4636 = vmatmul.mubr.bf16.gmra.mrb[0].mxu0 %v3749
  %v4637 = vpop.f32.mrb[0].mxu0
  %v4638 = vadd.f32 %v4173, %v4637
  %v4639 = vpop.f32.mrb[0].mxu0
  %v4640 = vpop.f32.mrb[0].mxu0
  %v4641 = vadd.f32 %v4176, %v4640
  %v4642 = vpop.f32.mrb[0].mxu0
  %4643 = vmatprep.mubr.bf16.mxu0 0
  %4644 = vmatmul.mubr.bf16.gmra.mrb[0].mxu0 %v3752
  %v4645 = vpop.f32.mrb[0].mxu0
  %v4646 = vadd.f32 %v4181, %v4645
  %v4647 = vpop.f32.mrb[0].mxu0
  %v4648 = vpop.f32.mrb[0].mxu0
  %v4649 = vadd.f32 %v4184, %v4648
  %v4650 = vpop.f32.mrb[0].mxu0
  %4651 = vmatprep.mubr.bf16.mxu0 0
  %4652 = vmatmul.mubr.bf16.gmra.mrb[0].mxu0 %v3755
  %v4653 = vpop.f32.mrb[0].mxu0
  %v4654 = vadd.f32 %v4189, %v4653
  %v4655 = vpop.f32.mrb[0].mxu0
  %v4656 = vpop.f32.mrb[0].mxu0
  %v4657 = vadd.f32 %v4192, %v4656
  %v4658 = vpop.f32.mrb[0].mxu0
  %4659 = vmatprep.mubr.bf16.mxu0 0
  %4660 = vmatmul.mubr.bf16.gmra.mrb[0].mxu0 %v3758
  %v4661 = vpop.f32.mrb[0].mxu0
  %v4662 = vadd.f32 %v4197, %v4661
  %v4663 = vpop.f32.mrb[0].mxu0
  %v4664 = vpop.f32.mrb[0].mxu0
  %v4665 = vadd.f32 %v4200, %v4664
  %v4666 = vpop.f32.mrb[0].mxu0
  %4667 = vmatprep.mubr.bf16.mxu0 0
  %4668 = vmatmul.mubr.bf16.gmra.mrb[0].mxu0 %v3761
  %v4669 = vpop.f32.mrb[0].mxu0
  %v4670 = vadd.f32 %v4205, %v4669
  %v4671 = vpop.f32.mrb[0].mxu0
  %v4672 = vpop.f32.mrb[0].mxu0
  %v4673 = vadd.f32 %v4208, %v4672
  %v4674 = vpop.f32.mrb[0].mxu0
  %4675 = vmatprep.mubr.bf16.mxu0 0
  %4676 = vmatmul.mubr.bf16.gmra.mrb[0].mxu0 %v3764
  %v4677 = vpop.f32.mrb[0].mxu0
  %v4678 = vadd.f32 %v4213, %v4677
  %v4679 = vpop.f32.mrb[0].mxu0
  %v4680 = vpop.f32.mrb[0].mxu0
  %v4681 = vadd.f32 %v4216, %v4680
  %v4682 = vpop.f32.mrb[0].mxu0
  %4683 = vmatprep.mubr.bf16.mxu0 0
  %4684 = vmatmul.mubr.bf16.gmra.mrb[0].mxu0 %v3767
  %v4685 = vpop.f32.mrb[0].mxu0
  %v4686 = vadd.f32 %v4221, %v4685
  %v4687 = vpop.f32.mrb[0].mxu0
  %v4688 = vpop.f32.mrb[0].mxu0
  %v4689 = vadd.f32 %v4224, %v4688
  %v4690 = vpop.f32.mrb[0].mxu0
  %4691 = vmatprep.mubr.bf16.mxu0 0
  %4692 = vmatmul.mubr.bf16.gmra.mrb[0].mxu0 %v3770
  %v4693 = vpop.f32.mrb[0].mxu0
  %v4694 = vadd.f32 %v4229, %v4693
  %v4695 = vpop.f32.mrb[0].mxu0
  %v4696 = vpop.f32.mrb[0].mxu0
  %v4697 = vadd.f32 %v4232, %v4696
  %v4698 = vpop.f32.mrb[0].mxu0
  %4699 = vmatprep.mubr.bf16.mxu0 0
  %4700 = vmatmul.mubr.bf16.gmra.mrb[0].mxu0 %v3773
  %v4701 = vpop.f32.mrb[0].mxu0
  %v4702 = vadd.f32 %v4237, %v4701
  %v4703 = vpop.f32.mrb[0].mxu0
  %v4704 = vpop.f32.mrb[0].mxu0
  %v4705 = vadd.f32 %v4240, %v4704
  %v4706 = vpop.f32.mrb[0].mxu0
  %4707 = vdwg.mxu0
  %v4708 = vmax.f32 %v4278, %v4385
  %v4709 = vmax.f32 %v4281, %v4390
  %v4710 = vmax.f32 %v4286, %v4393
  %v4711 = vmax.f32 %v4289, %v4398
  %v4712 = vmax.f32 %v4294, %v4401
  %v4713 = vmax.f32 %v4297, %v4406
  %v4714 = vmax.f32 %v4302, %v4409
  %v4715 = vmax.f32 %v4305, %v4414
  %v4716 = vmax.f32 %v4310, %v4417
  %v4717 = vmax.f32 %v4313, %v4422
  %v4718 = vmax.f32 %v4318, %v4425
  %v4719 = vmax.f32 %v4321, %v4430
  %v4720 = vmax.f32 %v4326, %v4433
  %v4721 = vmax.f32 %v4329, %v4438
  %v4722 = vmax.f32 %v4334, %v4441
  %v4723 = vmax.f32 %v4337, %v4446
  %v4724 = vmax.f32 %v4342, %v4449
  %v4725 = vmax.f32 %v4345, %v4454
  %v4726 = vmax.f32 %v4350, %v4457
  %v4727 = vmax.f32 %v4353, %v4462
  %v4728 = vmax.f32 %v4358, %v4465
  %v4729 = vmax.f32 %v4361, %v4470
  %v4730 = vmax.f32 %v4366, %v4473
  %v4731 = vmax.f32 %v4369, %v4478
  %v4732 = vmax.f32 %v4374, %v4481
  %v4733 = vmax.f32 %v4377, %v4486
  %v4734 = vmax.f32 %v4382, %v4489
  %v4735 = vmax.f32 %v4494, %v4601
  %v4736 = vmax.f32 %v4497, %v4606
  %v4737 = vmax.f32 %v4502, %v4609
  %v4738 = vmax.f32 %v4505, %v4614
  %v4739 = vmax.f32 %v4510, %v4617
  %v4740 = vmax.f32 %v4513, %v4622
  %v4741 = vmax.f32 %v4518, %v4625
  %v4742 = vmax.f32 %v4521, %v4630
  %v4743 = vmax.f32 %v4526, %v4633
  %v4744 = vmax.f32 %v4529, %v4638
  %v4745 = vmax.f32 %v4534, %v4641
  %v4746 = vmax.f32 %v4537, %v4646
  %v4747 = vmax.f32 %v4542, %v4649
  %v4748 = vmax.f32 %v4545, %v4654
  %v4749 = vmax.f32 %v4550, %v4657
  %v4750 = vmax.f32 %v4553, %v4662
  %v4751 = vmax.f32 %v4558, %v4665
  %v4752 = vmax.f32 %v4561, %v4670
  %v4753 = vmax.f32 %v4566, %v4673
  %v4754 = vmax.f32 %v4569, %v4678
  %v4755 = vmax.f32 %v4574, %v4681
  %v4756 = vmax.f32 %v4577, %v4686
  %v4757 = vmax.f32 %v4582, %v4689
  %v4758 = vmax.f32 %v4585, %v4694
  %v4759 = vmax.f32 %v4590, %v4697
  %v4760 = vmax.f32 %v4593, %v4702
  %v4761 = vmax.f32 %v4598, %v4705
  %v4762 = vmax.f32 %v4708, %v4735
  %v4763 = vmax.f32 %v4709, %v4736
  %v4764 = vmax.f32 %v4710, %v4737
  %v4765 = vmax.f32 %v4711, %v4738
  %v4766 = vmax.f32 %v4712, %v4739
  %v4767 = vmax.f32 %v4713, %v4740
  %v4768 = vmax.f32 %v4714, %v4741
  %v4769 = vmax.f32 %v4715, %v4742
  %v4770 = vmax.f32 %v4716, %v4743
  %v4771 = vmax.f32 %v4717, %v4744
  %v4772 = vmax.f32 %v4718, %v4745
  %v4773 = vmax.f32 %v4719, %v4746
  %v4774 = vmax.f32 %v4720, %v4747
  %v4775 = vmax.f32 %v4721, %v4748
  %v4776 = vmax.f32 %v4722, %v4749
  %v4777 = vmax.f32 %v4723, %v4750
  %v4778 = vmax.f32 %v4724, %v4751
  %v4779 = vmax.f32 %v4725, %v4752
  %v4780 = vmax.f32 %v4726, %v4753
  %v4781 = vmax.f32 %v4727, %v4754
  %v4782 = vmax.f32 %v4728, %v4755
  %v4783 = vmax.f32 %v4729, %v4756
  %v4784 = vmax.f32 %v4730, %v4757
  %v4785 = vmax.f32 %v4731, %v4758
  %v4786 = vmax.f32 %v4732, %v4759
  %v4787 = vmax.f32 %v4733, %v4760
  %v4788 = vmax.f32 %v4734, %v4761
  %v4789 = vld [vmem:[%s2 + $0xd8] sm:$0xff]
  %v4790 = vld [vmem:[%s2 + $0xe0] sm:$0xff]
  %v4791 = vld [vmem:[%s2 + $0xe8] sm:$0xff]
  %v4792 = vld [vmem:[%s2 + $0xf0] sm:$0xff]
  %v4793 = vld [vmem:[%s2 + $0xf8] sm:$0xff]
  %v4794 = vld [vmem:[%s2 + $0x100] sm:$0xff]
  %v4795 = vld [vmem:[%s2 + $0x108] sm:$0xff]
  %v4796 = vld [vmem:[%s2 + $0x110] sm:$0xff]
  %v4797 = vld [vmem:[%s2 + $0x118] sm:$0xff]
  %v4798 = vld [vmem:[%s2 + $0x120] sm:$0xff]
  %v4799 = vld [vmem:[%s2 + $0x128] sm:$0xff]
  %v4800 = vld [vmem:[%s2 + $0x130] sm:$0xff]
  %v4801 = vld [vmem:[%s2 + $0x138] sm:$0xff]
  %v4802 = vld [vmem:[%s2 + $0x140] sm:$0xff]
  %v4803 = vld [vmem:[%s2 + $0x148] sm:$0xff]
  %v4804 = vld [vmem:[%s2 + $0x150] sm:$0xff]
  %v4805 = vld [vmem:[%s2 + $0x158] sm:$0xff]
  %v4806 = vld [vmem:[%s2 + $0x160] sm:$0xff]
  %v4807 = vld [vmem:[%s2 + $0x168] sm:$0xff]
  %v4808 = vld [vmem:[%s2 + $0x170] sm:$0xff]
  %v4809 = vld [vmem:[%s2 + $0x178] sm:$0xff]
  %v4810 = vld [vmem:[%s2 + $0x180] sm:$0xff]
  %v4811 = vld [vmem:[%s2 + $0x188] sm:$0xff]
  %v4812 = vld [vmem:[%s2 + $0x190] sm:$0xff]
  %v4813 = vld [vmem:[%s2 + $0x198] sm:$0xff]
  %v4814 = vld [vmem:[%s2 + $0x1a0] sm:$0xff]
  %v4815 = vld [vmem:[%s2 + $0x1a8] sm:$0xff]
  %4817 = vset.pattern.permute.xlu0 0
  %4818 = vperm.xlu0 %4817, %v4789
  %v4819 = vpop.permute.xlu0 %4818
  %4822 = vset.pattern.permute.xlu0 0
  %4823 = vperm.xlu0 %4822, %v4790
  %v4824 = vpop.permute.xlu0 %4823
  %4827 = vset.pattern.permute.xlu0 0
  %4828 = vperm.xlu0 %4827, %v4791
  %v4829 = vpop.permute.xlu0 %4828
  %4832 = vset.pattern.permute.xlu0 0
  %4833 = vperm.xlu0 %4832, %v4792
  %v4834 = vpop.permute.xlu0 %4833
  %4837 = vset.pattern.permute.xlu0 0
  %4838 = vperm.xlu0 %4837, %v4793
  %v4839 = vpop.permute.xlu0 %4838
  %4842 = vset.pattern.permute.xlu0 0
  %4843 = vperm.xlu0 %4842, %v4794
  %v4844 = vpop.permute.xlu0 %4843
  %4847 = vset.pattern.permute.xlu0 0
  %4848 = vperm.xlu0 %4847, %v4795
  %v4849 = vpop.permute.xlu0 %4848
  %4852 = vset.pattern.permute.xlu0 0
  %4853 = vperm.xlu0 %4852, %v4796
  %v4854 = vpop.permute.xlu0 %4853
  %4857 = vset.pattern.permute.xlu0 0
  %4858 = vperm.xlu0 %4857, %v4797
  %v4859 = vpop.permute.xlu0 %4858
  %4862 = vset.pattern.permute.xlu0 0
  %4863 = vperm.xlu0 %4862, %v4798
  %v4864 = vpop.permute.xlu0 %4863
  %4867 = vset.pattern.permute.xlu0 0
  %4868 = vperm.xlu0 %4867, %v4799
  %v4869 = vpop.permute.xlu0 %4868
  %4872 = vset.pattern.permute.xlu0 0
  %4873 = vperm.xlu0 %4872, %v4800
  %v4874 = vpop.permute.xlu0 %4873
  %4877 = vset.pattern.permute.xlu0 0
  %4878 = vperm.xlu0 %4877, %v4801
  %v4879 = vpop.permute.xlu0 %4878
  %4882 = vset.pattern.permute.xlu0 0
  %4883 = vperm.xlu0 %4882, %v4802
  %v4884 = vpop.permute.xlu0 %4883
  %4887 = vset.pattern.permute.xlu0 0
  %4888 = vperm.xlu0 %4887, %v4803
  %v4889 = vpop.permute.xlu0 %4888
  %4892 = vset.pattern.permute.xlu0 0
  %4893 = vperm.xlu0 %4892, %v4804
  %v4894 = vpop.permute.xlu0 %4893
  %4897 = vset.pattern.permute.xlu0 0
  %4898 = vperm.xlu0 %4897, %v4805
  %v4899 = vpop.permute.xlu0 %4898
  %4902 = vset.pattern.permute.xlu0 0
  %4903 = vperm.xlu0 %4902, %v4806
  %v4904 = vpop.permute.xlu0 %4903
  %4907 = vset.pattern.permute.xlu0 0
  %4908 = vperm.xlu0 %4907, %v4807
  %v4909 = vpop.permute.xlu0 %4908
  %4912 = vset.pattern.permute.xlu0 0
  %4913 = vperm.xlu0 %4912, %v4808
  %v4914 = vpop.permute.xlu0 %4913
  %4917 = vset.pattern.permute.xlu0 0
  %4918 = vperm.xlu0 %4917, %v4809
  %v4919 = vpop.permute.xlu0 %4918
  %4922 = vset.pattern.permute.xlu0 0
  %4923 = vperm.xlu0 %4922, %v4810
  %v4924 = vpop.permute.xlu0 %4923
  %4927 = vset.pattern.permute.xlu0 0
  %4928 = vperm.xlu0 %4927, %v4811
  %v4929 = vpop.permute.xlu0 %4928
  %4932 = vset.pattern.permute.xlu0 0
  %4933 = vperm.xlu0 %4932, %v4812
  %v4934 = vpop.permute.xlu0 %4933
  %4937 = vset.pattern.permute.xlu0 0
  %4938 = vperm.xlu0 %4937, %v4813
  %v4939 = vpop.permute.xlu0 %4938
  %4942 = vset.pattern.permute.xlu0 0
  %4943 = vperm.xlu0 %4942, %v4814
  %v4944 = vpop.permute.xlu0 %4943
  %4947 = vset.pattern.permute.xlu0 0
  %4948 = vperm.xlu0 %4947, %v4815
  %v4949 = vpop.permute.xlu0 %4948
  %v4951 = vadd.f32 %v4762, %v4819
  %v4952 = vadd.f32 %v4763, %v4824
  %v4953 = vadd.f32 %v4764, %v4829
  %v4954 = vadd.f32 %v4765, %v4834
  %v4955 = vadd.f32 %v4766, %v4839
  %v4956 = vadd.f32 %v4767, %v4844
  %v4957 = vadd.f32 %v4768, %v4849
  %v4958 = vadd.f32 %v4769, %v4854
  %v4959 = vadd.f32 %v4770, %v4859
  %v4960 = vadd.f32 %v4771, %v4864
  %v4961 = vadd.f32 %v4772, %v4869
  %v4962 = vadd.f32 %v4773, %v4874
  %v4963 = vadd.f32 %v4774, %v4879
  %v4964 = vadd.f32 %v4775, %v4884
  %v4965 = vadd.f32 %v4776, %v4889
  %v4966 = vadd.f32 %v4777, %v4894
  %v4967 = vadd.f32 %v4778, %v4899
  %v4968 = vadd.f32 %v4779, %v4904
  %v4969 = vadd.f32 %v4780, %v4909
  %v4970 = vadd.f32 %v4781, %v4914
  %v4971 = vadd.f32 %v4782, %v4919
  %v4972 = vadd.f32 %v4783, %v4924
  %v4973 = vadd.f32 %v4784, %v4929
  %v4974 = vadd.f32 %v4785, %v4934
  %v4975 = vadd.f32 %v4786, %v4939
  %v4976 = vadd.f32 %v4787, %v4944
  %v4977 = vadd.f32 %v4788, %v4949
  %v4978 = vmax.f32 %v4951, 0.0
  %v4979 = vmax.f32 %v4952, 0.0
  %v4980 = vmax.f32 %v4953, 0.0
  %v4981 = vmax.f32 %v4954, 0.0
  %v4982 = vmax.f32 %v4955, 0.0
  %v4983 = vmax.f32 %v4956, 0.0
  %v4984 = vmax.f32 %v4957, 0.0
  %v4985 = vmax.f32 %v4958, 0.0
  %v4986 = vmax.f32 %v4959, 0.0
  %v4987 = vmax.f32 %v4960, 0.0
  %v4988 = vmax.f32 %v4961, 0.0
  %v4989 = vmax.f32 %v4962, 0.0
  %v4990 = vmax.f32 %v4963, 0.0
  %v4991 = vmax.f32 %v4964, 0.0
  %v4992 = vmax.f32 %v4965, 0.0
  %v4993 = vmax.f32 %v4966, 0.0
  %v4994 = vmax.f32 %v4967, 0.0
  %v4995 = vmax.f32 %v4968, 0.0
  %v4996 = vmax.f32 %v4969, 0.0
  %v4997 = vmax.f32 %v4970, 0.0
  %v4998 = vmax.f32 %v4971, 0.0
  %v4999 = vmax.f32 %v4972, 0.0
  %v5000 = vmax.f32 %v4973, 0.0
  %v5001 = vmax.f32 %v4974, 0.0
  %v5002 = vmax.f32 %v4975, 0.0
  %v5003 = vmax.f32 %v4976, 0.0
  %v5004 = vmax.f32 %v4977, 0.0
  %5005 = vst [vmem:[#allocation2 + $0xd8] sm:$0xff] %v4978
  %5006 = vst [vmem:[#allocation2 + $0xe0] sm:$0xff] %v4979
  %5007 = vst [vmem:[#allocation2 + $0xe8] sm:$0xff] %v4980
  %5008 = vst [vmem:[#allocation2 + $0xf0] sm:$0xff] %v4981
  %5009 = vst [vmem:[#allocation2 + $0xf8] sm:$0xff] %v4982
  %5010 = vst [vmem:[#allocation2 + $0x100] sm:$0xff] %v4983
  %5011 = vst [vmem:[#allocation2 + $0x108] sm:$0xff] %v4984
  %5012 = vst [vmem:[#allocation2 + $0x110] sm:$0xff] %v4985
  %5013 = vst [vmem:[#allocation2 + $0x118] sm:$0xff] %v4986
  %5014 = vst [vmem:[#allocation2 + $0x120] sm:$0xff] %v4987
  %5015 = vst [vmem:[#allocation2 + $0x128] sm:$0xff] %v4988
  %5016 = vst [vmem:[#allocation2 + $0x130] sm:$0xff] %v4989
  %5017 = vst [vmem:[#allocation2 + $0x138] sm:$0xff] %v4990
  %5018 = vst [vmem:[#allocation2 + $0x140] sm:$0xff] %v4991
  %5019 = vst [vmem:[#allocation2 + $0x148] sm:$0xff] %v4992
  %5020 = vst [vmem:[#allocation2 + $0x150] sm:$0xff] %v4993
  %5021 = vst [vmem:[#allocation2 + $0x158] sm:$0xff] %v4994
  %5022 = vst [vmem:[#allocation2 + $0x160] sm:$0xff] %v4995
  %5023 = vst [vmem:[#allocation2 + $0x168] sm:$0xff] %v4996
  %5024 = vst [vmem:[#allocation2 + $0x170] sm:$0xff] %v4997
  %5025 = vst [vmem:[#allocation2 + $0x178] sm:$0xff] %v4998
  %5026 = vst [vmem:[#allocation2 + $0x180] sm:$0xff] %v4999
  %5027 = vst [vmem:[#allocation2 + $0x188] sm:$0xff] %v5000
  %5028 = vst [vmem:[#allocation2 + $0x190] sm:$0xff] %v5001
  %5029 = vst [vmem:[#allocation2 + $0x198] sm:$0xff] %v5002
  %5030 = vst [vmem:[#allocation2 + $0x1a0] sm:$0xff] %v5003
  %5031 = vst [vmem:[#allocation2 + $0x1a8] sm:$0xff] %v5004
  %v5032 = vld [vmem:[%s0 + $0x150] sm:$0xff]
  %v5033 = vld [vmem:[%s0 + $0x158] sm:$0xff]
  %v5034 = vld [vmem:[%s0 + $0x160] sm:$0xff]
  %v5035 = vld [vmem:[%s0 + $0x168] sm:$0xff]
  %v5036 = vld [vmem:[%s0 + $0x170] sm:$0xff]
  %v5037 = vld [vmem:[%s0 + $0x178] sm:$0xff]
  %v5038 = vld [vmem:[%s0 + $0x180] sm:$0xff]
  %v5039 = vld [vmem:[%s0 + $0x188] sm:$0xff]
  %v5040 = vld [vmem:[%s0 + $0x190] sm:$0xff]
  %v5041 = vld [vmem:[%s0 + $0x198] sm:$0xff]
  %v5042 = vld [vmem:[%s0 + $0x1a0] sm:$0xff]
  %v5043 = vld [vmem:[%s0 + $0x1a8] sm:$0xff]
  %v5044 = vld [vmem:[%s0 + $0x1b0] sm:$0xff]
  %v5045 = vld [vmem:[%s0 + $0x1b8] sm:$0xff]
  %v5046 = vld [vmem:[%s0 + $0x1c0] sm:$0xff]
  %v5047 = vld [vmem:[%s0 + $0x1c8] sm:$0xff]
  %v5048 = vld [vmem:[%s0 + $0x1d0] sm:$0xff]
  %v5049 = vld [vmem:[%s0 + $0x1d8] sm:$0xff]
  %v5050 = vld [vmem:[%s0 + $0x1e0] sm:$0xff]
  %v5051 = vld [vmem:[%s0 + $0x1e8] sm:$0xff]
  %v5052 = vld [vmem:[%s0 + $0x1f0] sm:$0xff]
  %v5053 = vld [vmem:[%s0 + $0x1f8] sm:$0xff]
  %v5054 = vld [vmem:[%s0 + $0x200] sm:$0xff]
  %v5055 = vld [vmem:[%s0 + $0x208] sm:$0xff]
  %v5056 = vld [vmem:[%s0 + $0x210] sm:$0xff]
  %v5057 = vld [vmem:[%s0 + $0x218] sm:$0xff]
  %v5058 = vld [vmem:[%s0 + $0x220] sm:$0xff]
  %v5059 = vld [vmem:[%s0 + $0x228] sm:$0xff]
  %v5060 = vld [vmem:[%s0 + $0x230] sm:$0xff]
  %v5061 = vld [vmem:[%s0 + $0x238] sm:$0xff]
  %v5062 = vld [vmem:[%s0 + $0x240] sm:$0xff]
  %v5063 = vld [vmem:[%s0 + $0x248] sm:$0xff]
  %v5064 = vld [vmem:[%s0 + $0x250] sm:$0xff]
  %v5065 = vld [vmem:[%s0 + $0x258] sm:$0xff]
  %v5066 = vld [vmem:[%s0 + $0x260] sm:$0xff]
  %v5067 = vpack.c.bf16 %v5033, %v5032
  %v5068 = vpack.c.bf16 %v5035, %v5034
  %v5069 = vpack.c.bf16 %v5037, %v5036
  %v5070 = vpack.c.bf16 %v5039, %v5038
  %v5071 = vpack.c.bf16 %v5041, %v5040
  %v5072 = vpack.c.bf16 %v5043, %v5042
  %v5073 = vpack.c.bf16 %v5045, %v5044
  %v5074 = vpack.c.bf16 %v5047, %v5046
  %v5075 = vpack.c.bf16 %v5049, %v5048
  %v5076 = vpack.c.bf16 %v5051, %v5050
  %v5077 = vpack.c.bf16 %v5053, %v5052
  %v5078 = vpack.c.bf16 %v5055, %v5054
  %v5079 = vpack.c.bf16 %v5057, %v5056
  %v5080 = vpack.c.bf16 %v5059, %v5058
  %v5081 = vpack.c.bf16 %v5061, %v5060
  %v5082 = vpack.c.bf16 %v5063, %v5062
  %v5083 = vpack.c.bf16 %v5065, %v5064
  %v5084 = vpack.c.bf16 %v5066, %v5066
  %s5085 = scalar_lea.vmem %s1, 2592
  %v5086 = vld [vmem:[%s5085] sm:$0xff]
  %v5087 = vld [vmem:[%s5085 + $0x8] sm:$0xf]
  %v5088 = vld [vmem:[%s5085 + $0xc] sm:$0xff]
  %v5089 = vld [vmem:[%s5085 + $0x14] sm:$0xf]
  %v5090 = vld [vmem:[%s5085 + $0x18] sm:$0xff]
  %v5091 = vld [vmem:[%s5085 + $0x20] sm:$0xf]
  %v5092 = vld [vmem:[%s5085 + $0x24] sm:$0xff]
  %v5093 = vld [vmem:[%s5085 + $0x2c] sm:$0xf]
  %v5094 = vld [vmem:[%s5085 + $0x30] sm:$0xff]
  %v5095 = vld [vmem:[%s5085 + $0x38] sm:$0xf]
  %v5096 = vld [vmem:[%s5085 + $0x3c] sm:$0xff]
  %v5097 = vld [vmem:[%s5085 + $0x44] sm:$0xf]
  %v5098 = vld [vmem:[%s5085 + $0x48] sm:$0xff]
  %v5099 = vld [vmem:[%s5085 + $0x50] sm:$0xf]
  %v5100 = vld [vmem:[%s5085 + $0x54] sm:$0xff]
  %v5101 = vld [vmem:[%s5085 + $0x5c] sm:$0xf]
  %v5102 = vld [vmem:[%s5085 + $0x60] sm:$0xff]
  %v5103 = vld [vmem:[%s5085 + $0x68] sm:$0xf]
  %v5104 = vld [vmem:[%s5085 + $0x6c] sm:$0xff]
  %v5105 = vld [vmem:[%s5085 + $0x74] sm:$0xf]
  %v5106 = vld [vmem:[%s5085 + $0x78] sm:$0xff]
  %v5107 = vld [vmem:[%s5085 + $0x80] sm:$0xf]
  %v5108 = vld [vmem:[%s5085 + $0x84] sm:$0xff]
  %v5109 = vld [vmem:[%s5085 + $0x8c] sm:$0xf]
  %v5110 = vld [vmem:[%s5085 + $0x90] sm:$0xff]
  %v5111 = vld [vmem:[%s5085 + $0x98] sm:$0xf]
  %v5112 = vld [vmem:[%s5085 + $0x9c] sm:$0xff]
  %v5113 = vld [vmem:[%s5085 + $0xa4] sm:$0xf]
  %v5114 = vld [vmem:[%s5085 + $0xa8] sm:$0xff]
  %v5115 = vld [vmem:[%s5085 + $0xb0] sm:$0xf]
  %v5116 = vld [vmem:[%s5085 + $0xb4] sm:$0xff]
  %v5117 = vld [vmem:[%s5085 + $0xbc] sm:$0xf]
  %v5118 = vld [vmem:[%s5085 + $0xc0] sm:$0xff]
  %v5119 = vld [vmem:[%s5085 + $0xc8] sm:$0xf]
  %v5120 = vld [vmem:[%s5085 + $0xcc] sm:$0xff]
  %v5121 = vld [vmem:[%s5085 + $0xd4] sm:$0xf]
  %v5122 = vld [vmem:[%s5085 + $0xd8] sm:$0xff]
  %v5123 = vld [vmem:[%s5085 + $0xe0] sm:$0xf]
  %v5124 = vld [vmem:[%s5085 + $0xe4] sm:$0xff]
  %v5125 = vld [vmem:[%s5085 + $0xec] sm:$0xf]
  %v5126 = vld [vmem:[%s5085 + $0xf0] sm:$0xff]
  %v5127 = vld [vmem:[%s5085 + $0xf8] sm:$0xf]
  %v5128 = vld [vmem:[%s5085 + $0xfc] sm:$0xff]
  %v5129 = vld [vmem:[%s5085 + $0x104] sm:$0xf]
  %v5130 = vld [vmem:[%s5085 + $0x108] sm:$0xff]
  %v5131 = vld [vmem:[%s5085 + $0x110] sm:$0xf]
  %v5132 = vld [vmem:[%s5085 + $0x114] sm:$0xff]
  %v5133 = vld [vmem:[%s5085 + $0x11c] sm:$0xf]
  %v5134 = vld [vmem:[%s5085 + $0x120] sm:$0xff]
  %v5135 = vld [vmem:[%s5085 + $0x128] sm:$0xf]
  %v5136 = vld [vmem:[%s5085 + $0x12c] sm:$0xff]
  %v5137 = vld [vmem:[%s5085 + $0x134] sm:$0xf]
  %v5138 = vld [vmem:[%s5085 + $0x138] sm:$0xff]
  %v5139 = vld [vmem:[%s5085 + $0x140] sm:$0xf]
  %v5140 = vld [vmem:[%s5085 + $0x144] sm:$0xff]
  %v5141 = vld [vmem:[%s5085 + $0x14c] sm:$0xf]
  %v5142 = vld [vmem:[%s5085 + $0x150] sm:$0xff]
  %v5143 = vld [vmem:[%s5085 + $0x158] sm:$0xf]
  %v5144 = vld [vmem:[%s5085 + $0x15c] sm:$0xff]
  %v5145 = vld [vmem:[%s5085 + $0x164] sm:$0xf]
  %v5146 = vld [vmem:[%s5085 + $0x168] sm:$0xff]
  %v5147 = vld [vmem:[%s5085 + $0x170] sm:$0xf]
  %v5148 = vld [vmem:[%s5085 + $0x174] sm:$0xff]
  %v5149 = vld [vmem:[%s5085 + $0x17c] sm:$0xf]
  %v5150 = vld [vmem:[%s5085 + $0x180] sm:$0xff]
  %v5151 = vld [vmem:[%s5085 + $0x188] sm:$0xf]
  %v5152 = vld [vmem:[%s5085 + $0x18c] sm:$0xff]
  %v5153 = vld [vmem:[%s5085 + $0x194] sm:$0xf]
  %v5154 = vld [vmem:[%s5085 + $0x198] sm:$0xff]
  %v5155 = vld [vmem:[%s5085 + $0x1a0] sm:$0xf]
  %v5156 = vld [vmem:[%s5085 + $0x1a4] sm:$0xff]
  %v5157 = vld [vmem:[%s5085 + $0x1ac] sm:$0xf]
  %v5158 = vld [vmem:[%s5085 + $0x1b0] sm:$0xff]
  %v5159 = vld [vmem:[%s5085 + $0x1b8] sm:$0xf]
  %v5160 = vld [vmem:[%s5085 + $0x1bc] sm:$0xff]
  %v5161 = vld [vmem:[%s5085 + $0x1c4] sm:$0xf]
  %v5162 = vld [vmem:[%s5085 + $0x1c8] sm:$0xff]
  %v5163 = vld [vmem:[%s5085 + $0x1d0] sm:$0xf]
  %v5164 = vld [vmem:[%s5085 + $0x1d4] sm:$0xff]
  %v5165 = vld [vmem:[%s5085 + $0x1dc] sm:$0xf]
  %v5166 = vld [vmem:[%s5085 + $0x1e0] sm:$0xff]
  %v5167 = vld [vmem:[%s5085 + $0x1e8] sm:$0xf]
  %v5168 = vld [vmem:[%s5085 + $0x1ec] sm:$0xff]
  %v5169 = vld [vmem:[%s5085 + $0x1f4] sm:$0xf]
  %v5170 = vld [vmem:[%s5085 + $0x1f8] sm:$0xff]
  %v5171 = vld [vmem:[%s5085 + $0x200] sm:$0xf]
  %v5172 = vld [vmem:[%s5085 + $0x204] sm:$0xff]
  %v5173 = vld [vmem:[%s5085 + $0x20c] sm:$0xf]
  %v5174 = vld [vmem:[%s5085 + $0x210] sm:$0xff]
  %v5175 = vld [vmem:[%s5085 + $0x218] sm:$0xf]
  %v5176 = vld [vmem:[%s5085 + $0x21c] sm:$0xff]
  %v5177 = vld [vmem:[%s5085 + $0x224] sm:$0xf]
  %v5178 = vld [vmem:[%s5085 + $0x228] sm:$0xff]
  %v5179 = vld [vmem:[%s5085 + $0x230] sm:$0xf]
  %v5180 = vld [vmem:[%s5085 + $0x234] sm:$0xff]
  %v5181 = vld [vmem:[%s5085 + $0x23c] sm:$0xf]
  %v5182 = vld [vmem:[%s5085 + $0x240] sm:$0xff]
  %v5183 = vld [vmem:[%s5085 + $0x248] sm:$0xf]
  %v5184 = vld [vmem:[%s5085 + $0x24c] sm:$0xff]
  %v5185 = vld [vmem:[%s5085 + $0x254] sm:$0xf]
  %v5186 = vld [vmem:[%s5085 + $0x258] sm:$0xff]
  %v5187 = vld [vmem:[%s5085 + $0x260] sm:$0xf]
  %v5188 = vld [vmem:[%s5085 + $0x264] sm:$0xff]
  %v5189 = vld [vmem:[%s5085 + $0x26c] sm:$0xf]
  %v5190 = vld [vmem:[%s5085 + $0x270] sm:$0xff]
  %v5191 = vld [vmem:[%s5085 + $0x278] sm:$0xf]
  %v5192 = vld [vmem:[%s5085 + $0x27c] sm:$0xff]
  %v5193 = vld [vmem:[%s5085 + $0x284] sm:$0xf]
  %v5194 = vld [vmem:[%s5085 + $0x288] sm:$0xff]
  %v5195 = vld [vmem:[%s5085 + $0x290] sm:$0xf]
  %v5196 = vld [vmem:[%s5085 + $0x294] sm:$0xff]
  %v5197 = vld [vmem:[%s5085 + $0x29c] sm:$0xf]
  %v5198 = vld [vmem:[%s5085 + $0x2a0] sm:$0xff]
  %v5199 = vld [vmem:[%s5085 + $0x2a8] sm:$0xf]
  %v5200 = vld [vmem:[%s5085 + $0x2ac] sm:$0xff]
  %v5201 = vld [vmem:[%s5085 + $0x2b4] sm:$0xf]
  %v5202 = vld [vmem:[%s5085 + $0x2b8] sm:$0xff]
  %v5203 = vld [vmem:[%s5085 + $0x2c0] sm:$0xf]
  %v5204 = vld [vmem:[%s5085 + $0x2c4] sm:$0xff]
  %v5205 = vld [vmem:[%s5085 + $0x2cc] sm:$0xf]
  %v5206 = vld [vmem:[%s5085 + $0x2d0] sm:$0xff]
  %v5207 = vld [vmem:[%s5085 + $0x2d8] sm:$0xf]
  %v5208 = vld [vmem:[%s5085 + $0x2dc] sm:$0xff]
  %v5209 = vld [vmem:[%s5085 + $0x2e4] sm:$0xf]
  %v5210 = vld [vmem:[%s5085 + $0x2e8] sm:$0xff]
  %v5211 = vld [vmem:[%s5085 + $0x2f0] sm:$0xf]
  %v5212 = vld [vmem:[%s5085 + $0x2f4] sm:$0xff]
  %v5213 = vld [vmem:[%s5085 + $0x2fc] sm:$0xf]
  %v5214 = vld [vmem:[%s5085 + $0x300] sm:$0xff]
  %v5215 = vld [vmem:[%s5085 + $0x308] sm:$0xf]
  %v5216 = vld [vmem:[%s5085 + $0x30c] sm:$0xff]
  %v5217 = vld [vmem:[%s5085 + $0x314] sm:$0xf]
  %v5218 = vld [vmem:[%s5085 + $0x318] sm:$0xff]
  %v5219 = vld [vmem:[%s5085 + $0x320] sm:$0xf]
  %v5220 = vld [vmem:[%s5085 + $0x324] sm:$0xff]
  %v5221 = vld [vmem:[%s5085 + $0x32c] sm:$0xf]
  %v5222 = vld [vmem:[%s5085 + $0x330] sm:$0xff]
  %v5223 = vld [vmem:[%s5085 + $0x338] sm:$0xf]
  %v5224 = vld [vmem:[%s5085 + $0x33c] sm:$0xff]
  %v5225 = vld [vmem:[%s5085 + $0x344] sm:$0xf]
  %v5226 = vld [vmem:[%s5085 + $0x348] sm:$0xff]
  %v5227 = vld [vmem:[%s5085 + $0x350] sm:$0xf]
  %v5228 = vld [vmem:[%s5085 + $0x354] sm:$0xff]
  %v5229 = vld [vmem:[%s5085 + $0x35c] sm:$0xf]
  %v5230 = vld [vmem:[%s5085 + $0x360] sm:$0xff]
  %v5231 = vld [vmem:[%s5085 + $0x368] sm:$0xf]
  %v5232 = vld [vmem:[%s5085 + $0x36c] sm:$0xff]
  %v5233 = vld [vmem:[%s5085 + $0x374] sm:$0xf]
  %v5234 = vld [vmem:[%s5085 + $0x378] sm:$0xff]
  %v5235 = vld [vmem:[%s5085 + $0x380] sm:$0xf]
  %v5236 = vld [vmem:[%s5085 + $0x384] sm:$0xff]
  %v5237 = vld [vmem:[%s5085 + $0x38c] sm:$0xf]
  %v5238 = vld [vmem:[%s5085 + $0x390] sm:$0xff]
  %v5239 = vld [vmem:[%s5085 + $0x398] sm:$0xf]
  %v5240 = vld [vmem:[%s5085 + $0x39c] sm:$0xff]
  %v5241 = vld [vmem:[%s5085 + $0x3a4] sm:$0xf]
  %v5242 = vld [vmem:[%s5085 + $0x3a8] sm:$0xff]
  %v5243 = vld [vmem:[%s5085 + $0x3b0] sm:$0xf]
  %v5244 = vld [vmem:[%s5085 + $0x3b4] sm:$0xff]
  %v5245 = vld [vmem:[%s5085 + $0x3bc] sm:$0xf]
  %v5246 = vld [vmem:[%s5085 + $0x3c0] sm:$0xff]
  %v5247 = vld [vmem:[%s5085 + $0x3c8] sm:$0xf]
  %v5248 = vld [vmem:[%s5085 + $0x3cc] sm:$0xff]
  %v5249 = vld [vmem:[%s5085 + $0x3d4] sm:$0xf]
  %v5250 = vld [vmem:[%s5085 + $0x3d8] sm:$0xff]
  %v5251 = vld [vmem:[%s5085 + $0x3e0] sm:$0xf]
  %v5252 = vld [vmem:[%s5085 + $0x3e4] sm:$0xff]
  %v5253 = vld [vmem:[%s5085 + $0x3ec] sm:$0xf]
  %v5254 = vld [vmem:[%s5085 + $0x3f0] sm:$0xff]
  %v5255 = vld [vmem:[%s5085 + $0x3f8] sm:$0xf]
  %v5256 = vld [vmem:[%s5085 + $0x3fc] sm:$0xff]
  %v5257 = vld [vmem:[%s5085 + $0x404] sm:$0xf]
  %v5258 = vld [vmem:[%s5085 + $0x408] sm:$0xff]
  %v5259 = vld [vmem:[%s5085 + $0x410] sm:$0xf]
  %v5260 = vld [vmem:[%s5085 + $0x414] sm:$0xff]
  %v5261 = vld [vmem:[%s5085 + $0x41c] sm:$0xf]
  %v5262 = vld [vmem:[%s5085 + $0x420] sm:$0xff]
  %v5263 = vld [vmem:[%s5085 + $0x428] sm:$0xf]
  %v5264 = vld [vmem:[%s5085 + $0x42c] sm:$0xff]
  %v5265 = vld [vmem:[%s5085 + $0x434] sm:$0xf]
  %v5266 = vld [vmem:[%s5085 + $0x438] sm:$0xff]
  %v5267 = vld [vmem:[%s5085 + $0x440] sm:$0xf]
  %v5268 = vld [vmem:[%s5085 + $0x444] sm:$0xff]
  %v5269 = vld [vmem:[%s5085 + $0x44c] sm:$0xf]
  %v5270 = vld [vmem:[%s5085 + $0x450] sm:$0xff]
  %v5271 = vld [vmem:[%s5085 + $0x458] sm:$0xf]
  %v5272 = vld [vmem:[%s5085 + $0x45c] sm:$0xff]
  %v5273 = vld [vmem:[%s5085 + $0x464] sm:$0xf]
  %v5274 = vld [vmem:[%s5085 + $0x468] sm:$0xff]
  %v5275 = vld [vmem:[%s5085 + $0x470] sm:$0xf]
  %v5276 = vld [vmem:[%s5085 + $0x474] sm:$0xff]
  %v5277 = vld [vmem:[%s5085 + $0x47c] sm:$0xf]
  %v5278 = vld [vmem:[%s5085 + $0x480] sm:$0xff]
  %v5279 = vld [vmem:[%s5085 + $0x488] sm:$0xf]
  %v5280 = vld [vmem:[%s5085 + $0x48c] sm:$0xff]
  %v5281 = vld [vmem:[%s5085 + $0x494] sm:$0xf]
  %v5282 = vld [vmem:[%s5085 + $0x498] sm:$0xff]
  %v5283 = vld [vmem:[%s5085 + $0x4a0] sm:$0xf]
  %v5284 = vld [vmem:[%s5085 + $0x4a4] sm:$0xff]
  %v5285 = vld [vmem:[%s5085 + $0x4ac] sm:$0xf]
  %v5286 = vld [vmem:[%s5085 + $0x4b0] sm:$0xff]
  %v5287 = vld [vmem:[%s5085 + $0x4b8] sm:$0xf]
  %v5288 = vld [vmem:[%s5085 + $0x4bc] sm:$0xff]
  %v5289 = vld [vmem:[%s5085 + $0x4c4] sm:$0xf]
  %v5290 = vld [vmem:[%s5085 + $0x4c8] sm:$0xff]
  %v5291 = vld [vmem:[%s5085 + $0x4d0] sm:$0xf]
  %v5292 = vld [vmem:[%s5085 + $0x4d4] sm:$0xff]
  %v5293 = vld [vmem:[%s5085 + $0x4dc] sm:$0xf]
  %v5294 = vld [vmem:[%s5085 + $0x4e0] sm:$0xff]
  %v5295 = vld [vmem:[%s5085 + $0x4e8] sm:$0xf]
  %v5296 = vld [vmem:[%s5085 + $0x4ec] sm:$0xff]
  %v5297 = vld [vmem:[%s5085 + $0x4f4] sm:$0xf]
  %v5298 = vld [vmem:[%s5085 + $0x4f8] sm:$0xff]
  %v5299 = vld [vmem:[%s5085 + $0x500] sm:$0xf]
  %v5300 = vld [vmem:[%s5085 + $0x504] sm:$0xff]
  %v5301 = vld [vmem:[%s5085 + $0x50c] sm:$0xf]
  %v5518 = vunpack.c.l.b16 %v5086
  %v5519 = vunpack.c.h.b16 %v5086
  %v5520 = vunpack.c.l.b16 %v5087
  %v5521 = vunpack.c.l.b16 %v5088
  %v5522 = vunpack.c.h.b16 %v5088
  %v5523 = vunpack.c.l.b16 %v5089
  %v5524 = vunpack.c.l.b16 %v5090
  %v5525 = vunpack.c.h.b16 %v5090
  %v5526 = vunpack.c.l.b16 %v5091
  %v5527 = vunpack.c.l.b16 %v5092
  %v5528 = vunpack.c.h.b16 %v5092
  %v5529 = vunpack.c.l.b16 %v5093
  %v5530 = vunpack.c.l.b16 %v5094
  %v5531 = vunpack.c.h.b16 %v5094
  %v5532 = vunpack.c.l.b16 %v5095
  %v5533 = vunpack.c.l.b16 %v5096
  %v5534 = vunpack.c.h.b16 %v5096
  %v5535 = vunpack.c.l.b16 %v5097
  %v5536 = vunpack.c.l.b16 %v5098
  %v5537 = vunpack.c.h.b16 %v5098
  %v5538 = vunpack.c.l.b16 %v5099
  %v5539 = vunpack.c.l.b16 %v5100
  %v5540 = vunpack.c.h.b16 %v5100
  %v5541 = vunpack.c.l.b16 %v5101
  %v5542 = vunpack.c.l.b16 %v5102
  %v5543 = vunpack.c.h.b16 %v5102
  %v5544 = vunpack.c.l.b16 %v5103
  %v5545 = vunpack.c.l.b16 %v5104
  %v5546 = vunpack.c.h.b16 %v5104
  %v5547 = vunpack.c.l.b16 %v5105
  %v5548 = vunpack.c.l.b16 %v5106
  %v5549 = vunpack.c.h.b16 %v5106
  %v5550 = vunpack.c.l.b16 %v5107
  %v5551 = vunpack.c.l.b16 %v5108
  %v5552 = vunpack.c.h.b16 %v5108
  %v5553 = vunpack.c.l.b16 %v5109
  %v5554 = vunpack.c.l.b16 %v5110
  %v5555 = vunpack.c.h.b16 %v5110
  %v5556 = vunpack.c.l.b16 %v5111
  %v5557 = vunpack.c.l.b16 %v5112
  %v5558 = vunpack.c.h.b16 %v5112
  %v5559 = vunpack.c.l.b16 %v5113
  %v5560 = vunpack.c.l.b16 %v5114
  %v5561 = vunpack.c.h.b16 %v5114
  %v5562 = vunpack.c.l.b16 %v5115
  %v5563 = vunpack.c.l.b16 %v5116
  %v5564 = vunpack.c.h.b16 %v5116
  %v5565 = vunpack.c.l.b16 %v5117
  %v5566 = vunpack.c.l.b16 %v5118
  %v5567 = vunpack.c.h.b16 %v5118
  %v5568 = vunpack.c.l.b16 %v5119
  %v5569 = vunpack.c.l.b16 %v5120
  %v5570 = vunpack.c.h.b16 %v5120
  %v5571 = vunpack.c.l.b16 %v5121
  %v5572 = vunpack.c.l.b16 %v5122
  %v5573 = vunpack.c.h.b16 %v5122
  %v5574 = vunpack.c.l.b16 %v5123
  %v5575 = vunpack.c.l.b16 %v5124
  %v5576 = vunpack.c.h.b16 %v5124
  %v5577 = vunpack.c.l.b16 %v5125
  %v5578 = vunpack.c.l.b16 %v5126
  %v5579 = vunpack.c.h.b16 %v5126
  %v5580 = vunpack.c.l.b16 %v5127
  %v5581 = vunpack.c.l.b16 %v5128
  %v5582 = vunpack.c.h.b16 %v5128
  %v5583 = vunpack.c.l.b16 %v5129
  %v5584 = vunpack.c.l.b16 %v5130
  %v5585 = vunpack.c.h.b16 %v5130
  %v5586 = vunpack.c.l.b16 %v5131
  %v5587 = vunpack.c.l.b16 %v5132
  %v5588 = vunpack.c.h.b16 %v5132
  %v5589 = vunpack.c.l.b16 %v5133
  %v5590 = vunpack.c.l.b16 %v5134
  %v5591 = vunpack.c.h.b16 %v5134
  %v5592 = vunpack.c.l.b16 %v5135
  %v5593 = vunpack.c.l.b16 %v5136
  %v5594 = vunpack.c.h.b16 %v5136
  %v5595 = vunpack.c.l.b16 %v5137
  %v5596 = vunpack.c.l.b16 %v5138
  %v5597 = vunpack.c.h.b16 %v5138
  %v5598 = vunpack.c.l.b16 %v5139
  %v5599 = vunpack.c.l.b16 %v5140
  %v5600 = vunpack.c.h.b16 %v5140
  %v5601 = vunpack.c.l.b16 %v5141
  %v5602 = vunpack.c.l.b16 %v5142
  %v5603 = vunpack.c.h.b16 %v5142
  %v5604 = vunpack.c.l.b16 %v5143
  %v5605 = vunpack.c.l.b16 %v5144
  %v5606 = vunpack.c.h.b16 %v5144
  %v5607 = vunpack.c.l.b16 %v5145
  %v5608 = vunpack.c.l.b16 %v5146
  %v5609 = vunpack.c.h.b16 %v5146
  %v5610 = vunpack.c.l.b16 %v5147
  %v5611 = vunpack.c.l.b16 %v5148
  %v5612 = vunpack.c.h.b16 %v5148
  %v5613 = vunpack.c.l.b16 %v5149
  %v5614 = vunpack.c.l.b16 %v5150
  %v5615 = vunpack.c.h.b16 %v5150
  %v5616 = vunpack.c.l.b16 %v5151
  %v5617 = vunpack.c.l.b16 %v5152
  %v5618 = vunpack.c.h.b16 %v5152
  %v5619 = vunpack.c.l.b16 %v5153
  %v5620 = vunpack.c.l.b16 %v5154
  %v5621 = vunpack.c.h.b16 %v5154
  %v5622 = vunpack.c.l.b16 %v5155
  %v5623 = vunpack.c.l.b16 %v5156
  %v5624 = vunpack.c.h.b16 %v5156
  %v5625 = vunpack.c.l.b16 %v5157
  %v5626 = vunpack.c.l.b16 %v5158
  %v5627 = vunpack.c.h.b16 %v5158
  %v5628 = vunpack.c.l.b16 %v5159
  %v5629 = vunpack.c.l.b16 %v5160
  %v5630 = vunpack.c.h.b16 %v5160
  %v5631 = vunpack.c.l.b16 %v5161
  %v5632 = vunpack.c.l.b16 %v5162
  %v5633 = vunpack.c.h.b16 %v5162
  %v5634 = vunpack.c.l.b16 %v5163
  %v5635 = vunpack.c.l.b16 %v5164
  %v5636 = vunpack.c.h.b16 %v5164
  %v5637 = vunpack.c.l.b16 %v5165
  %v5638 = vunpack.c.l.b16 %v5166
  %v5639 = vunpack.c.h.b16 %v5166
  %v5640 = vunpack.c.l.b16 %v5167
  %v5641 = vunpack.c.l.b16 %v5168
  %v5642 = vunpack.c.h.b16 %v5168
  %v5643 = vunpack.c.l.b16 %v5169
  %v5644 = vunpack.c.l.b16 %v5170
  %v5645 = vunpack.c.h.b16 %v5170
  %v5646 = vunpack.c.l.b16 %v5171
  %v5647 = vunpack.c.l.b16 %v5172
  %v5648 = vunpack.c.h.b16 %v5172
  %v5649 = vunpack.c.l.b16 %v5173
  %v5650 = vunpack.c.l.b16 %v5174
  %v5651 = vunpack.c.h.b16 %v5174
  %v5652 = vunpack.c.l.b16 %v5175
  %v5653 = vunpack.c.l.b16 %v5176
  %v5654 = vunpack.c.h.b16 %v5176
  %v5655 = vunpack.c.l.b16 %v5177
  %v5656 = vunpack.c.l.b16 %v5178
  %v5657 = vunpack.c.h.b16 %v5178
  %v5658 = vunpack.c.l.b16 %v5179
  %v5659 = vunpack.c.l.b16 %v5180
  %v5660 = vunpack.c.h.b16 %v5180
  %v5661 = vunpack.c.l.b16 %v5181
  %v5662 = vunpack.c.l.b16 %v5182
  %v5663 = vunpack.c.h.b16 %v5182
  %v5664 = vunpack.c.l.b16 %v5183
  %v5665 = vunpack.c.l.b16 %v5184
  %v5666 = vunpack.c.h.b16 %v5184
  %v5667 = vunpack.c.l.b16 %v5185
  %v5668 = vunpack.c.l.b16 %v5186
  %v5669 = vunpack.c.h.b16 %v5186
  %v5670 = vunpack.c.l.b16 %v5187
  %v5671 = vunpack.c.l.b16 %v5188
  %v5672 = vunpack.c.h.b16 %v5188
  %v5673 = vunpack.c.l.b16 %v5189
  %v5674 = vunpack.c.l.b16 %v5190
  %v5675 = vunpack.c.h.b16 %v5190
  %v5676 = vunpack.c.l.b16 %v5191
  %v5677 = vunpack.c.l.b16 %v5192
  %v5678 = vunpack.c.h.b16 %v5192
  %v5679 = vunpack.c.l.b16 %v5193
  %v5680 = vunpack.c.l.b16 %v5194
  %v5681 = vunpack.c.h.b16 %v5194
  %v5682 = vunpack.c.l.b16 %v5195
  %v5683 = vunpack.c.l.b16 %v5196
  %v5684 = vunpack.c.h.b16 %v5196
  %v5685 = vunpack.c.l.b16 %v5197
  %v5686 = vunpack.c.l.b16 %v5198
  %v5687 = vunpack.c.h.b16 %v5198
  %v5688 = vunpack.c.l.b16 %v5199
  %v5689 = vunpack.c.l.b16 %v5200
  %v5690 = vunpack.c.h.b16 %v5200
  %v5691 = vunpack.c.l.b16 %v5201
  %v5692 = vunpack.c.l.b16 %v5202
  %v5693 = vunpack.c.h.b16 %v5202
  %v5694 = vunpack.c.l.b16 %v5203
  %v5695 = vunpack.c.l.b16 %v5204
  %v5696 = vunpack.c.h.b16 %v5204
  %v5697 = vunpack.c.l.b16 %v5205
  %v5698 = vunpack.c.l.b16 %v5206
  %v5699 = vunpack.c.h.b16 %v5206
  %v5700 = vunpack.c.l.b16 %v5207
  %v5701 = vunpack.c.l.b16 %v5208
  %v5702 = vunpack.c.h.b16 %v5208
  %v5703 = vunpack.c.l.b16 %v5209
  %v5704 = vunpack.c.l.b16 %v5210
  %v5705 = vunpack.c.h.b16 %v5210
  %v5706 = vunpack.c.l.b16 %v5211
  %v5707 = vunpack.c.l.b16 %v5212
  %v5708 = vunpack.c.h.b16 %v5212
  %v5709 = vunpack.c.l.b16 %v5213
  %v5710 = vunpack.c.l.b16 %v5214
  %v5711 = vunpack.c.h.b16 %v5214
  %v5712 = vunpack.c.l.b16 %v5215
  %v5713 = vunpack.c.l.b16 %v5216
  %v5714 = vunpack.c.h.b16 %v5216
  %v5715 = vunpack.c.l.b16 %v5217
  %v5716 = vunpack.c.l.b16 %v5218
  %v5717 = vunpack.c.h.b16 %v5218
  %v5718 = vunpack.c.l.b16 %v5219
  %v5719 = vunpack.c.l.b16 %v5220
  %v5720 = vunpack.c.h.b16 %v5220
  %v5721 = vunpack.c.l.b16 %v5221
  %v5722 = vunpack.c.l.b16 %v5222
  %v5723 = vunpack.c.h.b16 %v5222
  %v5724 = vunpack.c.l.b16 %v5223
  %v5725 = vunpack.c.l.b16 %v5224
  %v5726 = vunpack.c.h.b16 %v5224
  %v5727 = vunpack.c.l.b16 %v5225
  %v5728 = vunpack.c.l.b16 %v5226
  %v5729 = vunpack.c.h.b16 %v5226
  %v5730 = vunpack.c.l.b16 %v5227
  %v5731 = vunpack.c.l.b16 %v5228
  %v5732 = vunpack.c.h.b16 %v5228
  %v5733 = vunpack.c.l.b16 %v5229
  %v5734 = vunpack.c.l.b16 %v5230
  %v5735 = vunpack.c.h.b16 %v5230
  %v5736 = vunpack.c.l.b16 %v5231
  %v5737 = vunpack.c.l.b16 %v5232
  %v5738 = vunpack.c.h.b16 %v5232
  %v5739 = vunpack.c.l.b16 %v5233
  %v5740 = vunpack.c.l.b16 %v5234
  %v5741 = vunpack.c.h.b16 %v5234
  %v5742 = vunpack.c.l.b16 %v5235
  %v5743 = vunpack.c.l.b16 %v5236
  %v5744 = vunpack.c.h.b16 %v5236
  %v5745 = vunpack.c.l.b16 %v5237
  %v5746 = vunpack.c.l.b16 %v5238
  %v5747 = vunpack.c.h.b16 %v5238
  %v5748 = vunpack.c.l.b16 %v5239
  %v5749 = vunpack.c.l.b16 %v5240
  %v5750 = vunpack.c.h.b16 %v5240
  %v5751 = vunpack.c.l.b16 %v5241
  %v5752 = vunpack.c.l.b16 %v5242
  %v5753 = vunpack.c.h.b16 %v5242
  %v5754 = vunpack.c.l.b16 %v5243
  %v5755 = vunpack.c.l.b16 %v5244
  %v5756 = vunpack.c.h.b16 %v5244
  %v5757 = vunpack.c.l.b16 %v5245
  %v5758 = vunpack.c.l.b16 %v5246
  %v5759 = vunpack.c.h.b16 %v5246
  %v5760 = vunpack.c.l.b16 %v5247
  %v5761 = vunpack.c.l.b16 %v5248
  %v5762 = vunpack.c.h.b16 %v5248
  %v5763 = vunpack.c.l.b16 %v5249
  %v5764 = vunpack.c.l.b16 %v5250
  %v5765 = vunpack.c.h.b16 %v5250
  %v5766 = vunpack.c.l.b16 %v5251
  %v5767 = vunpack.c.l.b16 %v5252
  %v5768 = vunpack.c.h.b16 %v5252
  %v5769 = vunpack.c.l.b16 %v5253
  %v5770 = vunpack.c.l.b16 %v5254
  %v5771 = vunpack.c.h.b16 %v5254
  %v5772 = vunpack.c.l.b16 %v5255
  %v5773 = vunpack.c.l.b16 %v5256
  %v5774 = vunpack.c.h.b16 %v5256
  %v5775 = vunpack.c.l.b16 %v5257
  %v5776 = vunpack.c.l.b16 %v5258
  %v5777 = vunpack.c.h.b16 %v5258
  %v5778 = vunpack.c.l.b16 %v5259
  %v5779 = vunpack.c.l.b16 %v5260
  %v5780 = vunpack.c.h.b16 %v5260
  %v5781 = vunpack.c.l.b16 %v5261
  %v5782 = vunpack.c.l.b16 %v5262
  %v5783 = vunpack.c.h.b16 %v5262
  %v5784 = vunpack.c.l.b16 %v5263
  %v5785 = vunpack.c.l.b16 %v5264
  %v5786 = vunpack.c.h.b16 %v5264
  %v5787 = vunpack.c.l.b16 %v5265
  %v5788 = vunpack.c.l.b16 %v5266
  %v5789 = vunpack.c.h.b16 %v5266
  %v5790 = vunpack.c.l.b16 %v5267
  %v5791 = vunpack.c.l.b16 %v5268
  %v5792 = vunpack.c.h.b16 %v5268
  %v5793 = vunpack.c.l.b16 %v5269
  %v5794 = vunpack.c.l.b16 %v5270
  %v5795 = vunpack.c.h.b16 %v5270
  %v5796 = vunpack.c.l.b16 %v5271
  %v5797 = vunpack.c.l.b16 %v5272
  %v5798 = vunpack.c.h.b16 %v5272
  %v5799 = vunpack.c.l.b16 %v5273
  %v5800 = vunpack.c.l.b16 %v5274
  %v5801 = vunpack.c.h.b16 %v5274
  %v5802 = vunpack.c.l.b16 %v5275
  %v5803 = vunpack.c.l.b16 %v5276
  %v5804 = vunpack.c.h.b16 %v5276
  %v5805 = vunpack.c.l.b16 %v5277
  %v5806 = vunpack.c.l.b16 %v5278
  %v5807 = vunpack.c.h.b16 %v5278
  %v5808 = vunpack.c.l.b16 %v5279
  %v5809 = vunpack.c.l.b16 %v5280
  %v5810 = vunpack.c.h.b16 %v5280
  %v5811 = vunpack.c.l.b16 %v5281
  %v5812 = vunpack.c.l.b16 %v5282
  %v5813 = vunpack.c.h.b16 %v5282
  %v5814 = vunpack.c.l.b16 %v5283
  %v5815 = vunpack.c.l.b16 %v5284
  %v5816 = vunpack.c.h.b16 %v5284
  %v5817 = vunpack.c.l.b16 %v5285
  %v5818 = vunpack.c.l.b16 %v5286
  %v5819 = vunpack.c.h.b16 %v5286
  %v5820 = vunpack.c.l.b16 %v5287
  %v5821 = vunpack.c.l.b16 %v5288
  %v5822 = vunpack.c.h.b16 %v5288
  %v5823 = vunpack.c.l.b16 %v5289
  %v5824 = vunpack.c.l.b16 %v5290
  %v5825 = vunpack.c.h.b16 %v5290
  %v5826 = vunpack.c.l.b16 %v5291
  %v5827 = vunpack.c.l.b16 %v5292
  %v5828 = vunpack.c.h.b16 %v5292
  %v5829 = vunpack.c.l.b16 %v5293
  %v5830 = vunpack.c.l.b16 %v5294
  %v5831 = vunpack.c.h.b16 %v5294
  %v5832 = vunpack.c.l.b16 %v5295
  %v5833 = vunpack.c.l.b16 %v5296
  %v5834 = vunpack.c.h.b16 %v5296
  %v5835 = vunpack.c.l.b16 %v5297
  %v5836 = vunpack.c.l.b16 %v5298
  %v5837 = vunpack.c.h.b16 %v5298
  %v5838 = vunpack.c.l.b16 %v5299
  %v5839 = vunpack.c.l.b16 %v5300
  %v5840 = vunpack.c.h.b16 %v5300
  %v5841 = vunpack.c.l.b16 %v5301
  %v5842 = vpack.c.b16 %v5521, %v5518
  %v5843 = vpack.c.b16 %v5522, %v5519
  %v5844 = vpack.c.b16 %v5523, %v5520
  %v5845 = vpack.c.b16 %v5527, %v5524
  %v5846 = vpack.c.b16 %v5528, %v5525
  %v5847 = vpack.c.b16 %v5529, %v5526
  %v5848 = vpack.c.b16 %v5533, %v5530
  %v5849 = vpack.c.b16 %v5534, %v5531
  %v5850 = vpack.c.b16 %v5535, %v5532
  %v5851 = vpack.c.b16 %v5539, %v5536
  %v5852 = vpack.c.b16 %v5540, %v5537
  %v5853 = vpack.c.b16 %v5541, %v5538
  %v5854 = vpack.c.b16 %v5545, %v5542
  %v5855 = vpack.c.b16 %v5546, %v5543
  %v5856 = vpack.c.b16 %v5547, %v5544
  %v5857 = vpack.c.b16 %v5551, %v5548
  %v5858 = vpack.c.b16 %v5552, %v5549
  %v5859 = vpack.c.b16 %v5553, %v5550
  %v5860 = vpack.c.b16 %v5557, %v5554
  %v5861 = vpack.c.b16 %v5558, %v5555
  %v5862 = vpack.c.b16 %v5559, %v5556
  %v5863 = vpack.c.b16 %v5563, %v5560
  %v5864 = vpack.c.b16 %v5564, %v5561
  %v5865 = vpack.c.b16 %v5565, %v5562
  %v5866 = vpack.c.b16 %v5569, %v5566
  %v5867 = vpack.c.b16 %v5570, %v5567
  %v5868 = vpack.c.b16 %v5571, %v5568
  %v5869 = vpack.c.b16 %v5575, %v5572
  %v5870 = vpack.c.b16 %v5576, %v5573
  %v5871 = vpack.c.b16 %v5577, %v5574
  %v5872 = vpack.c.b16 %v5581, %v5578
  %v5873 = vpack.c.b16 %v5582, %v5579
  %v5874 = vpack.c.b16 %v5583, %v5580
  %v5875 = vpack.c.b16 %v5587, %v5584
  %v5876 = vpack.c.b16 %v5588, %v5585
  %v5877 = vpack.c.b16 %v5589, %v5586
  %v5878 = vpack.c.b16 %v5593, %v5590
  %v5879 = vpack.c.b16 %v5594, %v5591
  %v5880 = vpack.c.b16 %v5595, %v5592
  %v5881 = vpack.c.b16 %v5599, %v5596
  %v5882 = vpack.c.b16 %v5600, %v5597
  %v5883 = vpack.c.b16 %v5601, %v5598
  %v5884 = vpack.c.b16 %v5605, %v5602
  %v5885 = vpack.c.b16 %v5606, %v5603
  %v5886 = vpack.c.b16 %v5607, %v5604
  %v5887 = vpack.c.b16 %v5611, %v5608
  %v5888 = vpack.c.b16 %v5612, %v5609
  %v5889 = vpack.c.b16 %v5613, %v5610
  %v5890 = vpack.c.b16 %v5617, %v5614
  %v5891 = vpack.c.b16 %v5618, %v5615
  %v5892 = vpack.c.b16 %v5619, %v5616
  %v5893 = vpack.c.b16 %v5623, %v5620
  %v5894 = vpack.c.b16 %v5624, %v5621
  %v5895 = vpack.c.b16 %v5625, %v5622
  %v5896 = vpack.c.b16 %v5629, %v5626
  %v5897 = vpack.c.b16 %v5630, %v5627
  %v5898 = vpack.c.b16 %v5631, %v5628
  %v5899 = vpack.c.b16 %v5635, %v5632
  %v5900 = vpack.c.b16 %v5636, %v5633
  %v5901 = vpack.c.b16 %v5637, %v5634
  %v5902 = vpack.c.b16 %v5641, %v5638
  %v5903 = vpack.c.b16 %v5642, %v5639
  %v5904 = vpack.c.b16 %v5643, %v5640
  %v5905 = vpack.c.b16 %v5647, %v5644
  %v5906 = vpack.c.b16 %v5648, %v5645
  %v5907 = vpack.c.b16 %v5649, %v5646
  %v5908 = vpack.c.b16 %v5653, %v5650
  %v5909 = vpack.c.b16 %v5654, %v5651
  %v5910 = vpack.c.b16 %v5655, %v5652
  %v5911 = vpack.c.b16 %v5659, %v5656
  %v5912 = vpack.c.b16 %v5660, %v5657
  %v5913 = vpack.c.b16 %v5661, %v5658
  %v5914 = vpack.c.b16 %v5665, %v5662
  %v5915 = vpack.c.b16 %v5666, %v5663
  %v5916 = vpack.c.b16 %v5667, %v5664
  %v5917 = vpack.c.b16 %v5671, %v5668
  %v5918 = vpack.c.b16 %v5672, %v5669
  %v5919 = vpack.c.b16 %v5673, %v5670
  %v5920 = vpack.c.b16 %v5677, %v5674
  %v5921 = vpack.c.b16 %v5678, %v5675
  %v5922 = vpack.c.b16 %v5679, %v5676
  %v5923 = vpack.c.b16 %v5683, %v5680
  %v5924 = vpack.c.b16 %v5684, %v5681
  %v5925 = vpack.c.b16 %v5685, %v5682
  %v5926 = vpack.c.b16 %v5689, %v5686
  %v5927 = vpack.c.b16 %v5690, %v5687
  %v5928 = vpack.c.b16 %v5691, %v5688
  %v5929 = vpack.c.b16 %v5695, %v5692
  %v5930 = vpack.c.b16 %v5696, %v5693
  %v5931 = vpack.c.b16 %v5697, %v5694
  %v5932 = vpack.c.b16 %v5701, %v5698
  %v5933 = vpack.c.b16 %v5702, %v5699
  %v5934 = vpack.c.b16 %v5703, %v5700
  %v5935 = vpack.c.b16 %v5707, %v5704
  %v5936 = vpack.c.b16 %v5708, %v5705
  %v5937 = vpack.c.b16 %v5709, %v5706
  %v5938 = vpack.c.b16 %v5713, %v5710
  %v5939 = vpack.c.b16 %v5714, %v5711
  %v5940 = vpack.c.b16 %v5715, %v5712
  %v5941 = vpack.c.b16 %v5719, %v5716
  %v5942 = vpack.c.b16 %v5720, %v5717
  %v5943 = vpack.c.b16 %v5721, %v5718
  %v5944 = vpack.c.b16 %v5725, %v5722
  %v5945 = vpack.c.b16 %v5726, %v5723
  %v5946 = vpack.c.b16 %v5727, %v5724
  %v5947 = vpack.c.b16 %v5731, %v5728
  %v5948 = vpack.c.b16 %v5732, %v5729
  %v5949 = vpack.c.b16 %v5733, %v5730
  %v5950 = vpack.c.b16 %v5737, %v5734
  %v5951 = vpack.c.b16 %v5738, %v5735
  %v5952 = vpack.c.b16 %v5739, %v5736
  %v5953 = vpack.c.b16 %v5743, %v5740
  %v5954 = vpack.c.b16 %v5744, %v5741
  %v5955 = vpack.c.b16 %v5745, %v5742
  %v5956 = vpack.c.b16 %v5749, %v5746
  %v5957 = vpack.c.b16 %v5750, %v5747
  %v5958 = vpack.c.b16 %v5751, %v5748
  %v5959 = vpack.c.b16 %v5755, %v5752
  %v5960 = vpack.c.b16 %v5756, %v5753
  %v5961 = vpack.c.b16 %v5757, %v5754
  %v5962 = vpack.c.b16 %v5761, %v5758
  %v5963 = vpack.c.b16 %v5762, %v5759
  %v5964 = vpack.c.b16 %v5763, %v5760
  %v5965 = vpack.c.b16 %v5767, %v5764
  %v5966 = vpack.c.b16 %v5768, %v5765
  %v5967 = vpack.c.b16 %v5769, %v5766
  %v5968 = vpack.c.b16 %v5773, %v5770
  %v5969 = vpack.c.b16 %v5774, %v5771
  %v5970 = vpack.c.b16 %v5775, %v5772
  %v5971 = vpack.c.b16 %v5779, %v5776
  %v5972 = vpack.c.b16 %v5780, %v5777
  %v5973 = vpack.c.b16 %v5781, %v5778
  %v5974 = vpack.c.b16 %v5785, %v5782
  %v5975 = vpack.c.b16 %v5786, %v5783
  %v5976 = vpack.c.b16 %v5787, %v5784
  %v5977 = vpack.c.b16 %v5791, %v5788
  %v5978 = vpack.c.b16 %v5792, %v5789
  %v5979 = vpack.c.b16 %v5793, %v5790
  %v5980 = vpack.c.b16 %v5797, %v5794
  %v5981 = vpack.c.b16 %v5798, %v5795
  %v5982 = vpack.c.b16 %v5799, %v5796
  %v5983 = vpack.c.b16 %v5803, %v5800
  %v5984 = vpack.c.b16 %v5804, %v5801
  %v5985 = vpack.c.b16 %v5805, %v5802
  %v5986 = vpack.c.b16 %v5809, %v5806
  %v5987 = vpack.c.b16 %v5810, %v5807
  %v5988 = vpack.c.b16 %v5811, %v5808
  %v5989 = vpack.c.b16 %v5815, %v5812
  %v5990 = vpack.c.b16 %v5816, %v5813
  %v5991 = vpack.c.b16 %v5817, %v5814
  %v5992 = vpack.c.b16 %v5821, %v5818
  %v5993 = vpack.c.b16 %v5822, %v5819
  %v5994 = vpack.c.b16 %v5823, %v5820
  %v5995 = vpack.c.b16 %v5827, %v5824
  %v5996 = vpack.c.b16 %v5828, %v5825
  %v5997 = vpack.c.b16 %v5829, %v5826
  %v5998 = vpack.c.b16 %v5833, %v5830
  %v5999 = vpack.c.b16 %v5834, %v5831
  %v6000 = vpack.c.b16 %v5835, %v5832
  %v6001 = vpack.c.b16 %v5839, %v5836
  %v6002 = vpack.c.b16 %v5840, %v5837
  %v6003 = vpack.c.b16 %v5841, %v5838
  %v6113 = vsel %vm1112, %v5844, 0
  %v6116 = vsel %vm1112, %v5847, 0
  %v6119 = vsel %vm1112, %v5850, 0
  %v6122 = vsel %vm1112, %v5853, 0
  %v6125 = vsel %vm1112, %v5856, 0
  %v6128 = vsel %vm1112, %v5859, 0
  %v6131 = vsel %vm1112, %v5862, 0
  %v6134 = vsel %vm1112, %v5865, 0
  %v6137 = vsel %vm1112, %v5868, 0
  %v6140 = vsel %vm1112, %v5871, 0
  %v6143 = vsel %vm1112, %v5874, 0
  %v6146 = vsel %vm1112, %v5877, 0
  %v6149 = vsel %vm1112, %v5880, 0
  %v6152 = vsel %vm1112, %v5883, 0
  %v6155 = vsel %vm1112, %v5886, 0
  %v6158 = vsel %vm1112, %v5889, 0
  %v6161 = vsel %vm1112, %v5892, 0
  %v6164 = vsel %vm1112, %v5895, 0
  %v6167 = vsel %vm1112, %v5898, 0
  %v6170 = vsel %vm1112, %v5901, 0
  %v6173 = vsel %vm1112, %v5904, 0
  %v6176 = vsel %vm1112, %v5907, 0
  %v6179 = vsel %vm1112, %v5910, 0
  %v6182 = vsel %vm1112, %v5913, 0
  %v6185 = vsel %vm1112, %v5916, 0
  %v6188 = vsel %vm1112, %v5919, 0
  %v6191 = vsel %vm1112, %v5922, 0
  %v6194 = vsel %vm1112, %v5925, 0
  %v6197 = vsel %vm1112, %v5928, 0
  %v6200 = vsel %vm1112, %v5931, 0
  %v6203 = vsel %vm1112, %v5934, 0
  %v6206 = vsel %vm1112, %v5937, 0
  %v6209 = vsel %vm1112, %v5940, 0
  %v6212 = vsel %vm1112, %v5943, 0
  %v6215 = vsel %vm1112, %v5946, 0
  %v6218 = vsel %vm1112, %v5949, 0
  %v6221 = vsel %vm1112, %v5952, 0
  %v6224 = vsel %vm1112, %v5955, 0
  %v6227 = vsel %vm1112, %v5958, 0
  %v6230 = vsel %vm1112, %v5961, 0
  %v6233 = vsel %vm1112, %v5964, 0
  %v6236 = vsel %vm1112, %v5967, 0
  %v6239 = vsel %vm1112, %v5970, 0
  %v6242 = vsel %vm1112, %v5973, 0
  %v6245 = vsel %vm1112, %v5976, 0
  %v6248 = vsel %vm1112, %v5979, 0
  %v6251 = vsel %vm1112, %v5982, 0
  %v6254 = vsel %vm1112, %v5985, 0
  %v6257 = vsel %vm1112, %v5988, 0
  %v6260 = vsel %vm1112, %v5991, 0
  %v6263 = vsel %vm1112, %v5994, 0
  %v6266 = vsel %vm1112, %v5997, 0
  %v6269 = vsel %vm1112, %v6000, 0
  %v6272 = vsel %vm1112, %v6003, 0
  %v6275 = vsel %vm1275, %v5084, 0
  %6277 = vmatprep.subr.bf16.mxu0 0
  %6278 = vmatpush1.bf16.msra.mxu0 %v5067
  %6279 = vmatprep.subr.bf16.mxu0 0
  %6280 = vmatpush1.bf16.msra.mxu0 %v5068
  %6281 = vmatprep.subr.bf16.mxu0 0
  %6282 = vmatpush1.bf16.msra.mxu0 %v5069
  %6283 = vmatprep.subr.bf16.mxu0 0
  %6284 = vmatpush1.bf16.msra.mxu0 %v5070
  %6285 = vmatprep.subr.bf16.mxu0 0
  %6286 = vmatpush1.bf16.msra.mxu0 %v5071
  %6287 = vmatprep.subr.bf16.mxu0 0
  %6288 = vmatpush1.bf16.msra.mxu0 %v5072
  %6289 = vmatprep.subr.bf16.mxu0 0
  %6290 = vmatpush1.bf16.msra.mxu0 %v5073
  %6291 = vmatprep.subr.bf16.mxu0 0
  %6292 = vmatpush1.bf16.msra.mxu0 %v5074
  %6293 = vmatprep.subr.bf16.mxu0 0
  %6294 = vmatpush1.bf16.msra.mxu0 %v5075
  %6295 = vmatprep.subr.bf16.mxu0 0
  %6296 = vmatpush1.bf16.msra.mxu0 %v5076
  %6297 = vmatprep.subr.bf16.mxu0 0
  %6298 = vmatpush1.bf16.msra.mxu0 %v5077
  %6299 = vmatprep.subr.bf16.mxu0 0
  %6300 = vmatpush1.bf16.msra.mxu0 %v5078
  %6301 = vmatprep.subr.bf16.mxu0 0
  %6302 = vmatpush1.bf16.msra.mxu0 %v5079
  %6303 = vmatprep.subr.bf16.mxu0 0
  %6304 = vmatpush1.bf16.msra.mxu0 %v5080
  %6305 = vmatprep.subr.bf16.mxu0 0
  %6306 = vmatpush1.bf16.msra.mxu0 %v5081
  %6307 = vmatprep.subr.bf16.mxu0 0
  %6308 = vmatpush1.bf16.msra.mxu0 %v5082
  %6309 = vmatprep.mubr.bf16.mxu0 %v5843
  %6310 = vmatmul.mubr.bf16.gmra.mrb[0].mxu0 %v5842
  %v6311 = vpop.f32.mrb[0].mxu0
  %v6312 = vadd.f32 0.0, %v6311
  %v6313 = vpop.f32.mrb[0].mxu0
  %v6314 = vpop.f32.mrb[0].mxu0
  %v6315 = vadd.f32 0.0, %v6314
  %v6316 = vpop.f32.mrb[0].mxu0
  %6317 = vmatprep.mubr.bf16.mxu0 %v5846
  %6318 = vmatmul.mubr.bf16.gmra.mrb[0].mxu0 %v5845
  %v6319 = vpop.f32.mrb[0].mxu0
  %v6320 = vadd.f32 0.0, %v6319
  %v6321 = vpop.f32.mrb[0].mxu0
  %v6322 = vpop.f32.mrb[0].mxu0
  %v6323 = vadd.f32 0.0, %v6322
  %v6324 = vpop.f32.mrb[0].mxu0
  %6325 = vmatprep.mubr.bf16.mxu0 %v5849
  %6326 = vmatmul.mubr.bf16.gmra.mrb[0].mxu0 %v5848
  %v6327 = vpop.f32.mrb[0].mxu0
  %v6328 = vadd.f32 0.0, %v6327
  %v6329 = vpop.f32.mrb[0].mxu0
  %v6330 = vpop.f32.mrb[0].mxu0
  %v6331 = vadd.f32 0.0, %v6330
  %v6332 = vpop.f32.mrb[0].mxu0
  %6333 = vmatprep.mubr.bf16.mxu0 %v5852
  %6334 = vmatmul.mubr.bf16.gmra.mrb[0].mxu0 %v5851
  %v6335 = vpop.f32.mrb[0].mxu0
  %v6336 = vadd.f32 0.0, %v6335
  %v6337 = vpop.f32.mrb[0].mxu0
  %v6338 = vpop.f32.mrb[0].mxu0
  %v6339 = vadd.f32 0.0, %v6338
  %v6340 = vpop.f32.mrb[0].mxu0
  %6341 = vmatprep.mubr.bf16.mxu0 %v5855
  %6342 = vmatmul.mubr.bf16.gmra.mrb[0].mxu0 %v5854
  %v6343 = vpop.f32.mrb[0].mxu0
  %v6344 = vadd.f32 0.0, %v6343
  %v6345 = vpop.f32.mrb[0].mxu0
  %v6346 = vpop.f32.mrb[0].mxu0
  %v6347 = vadd.f32 0.0, %v6346
  %v6348 = vpop.f32.mrb[0].mxu0
  %6349 = vmatprep.mubr.bf16.mxu0 %v5858
  %6350 = vmatmul.mubr.bf16.gmra.mrb[0].mxu0 %v5857
  %v6351 = vpop.f32.mrb[0].mxu0
  %v6352 = vadd.f32 0.0, %v6351
  %v6353 = vpop.f32.mrb[0].mxu0
  %v6354 = vpop.f32.mrb[0].mxu0
  %v6355 = vadd.f32 0.0, %v6354
  %v6356 = vpop.f32.mrb[0].mxu0
  %6357 = vmatprep.mubr.bf16.mxu0 %v5861
  %6358 = vmatmul.mubr.bf16.gmra.mrb[0].mxu0 %v5860
  %v6359 = vpop.f32.mrb[0].mxu0
  %v6360 = vadd.f32 0.0, %v6359
  %v6361 = vpop.f32.mrb[0].mxu0
  %v6362 = vpop.f32.mrb[0].mxu0
  %v6363 = vadd.f32 0.0, %v6362
  %v6364 = vpop.f32.mrb[0].mxu0
  %6365 = vmatprep.mubr.bf16.mxu0 %v5864
  %6366 = vmatmul.mubr.bf16.gmra.mrb[0].mxu0 %v5863
  %v6367 = vpop.f32.mrb[0].mxu0
  %v6368 = vadd.f32 0.0, %v6367
  %v6369 = vpop.f32.mrb[0].mxu0
  %v6370 = vpop.f32.mrb[0].mxu0
  %v6371 = vadd.f32 0.0, %v6370
  %v6372 = vpop.f32.mrb[0].mxu0
  %6373 = vmatprep.mubr.bf16.mxu0 %v5867
  %6374 = vmatmul.mubr.bf16.gmra.mrb[0].mxu0 %v5866
  %v6375 = vpop.f32.mrb[0].mxu0
  %v6376 = vadd.f32 0.0, %v6375
  %v6377 = vpop.f32.mrb[0].mxu0
  %v6378 = vpop.f32.mrb[0].mxu0
  %v6379 = vadd.f32 0.0, %v6378
  %v6380 = vpop.f32.mrb[0].mxu0
  %6381 = vmatprep.mubr.bf16.mxu0 %v5870
  %6382 = vmatmul.mubr.bf16.gmra.mrb[0].mxu0 %v5869
  %v6383 = vpop.f32.mrb[0].mxu0
  %v6384 = vadd.f32 0.0, %v6383
  %v6385 = vpop.f32.mrb[0].mxu0
  %v6386 = vpop.f32.mrb[0].mxu0
  %v6387 = vadd.f32 0.0, %v6386
  %v6388 = vpop.f32.mrb[0].mxu0
  %6389 = vmatprep.mubr.bf16.mxu0 %v5873
  %6390 = vmatmul.mubr.bf16.gmra.mrb[0].mxu0 %v5872
  %v6391 = vpop.f32.mrb[0].mxu0
  %v6392 = vadd.f32 0.0, %v6391
  %v6393 = vpop.f32.mrb[0].mxu0
  %v6394 = vpop.f32.mrb[0].mxu0
  %v6395 = vadd.f32 0.0, %v6394
  %v6396 = vpop.f32.mrb[0].mxu0
  %6397 = vmatprep.mubr.bf16.mxu0 %v5876
  %6398 = vmatmul.mubr.bf16.gmra.mrb[0].mxu0 %v5875
  %v6399 = vpop.f32.mrb[0].mxu0
  %v6400 = vadd.f32 0.0, %v6399
  %v6401 = vpop.f32.mrb[0].mxu0
  %v6402 = vpop.f32.mrb[0].mxu0
  %v6403 = vadd.f32 0.0, %v6402
  %v6404 = vpop.f32.mrb[0].mxu0
  %6405 = vmatprep.mubr.bf16.mxu0 %v5879
  %6406 = vmatmul.mubr.bf16.gmra.mrb[0].mxu0 %v5878
  %v6407 = vpop.f32.mrb[0].mxu0
  %v6408 = vadd.f32 0.0, %v6407
  %v6409 = vpop.f32.mrb[0].mxu0
  %v6410 = vpop.f32.mrb[0].mxu0
  %v6411 = vadd.f32 0.0, %v6410
  %v6412 = vpop.f32.mrb[0].mxu0
  %6413 = vmatprep.mubr.bf16.mxu0 %v5882
  %6414 = vmatmul.mubr.bf16.gmra.mrb[0].mxu0 %v5881
  %v6415 = vpop.f32.mrb[0].mxu0
  %v6416 = vadd.f32 0.0, %v6415
  %v6417 = vpop.f32.mrb[0].mxu0
  %v6418 = vpop.f32.mrb[0].mxu0
  %v6419 = vadd.f32 0.0, %v6418
  %v6420 = vpop.f32.mrb[0].mxu0
  %6421 = vmatprep.mubr.bf16.mxu0 %v5885
  %6422 = vmatmul.mubr.bf16.gmra.mrb[0].mxu0 %v5884
  %v6423 = vpop.f32.mrb[0].mxu0
  %v6424 = vadd.f32 0.0, %v6423
  %v6425 = vpop.f32.mrb[0].mxu0
  %v6426 = vpop.f32.mrb[0].mxu0
  %v6427 = vadd.f32 0.0, %v6426
  %v6428 = vpop.f32.mrb[0].mxu0
  %6429 = vmatprep.mubr.bf16.mxu0 %v5888
  %6430 = vmatmul.mubr.bf16.gmra.mrb[0].mxu0 %v5887
  %v6431 = vpop.f32.mrb[0].mxu0
  %v6432 = vadd.f32 0.0, %v6431
  %v6433 = vpop.f32.mrb[0].mxu0
  %v6434 = vpop.f32.mrb[0].mxu0
  %v6435 = vadd.f32 0.0, %v6434
  %v6436 = vpop.f32.mrb[0].mxu0
  %6437 = vmatprep.mubr.bf16.mxu0 %v5891
  %6438 = vmatmul.mubr.bf16.gmra.mrb[0].mxu0 %v5890
  %v6439 = vpop.f32.mrb[0].mxu0
  %v6440 = vadd.f32 0.0, %v6439
  %v6441 = vpop.f32.mrb[0].mxu0
  %v6442 = vpop.f32.mrb[0].mxu0
  %v6443 = vadd.f32 0.0, %v6442
  %v6444 = vpop.f32.mrb[0].mxu0
  %6445 = vmatprep.mubr.bf16.mxu0 %v5894
  %6446 = vmatmul.mubr.bf16.gmra.mrb[0].mxu0 %v5893
  %v6447 = vpop.f32.mrb[0].mxu0
  %v6448 = vadd.f32 0.0, %v6447
  %v6449 = vpop.f32.mrb[0].mxu0
  %v6450 = vpop.f32.mrb[0].mxu0
  %v6451 = vadd.f32 0.0, %v6450
  %v6452 = vpop.f32.mrb[0].mxu0
  %6453 = vmatprep.mubr.bf16.mxu0 %v5897
  %6454 = vmatmul.mubr.bf16.gmra.mrb[0].mxu0 %v5896
  %v6455 = vpop.f32.mrb[0].mxu0
  %v6456 = vadd.f32 0.0, %v6455
  %v6457 = vpop.f32.mrb[0].mxu0
  %v6458 = vpop.f32.mrb[0].mxu0
  %v6459 = vadd.f32 0.0, %v6458
  %v6460 = vpop.f32.mrb[0].mxu0
  %6461 = vmatprep.mubr.bf16.mxu0 %v5900
  %6462 = vmatmul.mubr.bf16.gmra.mrb[0].mxu0 %v5899
  %v6463 = vpop.f32.mrb[0].mxu0
  %v6464 = vadd.f32 0.0, %v6463
  %v6465 = vpop.f32.mrb[0].mxu0
  %v6466 = vpop.f32.mrb[0].mxu0
  %v6467 = vadd.f32 0.0, %v6466
  %v6468 = vpop.f32.mrb[0].mxu0
  %6469 = vmatprep.mubr.bf16.mxu0 %v5903
  %6470 = vmatmul.mubr.bf16.gmra.mrb[0].mxu0 %v5902
  %v6471 = vpop.f32.mrb[0].mxu0
  %v6472 = vadd.f32 0.0, %v6471
  %v6473 = vpop.f32.mrb[0].mxu0
  %v6474 = vpop.f32.mrb[0].mxu0
  %v6475 = vadd.f32 0.0, %v6474
  %v6476 = vpop.f32.mrb[0].mxu0
  %6477 = vmatprep.mubr.bf16.mxu0 %v5906
  %6478 = vmatmul.mubr.bf16.gmra.mrb[0].mxu0 %v5905
  %v6479 = vpop.f32.mrb[0].mxu0
  %v6480 = vadd.f32 0.0, %v6479
  %v6481 = vpop.f32.mrb[0].mxu0
  %v6482 = vpop.f32.mrb[0].mxu0
  %v6483 = vadd.f32 0.0, %v6482
  %v6484 = vpop.f32.mrb[0].mxu0
  %6485 = vmatprep.mubr.bf16.mxu0 %v5909
  %6486 = vmatmul.mubr.bf16.gmra.mrb[0].mxu0 %v5908
  %v6487 = vpop.f32.mrb[0].mxu0
  %v6488 = vadd.f32 0.0, %v6487
  %v6489 = vpop.f32.mrb[0].mxu0
  %v6490 = vpop.f32.mrb[0].mxu0
  %v6491 = vadd.f32 0.0, %v6490
  %v6492 = vpop.f32.mrb[0].mxu0
  %6493 = vmatprep.mubr.bf16.mxu0 %v5912
  %6494 = vmatmul.mubr.bf16.gmra.mrb[0].mxu0 %v5911
  %v6495 = vpop.f32.mrb[0].mxu0
  %v6496 = vadd.f32 0.0, %v6495
  %v6497 = vpop.f32.mrb[0].mxu0
  %v6498 = vpop.f32.mrb[0].mxu0
  %v6499 = vadd.f32 0.0, %v6498
  %v6500 = vpop.f32.mrb[0].mxu0
  %6501 = vmatprep.mubr.bf16.mxu0 %v5915
  %6502 = vmatmul.mubr.bf16.gmra.mrb[0].mxu0 %v5914
  %v6503 = vpop.f32.mrb[0].mxu0
  %v6504 = vadd.f32 0.0, %v6503
  %v6505 = vpop.f32.mrb[0].mxu0
  %v6506 = vpop.f32.mrb[0].mxu0
  %v6507 = vadd.f32 0.0, %v6506
  %v6508 = vpop.f32.mrb[0].mxu0
  %6509 = vmatprep.mubr.bf16.mxu0 %v5918
  %6510 = vmatmul.mubr.bf16.gmra.mrb[0].mxu0 %v5917
  %v6511 = vpop.f32.mrb[0].mxu0
  %v6512 = vadd.f32 0.0, %v6511
  %v6513 = vpop.f32.mrb[0].mxu0
  %v6514 = vpop.f32.mrb[0].mxu0
  %v6515 = vadd.f32 0.0, %v6514
  %v6516 = vpop.f32.mrb[0].mxu0
  %6517 = vmatprep.mubr.bf16.mxu0 %v5921
  %6518 = vmatmul.mubr.bf16.gmra.mrb[0].mxu0 %v5920
  %v6519 = vpop.f32.mrb[0].mxu0
  %v6520 = vadd.f32 0.0, %v6519
  %v6521 = vpop.f32.mrb[0].mxu0
  %v6522 = vpop.f32.mrb[0].mxu0
  %v6523 = vadd.f32 0.0, %v6522
  %v6524 = vpop.f32.mrb[0].mxu0
  %6525 = vmatprep.mubr.bf16.mxu0 %v5924
  %6526 = vmatmul.mubr.bf16.gmra.mrb[0].mxu0 %v5923
  %v6527 = vpop.f32.mrb[0].mxu0
  %v6528 = vadd.f32 0.0, %v6527
  %v6529 = vpop.f32.mrb[0].mxu0
  %v6530 = vpop.f32.mrb[0].mxu0
  %v6531 = vadd.f32 0.0, %v6530
  %v6532 = vpop.f32.mrb[0].mxu0
  %6533 = vmatprep.mubr.bf16.mxu0 %v5927
  %6534 = vmatmul.mubr.bf16.gmra.mrb[0].mxu0 %v5926
  %v6535 = vpop.f32.mrb[0].mxu0
  %v6536 = vadd.f32 0.0, %v6535
  %v6537 = vpop.f32.mrb[0].mxu0
  %v6538 = vpop.f32.mrb[0].mxu0
  %v6539 = vadd.f32 0.0, %v6538
  %v6540 = vpop.f32.mrb[0].mxu0
  %6541 = vmatprep.mubr.bf16.mxu0 %v5930
  %6542 = vmatmul.mubr.bf16.gmra.mrb[0].mxu0 %v5929
  %v6543 = vpop.f32.mrb[0].mxu0
  %v6544 = vadd.f32 0.0, %v6543
  %v6545 = vpop.f32.mrb[0].mxu0
  %v6546 = vpop.f32.mrb[0].mxu0
  %v6547 = vadd.f32 0.0, %v6546
  %v6548 = vpop.f32.mrb[0].mxu0
  %6549 = vmatprep.mubr.bf16.mxu0 %v5933
  %6550 = vmatmul.mubr.bf16.gmra.mrb[0].mxu0 %v5932
  %v6551 = vpop.f32.mrb[0].mxu0
  %v6552 = vadd.f32 0.0, %v6551
  %v6553 = vpop.f32.mrb[0].mxu0
  %v6554 = vpop.f32.mrb[0].mxu0
  %v6555 = vadd.f32 0.0, %v6554
  %v6556 = vpop.f32.mrb[0].mxu0
  %6557 = vmatprep.mubr.bf16.mxu0 %v5936
  %6558 = vmatmul.mubr.bf16.gmra.mrb[0].mxu0 %v5935
  %v6559 = vpop.f32.mrb[0].mxu0
  %v6560 = vadd.f32 0.0, %v6559
  %v6561 = vpop.f32.mrb[0].mxu0
  %v6562 = vpop.f32.mrb[0].mxu0
  %v6563 = vadd.f32 0.0, %v6562
  %v6564 = vpop.f32.mrb[0].mxu0
  %6565 = vmatprep.mubr.bf16.mxu0 %v5939
  %6566 = vmatmul.mubr.bf16.gmra.mrb[0].mxu0 %v5938
  %v6567 = vpop.f32.mrb[0].mxu0
  %v6568 = vadd.f32 0.0, %v6567
  %v6569 = vpop.f32.mrb[0].mxu0
  %v6570 = vpop.f32.mrb[0].mxu0
  %v6571 = vadd.f32 0.0, %v6570
  %v6572 = vpop.f32.mrb[0].mxu0
  %6573 = vmatprep.mubr.bf16.mxu0 %v5942
  %6574 = vmatmul.mubr.bf16.gmra.mrb[0].mxu0 %v5941
  %v6575 = vpop.f32.mrb[0].mxu0
  %v6576 = vadd.f32 0.0, %v6575
  %v6577 = vpop.f32.mrb[0].mxu0
  %v6578 = vpop.f32.mrb[0].mxu0
  %v6579 = vadd.f32 0.0, %v6578
  %v6580 = vpop.f32.mrb[0].mxu0
  %6581 = vmatprep.mubr.bf16.mxu0 %v5945
  %6582 = vmatmul.mubr.bf16.gmra.mrb[0].mxu0 %v5944
  %v6583 = vpop.f32.mrb[0].mxu0
  %v6584 = vadd.f32 0.0, %v6583
  %v6585 = vpop.f32.mrb[0].mxu0
  %v6586 = vpop.f32.mrb[0].mxu0
  %v6587 = vadd.f32 0.0, %v6586
  %v6588 = vpop.f32.mrb[0].mxu0
  %6589 = vmatprep.mubr.bf16.mxu0 %v5948
  %6590 = vmatmul.mubr.bf16.gmra.mrb[0].mxu0 %v5947
  %v6591 = vpop.f32.mrb[0].mxu0
  %v6592 = vadd.f32 0.0, %v6591
  %v6593 = vpop.f32.mrb[0].mxu0
  %v6594 = vpop.f32.mrb[0].mxu0
  %v6595 = vadd.f32 0.0, %v6594
  %v6596 = vpop.f32.mrb[0].mxu0
  %6597 = vmatprep.mubr.bf16.mxu0 %v5951
  %6598 = vmatmul.mubr.bf16.gmra.mrb[0].mxu0 %v5950
  %v6599 = vpop.f32.mrb[0].mxu0
  %v6600 = vadd.f32 0.0, %v6599
  %v6601 = vpop.f32.mrb[0].mxu0
  %v6602 = vpop.f32.mrb[0].mxu0
  %v6603 = vadd.f32 0.0, %v6602
  %v6604 = vpop.f32.mrb[0].mxu0
  %6605 = vmatprep.mubr.bf16.mxu0 %v5954
  %6606 = vmatmul.mubr.bf16.gmra.mrb[0].mxu0 %v5953
  %v6607 = vpop.f32.mrb[0].mxu0
  %v6608 = vadd.f32 0.0, %v6607
  %v6609 = vpop.f32.mrb[0].mxu0
  %v6610 = vpop.f32.mrb[0].mxu0
  %v6611 = vadd.f32 0.0, %v6610
  %v6612 = vpop.f32.mrb[0].mxu0
  %6613 = vmatprep.mubr.bf16.mxu0 %v5957
  %6614 = vmatmul.mubr.bf16.gmra.mrb[0].mxu0 %v5956
  %v6615 = vpop.f32.mrb[0].mxu0
  %v6616 = vadd.f32 0.0, %v6615
  %v6617 = vpop.f32.mrb[0].mxu0
  %v6618 = vpop.f32.mrb[0].mxu0
  %v6619 = vadd.f32 0.0, %v6618
  %v6620 = vpop.f32.mrb[0].mxu0
  %6621 = vmatprep.mubr.bf16.mxu0 %v5960
  %6622 = vmatmul.mubr.bf16.gmra.mrb[0].mxu0 %v5959
  %v6623 = vpop.f32.mrb[0].mxu0
  %v6624 = vadd.f32 0.0, %v6623
  %v6625 = vpop.f32.mrb[0].mxu0
  %v6626 = vpop.f32.mrb[0].mxu0
  %v6627 = vadd.f32 0.0, %v6626
  %v6628 = vpop.f32.mrb[0].mxu0
  %6629 = vmatprep.mubr.bf16.mxu0 %v5963
  %6630 = vmatmul.mubr.bf16.gmra.mrb[0].mxu0 %v5962
  %v6631 = vpop.f32.mrb[0].mxu0
  %v6632 = vadd.f32 0.0, %v6631
  %v6633 = vpop.f32.mrb[0].mxu0
  %v6634 = vpop.f32.mrb[0].mxu0
  %v6635 = vadd.f32 0.0, %v6634
  %v6636 = vpop.f32.mrb[0].mxu0
  %6637 = vmatprep.mubr.bf16.mxu0 %v5966
  %6638 = vmatmul.mubr.bf16.gmra.mrb[0].mxu0 %v5965
  %v6639 = vpop.f32.mrb[0].mxu0
  %v6640 = vadd.f32 0.0, %v6639
  %v6641 = vpop.f32.mrb[0].mxu0
  %v6642 = vpop.f32.mrb[0].mxu0
  %v6643 = vadd.f32 0.0, %v6642
  %v6644 = vpop.f32.mrb[0].mxu0
  %6645 = vmatprep.mubr.bf16.mxu0 %v5969
  %6646 = vmatmul.mubr.bf16.gmra.mrb[0].mxu0 %v5968
  %v6647 = vpop.f32.mrb[0].mxu0
  %v6648 = vadd.f32 0.0, %v6647
  %v6649 = vpop.f32.mrb[0].mxu0
  %v6650 = vpop.f32.mrb[0].mxu0
  %v6651 = vadd.f32 0.0, %v6650
  %v6652 = vpop.f32.mrb[0].mxu0
  %6653 = vmatprep.mubr.bf16.mxu0 %v5972
  %6654 = vmatmul.mubr.bf16.gmra.mrb[0].mxu0 %v5971
  %v6655 = vpop.f32.mrb[0].mxu0
  %v6656 = vadd.f32 0.0, %v6655
  %v6657 = vpop.f32.mrb[0].mxu0
  %v6658 = vpop.f32.mrb[0].mxu0
  %v6659 = vadd.f32 0.0, %v6658
  %v6660 = vpop.f32.mrb[0].mxu0
  %6661 = vmatprep.mubr.bf16.mxu0 %v5975
  %6662 = vmatmul.mubr.bf16.gmra.mrb[0].mxu0 %v5974
  %v6663 = vpop.f32.mrb[0].mxu0
  %v6664 = vadd.f32 0.0, %v6663
  %v6665 = vpop.f32.mrb[0].mxu0
  %v6666 = vpop.f32.mrb[0].mxu0
  %v6667 = vadd.f32 0.0, %v6666
  %v6668 = vpop.f32.mrb[0].mxu0
  %6669 = vmatprep.mubr.bf16.mxu0 %v5978
  %6670 = vmatmul.mubr.bf16.gmra.mrb[0].mxu0 %v5977
  %v6671 = vpop.f32.mrb[0].mxu0
  %v6672 = vadd.f32 0.0, %v6671
  %v6673 = vpop.f32.mrb[0].mxu0
  %v6674 = vpop.f32.mrb[0].mxu0
  %v6675 = vadd.f32 0.0, %v6674
  %v6676 = vpop.f32.mrb[0].mxu0
  %6677 = vmatprep.mubr.bf16.mxu0 %v5981
  %6678 = vmatmul.mubr.bf16.gmra.mrb[0].mxu0 %v5980
  %v6679 = vpop.f32.mrb[0].mxu0
  %v6680 = vadd.f32 0.0, %v6679
  %v6681 = vpop.f32.mrb[0].mxu0
  %v6682 = vpop.f32.mrb[0].mxu0
  %v6683 = vadd.f32 0.0, %v6682
  %v6684 = vpop.f32.mrb[0].mxu0
  %6685 = vmatprep.mubr.bf16.mxu0 %v5984
  %6686 = vmatmul.mubr.bf16.gmra.mrb[0].mxu0 %v5983
  %v6687 = vpop.f32.mrb[0].mxu0
  %v6688 = vadd.f32 0.0, %v6687
  %v6689 = vpop.f32.mrb[0].mxu0
  %v6690 = vpop.f32.mrb[0].mxu0
  %v6691 = vadd.f32 0.0, %v6690
  %v6692 = vpop.f32.mrb[0].mxu0
  %6693 = vmatprep.mubr.bf16.mxu0 %v5987
  %6694 = vmatmul.mubr.bf16.gmra.mrb[0].mxu0 %v5986
  %v6695 = vpop.f32.mrb[0].mxu0
  %v6696 = vadd.f32 0.0, %v6695
  %v6697 = vpop.f32.mrb[0].mxu0
  %v6698 = vpop.f32.mrb[0].mxu0
  %v6699 = vadd.f32 0.0, %v6698
  %v6700 = vpop.f32.mrb[0].mxu0
  %6701 = vmatprep.mubr.bf16.mxu0 %v5990
  %6702 = vmatmul.mubr.bf16.gmra.mrb[0].mxu0 %v5989
  %v6703 = vpop.f32.mrb[0].mxu0
  %v6704 = vadd.f32 0.0, %v6703
  %v6705 = vpop.f32.mrb[0].mxu0
  %v6706 = vpop.f32.mrb[0].mxu0
  %v6707 = vadd.f32 0.0, %v6706
  %v6708 = vpop.f32.mrb[0].mxu0
  %6709 = vmatprep.mubr.bf16.mxu0 %v5993
  %6710 = vmatmul.mubr.bf16.gmra.mrb[0].mxu0 %v5992
  %v6711 = vpop.f32.mrb[0].mxu0
  %v6712 = vadd.f32 0.0, %v6711
  %v6713 = vpop.f32.mrb[0].mxu0
  %v6714 = vpop.f32.mrb[0].mxu0
  %v6715 = vadd.f32 0.0, %v6714
  %v6716 = vpop.f32.mrb[0].mxu0
  %6717 = vmatprep.mubr.bf16.mxu0 %v5996
  %6718 = vmatmul.mubr.bf16.gmra.mrb[0].mxu0 %v5995
  %v6719 = vpop.f32.mrb[0].mxu0
  %v6720 = vadd.f32 0.0, %v6719
  %v6721 = vpop.f32.mrb[0].mxu0
  %v6722 = vpop.f32.mrb[0].mxu0
  %v6723 = vadd.f32 0.0, %v6722
  %v6724 = vpop.f32.mrb[0].mxu0
  %6725 = vmatprep.mubr.bf16.mxu0 %v5999
  %6726 = vmatmul.mubr.bf16.gmra.mrb[0].mxu0 %v5998
  %v6727 = vpop.f32.mrb[0].mxu0
  %v6728 = vadd.f32 0.0, %v6727
  %v6729 = vpop.f32.mrb[0].mxu0
  %v6730 = vpop.f32.mrb[0].mxu0
  %v6731 = vadd.f32 0.0, %v6730
  %v6732 = vpop.f32.mrb[0].mxu0
  %6733 = vmatprep.mubr.bf16.mxu0 %v6002
  %6734 = vmatmul.mubr.bf16.gmra.mrb[0].mxu0 %v6001
  %v6735 = vpop.f32.mrb[0].mxu0
  %v6736 = vadd.f32 0.0, %v6735
  %v6737 = vpop.f32.mrb[0].mxu0
  %v6738 = vpop.f32.mrb[0].mxu0
  %v6739 = vadd.f32 0.0, %v6738
  %v6740 = vpop.f32.mrb[0].mxu0
  %6741 = vdwg.mxu0
  %6742 = vmatprep.subr.bf16.mxu0 0
  %6743 = vmatpush1.bf16.msra.mxu0 %v5083
  %6744 = vmatprep.subr.bf16.mxu0 0
  %6745 = vmatpush1.bf16.msra.mxu0 %v6275
  %6746 = vmatprep.subr.bf16.mxu0 0
  %6747 = vmatpush1.bf16.msra.mxu0 0
  %6748 = vmatprep.subr.bf16.mxu0 0
  %6749 = vmatpush1.bf16.msra.mxu0 0
  %6750 = vmatprep.subr.bf16.mxu0 0
  %6751 = vmatpush1.bf16.msra.mxu0 0
  %6752 = vmatprep.subr.bf16.mxu0 0
  %6753 = vmatpush1.bf16.msra.mxu0 0
  %6754 = vmatprep.subr.bf16.mxu0 0
  %6755 = vmatpush1.bf16.msra.mxu0 0
  %6756 = vmatprep.subr.bf16.mxu0 0
  %6757 = vmatpush1.bf16.msra.mxu0 0
  %6758 = vmatprep.subr.bf16.mxu0 0
  %6759 = vmatpush1.bf16.msra.mxu0 0
  %6760 = vmatprep.subr.bf16.mxu0 0
  %6761 = vmatpush1.bf16.msra.mxu0 0
  %6762 = vmatprep.subr.bf16.mxu0 0
  %6763 = vmatpush1.bf16.msra.mxu0 0
  %6764 = vmatprep.subr.bf16.mxu0 0
  %6765 = vmatpush1.bf16.msra.mxu0 0
  %6766 = vmatprep.subr.bf16.mxu0 0
  %6767 = vmatpush1.bf16.msra.mxu0 0
  %6768 = vmatprep.subr.bf16.mxu0 0
  %6769 = vmatpush1.bf16.msra.mxu0 0
  %6770 = vmatprep.subr.bf16.mxu0 0
  %6771 = vmatpush1.bf16.msra.mxu0 0
  %6772 = vmatprep.subr.bf16.mxu0 0
  %6773 = vmatpush1.bf16.msra.mxu0 0
  %6774 = vmatprep.mubr.bf16.mxu0 0
  %6775 = vmatmul.mubr.bf16.gmra.mrb[0].mxu0 %v6113
  %v6776 = vpop.f32.mrb[0].mxu0
  %v6777 = vadd.f32 %v6312, %v6776
  %v6778 = vpop.f32.mrb[0].mxu0
  %v6779 = vpop.f32.mrb[0].mxu0
  %v6780 = vadd.f32 %v6315, %v6779
  %v6781 = vpop.f32.mrb[0].mxu0
  %6782 = vmatprep.mubr.bf16.mxu0 0
  %6783 = vmatmul.mubr.bf16.gmra.mrb[0].mxu0 %v6116
  %v6784 = vpop.f32.mrb[0].mxu0
  %v6785 = vadd.f32 %v6320, %v6784
  %v6786 = vpop.f32.mrb[0].mxu0
  %v6787 = vpop.f32.mrb[0].mxu0
  %v6788 = vadd.f32 %v6323, %v6787
  %v6789 = vpop.f32.mrb[0].mxu0
  %6790 = vmatprep.mubr.bf16.mxu0 0
  %6791 = vmatmul.mubr.bf16.gmra.mrb[0].mxu0 %v6119
  %v6792 = vpop.f32.mrb[0].mxu0
  %v6793 = vadd.f32 %v6328, %v6792
  %v6794 = vpop.f32.mrb[0].mxu0
  %v6795 = vpop.f32.mrb[0].mxu0
  %v6796 = vadd.f32 %v6331, %v6795
  %v6797 = vpop.f32.mrb[0].mxu0
  %6798 = vmatprep.mubr.bf16.mxu0 0
  %6799 = vmatmul.mubr.bf16.gmra.mrb[0].mxu0 %v6122
  %v6800 = vpop.f32.mrb[0].mxu0
  %v6801 = vadd.f32 %v6336, %v6800
  %v6802 = vpop.f32.mrb[0].mxu0
  %v6803 = vpop.f32.mrb[0].mxu0
  %v6804 = vadd.f32 %v6339, %v6803
  %v6805 = vpop.f32.mrb[0].mxu0
  %6806 = vmatprep.mubr.bf16.mxu0 0
  %6807 = vmatmul.mubr.bf16.gmra.mrb[0].mxu0 %v6125
  %v6808 = vpop.f32.mrb[0].mxu0
  %v6809 = vadd.f32 %v6344, %v6808
  %v6810 = vpop.f32.mrb[0].mxu0
  %v6811 = vpop.f32.mrb[0].mxu0
  %v6812 = vadd.f32 %v6347, %v6811
  %v6813 = vpop.f32.mrb[0].mxu0
  %6814 = vmatprep.mubr.bf16.mxu0 0
  %6815 = vmatmul.mubr.bf16.gmra.mrb[0].mxu0 %v6128
  %v6816 = vpop.f32.mrb[0].mxu0
  %v6817 = vadd.f32 %v6352, %v6816
  %v6818 = vpop.f32.mrb[0].mxu0
  %v6819 = vpop.f32.mrb[0].mxu0
  %v6820 = vadd.f32 %v6355, %v6819
  %v6821 = vpop.f32.mrb[0].mxu0
  %6822 = vmatprep.mubr.bf16.mxu0 0
  %6823 = vmatmul.mubr.bf16.gmra.mrb[0].mxu0 %v6131
  %v6824 = vpop.f32.mrb[0].mxu0
  %v6825 = vadd.f32 %v6360, %v6824
  %v6826 = vpop.f32.mrb[0].mxu0
  %v6827 = vpop.f32.mrb[0].mxu0
  %v6828 = vadd.f32 %v6363, %v6827
  %v6829 = vpop.f32.mrb[0].mxu0
  %6830 = vmatprep.mubr.bf16.mxu0 0
  %6831 = vmatmul.mubr.bf16.gmra.mrb[0].mxu0 %v6134
  %v6832 = vpop.f32.mrb[0].mxu0
  %v6833 = vadd.f32 %v6368, %v6832
  %v6834 = vpop.f32.mrb[0].mxu0
  %v6835 = vpop.f32.mrb[0].mxu0
  %v6836 = vadd.f32 %v6371, %v6835
  %v6837 = vpop.f32.mrb[0].mxu0
  %6838 = vmatprep.mubr.bf16.mxu0 0
  %6839 = vmatmul.mubr.bf16.gmra.mrb[0].mxu0 %v6137
  %v6840 = vpop.f32.mrb[0].mxu0
  %v6841 = vadd.f32 %v6376, %v6840
  %v6842 = vpop.f32.mrb[0].mxu0
  %v6843 = vpop.f32.mrb[0].mxu0
  %v6844 = vadd.f32 %v6379, %v6843
  %v6845 = vpop.f32.mrb[0].mxu0
  %6846 = vmatprep.mubr.bf16.mxu0 0
  %6847 = vmatmul.mubr.bf16.gmra.mrb[0].mxu0 %v6140
  %v6848 = vpop.f32.mrb[0].mxu0
  %v6849 = vadd.f32 %v6384, %v6848
  %v6850 = vpop.f32.mrb[0].mxu0
  %v6851 = vpop.f32.mrb[0].mxu0
  %v6852 = vadd.f32 %v6387, %v6851
  %v6853 = vpop.f32.mrb[0].mxu0
  %6854 = vmatprep.mubr.bf16.mxu0 0
  %6855 = vmatmul.mubr.bf16.gmra.mrb[0].mxu0 %v6143
  %v6856 = vpop.f32.mrb[0].mxu0
  %v6857 = vadd.f32 %v6392, %v6856
  %v6858 = vpop.f32.mrb[0].mxu0
  %v6859 = vpop.f32.mrb[0].mxu0
  %v6860 = vadd.f32 %v6395, %v6859
  %v6861 = vpop.f32.mrb[0].mxu0
  %6862 = vmatprep.mubr.bf16.mxu0 0
  %6863 = vmatmul.mubr.bf16.gmra.mrb[0].mxu0 %v6146
  %v6864 = vpop.f32.mrb[0].mxu0
  %v6865 = vadd.f32 %v6400, %v6864
  %v6866 = vpop.f32.mrb[0].mxu0
  %v6867 = vpop.f32.mrb[0].mxu0
  %v6868 = vadd.f32 %v6403, %v6867
  %v6869 = vpop.f32.mrb[0].mxu0
  %6870 = vmatprep.mubr.bf16.mxu0 0
  %6871 = vmatmul.mubr.bf16.gmra.mrb[0].mxu0 %v6149
  %v6872 = vpop.f32.mrb[0].mxu0
  %v6873 = vadd.f32 %v6408, %v6872
  %v6874 = vpop.f32.mrb[0].mxu0
  %v6875 = vpop.f32.mrb[0].mxu0
  %v6876 = vadd.f32 %v6411, %v6875
  %v6877 = vpop.f32.mrb[0].mxu0
  %6878 = vmatprep.mubr.bf16.mxu0 0
  %6879 = vmatmul.mubr.bf16.gmra.mrb[0].mxu0 %v6152
  %v6880 = vpop.f32.mrb[0].mxu0
  %v6881 = vadd.f32 %v6416, %v6880
  %v6882 = vpop.f32.mrb[0].mxu0
  %v6883 = vpop.f32.mrb[0].mxu0
  %v6884 = vadd.f32 %v6419, %v6883
  %v6885 = vpop.f32.mrb[0].mxu0
  %6886 = vmatprep.mubr.bf16.mxu0 0
  %6887 = vmatmul.mubr.bf16.gmra.mrb[0].mxu0 %v6155
  %v6888 = vpop.f32.mrb[0].mxu0
  %v6889 = vadd.f32 %v6424, %v6888
  %v6890 = vpop.f32.mrb[0].mxu0
  %v6891 = vpop.f32.mrb[0].mxu0
  %v6892 = vadd.f32 %v6427, %v6891
  %v6893 = vpop.f32.mrb[0].mxu0
  %6894 = vmatprep.mubr.bf16.mxu0 0
  %6895 = vmatmul.mubr.bf16.gmra.mrb[0].mxu0 %v6158
  %v6896 = vpop.f32.mrb[0].mxu0
  %v6897 = vadd.f32 %v6432, %v6896
  %v6898 = vpop.f32.mrb[0].mxu0
  %v6899 = vpop.f32.mrb[0].mxu0
  %v6900 = vadd.f32 %v6435, %v6899
  %v6901 = vpop.f32.mrb[0].mxu0
  %6902 = vmatprep.mubr.bf16.mxu0 0
  %6903 = vmatmul.mubr.bf16.gmra.mrb[0].mxu0 %v6161
  %v6904 = vpop.f32.mrb[0].mxu0
  %v6905 = vadd.f32 %v6440, %v6904
  %v6906 = vpop.f32.mrb[0].mxu0
  %v6907 = vpop.f32.mrb[0].mxu0
  %v6908 = vadd.f32 %v6443, %v6907
  %v6909 = vpop.f32.mrb[0].mxu0
  %6910 = vmatprep.mubr.bf16.mxu0 0
  %6911 = vmatmul.mubr.bf16.gmra.mrb[0].mxu0 %v6164
  %v6912 = vpop.f32.mrb[0].mxu0
  %v6913 = vadd.f32 %v6448, %v6912
  %v6914 = vpop.f32.mrb[0].mxu0
  %v6915 = vpop.f32.mrb[0].mxu0
  %v6916 = vadd.f32 %v6451, %v6915
  %v6917 = vpop.f32.mrb[0].mxu0
  %6918 = vmatprep.mubr.bf16.mxu0 0
  %6919 = vmatmul.mubr.bf16.gmra.mrb[0].mxu0 %v6167
  %v6920 = vpop.f32.mrb[0].mxu0
  %v6921 = vadd.f32 %v6456, %v6920
  %v6922 = vpop.f32.mrb[0].mxu0
  %v6923 = vpop.f32.mrb[0].mxu0
  %v6924 = vadd.f32 %v6459, %v6923
  %v6925 = vpop.f32.mrb[0].mxu0
  %6926 = vmatprep.mubr.bf16.mxu0 0
  %6927 = vmatmul.mubr.bf16.gmra.mrb[0].mxu0 %v6170
  %v6928 = vpop.f32.mrb[0].mxu0
  %v6929 = vadd.f32 %v6464, %v6928
  %v6930 = vpop.f32.mrb[0].mxu0
  %v6931 = vpop.f32.mrb[0].mxu0
  %v6932 = vadd.f32 %v6467, %v6931
  %v6933 = vpop.f32.mrb[0].mxu0
  %6934 = vmatprep.mubr.bf16.mxu0 0
  %6935 = vmatmul.mubr.bf16.gmra.mrb[0].mxu0 %v6173
  %v6936 = vpop.f32.mrb[0].mxu0
  %v6937 = vadd.f32 %v6472, %v6936
  %v6938 = vpop.f32.mrb[0].mxu0
  %v6939 = vpop.f32.mrb[0].mxu0
  %v6940 = vadd.f32 %v6475, %v6939
  %v6941 = vpop.f32.mrb[0].mxu0
  %6942 = vmatprep.mubr.bf16.mxu0 0
  %6943 = vmatmul.mubr.bf16.gmra.mrb[0].mxu0 %v6176
  %v6944 = vpop.f32.mrb[0].mxu0
  %v6945 = vadd.f32 %v6480, %v6944
  %v6946 = vpop.f32.mrb[0].mxu0
  %v6947 = vpop.f32.mrb[0].mxu0
  %v6948 = vadd.f32 %v6483, %v6947
  %v6949 = vpop.f32.mrb[0].mxu0
  %6950 = vmatprep.mubr.bf16.mxu0 0
  %6951 = vmatmul.mubr.bf16.gmra.mrb[0].mxu0 %v6179
  %v6952 = vpop.f32.mrb[0].mxu0
  %v6953 = vadd.f32 %v6488, %v6952
  %v6954 = vpop.f32.mrb[0].mxu0
  %v6955 = vpop.f32.mrb[0].mxu0
  %v6956 = vadd.f32 %v6491, %v6955
  %v6957 = vpop.f32.mrb[0].mxu0
  %6958 = vmatprep.mubr.bf16.mxu0 0
  %6959 = vmatmul.mubr.bf16.gmra.mrb[0].mxu0 %v6182
  %v6960 = vpop.f32.mrb[0].mxu0
  %v6961 = vadd.f32 %v6496, %v6960
  %v6962 = vpop.f32.mrb[0].mxu0
  %v6963 = vpop.f32.mrb[0].mxu0
  %v6964 = vadd.f32 %v6499, %v6963
  %v6965 = vpop.f32.mrb[0].mxu0
  %6966 = vmatprep.mubr.bf16.mxu0 0
  %6967 = vmatmul.mubr.bf16.gmra.mrb[0].mxu0 %v6185
  %v6968 = vpop.f32.mrb[0].mxu0
  %v6969 = vadd.f32 %v6504, %v6968
  %v6970 = vpop.f32.mrb[0].mxu0
  %v6971 = vpop.f32.mrb[0].mxu0
  %v6972 = vadd.f32 %v6507, %v6971
  %v6973 = vpop.f32.mrb[0].mxu0
  %6974 = vmatprep.mubr.bf16.mxu0 0
  %6975 = vmatmul.mubr.bf16.gmra.mrb[0].mxu0 %v6188
  %v6976 = vpop.f32.mrb[0].mxu0
  %v6977 = vadd.f32 %v6512, %v6976
  %v6978 = vpop.f32.mrb[0].mxu0
  %v6979 = vpop.f32.mrb[0].mxu0
  %v6980 = vadd.f32 %v6515, %v6979
  %v6981 = vpop.f32.mrb[0].mxu0
  %6982 = vmatprep.mubr.bf16.mxu0 0
  %6983 = vmatmul.mubr.bf16.gmra.mrb[0].mxu0 %v6191
  %v6984 = vpop.f32.mrb[0].mxu0
  %v6985 = vadd.f32 %v6520, %v6984
  %v6986 = vpop.f32.mrb[0].mxu0
  %v6987 = vpop.f32.mrb[0].mxu0
  %v6988 = vadd.f32 %v6523, %v6987
  %v6989 = vpop.f32.mrb[0].mxu0
  %6990 = vmatprep.mubr.bf16.mxu0 0
  %6991 = vmatmul.mubr.bf16.gmra.mrb[0].mxu0 %v6194
  %v6992 = vpop.f32.mrb[0].mxu0
  %v6993 = vadd.f32 %v6528, %v6992
  %v6994 = vpop.f32.mrb[0].mxu0
  %v6995 = vpop.f32.mrb[0].mxu0
  %v6996 = vadd.f32 %v6531, %v6995
  %v6997 = vpop.f32.mrb[0].mxu0
  %6998 = vmatprep.mubr.bf16.mxu0 0
  %6999 = vmatmul.mubr.bf16.gmra.mrb[0].mxu0 %v6197
  %v7000 = vpop.f32.mrb[0].mxu0
  %v7001 = vadd.f32 %v6536, %v7000
  %v7002 = vpop.f32.mrb[0].mxu0
  %v7003 = vpop.f32.mrb[0].mxu0
  %v7004 = vadd.f32 %v6539, %v7003
  %v7005 = vpop.f32.mrb[0].mxu0
  %7006 = vmatprep.mubr.bf16.mxu0 0
  %7007 = vmatmul.mubr.bf16.gmra.mrb[0].mxu0 %v6200
  %v7008 = vpop.f32.mrb[0].mxu0
  %v7009 = vadd.f32 %v6544, %v7008
  %v7010 = vpop.f32.mrb[0].mxu0
  %v7011 = vpop.f32.mrb[0].mxu0
  %v7012 = vadd.f32 %v6547, %v7011
  %v7013 = vpop.f32.mrb[0].mxu0
  %7014 = vmatprep.mubr.bf16.mxu0 0
  %7015 = vmatmul.mubr.bf16.gmra.mrb[0].mxu0 %v6203
  %v7016 = vpop.f32.mrb[0].mxu0
  %v7017 = vadd.f32 %v6552, %v7016
  %v7018 = vpop.f32.mrb[0].mxu0
  %v7019 = vpop.f32.mrb[0].mxu0
  %v7020 = vadd.f32 %v6555, %v7019
  %v7021 = vpop.f32.mrb[0].mxu0
  %7022 = vmatprep.mubr.bf16.mxu0 0
  %7023 = vmatmul.mubr.bf16.gmra.mrb[0].mxu0 %v6206
  %v7024 = vpop.f32.mrb[0].mxu0
  %v7025 = vadd.f32 %v6560, %v7024
  %v7026 = vpop.f32.mrb[0].mxu0
  %v7027 = vpop.f32.mrb[0].mxu0
  %v7028 = vadd.f32 %v6563, %v7027
  %v7029 = vpop.f32.mrb[0].mxu0
  %7030 = vmatprep.mubr.bf16.mxu0 0
  %7031 = vmatmul.mubr.bf16.gmra.mrb[0].mxu0 %v6209
  %v7032 = vpop.f32.mrb[0].mxu0
  %v7033 = vadd.f32 %v6568, %v7032
  %v7034 = vpop.f32.mrb[0].mxu0
  %v7035 = vpop.f32.mrb[0].mxu0
  %v7036 = vadd.f32 %v6571, %v7035
  %v7037 = vpop.f32.mrb[0].mxu0
  %7038 = vmatprep.mubr.bf16.mxu0 0
  %7039 = vmatmul.mubr.bf16.gmra.mrb[0].mxu0 %v6212
  %v7040 = vpop.f32.mrb[0].mxu0
  %v7041 = vadd.f32 %v6576, %v7040
  %v7042 = vpop.f32.mrb[0].mxu0
  %v7043 = vpop.f32.mrb[0].mxu0
  %v7044 = vadd.f32 %v6579, %v7043
  %v7045 = vpop.f32.mrb[0].mxu0
  %7046 = vmatprep.mubr.bf16.mxu0 0
  %7047 = vmatmul.mubr.bf16.gmra.mrb[0].mxu0 %v6215
  %v7048 = vpop.f32.mrb[0].mxu0
  %v7049 = vadd.f32 %v6584, %v7048
  %v7050 = vpop.f32.mrb[0].mxu0
  %v7051 = vpop.f32.mrb[0].mxu0
  %v7052 = vadd.f32 %v6587, %v7051
  %v7053 = vpop.f32.mrb[0].mxu0
  %7054 = vmatprep.mubr.bf16.mxu0 0
  %7055 = vmatmul.mubr.bf16.gmra.mrb[0].mxu0 %v6218
  %v7056 = vpop.f32.mrb[0].mxu0
  %v7057 = vadd.f32 %v6592, %v7056
  %v7058 = vpop.f32.mrb[0].mxu0
  %v7059 = vpop.f32.mrb[0].mxu0
  %v7060 = vadd.f32 %v6595, %v7059
  %v7061 = vpop.f32.mrb[0].mxu0
  %7062 = vmatprep.mubr.bf16.mxu0 0
  %7063 = vmatmul.mubr.bf16.gmra.mrb[0].mxu0 %v6221
  %v7064 = vpop.f32.mrb[0].mxu0
  %v7065 = vadd.f32 %v6600, %v7064
  %v7066 = vpop.f32.mrb[0].mxu0
  %v7067 = vpop.f32.mrb[0].mxu0
  %v7068 = vadd.f32 %v6603, %v7067
  %v7069 = vpop.f32.mrb[0].mxu0
  %7070 = vmatprep.mubr.bf16.mxu0 0
  %7071 = vmatmul.mubr.bf16.gmra.mrb[0].mxu0 %v6224
  %v7072 = vpop.f32.mrb[0].mxu0
  %v7073 = vadd.f32 %v6608, %v7072
  %v7074 = vpop.f32.mrb[0].mxu0
  %v7075 = vpop.f32.mrb[0].mxu0
  %v7076 = vadd.f32 %v6611, %v7075
  %v7077 = vpop.f32.mrb[0].mxu0
  %7078 = vmatprep.mubr.bf16.mxu0 0
  %7079 = vmatmul.mubr.bf16.gmra.mrb[0].mxu0 %v6227
  %v7080 = vpop.f32.mrb[0].mxu0
  %v7081 = vadd.f32 %v6616, %v7080
  %v7082 = vpop.f32.mrb[0].mxu0
  %v7083 = vpop.f32.mrb[0].mxu0
  %v7084 = vadd.f32 %v6619, %v7083
  %v7085 = vpop.f32.mrb[0].mxu0
  %7086 = vmatprep.mubr.bf16.mxu0 0
  %7087 = vmatmul.mubr.bf16.gmra.mrb[0].mxu0 %v6230
  %v7088 = vpop.f32.mrb[0].mxu0
  %v7089 = vadd.f32 %v6624, %v7088
  %v7090 = vpop.f32.mrb[0].mxu0
  %v7091 = vpop.f32.mrb[0].mxu0
  %v7092 = vadd.f32 %v6627, %v7091
  %v7093 = vpop.f32.mrb[0].mxu0
  %7094 = vmatprep.mubr.bf16.mxu0 0
  %7095 = vmatmul.mubr.bf16.gmra.mrb[0].mxu0 %v6233
  %v7096 = vpop.f32.mrb[0].mxu0
  %v7097 = vadd.f32 %v6632, %v7096
  %v7098 = vpop.f32.mrb[0].mxu0
  %v7099 = vpop.f32.mrb[0].mxu0
  %v7100 = vadd.f32 %v6635, %v7099
  %v7101 = vpop.f32.mrb[0].mxu0
  %7102 = vmatprep.mubr.bf16.mxu0 0
  %7103 = vmatmul.mubr.bf16.gmra.mrb[0].mxu0 %v6236
  %v7104 = vpop.f32.mrb[0].mxu0
  %v7105 = vadd.f32 %v6640, %v7104
  %v7106 = vpop.f32.mrb[0].mxu0
  %v7107 = vpop.f32.mrb[0].mxu0
  %v7108 = vadd.f32 %v6643, %v7107
  %v7109 = vpop.f32.mrb[0].mxu0
  %7110 = vmatprep.mubr.bf16.mxu0 0
  %7111 = vmatmul.mubr.bf16.gmra.mrb[0].mxu0 %v6239
  %v7112 = vpop.f32.mrb[0].mxu0
  %v7113 = vadd.f32 %v6648, %v7112
  %v7114 = vpop.f32.mrb[0].mxu0
  %v7115 = vpop.f32.mrb[0].mxu0
  %v7116 = vadd.f32 %v6651, %v7115
  %v7117 = vpop.f32.mrb[0].mxu0
  %7118 = vmatprep.mubr.bf16.mxu0 0
  %7119 = vmatmul.mubr.bf16.gmra.mrb[0].mxu0 %v6242
  %v7120 = vpop.f32.mrb[0].mxu0
  %v7121 = vadd.f32 %v6656, %v7120
  %v7122 = vpop.f32.mrb[0].mxu0
  %v7123 = vpop.f32.mrb[0].mxu0
  %v7124 = vadd.f32 %v6659, %v7123
  %v7125 = vpop.f32.mrb[0].mxu0
  %7126 = vmatprep.mubr.bf16.mxu0 0
  %7127 = vmatmul.mubr.bf16.gmra.mrb[0].mxu0 %v6245
  %v7128 = vpop.f32.mrb[0].mxu0
  %v7129 = vadd.f32 %v6664, %v7128
  %v7130 = vpop.f32.mrb[0].mxu0
  %v7131 = vpop.f32.mrb[0].mxu0
  %v7132 = vadd.f32 %v6667, %v7131
  %v7133 = vpop.f32.mrb[0].mxu0
  %7134 = vmatprep.mubr.bf16.mxu0 0
  %7135 = vmatmul.mubr.bf16.gmra.mrb[0].mxu0 %v6248
  %v7136 = vpop.f32.mrb[0].mxu0
  %v7137 = vadd.f32 %v6672, %v7136
  %v7138 = vpop.f32.mrb[0].mxu0
  %v7139 = vpop.f32.mrb[0].mxu0
  %v7140 = vadd.f32 %v6675, %v7139
  %v7141 = vpop.f32.mrb[0].mxu0
  %7142 = vmatprep.mubr.bf16.mxu0 0
  %7143 = vmatmul.mubr.bf16.gmra.mrb[0].mxu0 %v6251
  %v7144 = vpop.f32.mrb[0].mxu0
  %v7145 = vadd.f32 %v6680, %v7144
  %v7146 = vpop.f32.mrb[0].mxu0
  %v7147 = vpop.f32.mrb[0].mxu0
  %v7148 = vadd.f32 %v6683, %v7147
  %v7149 = vpop.f32.mrb[0].mxu0
  %7150 = vmatprep.mubr.bf16.mxu0 0
  %7151 = vmatmul.mubr.bf16.gmra.mrb[0].mxu0 %v6254
  %v7152 = vpop.f32.mrb[0].mxu0
  %v7153 = vadd.f32 %v6688, %v7152
  %v7154 = vpop.f32.mrb[0].mxu0
  %v7155 = vpop.f32.mrb[0].mxu0
  %v7156 = vadd.f32 %v6691, %v7155
  %v7157 = vpop.f32.mrb[0].mxu0
  %7158 = vmatprep.mubr.bf16.mxu0 0
  %7159 = vmatmul.mubr.bf16.gmra.mrb[0].mxu0 %v6257
  %v7160 = vpop.f32.mrb[0].mxu0
  %v7161 = vadd.f32 %v6696, %v7160
  %v7162 = vpop.f32.mrb[0].mxu0
  %v7163 = vpop.f32.mrb[0].mxu0
  %v7164 = vadd.f32 %v6699, %v7163
  %v7165 = vpop.f32.mrb[0].mxu0
  %7166 = vmatprep.mubr.bf16.mxu0 0
  %7167 = vmatmul.mubr.bf16.gmra.mrb[0].mxu0 %v6260
  %v7168 = vpop.f32.mrb[0].mxu0
  %v7169 = vadd.f32 %v6704, %v7168
  %v7170 = vpop.f32.mrb[0].mxu0
  %v7171 = vpop.f32.mrb[0].mxu0
  %v7172 = vadd.f32 %v6707, %v7171
  %v7173 = vpop.f32.mrb[0].mxu0
  %7174 = vmatprep.mubr.bf16.mxu0 0
  %7175 = vmatmul.mubr.bf16.gmra.mrb[0].mxu0 %v6263
  %v7176 = vpop.f32.mrb[0].mxu0
  %v7177 = vadd.f32 %v6712, %v7176
  %v7178 = vpop.f32.mrb[0].mxu0
  %v7179 = vpop.f32.mrb[0].mxu0
  %v7180 = vadd.f32 %v6715, %v7179
  %v7181 = vpop.f32.mrb[0].mxu0
  %7182 = vmatprep.mubr.bf16.mxu0 0
  %7183 = vmatmul.mubr.bf16.gmra.mrb[0].mxu0 %v6266
  %v7184 = vpop.f32.mrb[0].mxu0
  %v7185 = vadd.f32 %v6720, %v7184
  %v7186 = vpop.f32.mrb[0].mxu0
  %v7187 = vpop.f32.mrb[0].mxu0
  %v7188 = vadd.f32 %v6723, %v7187
  %v7189 = vpop.f32.mrb[0].mxu0
  %7190 = vmatprep.mubr.bf16.mxu0 0
  %7191 = vmatmul.mubr.bf16.gmra.mrb[0].mxu0 %v6269
  %v7192 = vpop.f32.mrb[0].mxu0
  %v7193 = vadd.f32 %v6728, %v7192
  %v7194 = vpop.f32.mrb[0].mxu0
  %v7195 = vpop.f32.mrb[0].mxu0
  %v7196 = vadd.f32 %v6731, %v7195
  %v7197 = vpop.f32.mrb[0].mxu0
  %7198 = vmatprep.mubr.bf16.mxu0 0
  %7199 = vmatmul.mubr.bf16.gmra.mrb[0].mxu0 %v6272
  %v7200 = vpop.f32.mrb[0].mxu0
  %v7201 = vadd.f32 %v6736, %v7200
  %v7202 = vpop.f32.mrb[0].mxu0
  %v7203 = vpop.f32.mrb[0].mxu0
  %v7204 = vadd.f32 %v6739, %v7203
  %v7205 = vpop.f32.mrb[0].mxu0
  %7206 = vdwg.mxu0
  %v7207 = vmax.f32 %v6777, %v6884
  %v7208 = vmax.f32 %v6780, %v6889
  %v7209 = vmax.f32 %v6785, %v6892
  %v7210 = vmax.f32 %v6788, %v6897
  %v7211 = vmax.f32 %v6793, %v6900
  %v7212 = vmax.f32 %v6796, %v6905
  %v7213 = vmax.f32 %v6801, %v6908
  %v7214 = vmax.f32 %v6804, %v6913
  %v7215 = vmax.f32 %v6809, %v6916
  %v7216 = vmax.f32 %v6812, %v6921
  %v7217 = vmax.f32 %v6817, %v6924
  %v7218 = vmax.f32 %v6820, %v6929
  %v7219 = vmax.f32 %v6825, %v6932
  %v7220 = vmax.f32 %v6828, %v6937
  %v7221 = vmax.f32 %v6833, %v6940
  %v7222 = vmax.f32 %v6836, %v6945
  %v7223 = vmax.f32 %v6841, %v6948
  %v7224 = vmax.f32 %v6844, %v6953
  %v7225 = vmax.f32 %v6849, %v6956
  %v7226 = vmax.f32 %v6852, %v6961
  %v7227 = vmax.f32 %v6857, %v6964
  %v7228 = vmax.f32 %v6860, %v6969
  %v7229 = vmax.f32 %v6865, %v6972
  %v7230 = vmax.f32 %v6868, %v6977
  %v7231 = vmax.f32 %v6873, %v6980
  %v7232 = vmax.f32 %v6876, %v6985
  %v7233 = vmax.f32 %v6881, %v6988
  %v7234 = vmax.f32 %v6993, %v7100
  %v7235 = vmax.f32 %v6996, %v7105
  %v7236 = vmax.f32 %v7001, %v7108
  %v7237 = vmax.f32 %v7004, %v7113
  %v7238 = vmax.f32 %v7009, %v7116
  %v7239 = vmax.f32 %v7012, %v7121
  %v7240 = vmax.f32 %v7017, %v7124
  %v7241 = vmax.f32 %v7020, %v7129
  %v7242 = vmax.f32 %v7025, %v7132
  %v7243 = vmax.f32 %v7028, %v7137
  %v7244 = vmax.f32 %v7033, %v7140
  %v7245 = vmax.f32 %v7036, %v7145
  %v7246 = vmax.f32 %v7041, %v7148
  %v7247 = vmax.f32 %v7044, %v7153
  %v7248 = vmax.f32 %v7049, %v7156
  %v7249 = vmax.f32 %v7052, %v7161
  %v7250 = vmax.f32 %v7057, %v7164
  %v7251 = vmax.f32 %v7060, %v7169
  %v7252 = vmax.f32 %v7065, %v7172
  %v7253 = vmax.f32 %v7068, %v7177
  %v7254 = vmax.f32 %v7073, %v7180
  %v7255 = vmax.f32 %v7076, %v7185
  %v7256 = vmax.f32 %v7081, %v7188
  %v7257 = vmax.f32 %v7084, %v7193
  %v7258 = vmax.f32 %v7089, %v7196
  %v7259 = vmax.f32 %v7092, %v7201
  %v7260 = vmax.f32 %v7097, %v7204
  %v7261 = vmax.f32 %v7207, %v7234
  %v7262 = vmax.f32 %v7208, %v7235
  %v7263 = vmax.f32 %v7209, %v7236
  %v7264 = vmax.f32 %v7210, %v7237
  %v7265 = vmax.f32 %v7211, %v7238
  %v7266 = vmax.f32 %v7212, %v7239
  %v7267 = vmax.f32 %v7213, %v7240
  %v7268 = vmax.f32 %v7214, %v7241
  %v7269 = vmax.f32 %v7215, %v7242
  %v7270 = vmax.f32 %v7216, %v7243
  %v7271 = vmax.f32 %v7217, %v7244
  %v7272 = vmax.f32 %v7218, %v7245
  %v7273 = vmax.f32 %v7219, %v7246
  %v7274 = vmax.f32 %v7220, %v7247
  %v7275 = vmax.f32 %v7221, %v7248
  %v7276 = vmax.f32 %v7222, %v7249
  %v7277 = vmax.f32 %v7223, %v7250
  %v7278 = vmax.f32 %v7224, %v7251
  %v7279 = vmax.f32 %v7225, %v7252
  %v7280 = vmax.f32 %v7226, %v7253
  %v7281 = vmax.f32 %v7227, %v7254
  %v7282 = vmax.f32 %v7228, %v7255
  %v7283 = vmax.f32 %v7229, %v7256
  %v7284 = vmax.f32 %v7230, %v7257
  %v7285 = vmax.f32 %v7231, %v7258
  %v7286 = vmax.f32 %v7232, %v7259
  %v7287 = vmax.f32 %v7233, %v7260
  %v7288 = vld [vmem:[%s2 + $0x1b0] sm:$0xff]
  %v7289 = vld [vmem:[%s2 + $0x1b8] sm:$0xff]
  %v7290 = vld [vmem:[%s2 + $0x1c0] sm:$0xff]
  %v7291 = vld [vmem:[%s2 + $0x1c8] sm:$0xff]
  %v7292 = vld [vmem:[%s2 + $0x1d0] sm:$0xff]
  %v7293 = vld [vmem:[%s2 + $0x1d8] sm:$0xff]
  %v7294 = vld [vmem:[%s2 + $0x1e0] sm:$0xff]
  %v7295 = vld [vmem:[%s2 + $0x1e8] sm:$0xff]
  %v7296 = vld [vmem:[%s2 + $0x1f0] sm:$0xff]
  %v7297 = vld [vmem:[%s2 + $0x1f8] sm:$0xff]
  %v7298 = vld [vmem:[%s2 + $0x200] sm:$0xff]
  %v7299 = vld [vmem:[%s2 + $0x208] sm:$0xff]
  %v7300 = vld [vmem:[%s2 + $0x210] sm:$0xff]
  %v7301 = vld [vmem:[%s2 + $0x218] sm:$0xff]
  %v7302 = vld [vmem:[%s2 + $0x220] sm:$0xff]
  %v7303 = vld [vmem:[%s2 + $0x228] sm:$0xff]
  %v7304 = vld [vmem:[%s2 + $0x230] sm:$0xff]
  %v7305 = vld [vmem:[%s2 + $0x238] sm:$0xff]
  %v7306 = vld [vmem:[%s2 + $0x240] sm:$0xff]
  %v7307 = vld [vmem:[%s2 + $0x248] sm:$0xff]
  %v7308 = vld [vmem:[%s2 + $0x250] sm:$0xff]
  %v7309 = vld [vmem:[%s2 + $0x258] sm:$0xff]
  %v7310 = vld [vmem:[%s2 + $0x260] sm:$0xff]
  %v7311 = vld [vmem:[%s2 + $0x268] sm:$0xff]
  %v7312 = vld [vmem:[%s2 + $0x270] sm:$0xff]
  %v7313 = vld [vmem:[%s2 + $0x278] sm:$0xff]
  %v7314 = vld [vmem:[%s2 + $0x280] sm:$0xff]
  %7316 = vset.pattern.permute.xlu0 0
  %7317 = vperm.xlu0 %7316, %v7288
  %v7318 = vpop.permute.xlu0 %7317
  %7321 = vset.pattern.permute.xlu0 0
  %7322 = vperm.xlu0 %7321, %v7289
  %v7323 = vpop.permute.xlu0 %7322
  %7326 = vset.pattern.permute.xlu0 0
  %7327 = vperm.xlu0 %7326, %v7290
  %v7328 = vpop.permute.xlu0 %7327
  %7331 = vset.pattern.permute.xlu0 0
  %7332 = vperm.xlu0 %7331, %v7291
  %v7333 = vpop.permute.xlu0 %7332
  %7336 = vset.pattern.permute.xlu0 0
  %7337 = vperm.xlu0 %7336, %v7292
  %v7338 = vpop.permute.xlu0 %7337
  %7341 = vset.pattern.permute.xlu0 0
  %7342 = vperm.xlu0 %7341, %v7293
  %v7343 = vpop.permute.xlu0 %7342
  %7346 = vset.pattern.permute.xlu0 0
  %7347 = vperm.xlu0 %7346, %v7294
  %v7348 = vpop.permute.xlu0 %7347
  %7351 = vset.pattern.permute.xlu0 0
  %7352 = vperm.xlu0 %7351, %v7295
  %v7353 = vpop.permute.xlu0 %7352
  %7356 = vset.pattern.permute.xlu0 0
  %7357 = vperm.xlu0 %7356, %v7296
  %v7358 = vpop.permute.xlu0 %7357
  %7361 = vset.pattern.permute.xlu0 0
  %7362 = vperm.xlu0 %7361, %v7297
  %v7363 = vpop.permute.xlu0 %7362
  %7366 = vset.pattern.permute.xlu0 0
  %7367 = vperm.xlu0 %7366, %v7298
  %v7368 = vpop.permute.xlu0 %7367
  %7371 = vset.pattern.permute.xlu0 0
  %7372 = vperm.xlu0 %7371, %v7299
  %v7373 = vpop.permute.xlu0 %7372
  %7376 = vset.pattern.permute.xlu0 0
  %7377 = vperm.xlu0 %7376, %v7300
  %v7378 = vpop.permute.xlu0 %7377
  %7381 = vset.pattern.permute.xlu0 0
  %7382 = vperm.xlu0 %7381, %v7301
  %v7383 = vpop.permute.xlu0 %7382
  %7386 = vset.pattern.permute.xlu0 0
  %7387 = vperm.xlu0 %7386, %v7302
  %v7388 = vpop.permute.xlu0 %7387
  %7391 = vset.pattern.permute.xlu0 0
  %7392 = vperm.xlu0 %7391, %v7303
  %v7393 = vpop.permute.xlu0 %7392
  %7396 = vset.pattern.permute.xlu0 0
  %7397 = vperm.xlu0 %7396, %v7304
  %v7398 = vpop.permute.xlu0 %7397
  %7401 = vset.pattern.permute.xlu0 0
  %7402 = vperm.xlu0 %7401, %v7305
  %v7403 = vpop.permute.xlu0 %7402
  %7406 = vset.pattern.permute.xlu0 0
  %7407 = vperm.xlu0 %7406, %v7306
  %v7408 = vpop.permute.xlu0 %7407
  %7411 = vset.pattern.permute.xlu0 0
  %7412 = vperm.xlu0 %7411, %v7307
  %v7413 = vpop.permute.xlu0 %7412
  %7416 = vset.pattern.permute.xlu0 0
  %7417 = vperm.xlu0 %7416, %v7308
  %v7418 = vpop.permute.xlu0 %7417
  %7421 = vset.pattern.permute.xlu0 0
  %7422 = vperm.xlu0 %7421, %v7309
  %v7423 = vpop.permute.xlu0 %7422
  %7426 = vset.pattern.permute.xlu0 0
  %7427 = vperm.xlu0 %7426, %v7310
  %v7428 = vpop.permute.xlu0 %7427
  %7431 = vset.pattern.permute.xlu0 0
  %7432 = vperm.xlu0 %7431, %v7311
  %v7433 = vpop.permute.xlu0 %7432
  %7436 = vset.pattern.permute.xlu0 0
  %7437 = vperm.xlu0 %7436, %v7312
  %v7438 = vpop.permute.xlu0 %7437
  %7441 = vset.pattern.permute.xlu0 0
  %7442 = vperm.xlu0 %7441, %v7313
  %v7443 = vpop.permute.xlu0 %7442
  %7446 = vset.pattern.permute.xlu0 0
  %7447 = vperm.xlu0 %7446, %v7314
  %v7448 = vpop.permute.xlu0 %7447
  %v7450 = vadd.f32 %v7261, %v7318
  %v7451 = vadd.f32 %v7262, %v7323
  %v7452 = vadd.f32 %v7263, %v7328
  %v7453 = vadd.f32 %v7264, %v7333
  %v7454 = vadd.f32 %v7265, %v7338
  %v7455 = vadd.f32 %v7266, %v7343
  %v7456 = vadd.f32 %v7267, %v7348
  %v7457 = vadd.f32 %v7268, %v7353
  %v7458 = vadd.f32 %v7269, %v7358
  %v7459 = vadd.f32 %v7270, %v7363
  %v7460 = vadd.f32 %v7271, %v7368
  %v7461 = vadd.f32 %v7272, %v7373
  %v7462 = vadd.f32 %v7273, %v7378
  %v7463 = vadd.f32 %v7274, %v7383
  %v7464 = vadd.f32 %v7275, %v7388
  %v7465 = vadd.f32 %v7276, %v7393
  %v7466 = vadd.f32 %v7277, %v7398
  %v7467 = vadd.f32 %v7278, %v7403
  %v7468 = vadd.f32 %v7279, %v7408
  %v7469 = vadd.f32 %v7280, %v7413
  %v7470 = vadd.f32 %v7281, %v7418
  %v7471 = vadd.f32 %v7282, %v7423
  %v7472 = vadd.f32 %v7283, %v7428
  %v7473 = vadd.f32 %v7284, %v7433
  %v7474 = vadd.f32 %v7285, %v7438
  %v7475 = vadd.f32 %v7286, %v7443
  %v7476 = vadd.f32 %v7287, %v7448
  %v7477 = vmax.f32 %v7450, 0.0
  %v7478 = vmax.f32 %v7451, 0.0
  %v7479 = vmax.f32 %v7452, 0.0
  %v7480 = vmax.f32 %v7453, 0.0
  %v7481 = vmax.f32 %v7454, 0.0
  %v7482 = vmax.f32 %v7455, 0.0
  %v7483 = vmax.f32 %v7456, 0.0
  %v7484 = vmax.f32 %v7457, 0.0
  %v7485 = vmax.f32 %v7458, 0.0
  %v7486 = vmax.f32 %v7459, 0.0
  %v7487 = vmax.f32 %v7460, 0.0
  %v7488 = vmax.f32 %v7461, 0.0
  %v7489 = vmax.f32 %v7462, 0.0
  %v7490 = vmax.f32 %v7463, 0.0
  %v7491 = vmax.f32 %v7464, 0.0
  %v7492 = vmax.f32 %v7465, 0.0
  %v7493 = vmax.f32 %v7466, 0.0
  %v7494 = vmax.f32 %v7467, 0.0
  %v7495 = vmax.f32 %v7468, 0.0
  %v7496 = vmax.f32 %v7469, 0.0
  %v7497 = vmax.f32 %v7470, 0.0
  %v7498 = vmax.f32 %v7471, 0.0
  %v7499 = vmax.f32 %v7472, 0.0
  %v7500 = vmax.f32 %v7473, 0.0
  %v7501 = vmax.f32 %v7474, 0.0
  %v7502 = vmax.f32 %v7475, 0.0
  %v7503 = vmax.f32 %v7476, 0.0
  %7504 = vst [vmem:[#allocation2 + $0x1b0] sm:$0xff] %v7477
  %7505 = vst [vmem:[#allocation2 + $0x1b8] sm:$0xff] %v7478
  %7506 = vst [vmem:[#allocation2 + $0x1c0] sm:$0xff] %v7479
  %7507 = vst [vmem:[#allocation2 + $0x1c8] sm:$0xff] %v7480
  %7508 = vst [vmem:[#allocation2 + $0x1d0] sm:$0xff] %v7481
  %7509 = vst [vmem:[#allocation2 + $0x1d8] sm:$0xff] %v7482
  %7510 = vst [vmem:[#allocation2 + $0x1e0] sm:$0xff] %v7483
  %7511 = vst [vmem:[#allocation2 + $0x1e8] sm:$0xff] %v7484
  %7512 = vst [vmem:[#allocation2 + $0x1f0] sm:$0xff] %v7485
  %7513 = vst [vmem:[#allocation2 + $0x1f8] sm:$0xff] %v7486
  %7514 = vst [vmem:[#allocation2 + $0x200] sm:$0xff] %v7487
  %7515 = vst [vmem:[#allocation2 + $0x208] sm:$0xff] %v7488
  %7516 = vst [vmem:[#allocation2 + $0x210] sm:$0xff] %v7489
  %7517 = vst [vmem:[#allocation2 + $0x218] sm:$0xff] %v7490
  %7518 = vst [vmem:[#allocation2 + $0x220] sm:$0xff] %v7491
  %7519 = vst [vmem:[#allocation2 + $0x228] sm:$0xff] %v7492
  %7520 = vst [vmem:[#allocation2 + $0x230] sm:$0xff] %v7493
  %7521 = vst [vmem:[#allocation2 + $0x238] sm:$0xff] %v7494
  %7522 = vst [vmem:[#allocation2 + $0x240] sm:$0xff] %v7495
  %7523 = vst [vmem:[#allocation2 + $0x248] sm:$0xff] %v7496
  %7524 = vst [vmem:[#allocation2 + $0x250] sm:$0xff] %v7497
  %7525 = vst [vmem:[#allocation2 + $0x258] sm:$0xff] %v7498
  %7526 = vst [vmem:[#allocation2 + $0x260] sm:$0xff] %v7499
  %7527 = vst [vmem:[#allocation2 + $0x268] sm:$0xff] %v7500
  %7528 = vst [vmem:[#allocation2 + $0x270] sm:$0xff] %v7501
  %7529 = vst [vmem:[#allocation2 + $0x278] sm:$0xff] %v7502
  %7530 = vst [vmem:[#allocation2 + $0x280] sm:$0xff] %v7503
  %v7531 = vld [vmem:[%s0 + $0x1f8] sm:$0xff]
  %v7532 = vld [vmem:[%s0 + $0x200] sm:$0xff]
  %v7533 = vld [vmem:[%s0 + $0x208] sm:$0xff]
  %v7534 = vld [vmem:[%s0 + $0x210] sm:$0xff]
  %v7535 = vld [vmem:[%s0 + $0x218] sm:$0xff]
  %v7536 = vld [vmem:[%s0 + $0x220] sm:$0xff]
  %v7537 = vld [vmem:[%s0 + $0x228] sm:$0xff]
  %v7538 = vld [vmem:[%s0 + $0x230] sm:$0xff]
  %v7539 = vld [vmem:[%s0 + $0x238] sm:$0xff]
  %v7540 = vld [vmem:[%s0 + $0x240] sm:$0xff]
  %v7541 = vld [vmem:[%s0 + $0x248] sm:$0xff]
  %v7542 = vld [vmem:[%s0 + $0x250] sm:$0xff]
  %v7543 = vld [vmem:[%s0 + $0x258] sm:$0xff]
  %v7544 = vld [vmem:[%s0 + $0x260] sm:$0xff]
  %v7545 = vld [vmem:[%s0 + $0x268] sm:$0xff]
  %v7546 = vld [vmem:[%s0 + $0x270] sm:$0xff]
  %v7547 = vld [vmem:[%s0 + $0x278] sm:$0xff]
  %v7548 = vld [vmem:[%s0 + $0x280] sm:$0xff]
  %v7549 = vld [vmem:[%s0 + $0x288] sm:$0xff]
  %v7550 = vld [vmem:[%s0 + $0x290] sm:$0xff]
  %v7551 = vld [vmem:[%s0 + $0x298] sm:$0xff]
  %v7552 = vld [vmem:[%s0 + $0x2a0] sm:$0xff]
  %v7553 = vld [vmem:[%s0 + $0x2a8] sm:$0xff]
  %v7554 = vld [vmem:[%s0 + $0x2b0] sm:$0xff]
  %v7555 = vld [vmem:[%s0 + $0x2b8] sm:$0xff]
  %v7556 = vld [vmem:[%s0 + $0x2c0] sm:$0xff]
  %v7557 = vld [vmem:[%s0 + $0x2c8] sm:$0xff]
  %v7558 = vld [vmem:[%s0 + $0x2d0] sm:$0xff]
  %v7559 = vld [vmem:[%s0 + $0x2d8] sm:$0xff]
  %v7560 = vld [vmem:[%s0 + $0x2e0] sm:$0xff]
  %v7561 = vld [vmem:[%s0 + $0x2e8] sm:$0xff]
  %v7562 = vld [vmem:[%s0 + $0x2f0] sm:$0xff]
  %v7563 = vld [vmem:[%s0 + $0x2f8] sm:$0xff]
  %v7564 = vld [vmem:[%s0 + $0x300] sm:$0xff]
  %v7565 = vld [vmem:[%s0 + $0x308] sm:$0xff]
  %v7566 = vpack.c.bf16 %v7532, %v7531
  %v7567 = vpack.c.bf16 %v7534, %v7533
  %v7568 = vpack.c.bf16 %v7536, %v7535
  %v7569 = vpack.c.bf16 %v7538, %v7537
  %v7570 = vpack.c.bf16 %v7540, %v7539
  %v7571 = vpack.c.bf16 %v7542, %v7541
  %v7572 = vpack.c.bf16 %v7544, %v7543
  %v7573 = vpack.c.bf16 %v7546, %v7545
  %v7574 = vpack.c.bf16 %v7548, %v7547
  %v7575 = vpack.c.bf16 %v7550, %v7549
  %v7576 = vpack.c.bf16 %v7552, %v7551
  %v7577 = vpack.c.bf16 %v7554, %v7553
  %v7578 = vpack.c.bf16 %v7556, %v7555
  %v7579 = vpack.c.bf16 %v7558, %v7557
  %v7580 = vpack.c.bf16 %v7560, %v7559
  %v7581 = vpack.c.bf16 %v7562, %v7561
  %v7582 = vpack.c.bf16 %v7564, %v7563
  %v7583 = vpack.c.bf16 %v7565, %v7565
  %s7584 = scalar_lea.vmem %s1, 3888
  %v7585 = vld [vmem:[%s7584] sm:$0xff]
  %v7586 = vld [vmem:[%s7584 + $0x8] sm:$0xf]
  %v7587 = vld [vmem:[%s7584 + $0xc] sm:$0xff]
  %v7588 = vld [vmem:[%s7584 + $0x14] sm:$0xf]
  %v7589 = vld [vmem:[%s7584 + $0x18] sm:$0xff]
  %v7590 = vld [vmem:[%s7584 + $0x20] sm:$0xf]
  %v7591 = vld [vmem:[%s7584 + $0x24] sm:$0xff]
  %v7592 = vld [vmem:[%s7584 + $0x2c] sm:$0xf]
  %v7593 = vld [vmem:[%s7584 + $0x30] sm:$0xff]
  %v7594 = vld [vmem:[%s7584 + $0x38] sm:$0xf]
  %v7595 = vld [vmem:[%s7584 + $0x3c] sm:$0xff]
  %v7596 = vld [vmem:[%s7584 + $0x44] sm:$0xf]
  %v7597 = vld [vmem:[%s7584 + $0x48] sm:$0xff]
  %v7598 = vld [vmem:[%s7584 + $0x50] sm:$0xf]
  %v7599 = vld [vmem:[%s7584 + $0x54] sm:$0xff]
  %v7600 = vld [vmem:[%s7584 + $0x5c] sm:$0xf]
  %v7601 = vld [vmem:[%s7584 + $0x60] sm:$0xff]
  %v7602 = vld [vmem:[%s7584 + $0x68] sm:$0xf]
  %v7603 = vld [vmem:[%s7584 + $0x6c] sm:$0xff]
  %v7604 = vld [vmem:[%s7584 + $0x74] sm:$0xf]
  %v7605 = vld [vmem:[%s7584 + $0x78] sm:$0xff]
  %v7606 = vld [vmem:[%s7584 + $0x80] sm:$0xf]
  %v7607 = vld [vmem:[%s7584 + $0x84] sm:$0xff]
  %v7608 = vld [vmem:[%s7584 + $0x8c] sm:$0xf]
  %v7609 = vld [vmem:[%s7584 + $0x90] sm:$0xff]
  %v7610 = vld [vmem:[%s7584 + $0x98] sm:$0xf]
  %v7611 = vld [vmem:[%s7584 + $0x9c] sm:$0xff]
  %v7612 = vld [vmem:[%s7584 + $0xa4] sm:$0xf]
  %v7613 = vld [vmem:[%s7584 + $0xa8] sm:$0xff]
  %v7614 = vld [vmem:[%s7584 + $0xb0] sm:$0xf]
  %v7615 = vld [vmem:[%s7584 + $0xb4] sm:$0xff]
  %v7616 = vld [vmem:[%s7584 + $0xbc] sm:$0xf]
  %v7617 = vld [vmem:[%s7584 + $0xc0] sm:$0xff]
  %v7618 = vld [vmem:[%s7584 + $0xc8] sm:$0xf]
  %v7619 = vld [vmem:[%s7584 + $0xcc] sm:$0xff]
  %v7620 = vld [vmem:[%s7584 + $0xd4] sm:$0xf]
  %v7621 = vld [vmem:[%s7584 + $0xd8] sm:$0xff]
  %v7622 = vld [vmem:[%s7584 + $0xe0] sm:$0xf]
  %v7623 = vld [vmem:[%s7584 + $0xe4] sm:$0xff]
  %v7624 = vld [vmem:[%s7584 + $0xec] sm:$0xf]
  %v7625 = vld [vmem:[%s7584 + $0xf0] sm:$0xff]
  %v7626 = vld [vmem:[%s7584 + $0xf8] sm:$0xf]
  %v7627 = vld [vmem:[%s7584 + $0xfc] sm:$0xff]
  %v7628 = vld [vmem:[%s7584 + $0x104] sm:$0xf]
  %v7629 = vld [vmem:[%s7584 + $0x108] sm:$0xff]
  %v7630 = vld [vmem:[%s7584 + $0x110] sm:$0xf]
  %v7631 = vld [vmem:[%s7584 + $0x114] sm:$0xff]
  %v7632 = vld [vmem:[%s7584 + $0x11c] sm:$0xf]
  %v7633 = vld [vmem:[%s7584 + $0x120] sm:$0xff]
  %v7634 = vld [vmem:[%s7584 + $0x128] sm:$0xf]
  %v7635 = vld [vmem:[%s7584 + $0x12c] sm:$0xff]
  %v7636 = vld [vmem:[%s7584 + $0x134] sm:$0xf]
  %v7637 = vld [vmem:[%s7584 + $0x138] sm:$0xff]
  %v7638 = vld [vmem:[%s7584 + $0x140] sm:$0xf]
  %v7639 = vld [vmem:[%s7584 + $0x144] sm:$0xff]
  %v7640 = vld [vmem:[%s7584 + $0x14c] sm:$0xf]
  %v7641 = vld [vmem:[%s7584 + $0x150] sm:$0xff]
  %v7642 = vld [vmem:[%s7584 + $0x158] sm:$0xf]
  %v7643 = vld [vmem:[%s7584 + $0x15c] sm:$0xff]
  %v7644 = vld [vmem:[%s7584 + $0x164] sm:$0xf]
  %v7645 = vld [vmem:[%s7584 + $0x168] sm:$0xff]
  %v7646 = vld [vmem:[%s7584 + $0x170] sm:$0xf]
  %v7647 = vld [vmem:[%s7584 + $0x174] sm:$0xff]
  %v7648 = vld [vmem:[%s7584 + $0x17c] sm:$0xf]
  %v7649 = vld [vmem:[%s7584 + $0x180] sm:$0xff]
  %v7650 = vld [vmem:[%s7584 + $0x188] sm:$0xf]
  %v7651 = vld [vmem:[%s7584 + $0x18c] sm:$0xff]
  %v7652 = vld [vmem:[%s7584 + $0x194] sm:$0xf]
  %v7653 = vld [vmem:[%s7584 + $0x198] sm:$0xff]
  %v7654 = vld [vmem:[%s7584 + $0x1a0] sm:$0xf]
  %v7655 = vld [vmem:[%s7584 + $0x1a4] sm:$0xff]
  %v7656 = vld [vmem:[%s7584 + $0x1ac] sm:$0xf]
  %v7657 = vld [vmem:[%s7584 + $0x1b0] sm:$0xff]
  %v7658 = vld [vmem:[%s7584 + $0x1b8] sm:$0xf]
  %v7659 = vld [vmem:[%s7584 + $0x1bc] sm:$0xff]
  %v7660 = vld [vmem:[%s7584 + $0x1c4] sm:$0xf]
  %v7661 = vld [vmem:[%s7584 + $0x1c8] sm:$0xff]
  %v7662 = vld [vmem:[%s7584 + $0x1d0] sm:$0xf]
  %v7663 = vld [vmem:[%s7584 + $0x1d4] sm:$0xff]
  %v7664 = vld [vmem:[%s7584 + $0x1dc] sm:$0xf]
  %v7665 = vld [vmem:[%s7584 + $0x1e0] sm:$0xff]
  %v7666 = vld [vmem:[%s7584 + $0x1e8] sm:$0xf]
  %v7667 = vld [vmem:[%s7584 + $0x1ec] sm:$0xff]
  %v7668 = vld [vmem:[%s7584 + $0x1f4] sm:$0xf]
  %v7669 = vld [vmem:[%s7584 + $0x1f8] sm:$0xff]
  %v7670 = vld [vmem:[%s7584 + $0x200] sm:$0xf]
  %v7671 = vld [vmem:[%s7584 + $0x204] sm:$0xff]
  %v7672 = vld [vmem:[%s7584 + $0x20c] sm:$0xf]
  %v7673 = vld [vmem:[%s7584 + $0x210] sm:$0xff]
  %v7674 = vld [vmem:[%s7584 + $0x218] sm:$0xf]
  %v7675 = vld [vmem:[%s7584 + $0x21c] sm:$0xff]
  %v7676 = vld [vmem:[%s7584 + $0x224] sm:$0xf]
  %v7677 = vld [vmem:[%s7584 + $0x228] sm:$0xff]
  %v7678 = vld [vmem:[%s7584 + $0x230] sm:$0xf]
  %v7679 = vld [vmem:[%s7584 + $0x234] sm:$0xff]
  %v7680 = vld [vmem:[%s7584 + $0x23c] sm:$0xf]
  %v7681 = vld [vmem:[%s7584 + $0x240] sm:$0xff]
  %v7682 = vld [vmem:[%s7584 + $0x248] sm:$0xf]
  %v7683 = vld [vmem:[%s7584 + $0x24c] sm:$0xff]
  %v7684 = vld [vmem:[%s7584 + $0x254] sm:$0xf]
  %v7685 = vld [vmem:[%s7584 + $0x258] sm:$0xff]
  %v7686 = vld [vmem:[%s7584 + $0x260] sm:$0xf]
  %v7687 = vld [vmem:[%s7584 + $0x264] sm:$0xff]
  %v7688 = vld [vmem:[%s7584 + $0x26c] sm:$0xf]
  %v7689 = vld [vmem:[%s7584 + $0x270] sm:$0xff]
  %v7690 = vld [vmem:[%s7584 + $0x278] sm:$0xf]
  %v7691 = vld [vmem:[%s7584 + $0x27c] sm:$0xff]
  %v7692 = vld [vmem:[%s7584 + $0x284] sm:$0xf]
  %v7693 = vld [vmem:[%s7584 + $0x288] sm:$0xff]
  %v7694 = vld [vmem:[%s7584 + $0x290] sm:$0xf]
  %v7695 = vld [vmem:[%s7584 + $0x294] sm:$0xff]
  %v7696 = vld [vmem:[%s7584 + $0x29c] sm:$0xf]
  %v7697 = vld [vmem:[%s7584 + $0x2a0] sm:$0xff]
  %v7698 = vld [vmem:[%s7584 + $0x2a8] sm:$0xf]
  %v7699 = vld [vmem:[%s7584 + $0x2ac] sm:$0xff]
  %v7700 = vld [vmem:[%s7584 + $0x2b4] sm:$0xf]
  %v7701 = vld [vmem:[%s7584 + $0x2b8] sm:$0xff]
  %v7702 = vld [vmem:[%s7584 + $0x2c0] sm:$0xf]
  %v7703 = vld [vmem:[%s7584 + $0x2c4] sm:$0xff]
  %v7704 = vld [vmem:[%s7584 + $0x2cc] sm:$0xf]
  %v7705 = vld [vmem:[%s7584 + $0x2d0] sm:$0xff]
  %v7706 = vld [vmem:[%s7584 + $0x2d8] sm:$0xf]
  %v7707 = vld [vmem:[%s7584 + $0x2dc] sm:$0xff]
  %v7708 = vld [vmem:[%s7584 + $0x2e4] sm:$0xf]
  %v7709 = vld [vmem:[%s7584 + $0x2e8] sm:$0xff]
  %v7710 = vld [vmem:[%s7584 + $0x2f0] sm:$0xf]
  %v7711 = vld [vmem:[%s7584 + $0x2f4] sm:$0xff]
  %v7712 = vld [vmem:[%s7584 + $0x2fc] sm:$0xf]
  %v7713 = vld [vmem:[%s7584 + $0x300] sm:$0xff]
  %v7714 = vld [vmem:[%s7584 + $0x308] sm:$0xf]
  %v7715 = vld [vmem:[%s7584 + $0x30c] sm:$0xff]
  %v7716 = vld [vmem:[%s7584 + $0x314] sm:$0xf]
  %v7717 = vld [vmem:[%s7584 + $0x318] sm:$0xff]
  %v7718 = vld [vmem:[%s7584 + $0x320] sm:$0xf]
  %v7719 = vld [vmem:[%s7584 + $0x324] sm:$0xff]
  %v7720 = vld [vmem:[%s7584 + $0x32c] sm:$0xf]
  %v7721 = vld [vmem:[%s7584 + $0x330] sm:$0xff]
  %v7722 = vld [vmem:[%s7584 + $0x338] sm:$0xf]
  %v7723 = vld [vmem:[%s7584 + $0x33c] sm:$0xff]
  %v7724 = vld [vmem:[%s7584 + $0x344] sm:$0xf]
  %v7725 = vld [vmem:[%s7584 + $0x348] sm:$0xff]
  %v7726 = vld [vmem:[%s7584 + $0x350] sm:$0xf]
  %v7727 = vld [vmem:[%s7584 + $0x354] sm:$0xff]
  %v7728 = vld [vmem:[%s7584 + $0x35c] sm:$0xf]
  %v7729 = vld [vmem:[%s7584 + $0x360] sm:$0xff]
  %v7730 = vld [vmem:[%s7584 + $0x368] sm:$0xf]
  %v7731 = vld [vmem:[%s7584 + $0x36c] sm:$0xff]
  %v7732 = vld [vmem:[%s7584 + $0x374] sm:$0xf]
  %v7733 = vld [vmem:[%s7584 + $0x378] sm:$0xff]
  %v7734 = vld [vmem:[%s7584 + $0x380] sm:$0xf]
  %v7735 = vld [vmem:[%s7584 + $0x384] sm:$0xff]
  %v7736 = vld [vmem:[%s7584 + $0x38c] sm:$0xf]
  %v7737 = vld [vmem:[%s7584 + $0x390] sm:$0xff]
  %v7738 = vld [vmem:[%s7584 + $0x398] sm:$0xf]
  %v7739 = vld [vmem:[%s7584 + $0x39c] sm:$0xff]
  %v7740 = vld [vmem:[%s7584 + $0x3a4] sm:$0xf]
  %v7741 = vld [vmem:[%s7584 + $0x3a8] sm:$0xff]
  %v7742 = vld [vmem:[%s7584 + $0x3b0] sm:$0xf]
  %v7743 = vld [vmem:[%s7584 + $0x3b4] sm:$0xff]
  %v7744 = vld [vmem:[%s7584 + $0x3bc] sm:$0xf]
  %v7745 = vld [vmem:[%s7584 + $0x3c0] sm:$0xff]
  %v7746 = vld [vmem:[%s7584 + $0x3c8] sm:$0xf]
  %v7747 = vld [vmem:[%s7584 + $0x3cc] sm:$0xff]
  %v7748 = vld [vmem:[%s7584 + $0x3d4] sm:$0xf]
  %v7749 = vld [vmem:[%s7584 + $0x3d8] sm:$0xff]
  %v7750 = vld [vmem:[%s7584 + $0x3e0] sm:$0xf]
  %v7751 = vld [vmem:[%s7584 + $0x3e4] sm:$0xff]
  %v7752 = vld [vmem:[%s7584 + $0x3ec] sm:$0xf]
  %v7753 = vld [vmem:[%s7584 + $0x3f0] sm:$0xff]
  %v7754 = vld [vmem:[%s7584 + $0x3f8] sm:$0xf]
  %v7755 = vld [vmem:[%s7584 + $0x3fc] sm:$0xff]
  %v7756 = vld [vmem:[%s7584 + $0x404] sm:$0xf]
  %v7757 = vld [vmem:[%s7584 + $0x408] sm:$0xff]
  %v7758 = vld [vmem:[%s7584 + $0x410] sm:$0xf]
  %v7759 = vld [vmem:[%s7584 + $0x414] sm:$0xff]
  %v7760 = vld [vmem:[%s7584 + $0x41c] sm:$0xf]
  %v7761 = vld [vmem:[%s7584 + $0x420] sm:$0xff]
  %v7762 = vld [vmem:[%s7584 + $0x428] sm:$0xf]
  %v7763 = vld [vmem:[%s7584 + $0x42c] sm:$0xff]
  %v7764 = vld [vmem:[%s7584 + $0x434] sm:$0xf]
  %v7765 = vld [vmem:[%s7584 + $0x438] sm:$0xff]
  %v7766 = vld [vmem:[%s7584 + $0x440] sm:$0xf]
  %v7767 = vld [vmem:[%s7584 + $0x444] sm:$0xff]
  %v7768 = vld [vmem:[%s7584 + $0x44c] sm:$0xf]
  %v7769 = vld [vmem:[%s7584 + $0x450] sm:$0xff]
  %v7770 = vld [vmem:[%s7584 + $0x458] sm:$0xf]
  %v7771 = vld [vmem:[%s7584 + $0x45c] sm:$0xff]
  %v7772 = vld [vmem:[%s7584 + $0x464] sm:$0xf]
  %v7773 = vld [vmem:[%s7584 + $0x468] sm:$0xff]
  %v7774 = vld [vmem:[%s7584 + $0x470] sm:$0xf]
  %v7775 = vld [vmem:[%s7584 + $0x474] sm:$0xff]
  %v7776 = vld [vmem:[%s7584 + $0x47c] sm:$0xf]
  %v7777 = vld [vmem:[%s7584 + $0x480] sm:$0xff]
  %v7778 = vld [vmem:[%s7584 + $0x488] sm:$0xf]
  %v7779 = vld [vmem:[%s7584 + $0x48c] sm:$0xff]
  %v7780 = vld [vmem:[%s7584 + $0x494] sm:$0xf]
  %v7781 = vld [vmem:[%s7584 + $0x498] sm:$0xff]
  %v7782 = vld [vmem:[%s7584 + $0x4a0] sm:$0xf]
  %v7783 = vld [vmem:[%s7584 + $0x4a4] sm:$0xff]
  %v7784 = vld [vmem:[%s7584 + $0x4ac] sm:$0xf]
  %v7785 = vld [vmem:[%s7584 + $0x4b0] sm:$0xff]
  %v7786 = vld [vmem:[%s7584 + $0x4b8] sm:$0xf]
  %v7787 = vld [vmem:[%s7584 + $0x4bc] sm:$0xff]
  %v7788 = vld [vmem:[%s7584 + $0x4c4] sm:$0xf]
  %v7789 = vld [vmem:[%s7584 + $0x4c8] sm:$0xff]
  %v7790 = vld [vmem:[%s7584 + $0x4d0] sm:$0xf]
  %v7791 = vld [vmem:[%s7584 + $0x4d4] sm:$0xff]
  %v7792 = vld [vmem:[%s7584 + $0x4dc] sm:$0xf]
  %v7793 = vld [vmem:[%s7584 + $0x4e0] sm:$0xff]
  %v7794 = vld [vmem:[%s7584 + $0x4e8] sm:$0xf]
  %v7795 = vld [vmem:[%s7584 + $0x4ec] sm:$0xff]
  %v7796 = vld [vmem:[%s7584 + $0x4f4] sm:$0xf]
  %v7797 = vld [vmem:[%s7584 + $0x4f8] sm:$0xff]
  %v7798 = vld [vmem:[%s7584 + $0x500] sm:$0xf]
  %v7799 = vld [vmem:[%s7584 + $0x504] sm:$0xff]
  %v7800 = vld [vmem:[%s7584 + $0x50c] sm:$0xf]
  %v8017 = vunpack.c.l.b16 %v7585
  %v8018 = vunpack.c.h.b16 %v7585
  %v8019 = vunpack.c.l.b16 %v7586
  %v8020 = vunpack.c.l.b16 %v7587
  %v8021 = vunpack.c.h.b16 %v7587
  %v8022 = vunpack.c.l.b16 %v7588
  %v8023 = vunpack.c.l.b16 %v7589
  %v8024 = vunpack.c.h.b16 %v7589
  %v8025 = vunpack.c.l.b16 %v7590
  %v8026 = vunpack.c.l.b16 %v7591
  %v8027 = vunpack.c.h.b16 %v7591
  %v8028 = vunpack.c.l.b16 %v7592
  %v8029 = vunpack.c.l.b16 %v7593
  %v8030 = vunpack.c.h.b16 %v7593
  %v8031 = vunpack.c.l.b16 %v7594
  %v8032 = vunpack.c.l.b16 %v7595
  %v8033 = vunpack.c.h.b16 %v7595
  %v8034 = vunpack.c.l.b16 %v7596
  %v8035 = vunpack.c.l.b16 %v7597
  %v8036 = vunpack.c.h.b16 %v7597
  %v8037 = vunpack.c.l.b16 %v7598
  %v8038 = vunpack.c.l.b16 %v7599
  %v8039 = vunpack.c.h.b16 %v7599
  %v8040 = vunpack.c.l.b16 %v7600
  %v8041 = vunpack.c.l.b16 %v7601
  %v8042 = vunpack.c.h.b16 %v7601
  %v8043 = vunpack.c.l.b16 %v7602
  %v8044 = vunpack.c.l.b16 %v7603
  %v8045 = vunpack.c.h.b16 %v7603
  %v8046 = vunpack.c.l.b16 %v7604
  %v8047 = vunpack.c.l.b16 %v7605
  %v8048 = vunpack.c.h.b16 %v7605
  %v8049 = vunpack.c.l.b16 %v7606
  %v8050 = vunpack.c.l.b16 %v7607
  %v8051 = vunpack.c.h.b16 %v7607
  %v8052 = vunpack.c.l.b16 %v7608
  %v8053 = vunpack.c.l.b16 %v7609
  %v8054 = vunpack.c.h.b16 %v7609
  %v8055 = vunpack.c.l.b16 %v7610
  %v8056 = vunpack.c.l.b16 %v7611
  %v8057 = vunpack.c.h.b16 %v7611
  %v8058 = vunpack.c.l.b16 %v7612
  %v8059 = vunpack.c.l.b16 %v7613
  %v8060 = vunpack.c.h.b16 %v7613
  %v8061 = vunpack.c.l.b16 %v7614
  %v8062 = vunpack.c.l.b16 %v7615
  %v8063 = vunpack.c.h.b16 %v7615
  %v8064 = vunpack.c.l.b16 %v7616
  %v8065 = vunpack.c.l.b16 %v7617
  %v8066 = vunpack.c.h.b16 %v7617
  %v8067 = vunpack.c.l.b16 %v7618
  %v8068 = vunpack.c.l.b16 %v7619
  %v8069 = vunpack.c.h.b16 %v7619
  %v8070 = vunpack.c.l.b16 %v7620
  %v8071 = vunpack.c.l.b16 %v7621
  %v8072 = vunpack.c.h.b16 %v7621
  %v8073 = vunpack.c.l.b16 %v7622
  %v8074 = vunpack.c.l.b16 %v7623
  %v8075 = vunpack.c.h.b16 %v7623
  %v8076 = vunpack.c.l.b16 %v7624
  %v8077 = vunpack.c.l.b16 %v7625
  %v8078 = vunpack.c.h.b16 %v7625
  %v8079 = vunpack.c.l.b16 %v7626
  %v8080 = vunpack.c.l.b16 %v7627
  %v8081 = vunpack.c.h.b16 %v7627
  %v8082 = vunpack.c.l.b16 %v7628
  %v8083 = vunpack.c.l.b16 %v7629
  %v8084 = vunpack.c.h.b16 %v7629
  %v8085 = vunpack.c.l.b16 %v7630
  %v8086 = vunpack.c.l.b16 %v7631
  %v8087 = vunpack.c.h.b16 %v7631
  %v8088 = vunpack.c.l.b16 %v7632
  %v8089 = vunpack.c.l.b16 %v7633
  %v8090 = vunpack.c.h.b16 %v7633
  %v8091 = vunpack.c.l.b16 %v7634
  %v8092 = vunpack.c.l.b16 %v7635
  %v8093 = vunpack.c.h.b16 %v7635
  %v8094 = vunpack.c.l.b16 %v7636
  %v8095 = vunpack.c.l.b16 %v7637
  %v8096 = vunpack.c.h.b16 %v7637
  %v8097 = vunpack.c.l.b16 %v7638
  %v8098 = vunpack.c.l.b16 %v7639
  %v8099 = vunpack.c.h.b16 %v7639
  %v8100 = vunpack.c.l.b16 %v7640
  %v8101 = vunpack.c.l.b16 %v7641
  %v8102 = vunpack.c.h.b16 %v7641
  %v8103 = vunpack.c.l.b16 %v7642
  %v8104 = vunpack.c.l.b16 %v7643
  %v8105 = vunpack.c.h.b16 %v7643
  %v8106 = vunpack.c.l.b16 %v7644
  %v8107 = vunpack.c.l.b16 %v7645
  %v8108 = vunpack.c.h.b16 %v7645
  %v8109 = vunpack.c.l.b16 %v7646
  %v8110 = vunpack.c.l.b16 %v7647
  %v8111 = vunpack.c.h.b16 %v7647
  %v8112 = vunpack.c.l.b16 %v7648
  %v8113 = vunpack.c.l.b16 %v7649
  %v8114 = vunpack.c.h.b16 %v7649
  %v8115 = vunpack.c.l.b16 %v7650
  %v8116 = vunpack.c.l.b16 %v7651
  %v8117 = vunpack.c.h.b16 %v7651
  %v8118 = vunpack.c.l.b16 %v7652
  %v8119 = vunpack.c.l.b16 %v7653
  %v8120 = vunpack.c.h.b16 %v7653
  %v8121 = vunpack.c.l.b16 %v7654
  %v8122 = vunpack.c.l.b16 %v7655
  %v8123 = vunpack.c.h.b16 %v7655
  %v8124 = vunpack.c.l.b16 %v7656
  %v8125 = vunpack.c.l.b16 %v7657
  %v8126 = vunpack.c.h.b16 %v7657
  %v8127 = vunpack.c.l.b16 %v7658
  %v8128 = vunpack.c.l.b16 %v7659
  %v8129 = vunpack.c.h.b16 %v7659
  %v8130 = vunpack.c.l.b16 %v7660
  %v8131 = vunpack.c.l.b16 %v7661
  %v8132 = vunpack.c.h.b16 %v7661
  %v8133 = vunpack.c.l.b16 %v7662
  %v8134 = vunpack.c.l.b16 %v7663
  %v8135 = vunpack.c.h.b16 %v7663
  %v8136 = vunpack.c.l.b16 %v7664
  %v8137 = vunpack.c.l.b16 %v7665
  %v8138 = vunpack.c.h.b16 %v7665
  %v8139 = vunpack.c.l.b16 %v7666
  %v8140 = vunpack.c.l.b16 %v7667
  %v8141 = vunpack.c.h.b16 %v7667
  %v8142 = vunpack.c.l.b16 %v7668
  %v8143 = vunpack.c.l.b16 %v7669
  %v8144 = vunpack.c.h.b16 %v7669
  %v8145 = vunpack.c.l.b16 %v7670
  %v8146 = vunpack.c.l.b16 %v7671
  %v8147 = vunpack.c.h.b16 %v7671
  %v8148 = vunpack.c.l.b16 %v7672
  %v8149 = vunpack.c.l.b16 %v7673
  %v8150 = vunpack.c.h.b16 %v7673
  %v8151 = vunpack.c.l.b16 %v7674
  %v8152 = vunpack.c.l.b16 %v7675
  %v8153 = vunpack.c.h.b16 %v7675
  %v8154 = vunpack.c.l.b16 %v7676
  %v8155 = vunpack.c.l.b16 %v7677
  %v8156 = vunpack.c.h.b16 %v7677
  %v8157 = vunpack.c.l.b16 %v7678
  %v8158 = vunpack.c.l.b16 %v7679
  %v8159 = vunpack.c.h.b16 %v7679
  %v8160 = vunpack.c.l.b16 %v7680
  %v8161 = vunpack.c.l.b16 %v7681
  %v8162 = vunpack.c.h.b16 %v7681
  %v8163 = vunpack.c.l.b16 %v7682
  %v8164 = vunpack.c.l.b16 %v7683
  %v8165 = vunpack.c.h.b16 %v7683
  %v8166 = vunpack.c.l.b16 %v7684
  %v8167 = vunpack.c.l.b16 %v7685
  %v8168 = vunpack.c.h.b16 %v7685
  %v8169 = vunpack.c.l.b16 %v7686
  %v8170 = vunpack.c.l.b16 %v7687
  %v8171 = vunpack.c.h.b16 %v7687
  %v8172 = vunpack.c.l.b16 %v7688
  %v8173 = vunpack.c.l.b16 %v7689
  %v8174 = vunpack.c.h.b16 %v7689
  %v8175 = vunpack.c.l.b16 %v7690
  %v8176 = vunpack.c.l.b16 %v7691
  %v8177 = vunpack.c.h.b16 %v7691
  %v8178 = vunpack.c.l.b16 %v7692
  %v8179 = vunpack.c.l.b16 %v7693
  %v8180 = vunpack.c.h.b16 %v7693
  %v8181 = vunpack.c.l.b16 %v7694
  %v8182 = vunpack.c.l.b16 %v7695
  %v8183 = vunpack.c.h.b16 %v7695
  %v8184 = vunpack.c.l.b16 %v7696
  %v8185 = vunpack.c.l.b16 %v7697
  %v8186 = vunpack.c.h.b16 %v7697
  %v8187 = vunpack.c.l.b16 %v7698
  %v8188 = vunpack.c.l.b16 %v7699
  %v8189 = vunpack.c.h.b16 %v7699
  %v8190 = vunpack.c.l.b16 %v7700
  %v8191 = vunpack.c.l.b16 %v7701
  %v8192 = vunpack.c.h.b16 %v7701
  %v8193 = vunpack.c.l.b16 %v7702
  %v8194 = vunpack.c.l.b16 %v7703
  %v8195 = vunpack.c.h.b16 %v7703
  %v8196 = vunpack.c.l.b16 %v7704
  %v8197 = vunpack.c.l.b16 %v7705
  %v8198 = vunpack.c.h.b16 %v7705
  %v8199 = vunpack.c.l.b16 %v7706
  %v8200 = vunpack.c.l.b16 %v7707
  %v8201 = vunpack.c.h.b16 %v7707
  %v8202 = vunpack.c.l.b16 %v7708
  %v8203 = vunpack.c.l.b16 %v7709
  %v8204 = vunpack.c.h.b16 %v7709
  %v8205 = vunpack.c.l.b16 %v7710
  %v8206 = vunpack.c.l.b16 %v7711
  %v8207 = vunpack.c.h.b16 %v7711
  %v8208 = vunpack.c.l.b16 %v7712
  %v8209 = vunpack.c.l.b16 %v7713
  %v8210 = vunpack.c.h.b16 %v7713
  %v8211 = vunpack.c.l.b16 %v7714
  %v8212 = vunpack.c.l.b16 %v7715
  %v8213 = vunpack.c.h.b16 %v7715
  %v8214 = vunpack.c.l.b16 %v7716
  %v8215 = vunpack.c.l.b16 %v7717
  %v8216 = vunpack.c.h.b16 %v7717
  %v8217 = vunpack.c.l.b16 %v7718
  %v8218 = vunpack.c.l.b16 %v7719
  %v8219 = vunpack.c.h.b16 %v7719
  %v8220 = vunpack.c.l.b16 %v7720
  %v8221 = vunpack.c.l.b16 %v7721
  %v8222 = vunpack.c.h.b16 %v7721
  %v8223 = vunpack.c.l.b16 %v7722
  %v8224 = vunpack.c.l.b16 %v7723
  %v8225 = vunpack.c.h.b16 %v7723
  %v8226 = vunpack.c.l.b16 %v7724
  %v8227 = vunpack.c.l.b16 %v7725
  %v8228 = vunpack.c.h.b16 %v7725
  %v8229 = vunpack.c.l.b16 %v7726
  %v8230 = vunpack.c.l.b16 %v7727
  %v8231 = vunpack.c.h.b16 %v7727
  %v8232 = vunpack.c.l.b16 %v7728
  %v8233 = vunpack.c.l.b16 %v7729
  %v8234 = vunpack.c.h.b16 %v7729
  %v8235 = vunpack.c.l.b16 %v7730
  %v8236 = vunpack.c.l.b16 %v7731
  %v8237 = vunpack.c.h.b16 %v7731
  %v8238 = vunpack.c.l.b16 %v7732
  %v8239 = vunpack.c.l.b16 %v7733
  %v8240 = vunpack.c.h.b16 %v7733
  %v8241 = vunpack.c.l.b16 %v7734
  %v8242 = vunpack.c.l.b16 %v7735
  %v8243 = vunpack.c.h.b16 %v7735
  %v8244 = vunpack.c.l.b16 %v7736
  %v8245 = vunpack.c.l.b16 %v7737
  %v8246 = vunpack.c.h.b16 %v7737
  %v8247 = vunpack.c.l.b16 %v7738
  %v8248 = vunpack.c.l.b16 %v7739
  %v8249 = vunpack.c.h.b16 %v7739
  %v8250 = vunpack.c.l.b16 %v7740
  %v8251 = vunpack.c.l.b16 %v7741
  %v8252 = vunpack.c.h.b16 %v7741
  %v8253 = vunpack.c.l.b16 %v7742
  %v8254 = vunpack.c.l.b16 %v7743
  %v8255 = vunpack.c.h.b16 %v7743
  %v8256 = vunpack.c.l.b16 %v7744
  %v8257 = vunpack.c.l.b16 %v7745
  %v8258 = vunpack.c.h.b16 %v7745
  %v8259 = vunpack.c.l.b16 %v7746
  %v8260 = vunpack.c.l.b16 %v7747
  %v8261 = vunpack.c.h.b16 %v7747
  %v8262 = vunpack.c.l.b16 %v7748
  %v8263 = vunpack.c.l.b16 %v7749
  %v8264 = vunpack.c.h.b16 %v7749
  %v8265 = vunpack.c.l.b16 %v7750
  %v8266 = vunpack.c.l.b16 %v7751
  %v8267 = vunpack.c.h.b16 %v7751
  %v8268 = vunpack.c.l.b16 %v7752
  %v8269 = vunpack.c.l.b16 %v7753
  %v8270 = vunpack.c.h.b16 %v7753
  %v8271 = vunpack.c.l.b16 %v7754
  %v8272 = vunpack.c.l.b16 %v7755
  %v8273 = vunpack.c.h.b16 %v7755
  %v8274 = vunpack.c.l.b16 %v7756
  %v8275 = vunpack.c.l.b16 %v7757
  %v8276 = vunpack.c.h.b16 %v7757
  %v8277 = vunpack.c.l.b16 %v7758
  %v8278 = vunpack.c.l.b16 %v7759
  %v8279 = vunpack.c.h.b16 %v7759
  %v8280 = vunpack.c.l.b16 %v7760
  %v8281 = vunpack.c.l.b16 %v7761
  %v8282 = vunpack.c.h.b16 %v7761
  %v8283 = vunpack.c.l.b16 %v7762
  %v8284 = vunpack.c.l.b16 %v7763
  %v8285 = vunpack.c.h.b16 %v7763
  %v8286 = vunpack.c.l.b16 %v7764
  %v8287 = vunpack.c.l.b16 %v7765
  %v8288 = vunpack.c.h.b16 %v7765
  %v8289 = vunpack.c.l.b16 %v7766
  %v8290 = vunpack.c.l.b16 %v7767
  %v8291 = vunpack.c.h.b16 %v7767
  %v8292 = vunpack.c.l.b16 %v7768
  %v8293 = vunpack.c.l.b16 %v7769
  %v8294 = vunpack.c.h.b16 %v7769
  %v8295 = vunpack.c.l.b16 %v7770
  %v8296 = vunpack.c.l.b16 %v7771
  %v8297 = vunpack.c.h.b16 %v7771
  %v8298 = vunpack.c.l.b16 %v7772
  %v8299 = vunpack.c.l.b16 %v7773
  %v8300 = vunpack.c.h.b16 %v7773
  %v8301 = vunpack.c.l.b16 %v7774
  %v8302 = vunpack.c.l.b16 %v7775
  %v8303 = vunpack.c.h.b16 %v7775
  %v8304 = vunpack.c.l.b16 %v7776
  %v8305 = vunpack.c.l.b16 %v7777
  %v8306 = vunpack.c.h.b16 %v7777
  %v8307 = vunpack.c.l.b16 %v7778
  %v8308 = vunpack.c.l.b16 %v7779
  %v8309 = vunpack.c.h.b16 %v7779
  %v8310 = vunpack.c.l.b16 %v7780
  %v8311 = vunpack.c.l.b16 %v7781
  %v8312 = vunpack.c.h.b16 %v7781
  %v8313 = vunpack.c.l.b16 %v7782
  %v8314 = vunpack.c.l.b16 %v7783
  %v8315 = vunpack.c.h.b16 %v7783
  %v8316 = vunpack.c.l.b16 %v7784
  %v8317 = vunpack.c.l.b16 %v7785
  %v8318 = vunpack.c.h.b16 %v7785
  %v8319 = vunpack.c.l.b16 %v7786
  %v8320 = vunpack.c.l.b16 %v7787
  %v8321 = vunpack.c.h.b16 %v7787
  %v8322 = vunpack.c.l.b16 %v7788
  %v8323 = vunpack.c.l.b16 %v7789
  %v8324 = vunpack.c.h.b16 %v7789
  %v8325 = vunpack.c.l.b16 %v7790
  %v8326 = vunpack.c.l.b16 %v7791
  %v8327 = vunpack.c.h.b16 %v7791
  %v8328 = vunpack.c.l.b16 %v7792
  %v8329 = vunpack.c.l.b16 %v7793
  %v8330 = vunpack.c.h.b16 %v7793
  %v8331 = vunpack.c.l.b16 %v7794
  %v8332 = vunpack.c.l.b16 %v7795
  %v8333 = vunpack.c.h.b16 %v7795
  %v8334 = vunpack.c.l.b16 %v7796
  %v8335 = vunpack.c.l.b16 %v7797
  %v8336 = vunpack.c.h.b16 %v7797
  %v8337 = vunpack.c.l.b16 %v7798
  %v8338 = vunpack.c.l.b16 %v7799
  %v8339 = vunpack.c.h.b16 %v7799
  %v8340 = vunpack.c.l.b16 %v7800
  %v8341 = vpack.c.b16 %v8020, %v8017
  %v8342 = vpack.c.b16 %v8021, %v8018
  %v8343 = vpack.c.b16 %v8022, %v8019
  %v8344 = vpack.c.b16 %v8026, %v8023
  %v8345 = vpack.c.b16 %v8027, %v8024
  %v8346 = vpack.c.b16 %v8028, %v8025
  %v8347 = vpack.c.b16 %v8032, %v8029
  %v8348 = vpack.c.b16 %v8033, %v8030
  %v8349 = vpack.c.b16 %v8034, %v8031
  %v8350 = vpack.c.b16 %v8038, %v8035
  %v8351 = vpack.c.b16 %v8039, %v8036
  %v8352 = vpack.c.b16 %v8040, %v8037
  %v8353 = vpack.c.b16 %v8044, %v8041
  %v8354 = vpack.c.b16 %v8045, %v8042
  %v8355 = vpack.c.b16 %v8046, %v8043
  %v8356 = vpack.c.b16 %v8050, %v8047
  %v8357 = vpack.c.b16 %v8051, %v8048
  %v8358 = vpack.c.b16 %v8052, %v8049
  %v8359 = vpack.c.b16 %v8056, %v8053
  %v8360 = vpack.c.b16 %v8057, %v8054
  %v8361 = vpack.c.b16 %v8058, %v8055
  %v8362 = vpack.c.b16 %v8062, %v8059
  %v8363 = vpack.c.b16 %v8063, %v8060
  %v8364 = vpack.c.b16 %v8064, %v8061
  %v8365 = vpack.c.b16 %v8068, %v8065
  %v8366 = vpack.c.b16 %v8069, %v8066
  %v8367 = vpack.c.b16 %v8070, %v8067
  %v8368 = vpack.c.b16 %v8074, %v8071
  %v8369 = vpack.c.b16 %v8075, %v8072
  %v8370 = vpack.c.b16 %v8076, %v8073
  %v8371 = vpack.c.b16 %v8080, %v8077
  %v8372 = vpack.c.b16 %v8081, %v8078
  %v8373 = vpack.c.b16 %v8082, %v8079
  %v8374 = vpack.c.b16 %v8086, %v8083
  %v8375 = vpack.c.b16 %v8087, %v8084
  %v8376 = vpack.c.b16 %v8088, %v8085
  %v8377 = vpack.c.b16 %v8092, %v8089
  %v8378 = vpack.c.b16 %v8093, %v8090
  %v8379 = vpack.c.b16 %v8094, %v8091
  %v8380 = vpack.c.b16 %v8098, %v8095
  %v8381 = vpack.c.b16 %v8099, %v8096
  %v8382 = vpack.c.b16 %v8100, %v8097
  %v8383 = vpack.c.b16 %v8104, %v8101
  %v8384 = vpack.c.b16 %v8105, %v8102
  %v8385 = vpack.c.b16 %v8106, %v8103
  %v8386 = vpack.c.b16 %v8110, %v8107
  %v8387 = vpack.c.b16 %v8111, %v8108
  %v8388 = vpack.c.b16 %v8112, %v8109
  %v8389 = vpack.c.b16 %v8116, %v8113
  %v8390 = vpack.c.b16 %v8117, %v8114
  %v8391 = vpack.c.b16 %v8118, %v8115
  %v8392 = vpack.c.b16 %v8122, %v8119
  %v8393 = vpack.c.b16 %v8123, %v8120
  %v8394 = vpack.c.b16 %v8124, %v8121
  %v8395 = vpack.c.b16 %v8128, %v8125
  %v8396 = vpack.c.b16 %v8129, %v8126
  %v8397 = vpack.c.b16 %v8130, %v8127
  %v8398 = vpack.c.b16 %v8134, %v8131
  %v8399 = vpack.c.b16 %v8135, %v8132
  %v8400 = vpack.c.b16 %v8136, %v8133
  %v8401 = vpack.c.b16 %v8140, %v8137
  %v8402 = vpack.c.b16 %v8141, %v8138
  %v8403 = vpack.c.b16 %v8142, %v8139
  %v8404 = vpack.c.b16 %v8146, %v8143
  %v8405 = vpack.c.b16 %v8147, %v8144
  %v8406 = vpack.c.b16 %v8148, %v8145
  %v8407 = vpack.c.b16 %v8152, %v8149
  %v8408 = vpack.c.b16 %v8153, %v8150
  %v8409 = vpack.c.b16 %v8154, %v8151
  %v8410 = vpack.c.b16 %v8158, %v8155
  %v8411 = vpack.c.b16 %v8159, %v8156
  %v8412 = vpack.c.b16 %v8160, %v8157
  %v8413 = vpack.c.b16 %v8164, %v8161
  %v8414 = vpack.c.b16 %v8165, %v8162
  %v8415 = vpack.c.b16 %v8166, %v8163
  %v8416 = vpack.c.b16 %v8170, %v8167
  %v8417 = vpack.c.b16 %v8171, %v8168
  %v8418 = vpack.c.b16 %v8172, %v8169
  %v8419 = vpack.c.b16 %v8176, %v8173
  %v8420 = vpack.c.b16 %v8177, %v8174
  %v8421 = vpack.c.b16 %v8178, %v8175
  %v8422 = vpack.c.b16 %v8182, %v8179
  %v8423 = vpack.c.b16 %v8183, %v8180
  %v8424 = vpack.c.b16 %v8184, %v8181
  %v8425 = vpack.c.b16 %v8188, %v8185
  %v8426 = vpack.c.b16 %v8189, %v8186
  %v8427 = vpack.c.b16 %v8190, %v8187
  %v8428 = vpack.c.b16 %v8194, %v8191
  %v8429 = vpack.c.b16 %v8195, %v8192
  %v8430 = vpack.c.b16 %v8196, %v8193
  %v8431 = vpack.c.b16 %v8200, %v8197
  %v8432 = vpack.c.b16 %v8201, %v8198
  %v8433 = vpack.c.b16 %v8202, %v8199
  %v8434 = vpack.c.b16 %v8206, %v8203
  %v8435 = vpack.c.b16 %v8207, %v8204
  %v8436 = vpack.c.b16 %v8208, %v8205
  %v8437 = vpack.c.b16 %v8212, %v8209
  %v8438 = vpack.c.b16 %v8213, %v8210
  %v8439 = vpack.c.b16 %v8214, %v8211
  %v8440 = vpack.c.b16 %v8218, %v8215
  %v8441 = vpack.c.b16 %v8219, %v8216
  %v8442 = vpack.c.b16 %v8220, %v8217
  %v8443 = vpack.c.b16 %v8224, %v8221
  %v8444 = vpack.c.b16 %v8225, %v8222
  %v8445 = vpack.c.b16 %v8226, %v8223
  %v8446 = vpack.c.b16 %v8230, %v8227
  %v8447 = vpack.c.b16 %v8231, %v8228
  %v8448 = vpack.c.b16 %v8232, %v8229
  %v8449 = vpack.c.b16 %v8236, %v8233
  %v8450 = vpack.c.b16 %v8237, %v8234
  %v8451 = vpack.c.b16 %v8238, %v8235
  %v8452 = vpack.c.b16 %v8242, %v8239
  %v8453 = vpack.c.b16 %v8243, %v8240
  %v8454 = vpack.c.b16 %v8244, %v8241
  %v8455 = vpack.c.b16 %v8248, %v8245
  %v8456 = vpack.c.b16 %v8249, %v8246
  %v8457 = vpack.c.b16 %v8250, %v8247
  %v8458 = vpack.c.b16 %v8254, %v8251
  %v8459 = vpack.c.b16 %v8255, %v8252
  %v8460 = vpack.c.b16 %v8256, %v8253
  %v8461 = vpack.c.b16 %v8260, %v8257
  %v8462 = vpack.c.b16 %v8261, %v8258
  %v8463 = vpack.c.b16 %v8262, %v8259
  %v8464 = vpack.c.b16 %v8266, %v8263
  %v8465 = vpack.c.b16 %v8267, %v8264
  %v8466 = vpack.c.b16 %v8268, %v8265
  %v8467 = vpack.c.b16 %v8272, %v8269
  %v8468 = vpack.c.b16 %v8273, %v8270
  %v8469 = vpack.c.b16 %v8274, %v8271
  %v8470 = vpack.c.b16 %v8278, %v8275
  %v8471 = vpack.c.b16 %v8279, %v8276
  %v8472 = vpack.c.b16 %v8280, %v8277
  %v8473 = vpack.c.b16 %v8284, %v8281
  %v8474 = vpack.c.b16 %v8285, %v8282
  %v8475 = vpack.c.b16 %v8286, %v8283
  %v8476 = vpack.c.b16 %v8290, %v8287
  %v8477 = vpack.c.b16 %v8291, %v8288
  %v8478 = vpack.c.b16 %v8292, %v8289
  %v8479 = vpack.c.b16 %v8296, %v8293
  %v8480 = vpack.c.b16 %v8297, %v8294
  %v8481 = vpack.c.b16 %v8298, %v8295
  %v8482 = vpack.c.b16 %v8302, %v8299
  %v8483 = vpack.c.b16 %v8303, %v8300
  %v8484 = vpack.c.b16 %v8304, %v8301
  %v8485 = vpack.c.b16 %v8308, %v8305
  %v8486 = vpack.c.b16 %v8309, %v8306
  %v8487 = vpack.c.b16 %v8310, %v8307
  %v8488 = vpack.c.b16 %v8314, %v8311
  %v8489 = vpack.c.b16 %v8315, %v8312
  %v8490 = vpack.c.b16 %v8316, %v8313
  %v8491 = vpack.c.b16 %v8320, %v8317
  %v8492 = vpack.c.b16 %v8321, %v8318
  %v8493 = vpack.c.b16 %v8322, %v8319
  %v8494 = vpack.c.b16 %v8326, %v8323
  %v8495 = vpack.c.b16 %v8327, %v8324
  %v8496 = vpack.c.b16 %v8328, %v8325
  %v8497 = vpack.c.b16 %v8332, %v8329
  %v8498 = vpack.c.b16 %v8333, %v8330
  %v8499 = vpack.c.b16 %v8334, %v8331
  %v8500 = vpack.c.b16 %v8338, %v8335
  %v8501 = vpack.c.b16 %v8339, %v8336
  %v8502 = vpack.c.b16 %v8340, %v8337
  %v8612 = vsel %vm1112, %v8343, 0
  %v8615 = vsel %vm1112, %v8346, 0
  %v8618 = vsel %vm1112, %v8349, 0
  %v8621 = vsel %vm1112, %v8352, 0
  %v8624 = vsel %vm1112, %v8355, 0
  %v8627 = vsel %vm1112, %v8358, 0
  %v8630 = vsel %vm1112, %v8361, 0
  %v8633 = vsel %vm1112, %v8364, 0
  %v8636 = vsel %vm1112, %v8367, 0
  %v8639 = vsel %vm1112, %v8370, 0
  %v8642 = vsel %vm1112, %v8373, 0
  %v8645 = vsel %vm1112, %v8376, 0
  %v8648 = vsel %vm1112, %v8379, 0
  %v8651 = vsel %vm1112, %v8382, 0
  %v8654 = vsel %vm1112, %v8385, 0
  %v8657 = vsel %vm1112, %v8388, 0
  %v8660 = vsel %vm1112, %v8391, 0
  %v8663 = vsel %vm1112, %v8394, 0
  %v8666 = vsel %vm1112, %v8397, 0
  %v8669 = vsel %vm1112, %v8400, 0
  %v8672 = vsel %vm1112, %v8403, 0
  %v8675 = vsel %vm1112, %v8406, 0
  %v8678 = vsel %vm1112, %v8409, 0
  %v8681 = vsel %vm1112, %v8412, 0
  %v8684 = vsel %vm1112, %v8415, 0
  %v8687 = vsel %vm1112, %v8418, 0
  %v8690 = vsel %vm1112, %v8421, 0
  %v8693 = vsel %vm1112, %v8424, 0
  %v8696 = vsel %vm1112, %v8427, 0
  %v8699 = vsel %vm1112, %v8430, 0
  %v8702 = vsel %vm1112, %v8433, 0
  %v8705 = vsel %vm1112, %v8436, 0
  %v8708 = vsel %vm1112, %v8439, 0
  %v8711 = vsel %vm1112, %v8442, 0
  %v8714 = vsel %vm1112, %v8445, 0
  %v8717 = vsel %vm1112, %v8448, 0
  %v8720 = vsel %vm1112, %v8451, 0
  %v8723 = vsel %vm1112, %v8454, 0
  %v8726 = vsel %vm1112, %v8457, 0
  %v8729 = vsel %vm1112, %v8460, 0
  %v8732 = vsel %vm1112, %v8463, 0
  %v8735 = vsel %vm1112, %v8466, 0
  %v8738 = vsel %vm1112, %v8469, 0
  %v8741 = vsel %vm1112, %v8472, 0
  %v8744 = vsel %vm1112, %v8475, 0
  %v8747 = vsel %vm1112, %v8478, 0
  %v8750 = vsel %vm1112, %v8481, 0
  %v8753 = vsel %vm1112, %v8484, 0
  %v8756 = vsel %vm1112, %v8487, 0
  %v8759 = vsel %vm1112, %v8490, 0
  %v8762 = vsel %vm1112, %v8493, 0
  %v8765 = vsel %vm1112, %v8496, 0
  %v8768 = vsel %vm1112, %v8499, 0
  %v8771 = vsel %vm1112, %v8502, 0
  %v8774 = vsel %vm1275, %v7583, 0
  %8776 = vmatprep.subr.bf16.mxu0 0
  %8777 = vmatpush1.bf16.msra.mxu0 %v7566
  %8778 = vmatprep.subr.bf16.mxu0 0
  %8779 = vmatpush1.bf16.msra.mxu0 %v7567
  %8780 = vmatprep.subr.bf16.mxu0 0
  %8781 = vmatpush1.bf16.msra.mxu0 %v7568
  %8782 = vmatprep.subr.bf16.mxu0 0
  %8783 = vmatpush1.bf16.msra.mxu0 %v7569
  %8784 = vmatprep.subr.bf16.mxu0 0
  %8785 = vmatpush1.bf16.msra.mxu0 %v7570
  %8786 = vmatprep.subr.bf16.mxu0 0
  %8787 = vmatpush1.bf16.msra.mxu0 %v7571
  %8788 = vmatprep.subr.bf16.mxu0 0
  %8789 = vmatpush1.bf16.msra.mxu0 %v7572
  %8790 = vmatprep.subr.bf16.mxu0 0
  %8791 = vmatpush1.bf16.msra.mxu0 %v7573
  %8792 = vmatprep.subr.bf16.mxu0 0
  %8793 = vmatpush1.bf16.msra.mxu0 %v7574
  %8794 = vmatprep.subr.bf16.mxu0 0
  %8795 = vmatpush1.bf16.msra.mxu0 %v7575
  %8796 = vmatprep.subr.bf16.mxu0 0
  %8797 = vmatpush1.bf16.msra.mxu0 %v7576
  %8798 = vmatprep.subr.bf16.mxu0 0
  %8799 = vmatpush1.bf16.msra.mxu0 %v7577
  %8800 = vmatprep.subr.bf16.mxu0 0
  %8801 = vmatpush1.bf16.msra.mxu0 %v7578
  %8802 = vmatprep.subr.bf16.mxu0 0
  %8803 = vmatpush1.bf16.msra.mxu0 %v7579
  %8804 = vmatprep.subr.bf16.mxu0 0
  %8805 = vmatpush1.bf16.msra.mxu0 %v7580
  %8806 = vmatprep.subr.bf16.mxu0 0
  %8807 = vmatpush1.bf16.msra.mxu0 %v7581
  %8808 = vmatprep.mubr.bf16.mxu0 %v8342
  %8809 = vmatmul.mubr.bf16.gmra.mrb[0].mxu0 %v8341
  %v8810 = vpop.f32.mrb[0].mxu0
  %v8811 = vadd.f32 0.0, %v8810
  %v8812 = vpop.f32.mrb[0].mxu0
  %v8813 = vpop.f32.mrb[0].mxu0
  %v8814 = vadd.f32 0.0, %v8813
  %v8815 = vpop.f32.mrb[0].mxu0
  %8816 = vmatprep.mubr.bf16.mxu0 %v8345
  %8817 = vmatmul.mubr.bf16.gmra.mrb[0].mxu0 %v8344
  %v8818 = vpop.f32.mrb[0].mxu0
  %v8819 = vadd.f32 0.0, %v8818
  %v8820 = vpop.f32.mrb[0].mxu0
  %v8821 = vpop.f32.mrb[0].mxu0
  %v8822 = vadd.f32 0.0, %v8821
  %v8823 = vpop.f32.mrb[0].mxu0
  %8824 = vmatprep.mubr.bf16.mxu0 %v8348
  %8825 = vmatmul.mubr.bf16.gmra.mrb[0].mxu0 %v8347
  %v8826 = vpop.f32.mrb[0].mxu0
  %v8827 = vadd.f32 0.0, %v8826
  %v8828 = vpop.f32.mrb[0].mxu0
  %v8829 = vpop.f32.mrb[0].mxu0
  %v8830 = vadd.f32 0.0, %v8829
  %v8831 = vpop.f32.mrb[0].mxu0
  %8832 = vmatprep.mubr.bf16.mxu0 %v8351
  %8833 = vmatmul.mubr.bf16.gmra.mrb[0].mxu0 %v8350
  %v8834 = vpop.f32.mrb[0].mxu0
  %v8835 = vadd.f32 0.0, %v8834
  %v8836 = vpop.f32.mrb[0].mxu0
  %v8837 = vpop.f32.mrb[0].mxu0
  %v8838 = vadd.f32 0.0, %v8837
  %v8839 = vpop.f32.mrb[0].mxu0
  %8840 = vmatprep.mubr.bf16.mxu0 %v8354
  %8841 = vmatmul.mubr.bf16.gmra.mrb[0].mxu0 %v8353
  %v8842 = vpop.f32.mrb[0].mxu0
  %v8843 = vadd.f32 0.0, %v8842
  %v8844 = vpop.f32.mrb[0].mxu0
  %v8845 = vpop.f32.mrb[0].mxu0
  %v8846 = vadd.f32 0.0, %v8845
  %v8847 = vpop.f32.mrb[0].mxu0
  %8848 = vmatprep.mubr.bf16.mxu0 %v8357
  %8849 = vmatmul.mubr.bf16.gmra.mrb[0].mxu0 %v8356
  %v8850 = vpop.f32.mrb[0].mxu0
  %v8851 = vadd.f32 0.0, %v8850
  %v8852 = vpop.f32.mrb[0].mxu0
  %v8853 = vpop.f32.mrb[0].mxu0
  %v8854 = vadd.f32 0.0, %v8853
  %v8855 = vpop.f32.mrb[0].mxu0
  %8856 = vmatprep.mubr.bf16.mxu0 %v8360
  %8857 = vmatmul.mubr.bf16.gmra.mrb[0].mxu0 %v8359
  %v8858 = vpop.f32.mrb[0].mxu0
  %v8859 = vadd.f32 0.0, %v8858
  %v8860 = vpop.f32.mrb[0].mxu0
  %v8861 = vpop.f32.mrb[0].mxu0
  %v8862 = vadd.f32 0.0, %v8861
  %v8863 = vpop.f32.mrb[0].mxu0
  %8864 = vmatprep.mubr.bf16.mxu0 %v8363
  %8865 = vmatmul.mubr.bf16.gmra.mrb[0].mxu0 %v8362
  %v8866 = vpop.f32.mrb[0].mxu0
  %v8867 = vadd.f32 0.0, %v8866
  %v8868 = vpop.f32.mrb[0].mxu0
  %v8869 = vpop.f32.mrb[0].mxu0
  %v8870 = vadd.f32 0.0, %v8869
  %v8871 = vpop.f32.mrb[0].mxu0
  %8872 = vmatprep.mubr.bf16.mxu0 %v8366
  %8873 = vmatmul.mubr.bf16.gmra.mrb[0].mxu0 %v8365
  %v8874 = vpop.f32.mrb[0].mxu0
  %v8875 = vadd.f32 0.0, %v8874
  %v8876 = vpop.f32.mrb[0].mxu0
  %v8877 = vpop.f32.mrb[0].mxu0
  %v8878 = vadd.f32 0.0, %v8877
  %v8879 = vpop.f32.mrb[0].mxu0
  %8880 = vmatprep.mubr.bf16.mxu0 %v8369
  %8881 = vmatmul.mubr.bf16.gmra.mrb[0].mxu0 %v8368
  %v8882 = vpop.f32.mrb[0].mxu0
  %v8883 = vadd.f32 0.0, %v8882
  %v8884 = vpop.f32.mrb[0].mxu0
  %v8885 = vpop.f32.mrb[0].mxu0
  %v8886 = vadd.f32 0.0, %v8885
  %v8887 = vpop.f32.mrb[0].mxu0
  %8888 = vmatprep.mubr.bf16.mxu0 %v8372
  %8889 = vmatmul.mubr.bf16.gmra.mrb[0].mxu0 %v8371
  %v8890 = vpop.f32.mrb[0].mxu0
  %v8891 = vadd.f32 0.0, %v8890
  %v8892 = vpop.f32.mrb[0].mxu0
  %v8893 = vpop.f32.mrb[0].mxu0
  %v8894 = vadd.f32 0.0, %v8893
  %v8895 = vpop.f32.mrb[0].mxu0
  %8896 = vmatprep.mubr.bf16.mxu0 %v8375
  %8897 = vmatmul.mubr.bf16.gmra.mrb[0].mxu0 %v8374
  %v8898 = vpop.f32.mrb[0].mxu0
  %v8899 = vadd.f32 0.0, %v8898
  %v8900 = vpop.f32.mrb[0].mxu0
  %v8901 = vpop.f32.mrb[0].mxu0
  %v8902 = vadd.f32 0.0, %v8901
  %v8903 = vpop.f32.mrb[0].mxu0
  %8904 = vmatprep.mubr.bf16.mxu0 %v8378
  %8905 = vmatmul.mubr.bf16.gmra.mrb[0].mxu0 %v8377
  %v8906 = vpop.f32.mrb[0].mxu0
  %v8907 = vadd.f32 0.0, %v8906
  %v8908 = vpop.f32.mrb[0].mxu0
  %v8909 = vpop.f32.mrb[0].mxu0
  %v8910 = vadd.f32 0.0, %v8909
  %v8911 = vpop.f32.mrb[0].mxu0
  %8912 = vmatprep.mubr.bf16.mxu0 %v8381
  %8913 = vmatmul.mubr.bf16.gmra.mrb[0].mxu0 %v8380
  %v8914 = vpop.f32.mrb[0].mxu0
  %v8915 = vadd.f32 0.0, %v8914
  %v8916 = vpop.f32.mrb[0].mxu0
  %v8917 = vpop.f32.mrb[0].mxu0
  %v8918 = vadd.f32 0.0, %v8917
  %v8919 = vpop.f32.mrb[0].mxu0
  %8920 = vmatprep.mubr.bf16.mxu0 %v8384
  %8921 = vmatmul.mubr.bf16.gmra.mrb[0].mxu0 %v8383
  %v8922 = vpop.f32.mrb[0].mxu0
  %v8923 = vadd.f32 0.0, %v8922
  %v8924 = vpop.f32.mrb[0].mxu0
  %v8925 = vpop.f32.mrb[0].mxu0
  %v8926 = vadd.f32 0.0, %v8925
  %v8927 = vpop.f32.mrb[0].mxu0
  %8928 = vmatprep.mubr.bf16.mxu0 %v8387
  %8929 = vmatmul.mubr.bf16.gmra.mrb[0].mxu0 %v8386
  %v8930 = vpop.f32.mrb[0].mxu0
  %v8931 = vadd.f32 0.0, %v8930
  %v8932 = vpop.f32.mrb[0].mxu0
  %v8933 = vpop.f32.mrb[0].mxu0
  %v8934 = vadd.f32 0.0, %v8933
  %v8935 = vpop.f32.mrb[0].mxu0
  %8936 = vmatprep.mubr.bf16.mxu0 %v8390
  %8937 = vmatmul.mubr.bf16.gmra.mrb[0].mxu0 %v8389
  %v8938 = vpop.f32.mrb[0].mxu0
  %v8939 = vadd.f32 0.0, %v8938
  %v8940 = vpop.f32.mrb[0].mxu0
  %v8941 = vpop.f32.mrb[0].mxu0
  %v8942 = vadd.f32 0.0, %v8941
  %v8943 = vpop.f32.mrb[0].mxu0
  %8944 = vmatprep.mubr.bf16.mxu0 %v8393
  %8945 = vmatmul.mubr.bf16.gmra.mrb[0].mxu0 %v8392
  %v8946 = vpop.f32.mrb[0].mxu0
  %v8947 = vadd.f32 0.0, %v8946
  %v8948 = vpop.f32.mrb[0].mxu0
  %v8949 = vpop.f32.mrb[0].mxu0
  %v8950 = vadd.f32 0.0, %v8949
  %v8951 = vpop.f32.mrb[0].mxu0
  %8952 = vmatprep.mubr.bf16.mxu0 %v8396
  %8953 = vmatmul.mubr.bf16.gmra.mrb[0].mxu0 %v8395
  %v8954 = vpop.f32.mrb[0].mxu0
  %v8955 = vadd.f32 0.0, %v8954
  %v8956 = vpop.f32.mrb[0].mxu0
  %v8957 = vpop.f32.mrb[0].mxu0
  %v8958 = vadd.f32 0.0, %v8957
  %v8959 = vpop.f32.mrb[0].mxu0
  %8960 = vmatprep.mubr.bf16.mxu0 %v8399
  %8961 = vmatmul.mubr.bf16.gmra.mrb[0].mxu0 %v8398
  %v8962 = vpop.f32.mrb[0].mxu0
  %v8963 = vadd.f32 0.0, %v8962
  %v8964 = vpop.f32.mrb[0].mxu0
  %v8965 = vpop.f32.mrb[0].mxu0
  %v8966 = vadd.f32 0.0, %v8965
  %v8967 = vpop.f32.mrb[0].mxu0
  %8968 = vmatprep.mubr.bf16.mxu0 %v8402
  %8969 = vmatmul.mubr.bf16.gmra.mrb[0].mxu0 %v8401
  %v8970 = vpop.f32.mrb[0].mxu0
  %v8971 = vadd.f32 0.0, %v8970
  %v8972 = vpop.f32.mrb[0].mxu0
  %v8973 = vpop.f32.mrb[0].mxu0
  %v8974 = vadd.f32 0.0, %v8973
  %v8975 = vpop.f32.mrb[0].mxu0
  %8976 = vmatprep.mubr.bf16.mxu0 %v8405
  %8977 = vmatmul.mubr.bf16.gmra.mrb[0].mxu0 %v8404
  %v8978 = vpop.f32.mrb[0].mxu0
  %v8979 = vadd.f32 0.0, %v8978
  %v8980 = vpop.f32.mrb[0].mxu0
  %v8981 = vpop.f32.mrb[0].mxu0
  %v8982 = vadd.f32 0.0, %v8981
  %v8983 = vpop.f32.mrb[0].mxu0
  %8984 = vmatprep.mubr.bf16.mxu0 %v8408
  %8985 = vmatmul.mubr.bf16.gmra.mrb[0].mxu0 %v8407
  %v8986 = vpop.f32.mrb[0].mxu0
  %v8987 = vadd.f32 0.0, %v8986
  %v8988 = vpop.f32.mrb[0].mxu0
  %v8989 = vpop.f32.mrb[0].mxu0
  %v8990 = vadd.f32 0.0, %v8989
  %v8991 = vpop.f32.mrb[0].mxu0
  %8992 = vmatprep.mubr.bf16.mxu0 %v8411
  %8993 = vmatmul.mubr.bf16.gmra.mrb[0].mxu0 %v8410
  %v8994 = vpop.f32.mrb[0].mxu0
  %v8995 = vadd.f32 0.0, %v8994
  %v8996 = vpop.f32.mrb[0].mxu0
  %v8997 = vpop.f32.mrb[0].mxu0
  %v8998 = vadd.f32 0.0, %v8997
  %v8999 = vpop.f32.mrb[0].mxu0
  %9000 = vmatprep.mubr.bf16.mxu0 %v8414
  %9001 = vmatmul.mubr.bf16.gmra.mrb[0].mxu0 %v8413
  %v9002 = vpop.f32.mrb[0].mxu0
  %v9003 = vadd.f32 0.0, %v9002
  %v9004 = vpop.f32.mrb[0].mxu0
  %v9005 = vpop.f32.mrb[0].mxu0
  %v9006 = vadd.f32 0.0, %v9005
  %v9007 = vpop.f32.mrb[0].mxu0
  %9008 = vmatprep.mubr.bf16.mxu0 %v8417
  %9009 = vmatmul.mubr.bf16.gmra.mrb[0].mxu0 %v8416
  %v9010 = vpop.f32.mrb[0].mxu0
  %v9011 = vadd.f32 0.0, %v9010
  %v9012 = vpop.f32.mrb[0].mxu0
  %v9013 = vpop.f32.mrb[0].mxu0
  %v9014 = vadd.f32 0.0, %v9013
  %v9015 = vpop.f32.mrb[0].mxu0
  %9016 = vmatprep.mubr.bf16.mxu0 %v8420
  %9017 = vmatmul.mubr.bf16.gmra.mrb[0].mxu0 %v8419
  %v9018 = vpop.f32.mrb[0].mxu0
  %v9019 = vadd.f32 0.0, %v9018
  %v9020 = vpop.f32.mrb[0].mxu0
  %v9021 = vpop.f32.mrb[0].mxu0
  %v9022 = vadd.f32 0.0, %v9021
  %v9023 = vpop.f32.mrb[0].mxu0
  %9024 = vmatprep.mubr.bf16.mxu0 %v8423
  %9025 = vmatmul.mubr.bf16.gmra.mrb[0].mxu0 %v8422
  %v9026 = vpop.f32.mrb[0].mxu0
  %v9027 = vadd.f32 0.0, %v9026
  %v9028 = vpop.f32.mrb[0].mxu0
  %v9029 = vpop.f32.mrb[0].mxu0
  %v9030 = vadd.f32 0.0, %v9029
  %v9031 = vpop.f32.mrb[0].mxu0
  %9032 = vmatprep.mubr.bf16.mxu0 %v8426
  %9033 = vmatmul.mubr.bf16.gmra.mrb[0].mxu0 %v8425
  %v9034 = vpop.f32.mrb[0].mxu0
  %v9035 = vadd.f32 0.0, %v9034
  %v9036 = vpop.f32.mrb[0].mxu0
  %v9037 = vpop.f32.mrb[0].mxu0
  %v9038 = vadd.f32 0.0, %v9037
  %v9039 = vpop.f32.mrb[0].mxu0
  %9040 = vmatprep.mubr.bf16.mxu0 %v8429
  %9041 = vmatmul.mubr.bf16.gmra.mrb[0].mxu0 %v8428
  %v9042 = vpop.f32.mrb[0].mxu0
  %v9043 = vadd.f32 0.0, %v9042
  %v9044 = vpop.f32.mrb[0].mxu0
  %v9045 = vpop.f32.mrb[0].mxu0
  %v9046 = vadd.f32 0.0, %v9045
  %v9047 = vpop.f32.mrb[0].mxu0
  %9048 = vmatprep.mubr.bf16.mxu0 %v8432
  %9049 = vmatmul.mubr.bf16.gmra.mrb[0].mxu0 %v8431
  %v9050 = vpop.f32.mrb[0].mxu0
  %v9051 = vadd.f32 0.0, %v9050
  %v9052 = vpop.f32.mrb[0].mxu0
  %v9053 = vpop.f32.mrb[0].mxu0
  %v9054 = vadd.f32 0.0, %v9053
  %v9055 = vpop.f32.mrb[0].mxu0
  %9056 = vmatprep.mubr.bf16.mxu0 %v8435
  %9057 = vmatmul.mubr.bf16.gmra.mrb[0].mxu0 %v8434
  %v9058 = vpop.f32.mrb[0].mxu0
  %v9059 = vadd.f32 0.0, %v9058
  %v9060 = vpop.f32.mrb[0].mxu0
  %v9061 = vpop.f32.mrb[0].mxu0
  %v9062 = vadd.f32 0.0, %v9061
  %v9063 = vpop.f32.mrb[0].mxu0
  %9064 = vmatprep.mubr.bf16.mxu0 %v8438
  %9065 = vmatmul.mubr.bf16.gmra.mrb[0].mxu0 %v8437
  %v9066 = vpop.f32.mrb[0].mxu0
  %v9067 = vadd.f32 0.0, %v9066
  %v9068 = vpop.f32.mrb[0].mxu0
  %v9069 = vpop.f32.mrb[0].mxu0
  %v9070 = vadd.f32 0.0, %v9069
  %v9071 = vpop.f32.mrb[0].mxu0
  %9072 = vmatprep.mubr.bf16.mxu0 %v8441
  %9073 = vmatmul.mubr.bf16.gmra.mrb[0].mxu0 %v8440
  %v9074 = vpop.f32.mrb[0].mxu0
  %v9075 = vadd.f32 0.0, %v9074
  %v9076 = vpop.f32.mrb[0].mxu0
  %v9077 = vpop.f32.mrb[0].mxu0
  %v9078 = vadd.f32 0.0, %v9077
  %v9079 = vpop.f32.mrb[0].mxu0
  %9080 = vmatprep.mubr.bf16.mxu0 %v8444
  %9081 = vmatmul.mubr.bf16.gmra.mrb[0].mxu0 %v8443
  %v9082 = vpop.f32.mrb[0].mxu0
  %v9083 = vadd.f32 0.0, %v9082
  %v9084 = vpop.f32.mrb[0].mxu0
  %v9085 = vpop.f32.mrb[0].mxu0
  %v9086 = vadd.f32 0.0, %v9085
  %v9087 = vpop.f32.mrb[0].mxu0
  %9088 = vmatprep.mubr.bf16.mxu0 %v8447
  %9089 = vmatmul.mubr.bf16.gmra.mrb[0].mxu0 %v8446
  %v9090 = vpop.f32.mrb[0].mxu0
  %v9091 = vadd.f32 0.0, %v9090
  %v9092 = vpop.f32.mrb[0].mxu0
  %v9093 = vpop.f32.mrb[0].mxu0
  %v9094 = vadd.f32 0.0, %v9093
  %v9095 = vpop.f32.mrb[0].mxu0
  %9096 = vmatprep.mubr.bf16.mxu0 %v8450
  %9097 = vmatmul.mubr.bf16.gmra.mrb[0].mxu0 %v8449
  %v9098 = vpop.f32.mrb[0].mxu0
  %v9099 = vadd.f32 0.0, %v9098
  %v9100 = vpop.f32.mrb[0].mxu0
  %v9101 = vpop.f32.mrb[0].mxu0
  %v9102 = vadd.f32 0.0, %v9101
  %v9103 = vpop.f32.mrb[0].mxu0
  %9104 = vmatprep.mubr.bf16.mxu0 %v8453
  %9105 = vmatmul.mubr.bf16.gmra.mrb[0].mxu0 %v8452
  %v9106 = vpop.f32.mrb[0].mxu0
  %v9107 = vadd.f32 0.0, %v9106
  %v9108 = vpop.f32.mrb[0].mxu0
  %v9109 = vpop.f32.mrb[0].mxu0
  %v9110 = vadd.f32 0.0, %v9109
  %v9111 = vpop.f32.mrb[0].mxu0
  %9112 = vmatprep.mubr.bf16.mxu0 %v8456
  %9113 = vmatmul.mubr.bf16.gmra.mrb[0].mxu0 %v8455
  %v9114 = vpop.f32.mrb[0].mxu0
  %v9115 = vadd.f32 0.0, %v9114
  %v9116 = vpop.f32.mrb[0].mxu0
  %v9117 = vpop.f32.mrb[0].mxu0
  %v9118 = vadd.f32 0.0, %v9117
  %v9119 = vpop.f32.mrb[0].mxu0
  %9120 = vmatprep.mubr.bf16.mxu0 %v8459
  %9121 = vmatmul.mubr.bf16.gmra.mrb[0].mxu0 %v8458
  %v9122 = vpop.f32.mrb[0].mxu0
  %v9123 = vadd.f32 0.0, %v9122
  %v9124 = vpop.f32.mrb[0].mxu0
  %v9125 = vpop.f32.mrb[0].mxu0
  %v9126 = vadd.f32 0.0, %v9125
  %v9127 = vpop.f32.mrb[0].mxu0
  %9128 = vmatprep.mubr.bf16.mxu0 %v8462
  %9129 = vmatmul.mubr.bf16.gmra.mrb[0].mxu0 %v8461
  %v9130 = vpop.f32.mrb[0].mxu0
  %v9131 = vadd.f32 0.0, %v9130
  %v9132 = vpop.f32.mrb[0].mxu0
  %v9133 = vpop.f32.mrb[0].mxu0
  %v9134 = vadd.f32 0.0, %v9133
  %v9135 = vpop.f32.mrb[0].mxu0
  %9136 = vmatprep.mubr.bf16.mxu0 %v8465
  %9137 = vmatmul.mubr.bf16.gmra.mrb[0].mxu0 %v8464
  %v9138 = vpop.f32.mrb[0].mxu0
  %v9139 = vadd.f32 0.0, %v9138
  %v9140 = vpop.f32.mrb[0].mxu0
  %v9141 = vpop.f32.mrb[0].mxu0
  %v9142 = vadd.f32 0.0, %v9141
  %v9143 = vpop.f32.mrb[0].mxu0
  %9144 = vmatprep.mubr.bf16.mxu0 %v8468
  %9145 = vmatmul.mubr.bf16.gmra.mrb[0].mxu0 %v8467
  %v9146 = vpop.f32.mrb[0].mxu0
  %v9147 = vadd.f32 0.0, %v9146
  %v9148 = vpop.f32.mrb[0].mxu0
  %v9149 = vpop.f32.mrb[0].mxu0
  %v9150 = vadd.f32 0.0, %v9149
  %v9151 = vpop.f32.mrb[0].mxu0
  %9152 = vmatprep.mubr.bf16.mxu0 %v8471
  %9153 = vmatmul.mubr.bf16.gmra.mrb[0].mxu0 %v8470
  %v9154 = vpop.f32.mrb[0].mxu0
  %v9155 = vadd.f32 0.0, %v9154
  %v9156 = vpop.f32.mrb[0].mxu0
  %v9157 = vpop.f32.mrb[0].mxu0
  %v9158 = vadd.f32 0.0, %v9157
  %v9159 = vpop.f32.mrb[0].mxu0
  %9160 = vmatprep.mubr.bf16.mxu0 %v8474
  %9161 = vmatmul.mubr.bf16.gmra.mrb[0].mxu0 %v8473
  %v9162 = vpop.f32.mrb[0].mxu0
  %v9163 = vadd.f32 0.0, %v9162
  %v9164 = vpop.f32.mrb[0].mxu0
  %v9165 = vpop.f32.mrb[0].mxu0
  %v9166 = vadd.f32 0.0, %v9165
  %v9167 = vpop.f32.mrb[0].mxu0
  %9168 = vmatprep.mubr.bf16.mxu0 %v8477
  %9169 = vmatmul.mubr.bf16.gmra.mrb[0].mxu0 %v8476
  %v9170 = vpop.f32.mrb[0].mxu0
  %v9171 = vadd.f32 0.0, %v9170
  %v9172 = vpop.f32.mrb[0].mxu0
  %v9173 = vpop.f32.mrb[0].mxu0
  %v9174 = vadd.f32 0.0, %v9173
  %v9175 = vpop.f32.mrb[0].mxu0
  %9176 = vmatprep.mubr.bf16.mxu0 %v8480
  %9177 = vmatmul.mubr.bf16.gmra.mrb[0].mxu0 %v8479
  %v9178 = vpop.f32.mrb[0].mxu0
  %v9179 = vadd.f32 0.0, %v9178
  %v9180 = vpop.f32.mrb[0].mxu0
  %v9181 = vpop.f32.mrb[0].mxu0
  %v9182 = vadd.f32 0.0, %v9181
  %v9183 = vpop.f32.mrb[0].mxu0
  %9184 = vmatprep.mubr.bf16.mxu0 %v8483
  %9185 = vmatmul.mubr.bf16.gmra.mrb[0].mxu0 %v8482
  %v9186 = vpop.f32.mrb[0].mxu0
  %v9187 = vadd.f32 0.0, %v9186
  %v9188 = vpop.f32.mrb[0].mxu0
  %v9189 = vpop.f32.mrb[0].mxu0
  %v9190 = vadd.f32 0.0, %v9189
  %v9191 = vpop.f32.mrb[0].mxu0
  %9192 = vmatprep.mubr.bf16.mxu0 %v8486
  %9193 = vmatmul.mubr.bf16.gmra.mrb[0].mxu0 %v8485
  %v9194 = vpop.f32.mrb[0].mxu0
  %v9195 = vadd.f32 0.0, %v9194
  %v9196 = vpop.f32.mrb[0].mxu0
  %v9197 = vpop.f32.mrb[0].mxu0
  %v9198 = vadd.f32 0.0, %v9197
  %v9199 = vpop.f32.mrb[0].mxu0
  %9200 = vmatprep.mubr.bf16.mxu0 %v8489
  %9201 = vmatmul.mubr.bf16.gmra.mrb[0].mxu0 %v8488
  %v9202 = vpop.f32.mrb[0].mxu0
  %v9203 = vadd.f32 0.0, %v9202
  %v9204 = vpop.f32.mrb[0].mxu0
  %v9205 = vpop.f32.mrb[0].mxu0
  %v9206 = vadd.f32 0.0, %v9205
  %v9207 = vpop.f32.mrb[0].mxu0
  %9208 = vmatprep.mubr.bf16.mxu0 %v8492
  %9209 = vmatmul.mubr.bf16.gmra.mrb[0].mxu0 %v8491
  %v9210 = vpop.f32.mrb[0].mxu0
  %v9211 = vadd.f32 0.0, %v9210
  %v9212 = vpop.f32.mrb[0].mxu0
  %v9213 = vpop.f32.mrb[0].mxu0
  %v9214 = vadd.f32 0.0, %v9213
  %v9215 = vpop.f32.mrb[0].mxu0
  %9216 = vmatprep.mubr.bf16.mxu0 %v8495
  %9217 = vmatmul.mubr.bf16.gmra.mrb[0].mxu0 %v8494
  %v9218 = vpop.f32.mrb[0].mxu0
  %v9219 = vadd.f32 0.0, %v9218
  %v9220 = vpop.f32.mrb[0].mxu0
  %v9221 = vpop.f32.mrb[0].mxu0
  %v9222 = vadd.f32 0.0, %v9221
  %v9223 = vpop.f32.mrb[0].mxu0
  %9224 = vmatprep.mubr.bf16.mxu0 %v8498
  %9225 = vmatmul.mubr.bf16.gmra.mrb[0].mxu0 %v8497
  %v9226 = vpop.f32.mrb[0].mxu0
  %v9227 = vadd.f32 0.0, %v9226
  %v9228 = vpop.f32.mrb[0].mxu0
  %v9229 = vpop.f32.mrb[0].mxu0
  %v9230 = vadd.f32 0.0, %v9229
  %v9231 = vpop.f32.mrb[0].mxu0
  %9232 = vmatprep.mubr.bf16.mxu0 %v8501
  %9233 = vmatmul.mubr.bf16.gmra.mrb[0].mxu0 %v8500
  %v9234 = vpop.f32.mrb[0].mxu0
  %v9235 = vadd.f32 0.0, %v9234
  %v9236 = vpop.f32.mrb[0].mxu0
  %v9237 = vpop.f32.mrb[0].mxu0
  %v9238 = vadd.f32 0.0, %v9237
  %v9239 = vpop.f32.mrb[0].mxu0
  %9240 = vdwg.mxu0
  %9241 = vmatprep.subr.bf16.mxu0 0
  %9242 = vmatpush1.bf16.msra.mxu0 %v7582
  %9243 = vmatprep.subr.bf16.mxu0 0
  %9244 = vmatpush1.bf16.msra.mxu0 %v8774
  %9245 = vmatprep.subr.bf16.mxu0 0
  %9246 = vmatpush1.bf16.msra.mxu0 0
  %9247 = vmatprep.subr.bf16.mxu0 0
  %9248 = vmatpush1.bf16.msra.mxu0 0
  %9249 = vmatprep.subr.bf16.mxu0 0
  %9250 = vmatpush1.bf16.msra.mxu0 0
  %9251 = vmatprep.subr.bf16.mxu0 0
  %9252 = vmatpush1.bf16.msra.mxu0 0
  %9253 = vmatprep.subr.bf16.mxu0 0
  %9254 = vmatpush1.bf16.msra.mxu0 0
  %9255 = vmatprep.subr.bf16.mxu0 0
  %9256 = vmatpush1.bf16.msra.mxu0 0
  %9257 = vmatprep.subr.bf16.mxu0 0
  %9258 = vmatpush1.bf16.msra.mxu0 0
  %9259 = vmatprep.subr.bf16.mxu0 0
  %9260 = vmatpush1.bf16.msra.mxu0 0
  %9261 = vmatprep.subr.bf16.mxu0 0
  %9262 = vmatpush1.bf16.msra.mxu0 0
  %9263 = vmatprep.subr.bf16.mxu0 0
  %9264 = vmatpush1.bf16.msra.mxu0 0
  %9265 = vmatprep.subr.bf16.mxu0 0
  %9266 = vmatpush1.bf16.msra.mxu0 0
  %9267 = vmatprep.subr.bf16.mxu0 0
  %9268 = vmatpush1.bf16.msra.mxu0 0
  %9269 = vmatprep.subr.bf16.mxu0 0
  %9270 = vmatpush1.bf16.msra.mxu0 0
  %9271 = vmatprep.subr.bf16.mxu0 0
  %9272 = vmatpush1.bf16.msra.mxu0 0
  %9273 = vmatprep.mubr.bf16.mxu0 0
  %9274 = vmatmul.mubr.bf16.gmra.mrb[0].mxu0 %v8612
  %v9275 = vpop.f32.mrb[0].mxu0
  %v9276 = vadd.f32 %v8811, %v9275
  %v9277 = vpop.f32.mrb[0].mxu0
  %v9278 = vpop.f32.mrb[0].mxu0
  %v9279 = vadd.f32 %v8814, %v9278
  %v9280 = vpop.f32.mrb[0].mxu0
  %9281 = vmatprep.mubr.bf16.mxu0 0
  %9282 = vmatmul.mubr.bf16.gmra.mrb[0].mxu0 %v8615
  %v9283 = vpop.f32.mrb[0].mxu0
  %v9284 = vadd.f32 %v8819, %v9283
  %v9285 = vpop.f32.mrb[0].mxu0
  %v9286 = vpop.f32.mrb[0].mxu0
  %v9287 = vadd.f32 %v8822, %v9286
  %v9288 = vpop.f32.mrb[0].mxu0
  %9289 = vmatprep.mubr.bf16.mxu0 0
  %9290 = vmatmul.mubr.bf16.gmra.mrb[0].mxu0 %v8618
  %v9291 = vpop.f32.mrb[0].mxu0
  %v9292 = vadd.f32 %v8827, %v9291
  %v9293 = vpop.f32.mrb[0].mxu0
  %v9294 = vpop.f32.mrb[0].mxu0
  %v9295 = vadd.f32 %v8830, %v9294
  %v9296 = vpop.f32.mrb[0].mxu0
  %9297 = vmatprep.mubr.bf16.mxu0 0
  %9298 = vmatmul.mubr.bf16.gmra.mrb[0].mxu0 %v8621
  %v9299 = vpop.f32.mrb[0].mxu0
  %v9300 = vadd.f32 %v8835, %v9299
  %v9301 = vpop.f32.mrb[0].mxu0
  %v9302 = vpop.f32.mrb[0].mxu0
  %v9303 = vadd.f32 %v8838, %v9302
  %v9304 = vpop.f32.mrb[0].mxu0
  %9305 = vmatprep.mubr.bf16.mxu0 0
  %9306 = vmatmul.mubr.bf16.gmra.mrb[0].mxu0 %v8624
  %v9307 = vpop.f32.mrb[0].mxu0
  %v9308 = vadd.f32 %v8843, %v9307
  %v9309 = vpop.f32.mrb[0].mxu0
  %v9310 = vpop.f32.mrb[0].mxu0
  %v9311 = vadd.f32 %v8846, %v9310
  %v9312 = vpop.f32.mrb[0].mxu0
  %9313 = vmatprep.mubr.bf16.mxu0 0
  %9314 = vmatmul.mubr.bf16.gmra.mrb[0].mxu0 %v8627
  %v9315 = vpop.f32.mrb[0].mxu0
  %v9316 = vadd.f32 %v8851, %v9315
  %v9317 = vpop.f32.mrb[0].mxu0
  %v9318 = vpop.f32.mrb[0].mxu0
  %v9319 = vadd.f32 %v8854, %v9318
  %v9320 = vpop.f32.mrb[0].mxu0
  %9321 = vmatprep.mubr.bf16.mxu0 0
  %9322 = vmatmul.mubr.bf16.gmra.mrb[0].mxu0 %v8630
  %v9323 = vpop.f32.mrb[0].mxu0
  %v9324 = vadd.f32 %v8859, %v9323
  %v9325 = vpop.f32.mrb[0].mxu0
  %v9326 = vpop.f32.mrb[0].mxu0
  %v9327 = vadd.f32 %v8862, %v9326
  %v9328 = vpop.f32.mrb[0].mxu0
  %9329 = vmatprep.mubr.bf16.mxu0 0
  %9330 = vmatmul.mubr.bf16.gmra.mrb[0].mxu0 %v8633
  %v9331 = vpop.f32.mrb[0].mxu0
  %v9332 = vadd.f32 %v8867, %v9331
  %v9333 = vpop.f32.mrb[0].mxu0
  %v9334 = vpop.f32.mrb[0].mxu0
  %v9335 = vadd.f32 %v8870, %v9334
  %v9336 = vpop.f32.mrb[0].mxu0
  %9337 = vmatprep.mubr.bf16.mxu0 0
  %9338 = vmatmul.mubr.bf16.gmra.mrb[0].mxu0 %v8636
  %v9339 = vpop.f32.mrb[0].mxu0
  %v9340 = vadd.f32 %v8875, %v9339
  %v9341 = vpop.f32.mrb[0].mxu0
  %v9342 = vpop.f32.mrb[0].mxu0
  %v9343 = vadd.f32 %v8878, %v9342
  %v9344 = vpop.f32.mrb[0].mxu0
  %9345 = vmatprep.mubr.bf16.mxu0 0
  %9346 = vmatmul.mubr.bf16.gmra.mrb[0].mxu0 %v8639
  %v9347 = vpop.f32.mrb[0].mxu0
  %v9348 = vadd.f32 %v8883, %v9347
  %v9349 = vpop.f32.mrb[0].mxu0
  %v9350 = vpop.f32.mrb[0].mxu0
  %v9351 = vadd.f32 %v8886, %v9350
  %v9352 = vpop.f32.mrb[0].mxu0
  %9353 = vmatprep.mubr.bf16.mxu0 0
  %9354 = vmatmul.mubr.bf16.gmra.mrb[0].mxu0 %v8642
  %v9355 = vpop.f32.mrb[0].mxu0
  %v9356 = vadd.f32 %v8891, %v9355
  %v9357 = vpop.f32.mrb[0].mxu0
  %v9358 = vpop.f32.mrb[0].mxu0
  %v9359 = vadd.f32 %v8894, %v9358
  %v9360 = vpop.f32.mrb[0].mxu0
  %9361 = vmatprep.mubr.bf16.mxu0 0
  %9362 = vmatmul.mubr.bf16.gmra.mrb[0].mxu0 %v8645
  %v9363 = vpop.f32.mrb[0].mxu0
  %v9364 = vadd.f32 %v8899, %v9363
  %v9365 = vpop.f32.mrb[0].mxu0
  %v9366 = vpop.f32.mrb[0].mxu0
  %v9367 = vadd.f32 %v8902, %v9366
  %v9368 = vpop.f32.mrb[0].mxu0
  %9369 = vmatprep.mubr.bf16.mxu0 0
  %9370 = vmatmul.mubr.bf16.gmra.mrb[0].mxu0 %v8648
  %v9371 = vpop.f32.mrb[0].mxu0
  %v9372 = vadd.f32 %v8907, %v9371
  %v9373 = vpop.f32.mrb[0].mxu0
  %v9374 = vpop.f32.mrb[0].mxu0
  %v9375 = vadd.f32 %v8910, %v9374
  %v9376 = vpop.f32.mrb[0].mxu0
  %9377 = vmatprep.mubr.bf16.mxu0 0
  %9378 = vmatmul.mubr.bf16.gmra.mrb[0].mxu0 %v8651
  %v9379 = vpop.f32.mrb[0].mxu0
  %v9380 = vadd.f32 %v8915, %v9379
  %v9381 = vpop.f32.mrb[0].mxu0
  %v9382 = vpop.f32.mrb[0].mxu0
  %v9383 = vadd.f32 %v8918, %v9382
  %v9384 = vpop.f32.mrb[0].mxu0
  %9385 = vmatprep.mubr.bf16.mxu0 0
  %9386 = vmatmul.mubr.bf16.gmra.mrb[0].mxu0 %v8654
  %v9387 = vpop.f32.mrb[0].mxu0
  %v9388 = vadd.f32 %v8923, %v9387
  %v9389 = vpop.f32.mrb[0].mxu0
  %v9390 = vpop.f32.mrb[0].mxu0
  %v9391 = vadd.f32 %v8926, %v9390
  %v9392 = vpop.f32.mrb[0].mxu0
  %9393 = vmatprep.mubr.bf16.mxu0 0
  %9394 = vmatmul.mubr.bf16.gmra.mrb[0].mxu0 %v8657
  %v9395 = vpop.f32.mrb[0].mxu0
  %v9396 = vadd.f32 %v8931, %v9395
  %v9397 = vpop.f32.mrb[0].mxu0
  %v9398 = vpop.f32.mrb[0].mxu0
  %v9399 = vadd.f32 %v8934, %v9398
  %v9400 = vpop.f32.mrb[0].mxu0
  %9401 = vmatprep.mubr.bf16.mxu0 0
  %9402 = vmatmul.mubr.bf16.gmra.mrb[0].mxu0 %v8660
  %v9403 = vpop.f32.mrb[0].mxu0
  %v9404 = vadd.f32 %v8939, %v9403
  %v9405 = vpop.f32.mrb[0].mxu0
  %v9406 = vpop.f32.mrb[0].mxu0
  %v9407 = vadd.f32 %v8942, %v9406
  %v9408 = vpop.f32.mrb[0].mxu0
  %9409 = vmatprep.mubr.bf16.mxu0 0
  %9410 = vmatmul.mubr.bf16.gmra.mrb[0].mxu0 %v8663
  %v9411 = vpop.f32.mrb[0].mxu0
  %v9412 = vadd.f32 %v8947, %v9411
  %v9413 = vpop.f32.mrb[0].mxu0
  %v9414 = vpop.f32.mrb[0].mxu0
  %v9415 = vadd.f32 %v8950, %v9414
  %v9416 = vpop.f32.mrb[0].mxu0
  %9417 = vmatprep.mubr.bf16.mxu0 0
  %9418 = vmatmul.mubr.bf16.gmra.mrb[0].mxu0 %v8666
  %v9419 = vpop.f32.mrb[0].mxu0
  %v9420 = vadd.f32 %v8955, %v9419
  %v9421 = vpop.f32.mrb[0].mxu0
  %v9422 = vpop.f32.mrb[0].mxu0
  %v9423 = vadd.f32 %v8958, %v9422
  %v9424 = vpop.f32.mrb[0].mxu0
  %9425 = vmatprep.mubr.bf16.mxu0 0
  %9426 = vmatmul.mubr.bf16.gmra.mrb[0].mxu0 %v8669
  %v9427 = vpop.f32.mrb[0].mxu0
  %v9428 = vadd.f32 %v8963, %v9427
  %v9429 = vpop.f32.mrb[0].mxu0
  %v9430 = vpop.f32.mrb[0].mxu0
  %v9431 = vadd.f32 %v8966, %v9430
  %v9432 = vpop.f32.mrb[0].mxu0
  %9433 = vmatprep.mubr.bf16.mxu0 0
  %9434 = vmatmul.mubr.bf16.gmra.mrb[0].mxu0 %v8672
  %v9435 = vpop.f32.mrb[0].mxu0
  %v9436 = vadd.f32 %v8971, %v9435
  %v9437 = vpop.f32.mrb[0].mxu0
  %v9438 = vpop.f32.mrb[0].mxu0
  %v9439 = vadd.f32 %v8974, %v9438
  %v9440 = vpop.f32.mrb[0].mxu0
  %9441 = vmatprep.mubr.bf16.mxu0 0
  %9442 = vmatmul.mubr.bf16.gmra.mrb[0].mxu0 %v8675
  %v9443 = vpop.f32.mrb[0].mxu0
  %v9444 = vadd.f32 %v8979, %v9443
  %v9445 = vpop.f32.mrb[0].mxu0
  %v9446 = vpop.f32.mrb[0].mxu0
  %v9447 = vadd.f32 %v8982, %v9446
  %v9448 = vpop.f32.mrb[0].mxu0
  %9449 = vmatprep.mubr.bf16.mxu0 0
  %9450 = vmatmul.mubr.bf16.gmra.mrb[0].mxu0 %v8678
  %v9451 = vpop.f32.mrb[0].mxu0
  %v9452 = vadd.f32 %v8987, %v9451
  %v9453 = vpop.f32.mrb[0].mxu0
  %v9454 = vpop.f32.mrb[0].mxu0
  %v9455 = vadd.f32 %v8990, %v9454
  %v9456 = vpop.f32.mrb[0].mxu0
  %9457 = vmatprep.mubr.bf16.mxu0 0
  %9458 = vmatmul.mubr.bf16.gmra.mrb[0].mxu0 %v8681
  %v9459 = vpop.f32.mrb[0].mxu0
  %v9460 = vadd.f32 %v8995, %v9459
  %v9461 = vpop.f32.mrb[0].mxu0
  %v9462 = vpop.f32.mrb[0].mxu0
  %v9463 = vadd.f32 %v8998, %v9462
  %v9464 = vpop.f32.mrb[0].mxu0
  %9465 = vmatprep.mubr.bf16.mxu0 0
  %9466 = vmatmul.mubr.bf16.gmra.mrb[0].mxu0 %v8684
  %v9467 = vpop.f32.mrb[0].mxu0
  %v9468 = vadd.f32 %v9003, %v9467
  %v9469 = vpop.f32.mrb[0].mxu0
  %v9470 = vpop.f32.mrb[0].mxu0
  %v9471 = vadd.f32 %v9006, %v9470
  %v9472 = vpop.f32.mrb[0].mxu0
  %9473 = vmatprep.mubr.bf16.mxu0 0
  %9474 = vmatmul.mubr.bf16.gmra.mrb[0].mxu0 %v8687
  %v9475 = vpop.f32.mrb[0].mxu0
  %v9476 = vadd.f32 %v9011, %v9475
  %v9477 = vpop.f32.mrb[0].mxu0
  %v9478 = vpop.f32.mrb[0].mxu0
  %v9479 = vadd.f32 %v9014, %v9478
  %v9480 = vpop.f32.mrb[0].mxu0
  %9481 = vmatprep.mubr.bf16.mxu0 0
  %9482 = vmatmul.mubr.bf16.gmra.mrb[0].mxu0 %v8690
  %v9483 = vpop.f32.mrb[0].mxu0
  %v9484 = vadd.f32 %v9019, %v9483
  %v9485 = vpop.f32.mrb[0].mxu0
  %v9486 = vpop.f32.mrb[0].mxu0
  %v9487 = vadd.f32 %v9022, %v9486
  %v9488 = vpop.f32.mrb[0].mxu0
  %9489 = vmatprep.mubr.bf16.mxu0 0
  %9490 = vmatmul.mubr.bf16.gmra.mrb[0].mxu0 %v8693
  %v9491 = vpop.f32.mrb[0].mxu0
  %v9492 = vadd.f32 %v9027, %v9491
  %v9493 = vpop.f32.mrb[0].mxu0
  %v9494 = vpop.f32.mrb[0].mxu0
  %v9495 = vadd.f32 %v9030, %v9494
  %v9496 = vpop.f32.mrb[0].mxu0
  %9497 = vmatprep.mubr.bf16.mxu0 0
  %9498 = vmatmul.mubr.bf16.gmra.mrb[0].mxu0 %v8696
  %v9499 = vpop.f32.mrb[0].mxu0
  %v9500 = vadd.f32 %v9035, %v9499
  %v9501 = vpop.f32.mrb[0].mxu0
  %v9502 = vpop.f32.mrb[0].mxu0
  %v9503 = vadd.f32 %v9038, %v9502
  %v9504 = vpop.f32.mrb[0].mxu0
  %9505 = vmatprep.mubr.bf16.mxu0 0
  %9506 = vmatmul.mubr.bf16.gmra.mrb[0].mxu0 %v8699
  %v9507 = vpop.f32.mrb[0].mxu0
  %v9508 = vadd.f32 %v9043, %v9507
  %v9509 = vpop.f32.mrb[0].mxu0
  %v9510 = vpop.f32.mrb[0].mxu0
  %v9511 = vadd.f32 %v9046, %v9510
  %v9512 = vpop.f32.mrb[0].mxu0
  %9513 = vmatprep.mubr.bf16.mxu0 0
  %9514 = vmatmul.mubr.bf16.gmra.mrb[0].mxu0 %v8702
  %v9515 = vpop.f32.mrb[0].mxu0
  %v9516 = vadd.f32 %v9051, %v9515
  %v9517 = vpop.f32.mrb[0].mxu0
  %v9518 = vpop.f32.mrb[0].mxu0
  %v9519 = vadd.f32 %v9054, %v9518
  %v9520 = vpop.f32.mrb[0].mxu0
  %9521 = vmatprep.mubr.bf16.mxu0 0
  %9522 = vmatmul.mubr.bf16.gmra.mrb[0].mxu0 %v8705
  %v9523 = vpop.f32.mrb[0].mxu0
  %v9524 = vadd.f32 %v9059, %v9523
  %v9525 = vpop.f32.mrb[0].mxu0
  %v9526 = vpop.f32.mrb[0].mxu0
  %v9527 = vadd.f32 %v9062, %v9526
  %v9528 = vpop.f32.mrb[0].mxu0
  %9529 = vmatprep.mubr.bf16.mxu0 0
  %9530 = vmatmul.mubr.bf16.gmra.mrb[0].mxu0 %v8708
  %v9531 = vpop.f32.mrb[0].mxu0
  %v9532 = vadd.f32 %v9067, %v9531
  %v9533 = vpop.f32.mrb[0].mxu0
  %v9534 = vpop.f32.mrb[0].mxu0
  %v9535 = vadd.f32 %v9070, %v9534
  %v9536 = vpop.f32.mrb[0].mxu0
  %9537 = vmatprep.mubr.bf16.mxu0 0
  %9538 = vmatmul.mubr.bf16.gmra.mrb[0].mxu0 %v8711
  %v9539 = vpop.f32.mrb[0].mxu0
  %v9540 = vadd.f32 %v9075, %v9539
  %v9541 = vpop.f32.mrb[0].mxu0
  %v9542 = vpop.f32.mrb[0].mxu0
  %v9543 = vadd.f32 %v9078, %v9542
  %v9544 = vpop.f32.mrb[0].mxu0
  %9545 = vmatprep.mubr.bf16.mxu0 0
  %9546 = vmatmul.mubr.bf16.gmra.mrb[0].mxu0 %v8714
  %v9547 = vpop.f32.mrb[0].mxu0
  %v9548 = vadd.f32 %v9083, %v9547
  %v9549 = vpop.f32.mrb[0].mxu0
  %v9550 = vpop.f32.mrb[0].mxu0
  %v9551 = vadd.f32 %v9086, %v9550
  %v9552 = vpop.f32.mrb[0].mxu0
  %9553 = vmatprep.mubr.bf16.mxu0 0
  %9554 = vmatmul.mubr.bf16.gmra.mrb[0].mxu0 %v8717
  %v9555 = vpop.f32.mrb[0].mxu0
  %v9556 = vadd.f32 %v9091, %v9555
  %v9557 = vpop.f32.mrb[0].mxu0
  %v9558 = vpop.f32.mrb[0].mxu0
  %v9559 = vadd.f32 %v9094, %v9558
  %v9560 = vpop.f32.mrb[0].mxu0
  %9561 = vmatprep.mubr.bf16.mxu0 0
  %9562 = vmatmul.mubr.bf16.gmra.mrb[0].mxu0 %v8720
  %v9563 = vpop.f32.mrb[0].mxu0
  %v9564 = vadd.f32 %v9099, %v9563
  %v9565 = vpop.f32.mrb[0].mxu0
  %v9566 = vpop.f32.mrb[0].mxu0
  %v9567 = vadd.f32 %v9102, %v9566
  %v9568 = vpop.f32.mrb[0].mxu0
  %9569 = vmatprep.mubr.bf16.mxu0 0
  %9570 = vmatmul.mubr.bf16.gmra.mrb[0].mxu0 %v8723
  %v9571 = vpop.f32.mrb[0].mxu0
  %v9572 = vadd.f32 %v9107, %v9571
  %v9573 = vpop.f32.mrb[0].mxu0
  %v9574 = vpop.f32.mrb[0].mxu0
  %v9575 = vadd.f32 %v9110, %v9574
  %v9576 = vpop.f32.mrb[0].mxu0
  %9577 = vmatprep.mubr.bf16.mxu0 0
  %9578 = vmatmul.mubr.bf16.gmra.mrb[0].mxu0 %v8726
  %v9579 = vpop.f32.mrb[0].mxu0
  %v9580 = vadd.f32 %v9115, %v9579
  %v9581 = vpop.f32.mrb[0].mxu0
  %v9582 = vpop.f32.mrb[0].mxu0
  %v9583 = vadd.f32 %v9118, %v9582
  %v9584 = vpop.f32.mrb[0].mxu0
  %9585 = vmatprep.mubr.bf16.mxu0 0
  %9586 = vmatmul.mubr.bf16.gmra.mrb[0].mxu0 %v8729
  %v9587 = vpop.f32.mrb[0].mxu0
  %v9588 = vadd.f32 %v9123, %v9587
  %v9589 = vpop.f32.mrb[0].mxu0
  %v9590 = vpop.f32.mrb[0].mxu0
  %v9591 = vadd.f32 %v9126, %v9590
  %v9592 = vpop.f32.mrb[0].mxu0
  %9593 = vmatprep.mubr.bf16.mxu0 0
  %9594 = vmatmul.mubr.bf16.gmra.mrb[0].mxu0 %v8732
  %v9595 = vpop.f32.mrb[0].mxu0
  %v9596 = vadd.f32 %v9131, %v9595
  %v9597 = vpop.f32.mrb[0].mxu0
  %v9598 = vpop.f32.mrb[0].mxu0
  %v9599 = vadd.f32 %v9134, %v9598
  %v9600 = vpop.f32.mrb[0].mxu0
  %9601 = vmatprep.mubr.bf16.mxu0 0
  %9602 = vmatmul.mubr.bf16.gmra.mrb[0].mxu0 %v8735
  %v9603 = vpop.f32.mrb[0].mxu0
  %v9604 = vadd.f32 %v9139, %v9603
  %v9605 = vpop.f32.mrb[0].mxu0
  %v9606 = vpop.f32.mrb[0].mxu0
  %v9607 = vadd.f32 %v9142, %v9606
  %v9608 = vpop.f32.mrb[0].mxu0
  %9609 = vmatprep.mubr.bf16.mxu0 0
  %9610 = vmatmul.mubr.bf16.gmra.mrb[0].mxu0 %v8738
  %v9611 = vpop.f32.mrb[0].mxu0
  %v9612 = vadd.f32 %v9147, %v9611
  %v9613 = vpop.f32.mrb[0].mxu0
  %v9614 = vpop.f32.mrb[0].mxu0
  %v9615 = vadd.f32 %v9150, %v9614
  %v9616 = vpop.f32.mrb[0].mxu0
  %9617 = vmatprep.mubr.bf16.mxu0 0
  %9618 = vmatmul.mubr.bf16.gmra.mrb[0].mxu0 %v8741
  %v9619 = vpop.f32.mrb[0].mxu0
  %v9620 = vadd.f32 %v9155, %v9619
  %v9621 = vpop.f32.mrb[0].mxu0
  %v9622 = vpop.f32.mrb[0].mxu0
  %v9623 = vadd.f32 %v9158, %v9622
  %v9624 = vpop.f32.mrb[0].mxu0
  %9625 = vmatprep.mubr.bf16.mxu0 0
  %9626 = vmatmul.mubr.bf16.gmra.mrb[0].mxu0 %v8744
  %v9627 = vpop.f32.mrb[0].mxu0
  %v9628 = vadd.f32 %v9163, %v9627
  %v9629 = vpop.f32.mrb[0].mxu0
  %v9630 = vpop.f32.mrb[0].mxu0
  %v9631 = vadd.f32 %v9166, %v9630
  %v9632 = vpop.f32.mrb[0].mxu0
  %9633 = vmatprep.mubr.bf16.mxu0 0
  %9634 = vmatmul.mubr.bf16.gmra.mrb[0].mxu0 %v8747
  %v9635 = vpop.f32.mrb[0].mxu0
  %v9636 = vadd.f32 %v9171, %v9635
  %v9637 = vpop.f32.mrb[0].mxu0
  %v9638 = vpop.f32.mrb[0].mxu0
  %v9639 = vadd.f32 %v9174, %v9638
  %v9640 = vpop.f32.mrb[0].mxu0
  %9641 = vmatprep.mubr.bf16.mxu0 0
  %9642 = vmatmul.mubr.bf16.gmra.mrb[0].mxu0 %v8750
  %v9643 = vpop.f32.mrb[0].mxu0
  %v9644 = vadd.f32 %v9179, %v9643
  %v9645 = vpop.f32.mrb[0].mxu0
  %v9646 = vpop.f32.mrb[0].mxu0
  %v9647 = vadd.f32 %v9182, %v9646
  %v9648 = vpop.f32.mrb[0].mxu0
  %9649 = vmatprep.mubr.bf16.mxu0 0
  %9650 = vmatmul.mubr.bf16.gmra.mrb[0].mxu0 %v8753
  %v9651 = vpop.f32.mrb[0].mxu0
  %v9652 = vadd.f32 %v9187, %v9651
  %v9653 = vpop.f32.mrb[0].mxu0
  %v9654 = vpop.f32.mrb[0].mxu0
  %v9655 = vadd.f32 %v9190, %v9654
  %v9656 = vpop.f32.mrb[0].mxu0
  %9657 = vmatprep.mubr.bf16.mxu0 0
  %9658 = vmatmul.mubr.bf16.gmra.mrb[0].mxu0 %v8756
  %v9659 = vpop.f32.mrb[0].mxu0
  %v9660 = vadd.f32 %v9195, %v9659
  %v9661 = vpop.f32.mrb[0].mxu0
  %v9662 = vpop.f32.mrb[0].mxu0
  %v9663 = vadd.f32 %v9198, %v9662
  %v9664 = vpop.f32.mrb[0].mxu0
  %9665 = vmatprep.mubr.bf16.mxu0 0
  %9666 = vmatmul.mubr.bf16.gmra.mrb[0].mxu0 %v8759
  %v9667 = vpop.f32.mrb[0].mxu0
  %v9668 = vadd.f32 %v9203, %v9667
  %v9669 = vpop.f32.mrb[0].mxu0
  %v9670 = vpop.f32.mrb[0].mxu0
  %v9671 = vadd.f32 %v9206, %v9670
  %v9672 = vpop.f32.mrb[0].mxu0
  %9673 = vmatprep.mubr.bf16.mxu0 0
  %9674 = vmatmul.mubr.bf16.gmra.mrb[0].mxu0 %v8762
  %v9675 = vpop.f32.mrb[0].mxu0
  %v9676 = vadd.f32 %v9211, %v9675
  %v9677 = vpop.f32.mrb[0].mxu0
  %v9678 = vpop.f32.mrb[0].mxu0
  %v9679 = vadd.f32 %v9214, %v9678
  %v9680 = vpop.f32.mrb[0].mxu0
  %9681 = vmatprep.mubr.bf16.mxu0 0
  %9682 = vmatmul.mubr.bf16.gmra.mrb[0].mxu0 %v8765
  %v9683 = vpop.f32.mrb[0].mxu0
  %v9684 = vadd.f32 %v9219, %v9683
  %v9685 = vpop.f32.mrb[0].mxu0
  %v9686 = vpop.f32.mrb[0].mxu0
  %v9687 = vadd.f32 %v9222, %v9686
  %v9688 = vpop.f32.mrb[0].mxu0
  %9689 = vmatprep.mubr.bf16.mxu0 0
  %9690 = vmatmul.mubr.bf16.gmra.mrb[0].mxu0 %v8768
  %v9691 = vpop.f32.mrb[0].mxu0
  %v9692 = vadd.f32 %v9227, %v9691
  %v9693 = vpop.f32.mrb[0].mxu0
  %v9694 = vpop.f32.mrb[0].mxu0
  %v9695 = vadd.f32 %v9230, %v9694
  %v9696 = vpop.f32.mrb[0].mxu0
  %9697 = vmatprep.mubr.bf16.mxu0 0
  %9698 = vmatmul.mubr.bf16.gmra.mrb[0].mxu0 %v8771
  %v9699 = vpop.f32.mrb[0].mxu0
  %v9700 = vadd.f32 %v9235, %v9699
  %v9701 = vpop.f32.mrb[0].mxu0
  %v9702 = vpop.f32.mrb[0].mxu0
  %v9703 = vadd.f32 %v9238, %v9702
  %v9704 = vpop.f32.mrb[0].mxu0
  %9705 = vdwg.mxu0
  %v9706 = vmax.f32 %v9276, %v9383
  %v9707 = vmax.f32 %v9279, %v9388
  %v9708 = vmax.f32 %v9284, %v9391
  %v9709 = vmax.f32 %v9287, %v9396
  %v9710 = vmax.f32 %v9292, %v9399
  %v9711 = vmax.f32 %v9295, %v9404
  %v9712 = vmax.f32 %v9300, %v9407
  %v9713 = vmax.f32 %v9303, %v9412
  %v9714 = vmax.f32 %v9308, %v9415
  %v9715 = vmax.f32 %v9311, %v9420
  %v9716 = vmax.f32 %v9316, %v9423
  %v9717 = vmax.f32 %v9319, %v9428
  %v9718 = vmax.f32 %v9324, %v9431
  %v9719 = vmax.f32 %v9327, %v9436
  %v9720 = vmax.f32 %v9332, %v9439
  %v9721 = vmax.f32 %v9335, %v9444
  %v9722 = vmax.f32 %v9340, %v9447
  %v9723 = vmax.f32 %v9343, %v9452
  %v9724 = vmax.f32 %v9348, %v9455
  %v9725 = vmax.f32 %v9351, %v9460
  %v9726 = vmax.f32 %v9356, %v9463
  %v9727 = vmax.f32 %v9359, %v9468
  %v9728 = vmax.f32 %v9364, %v9471
  %v9729 = vmax.f32 %v9367, %v9476
  %v9730 = vmax.f32 %v9372, %v9479
  %v9731 = vmax.f32 %v9375, %v9484
  %v9732 = vmax.f32 %v9380, %v9487
  %v9733 = vmax.f32 %v9492, %v9599
  %v9734 = vmax.f32 %v9495, %v9604
  %v9735 = vmax.f32 %v9500, %v9607
  %v9736 = vmax.f32 %v9503, %v9612
  %v9737 = vmax.f32 %v9508, %v9615
  %v9738 = vmax.f32 %v9511, %v9620
  %v9739 = vmax.f32 %v9516, %v9623
  %v9740 = vmax.f32 %v9519, %v9628
  %v9741 = vmax.f32 %v9524, %v9631
  %v9742 = vmax.f32 %v9527, %v9636
  %v9743 = vmax.f32 %v9532, %v9639
  %v9744 = vmax.f32 %v9535, %v9644
  %v9745 = vmax.f32 %v9540, %v9647
  %v9746 = vmax.f32 %v9543, %v9652
  %v9747 = vmax.f32 %v9548, %v9655
  %v9748 = vmax.f32 %v9551, %v9660
  %v9749 = vmax.f32 %v9556, %v9663
  %v9750 = vmax.f32 %v9559, %v9668
  %v9751 = vmax.f32 %v9564, %v9671
  %v9752 = vmax.f32 %v9567, %v9676
  %v9753 = vmax.f32 %v9572, %v9679
  %v9754 = vmax.f32 %v9575, %v9684
  %v9755 = vmax.f32 %v9580, %v9687
  %v9756 = vmax.f32 %v9583, %v9692
  %v9757 = vmax.f32 %v9588, %v9695
  %v9758 = vmax.f32 %v9591, %v9700
  %v9759 = vmax.f32 %v9596, %v9703
  %v9760 = vmax.f32 %v9706, %v9733
  %v9761 = vmax.f32 %v9707, %v9734
  %v9762 = vmax.f32 %v9708, %v9735
  %v9763 = vmax.f32 %v9709, %v9736
  %v9764 = vmax.f32 %v9710, %v9737
  %v9765 = vmax.f32 %v9711, %v9738
  %v9766 = vmax.f32 %v9712, %v9739
  %v9767 = vmax.f32 %v9713, %v9740
  %v9768 = vmax.f32 %v9714, %v9741
  %v9769 = vmax.f32 %v9715, %v9742
  %v9770 = vmax.f32 %v9716, %v9743
  %v9771 = vmax.f32 %v9717, %v9744
  %v9772 = vmax.f32 %v9718, %v9745
  %v9773 = vmax.f32 %v9719, %v9746
  %v9774 = vmax.f32 %v9720, %v9747
  %v9775 = vmax.f32 %v9721, %v9748
  %v9776 = vmax.f32 %v9722, %v9749
  %v9777 = vmax.f32 %v9723, %v9750
  %v9778 = vmax.f32 %v9724, %v9751
  %v9779 = vmax.f32 %v9725, %v9752
  %v9780 = vmax.f32 %v9726, %v9753
  %v9781 = vmax.f32 %v9727, %v9754
  %v9782 = vmax.f32 %v9728, %v9755
  %v9783 = vmax.f32 %v9729, %v9756
  %v9784 = vmax.f32 %v9730, %v9757
  %v9785 = vmax.f32 %v9731, %v9758
  %v9786 = vmax.f32 %v9732, %v9759
  %v9787 = vld [vmem:[%s2 + $0x288] sm:$0xff]
  %v9788 = vld [vmem:[%s2 + $0x290] sm:$0xff]
  %v9789 = vld [vmem:[%s2 + $0x298] sm:$0xff]
  %v9790 = vld [vmem:[%s2 + $0x2a0] sm:$0xff]
  %v9791 = vld [vmem:[%s2 + $0x2a8] sm:$0xff]
  %v9792 = vld [vmem:[%s2 + $0x2b0] sm:$0xff]
  %v9793 = vld [vmem:[%s2 + $0x2b8] sm:$0xff]
  %v9794 = vld [vmem:[%s2 + $0x2c0] sm:$0xff]
  %v9795 = vld [vmem:[%s2 + $0x2c8] sm:$0xff]
  %v9796 = vld [vmem:[%s2 + $0x2d0] sm:$0xff]
  %v9797 = vld [vmem:[%s2 + $0x2d8] sm:$0xff]
  %v9798 = vld [vmem:[%s2 + $0x2e0] sm:$0xff]
  %v9799 = vld [vmem:[%s2 + $0x2e8] sm:$0xff]
  %v9800 = vld [vmem:[%s2 + $0x2f0] sm:$0xff]
  %v9801 = vld [vmem:[%s2 + $0x2f8] sm:$0xff]
  %v9802 = vld [vmem:[%s2 + $0x300] sm:$0xff]
  %v9803 = vld [vmem:[%s2 + $0x308] sm:$0xff]
  %v9804 = vld [vmem:[%s2 + $0x310] sm:$0xff]
  %v9805 = vld [vmem:[%s2 + $0x318] sm:$0xff]
  %v9806 = vld [vmem:[%s2 + $0x320] sm:$0xff]
  %v9807 = vld [vmem:[%s2 + $0x328] sm:$0xff]
  %v9808 = vld [vmem:[%s2 + $0x330] sm:$0xff]
  %v9809 = vld [vmem:[%s2 + $0x338] sm:$0xff]
  %v9810 = vld [vmem:[%s2 + $0x340] sm:$0xff]
  %v9811 = vld [vmem:[%s2 + $0x348] sm:$0xff]
  %v9812 = vld [vmem:[%s2 + $0x350] sm:$0xff]
  %v9813 = vld [vmem:[%s2 + $0x358] sm:$0xff]
  %9815 = vset.pattern.permute.xlu0 0
  %9816 = vperm.xlu0 %9815, %v9787
  %v9817 = vpop.permute.xlu0 %9816
  %9820 = vset.pattern.permute.xlu0 0
  %9821 = vperm.xlu0 %9820, %v9788
  %v9822 = vpop.permute.xlu0 %9821
  %9825 = vset.pattern.permute.xlu0 0
  %9826 = vperm.xlu0 %9825, %v9789
  %v9827 = vpop.permute.xlu0 %9826
  %9830 = vset.pattern.permute.xlu0 0
  %9831 = vperm.xlu0 %9830, %v9790
  %v9832 = vpop.permute.xlu0 %9831
  %9835 = vset.pattern.permute.xlu0 0
  %9836 = vperm.xlu0 %9835, %v9791
  %v9837 = vpop.permute.xlu0 %9836
  %9840 = vset.pattern.permute.xlu0 0
  %9841 = vperm.xlu0 %9840, %v9792
  %v9842 = vpop.permute.xlu0 %9841
  %9845 = vset.pattern.permute.xlu0 0
  %9846 = vperm.xlu0 %9845, %v9793
  %v9847 = vpop.permute.xlu0 %9846
  %9850 = vset.pattern.permute.xlu0 0
  %9851 = vperm.xlu0 %9850, %v9794
  %v9852 = vpop.permute.xlu0 %9851
  %9855 = vset.pattern.permute.xlu0 0
  %9856 = vperm.xlu0 %9855, %v9795
  %v9857 = vpop.permute.xlu0 %9856
  %9860 = vset.pattern.permute.xlu0 0
  %9861 = vperm.xlu0 %9860, %v9796
  %v9862 = vpop.permute.xlu0 %9861
  %9865 = vset.pattern.permute.xlu0 0
  %9866 = vperm.xlu0 %9865, %v9797
  %v9867 = vpop.permute.xlu0 %9866
  %9870 = vset.pattern.permute.xlu0 0
  %9871 = vperm.xlu0 %9870, %v9798
  %v9872 = vpop.permute.xlu0 %9871
  %9875 = vset.pattern.permute.xlu0 0
  %9876 = vperm.xlu0 %9875, %v9799
  %v9877 = vpop.permute.xlu0 %9876
  %9880 = vset.pattern.permute.xlu0 0
  %9881 = vperm.xlu0 %9880, %v9800
  %v9882 = vpop.permute.xlu0 %9881
  %9885 = vset.pattern.permute.xlu0 0
  %9886 = vperm.xlu0 %9885, %v9801
  %v9887 = vpop.permute.xlu0 %9886
  %9890 = vset.pattern.permute.xlu0 0
  %9891 = vperm.xlu0 %9890, %v9802
  %v9892 = vpop.permute.xlu0 %9891
  %9895 = vset.pattern.permute.xlu0 0
  %9896 = vperm.xlu0 %9895, %v9803
  %v9897 = vpop.permute.xlu0 %9896
  %9900 = vset.pattern.permute.xlu0 0
  %9901 = vperm.xlu0 %9900, %v9804
  %v9902 = vpop.permute.xlu0 %9901
  %9905 = vset.pattern.permute.xlu0 0
  %9906 = vperm.xlu0 %9905, %v9805
  %v9907 = vpop.permute.xlu0 %9906
  %9910 = vset.pattern.permute.xlu0 0
  %9911 = vperm.xlu0 %9910, %v9806
  %v9912 = vpop.permute.xlu0 %9911
  %9915 = vset.pattern.permute.xlu0 0
  %9916 = vperm.xlu0 %9915, %v9807
  %v9917 = vpop.permute.xlu0 %9916
  %9920 = vset.pattern.permute.xlu0 0
  %9921 = vperm.xlu0 %9920, %v9808
  %v9922 = vpop.permute.xlu0 %9921
  %9925 = vset.pattern.permute.xlu0 0
  %9926 = vperm.xlu0 %9925, %v9809
  %v9927 = vpop.permute.xlu0 %9926
  %9930 = vset.pattern.permute.xlu0 0
  %9931 = vperm.xlu0 %9930, %v9810
  %v9932 = vpop.permute.xlu0 %9931
  %9935 = vset.pattern.permute.xlu0 0
  %9936 = vperm.xlu0 %9935, %v9811
  %v9937 = vpop.permute.xlu0 %9936
  %9940 = vset.pattern.permute.xlu0 0
  %9941 = vperm.xlu0 %9940, %v9812
  %v9942 = vpop.permute.xlu0 %9941
  %9945 = vset.pattern.permute.xlu0 0
  %9946 = vperm.xlu0 %9945, %v9813
  %v9947 = vpop.permute.xlu0 %9946
  %v9949 = vadd.f32 %v9760, %v9817
  %v9950 = vadd.f32 %v9761, %v9822
  %v9951 = vadd.f32 %v9762, %v9827
  %v9952 = vadd.f32 %v9763, %v9832
  %v9953 = vadd.f32 %v9764, %v9837
  %v9954 = vadd.f32 %v9765, %v9842
  %v9955 = vadd.f32 %v9766, %v9847
  %v9956 = vadd.f32 %v9767, %v9852
  %v9957 = vadd.f32 %v9768, %v9857
  %v9958 = vadd.f32 %v9769, %v9862
  %v9959 = vadd.f32 %v9770, %v9867
  %v9960 = vadd.f32 %v9771, %v9872
  %v9961 = vadd.f32 %v9772, %v9877
  %v9962 = vadd.f32 %v9773, %v9882
  %v9963 = vadd.f32 %v9774, %v9887
  %v9964 = vadd.f32 %v9775, %v9892
  %v9965 = vadd.f32 %v9776, %v9897
  %v9966 = vadd.f32 %v9777, %v9902
  %v9967 = vadd.f32 %v9778, %v9907
  %v9968 = vadd.f32 %v9779, %v9912
  %v9969 = vadd.f32 %v9780, %v9917
  %v9970 = vadd.f32 %v9781, %v9922
  %v9971 = vadd.f32 %v9782, %v9927
  %v9972 = vadd.f32 %v9783, %v9932
  %v9973 = vadd.f32 %v9784, %v9937
  %v9974 = vadd.f32 %v9785, %v9942
  %v9975 = vadd.f32 %v9786, %v9947
  %v9976 = vmax.f32 %v9949, 0.0
  %v9977 = vmax.f32 %v9950, 0.0
  %v9978 = vmax.f32 %v9951, 0.0
  %v9979 = vmax.f32 %v9952, 0.0
  %v9980 = vmax.f32 %v9953, 0.0
  %v9981 = vmax.f32 %v9954, 0.0
  %v9982 = vmax.f32 %v9955, 0.0
  %v9983 = vmax.f32 %v9956, 0.0
  %v9984 = vmax.f32 %v9957, 0.0
  %v9985 = vmax.f32 %v9958, 0.0
  %v9986 = vmax.f32 %v9959, 0.0
  %v9987 = vmax.f32 %v9960, 0.0
  %v9988 = vmax.f32 %v9961, 0.0
  %v9989 = vmax.f32 %v9962, 0.0
  %v9990 = vmax.f32 %v9963, 0.0
  %v9991 = vmax.f32 %v9964, 0.0
  %v9992 = vmax.f32 %v9965, 0.0
  %v9993 = vmax.f32 %v9966, 0.0
  %v9994 = vmax.f32 %v9967, 0.0
  %v9995 = vmax.f32 %v9968, 0.0
  %v9996 = vmax.f32 %v9969, 0.0
  %v9997 = vmax.f32 %v9970, 0.0
  %v9998 = vmax.f32 %v9971, 0.0
  %v9999 = vmax.f32 %v9972, 0.0
  %v10000 = vmax.f32 %v9973, 0.0
  %v10001 = vmax.f32 %v9974, 0.0
  %v10002 = vmax.f32 %v9975, 0.0
  %10003 = vst [vmem:[#allocation2 + $0x288] sm:$0xff] %v9976
  %10004 = vst [vmem:[#allocation2 + $0x290] sm:$0xff] %v9977
  %10005 = vst [vmem:[#allocation2 + $0x298] sm:$0xff] %v9978
  %10006 = vst [vmem:[#allocation2 + $0x2a0] sm:$0xff] %v9979
  %10007 = vst [vmem:[#allocation2 + $0x2a8] sm:$0xff] %v9980
  %10008 = vst [vmem:[#allocation2 + $0x2b0] sm:$0xff] %v9981
  %10009 = vst [vmem:[#allocation2 + $0x2b8] sm:$0xff] %v9982
  %10010 = vst [vmem:[#allocation2 + $0x2c0] sm:$0xff] %v9983
  %10011 = vst [vmem:[#allocation2 + $0x2c8] sm:$0xff] %v9984
  %10012 = vst [vmem:[#allocation2 + $0x2d0] sm:$0xff] %v9985
  %10013 = vst [vmem:[#allocation2 + $0x2d8] sm:$0xff] %v9986
  %10014 = vst [vmem:[#allocation2 + $0x2e0] sm:$0xff] %v9987
  %10015 = vst [vmem:[#allocation2 + $0x2e8] sm:$0xff] %v9988
  %10016 = vst [vmem:[#allocation2 + $0x2f0] sm:$0xff] %v9989
  %10017 = vst [vmem:[#allocation2 + $0x2f8] sm:$0xff] %v9990
  %10018 = vst [vmem:[#allocation2 + $0x300] sm:$0xff] %v9991
  %10019 = vst [vmem:[#allocation2 + $0x308] sm:$0xff] %v9992
  %10020 = vst [vmem:[#allocation2 + $0x310] sm:$0xff] %v9993
  %10021 = vst [vmem:[#allocation2 + $0x318] sm:$0xff] %v9994
  %10022 = vst [vmem:[#allocation2 + $0x320] sm:$0xff] %v9995
  %10023 = vst [vmem:[#allocation2 + $0x328] sm:$0xff] %v9996
  %10024 = vst [vmem:[#allocation2 + $0x330] sm:$0xff] %v9997
  %10025 = vst [vmem:[#allocation2 + $0x338] sm:$0xff] %v9998
  %10026 = vst [vmem:[#allocation2 + $0x340] sm:$0xff] %v9999
  %10027 = vst [vmem:[#allocation2 + $0x348] sm:$0xff] %v10000
  %10028 = vst [vmem:[#allocation2 + $0x350] sm:$0xff] %v10001
  %10029 = vst [vmem:[#allocation2 + $0x358] sm:$0xff] %v10002
  %v10030 = vld [vmem:[#allocation2] sm:$0xff]
  %v10031 = vld [vmem:[#allocation2 + $0x8] sm:$0xff]
  %v10032 = vld [vmem:[#allocation2 + $0x10] sm:$0xff]
  %v10033 = vld [vmem:[#allocation2 + $0x18] sm:$0xff]
  %v10034 = vld [vmem:[#allocation2 + $0x20] sm:$0xff]
  %v10035 = vld [vmem:[#allocation2 + $0x28] sm:$0xff]
  %v10036 = vld [vmem:[#allocation2 + $0x30] sm:$0xff]
  %v10037 = vld [vmem:[#allocation2 + $0x38] sm:$0xff]
  %v10038 = vld [vmem:[#allocation2 + $0x40] sm:$0xff]
  %v10039 = vld [vmem:[#allocation2 + $0x48] sm:$0xff]
  %v10040 = vld [vmem:[#allocation2 + $0x50] sm:$0xff]
  %v10041 = vld [vmem:[#allocation2 + $0x58] sm:$0xff]
  %v10042 = vld [vmem:[#allocation2 + $0x60] sm:$0xff]
  %v10043 = vld [vmem:[#allocation2 + $0x68] sm:$0xff]
  %v10044 = vld [vmem:[#allocation2 + $0x70] sm:$0xff]
  %v10045 = vld [vmem:[#allocation2 + $0x78] sm:$0xff]
  %v10046 = vld [vmem:[#allocation2 + $0x80] sm:$0xff]
  %v10047 = vld [vmem:[#allocation2 + $0x88] sm:$0xff]
  %v10048 = vld [vmem:[#allocation2 + $0x90] sm:$0xff]
  %v10049 = vld [vmem:[#allocation2 + $0x98] sm:$0xff]
  %v10050 = vld [vmem:[#allocation2 + $0xa0] sm:$0xff]
  %v10051 = vld [vmem:[#allocation2 + $0xa8] sm:$0xff]
  %v10052 = vld [vmem:[#allocation2 + $0xb0] sm:$0xff]
  %v10053 = vld [vmem:[#allocation2 + $0xb8] sm:$0xff]
  %v10054 = vld [vmem:[#allocation2 + $0xc0] sm:$0xff]
  %v10055 = vld [vmem:[#allocation2 + $0xc8] sm:$0xff]
  %v10056 = vld [vmem:[#allocation2 + $0xd0] sm:$0xff]
  %v10057 = vld [vmem:[#allocation2 + $0xd8] sm:$0xff]
  %v10058 = vld [vmem:[#allocation2 + $0xe0] sm:$0xff]
  %v10059 = vld [vmem:[#allocation2 + $0xe8] sm:$0xff]
  %v10060 = vld [vmem:[#allocation2 + $0xf0] sm:$0xff]
  %v10061 = vld [vmem:[#allocation2 + $0xf8] sm:$0xff]
  %v10062 = vld [vmem:[#allocation2 + $0x100] sm:$0xff]
  %v10063 = vld [vmem:[#allocation2 + $0x108] sm:$0xff]
  %v10064 = vld [vmem:[#allocation2 + $0x110] sm:$0xff]
  %v10065 = vld [vmem:[#allocation2 + $0x118] sm:$0xff]
  %v10066 = vld [vmem:[#allocation2 + $0x120] sm:$0xff]
  %v10067 = vld [vmem:[#allocation2 + $0x128] sm:$0xff]
  %v10068 = vld [vmem:[#allocation2 + $0x130] sm:$0xff]
  %v10069 = vld [vmem:[#allocation2 + $0x138] sm:$0xff]
  %v10070 = vld [vmem:[#allocation2 + $0x140] sm:$0xff]
  %v10071 = vld [vmem:[#allocation2 + $0x148] sm:$0xff]
  %v10072 = vld [vmem:[#allocation2 + $0x150] sm:$0xff]
  %v10073 = vld [vmem:[#allocation2 + $0x158] sm:$0xff]
  %v10074 = vld [vmem:[#allocation2 + $0x160] sm:$0xff]
  %v10075 = vld [vmem:[#allocation2 + $0x168] sm:$0xff]
  %v10076 = vld [vmem:[#allocation2 + $0x170] sm:$0xff]
  %v10077 = vld [vmem:[#allocation2 + $0x178] sm:$0xff]
  %v10078 = vld [vmem:[#allocation2 + $0x180] sm:$0xff]
  %v10079 = vld [vmem:[#allocation2 + $0x188] sm:$0xff]
  %v10080 = vld [vmem:[#allocation2 + $0x190] sm:$0xff]
  %v10081 = vld [vmem:[#allocation2 + $0x198] sm:$0xff]
  %v10082 = vld [vmem:[#allocation2 + $0x1a0] sm:$0xff]
  %v10083 = vld [vmem:[#allocation2 + $0x1a8] sm:$0xff]
  %v10084 = vpack.c.bf16 %v10031, %v10030
  %v10085 = vpack.c.bf16 %v10033, %v10032
  %v10086 = vpack.c.bf16 %v10035, %v10034
  %v10087 = vpack.c.bf16 %v10037, %v10036
  %v10088 = vpack.c.bf16 %v10039, %v10038
  %v10089 = vpack.c.bf16 %v10041, %v10040
  %v10090 = vpack.c.bf16 %v10043, %v10042
  %v10091 = vpack.c.bf16 %v10045, %v10044
  %v10092 = vpack.c.bf16 %v10047, %v10046
  %v10093 = vpack.c.bf16 %v10049, %v10048
  %v10094 = vpack.c.bf16 %v10051, %v10050
  %v10095 = vpack.c.bf16 %v10053, %v10052
  %v10096 = vpack.c.bf16 %v10055, %v10054
  %v10097 = vpack.c.bf16 %v10057, %v10056
  %v10098 = vpack.c.bf16 %v10059, %v10058
  %v10099 = vpack.c.bf16 %v10061, %v10060
  %v10100 = vpack.c.bf16 %v10063, %v10062
  %v10101 = vpack.c.bf16 %v10065, %v10064
  %v10102 = vpack.c.bf16 %v10067, %v10066
  %v10103 = vpack.c.bf16 %v10069, %v10068
  %v10104 = vpack.c.bf16 %v10071, %v10070
  %v10105 = vpack.c.bf16 %v10073, %v10072
  %v10106 = vpack.c.bf16 %v10075, %v10074
  %v10107 = vpack.c.bf16 %v10077, %v10076
  %v10108 = vpack.c.bf16 %v10079, %v10078
  %v10109 = vpack.c.bf16 %v10081, %v10080
  %v10110 = vpack.c.bf16 %v10083, %v10082
  %v10111 = vld [vmem:[%s3] sm:$0xff]
  %v10112 = vld [vmem:[%s3 + $0x8] sm:$0xff]
  %v10113 = vld [vmem:[%s3 + $0x10] sm:$0xff]
  %v10114 = vld [vmem:[%s3 + $0x18] sm:$0xff]
  %v10115 = vld [vmem:[%s3 + $0x20] sm:$0xff]
  %v10116 = vld [vmem:[%s3 + $0x28] sm:$0xff]
  %v10117 = vld [vmem:[%s3 + $0x30] sm:$0xff]
  %v10118 = vld [vmem:[%s3 + $0x38] sm:$0xff]
  %v10119 = vld [vmem:[%s3 + $0x40] sm:$0xff]
  %v10120 = vld [vmem:[%s3 + $0x48] sm:$0xff]
  %v10121 = vld [vmem:[%s3 + $0x50] sm:$0xff]
  %v10122 = vld [vmem:[%s3 + $0x58] sm:$0xff]
  %v10123 = vld [vmem:[%s3 + $0x60] sm:$0xff]
  %v10124 = vld [vmem:[%s3 + $0x68] sm:$0xff]
  %v10125 = vld [vmem:[%s3 + $0x70] sm:$0xff]
  %v10126 = vld [vmem:[%s3 + $0x78] sm:$0xff]
  %v10127 = vld [vmem:[%s3 + $0x80] sm:$0xff]
  %v10128 = vld [vmem:[%s3 + $0x88] sm:$0xff]
  %v10129 = vld [vmem:[%s3 + $0x90] sm:$0xff]
  %v10130 = vld [vmem:[%s3 + $0x98] sm:$0xff]
  %v10131 = vld [vmem:[%s3 + $0xa0] sm:$0xff]
  %v10132 = vld [vmem:[%s3 + $0xa8] sm:$0xff]
  %v10133 = vld [vmem:[%s3 + $0xb0] sm:$0xff]
  %v10134 = vld [vmem:[%s3 + $0xb8] sm:$0xff]
  %v10135 = vld [vmem:[%s3 + $0xc0] sm:$0xff]
  %v10136 = vld [vmem:[%s3 + $0xc8] sm:$0xff]
  %v10137 = vld [vmem:[%s3 + $0xd0] sm:$0xff]
  %v10138 = vld [vmem:[%s3 + $0xd8] sm:$0xff]
  %v10139 = vld [vmem:[%s3 + $0xe0] sm:$0xff]
  %v10140 = vld [vmem:[%s3 + $0xe8] sm:$0xff]
  %v10141 = vld [vmem:[%s3 + $0xf0] sm:$0xff]
  %v10142 = vld [vmem:[%s3 + $0xf8] sm:$0xff]
  %v10143 = vld [vmem:[%s3 + $0x100] sm:$0xff]
  %v10144 = vld [vmem:[%s3 + $0x108] sm:$0xff]
  %v10145 = vld [vmem:[%s3 + $0x110] sm:$0xff]
  %v10146 = vld [vmem:[%s3 + $0x118] sm:$0xff]
  %v10147 = vld [vmem:[%s3 + $0x120] sm:$0xff]
  %v10148 = vld [vmem:[%s3 + $0x128] sm:$0xff]
  %v10149 = vld [vmem:[%s3 + $0x130] sm:$0xff]
  %v10150 = vld [vmem:[%s3 + $0x138] sm:$0xff]
  %v10151 = vld [vmem:[%s3 + $0x140] sm:$0xff]
  %v10152 = vld [vmem:[%s3 + $0x148] sm:$0xff]
  %v10153 = vld [vmem:[%s3 + $0x150] sm:$0xff]
  %v10154 = vld [vmem:[%s3 + $0x158] sm:$0xff]
  %v10155 = vld [vmem:[%s3 + $0x160] sm:$0xff]
  %v10156 = vld [vmem:[%s3 + $0x168] sm:$0xff]
  %v10157 = vld [vmem:[%s3 + $0x170] sm:$0xff]
  %v10158 = vld [vmem:[%s3 + $0x178] sm:$0xff]
  %v10159 = vld [vmem:[%s3 + $0x180] sm:$0xff]
  %v10160 = vld [vmem:[%s3 + $0x188] sm:$0xff]
  %v10161 = vld [vmem:[%s3 + $0x190] sm:$0xff]
  %v10162 = vld [vmem:[%s3 + $0x198] sm:$0xff]
  %v10163 = vld [vmem:[%s3 + $0x1a0] sm:$0xff]
  %v10164 = vld [vmem:[%s3 + $0x1a8] sm:$0xff]
  %v10165 = vld [vmem:[%s3 + $0x1b0] sm:$0xff]
  %v10166 = vld [vmem:[%s3 + $0x1b8] sm:$0xff]
  %v10167 = vld [vmem:[%s3 + $0x1c0] sm:$0xff]
  %v10168 = vld [vmem:[%s3 + $0x1c8] sm:$0xff]
  %v10169 = vld [vmem:[%s3 + $0x1d0] sm:$0xff]
  %v10170 = vld [vmem:[%s3 + $0x1d8] sm:$0xff]
  %v10171 = vld [vmem:[%s3 + $0x1e0] sm:$0xff]
  %v10172 = vld [vmem:[%s3 + $0x1e8] sm:$0xff]
  %v10173 = vld [vmem:[%s3 + $0x1f0] sm:$0xff]
  %v10174 = vld [vmem:[%s3 + $0x1f8] sm:$0xff]
  %v10239 = vunpack.c.l.b16 %v10111
  %v10240 = vunpack.c.h.b16 %v10111
  %v10241 = vunpack.c.l.b16 %v10112
  %v10242 = vunpack.c.h.b16 %v10112
  %v10243 = vunpack.c.l.b16 %v10113
  %v10244 = vunpack.c.h.b16 %v10113
  %v10245 = vunpack.c.l.b16 %v10114
  %v10246 = vunpack.c.h.b16 %v10114
  %v10247 = vunpack.c.l.b16 %v10115
  %v10248 = vunpack.c.h.b16 %v10115
  %v10249 = vunpack.c.l.b16 %v10116
  %v10250 = vunpack.c.h.b16 %v10116
  %v10251 = vunpack.c.l.b16 %v10117
  %v10252 = vunpack.c.h.b16 %v10117
  %v10253 = vunpack.c.l.b16 %v10118
  %v10254 = vunpack.c.h.b16 %v10118
  %v10255 = vunpack.c.l.b16 %v10119
  %v10256 = vunpack.c.h.b16 %v10119
  %v10257 = vunpack.c.l.b16 %v10120
  %v10258 = vunpack.c.h.b16 %v10120
  %v10259 = vunpack.c.l.b16 %v10121
  %v10260 = vunpack.c.h.b16 %v10121
  %v10261 = vunpack.c.l.b16 %v10122
  %v10262 = vunpack.c.h.b16 %v10122
  %v10263 = vunpack.c.l.b16 %v10123
  %v10264 = vunpack.c.h.b16 %v10123
  %v10265 = vunpack.c.l.b16 %v10124
  %v10266 = vunpack.c.h.b16 %v10124
  %v10267 = vunpack.c.l.b16 %v10125
  %v10268 = vunpack.c.h.b16 %v10125
  %v10269 = vunpack.c.l.b16 %v10126
  %v10270 = vunpack.c.h.b16 %v10126
  %v10271 = vunpack.c.l.b16 %v10127
  %v10272 = vunpack.c.h.b16 %v10127
  %v10273 = vunpack.c.l.b16 %v10128
  %v10274 = vunpack.c.h.b16 %v10128
  %v10275 = vunpack.c.l.b16 %v10129
  %v10276 = vunpack.c.h.b16 %v10129
  %v10277 = vunpack.c.l.b16 %v10130
  %v10278 = vunpack.c.h.b16 %v10130
  %v10279 = vunpack.c.l.b16 %v10131
  %v10280 = vunpack.c.h.b16 %v10131
  %v10281 = vunpack.c.l.b16 %v10132
  %v10282 = vunpack.c.h.b16 %v10132
  %v10283 = vunpack.c.l.b16 %v10133
  %v10284 = vunpack.c.h.b16 %v10133
  %v10285 = vunpack.c.l.b16 %v10134
  %v10286 = vunpack.c.h.b16 %v10134
  %v10287 = vunpack.c.l.b16 %v10135
  %v10288 = vunpack.c.h.b16 %v10135
  %v10289 = vunpack.c.l.b16 %v10136
  %v10290 = vunpack.c.h.b16 %v10136
  %v10291 = vunpack.c.l.b16 %v10137
  %v10292 = vunpack.c.h.b16 %v10137
  %v10293 = vunpack.c.l.b16 %v10138
  %v10294 = vunpack.c.h.b16 %v10138
  %v10295 = vunpack.c.l.b16 %v10139
  %v10296 = vunpack.c.h.b16 %v10139
  %v10297 = vunpack.c.l.b16 %v10140
  %v10298 = vunpack.c.h.b16 %v10140
  %v10299 = vunpack.c.l.b16 %v10141
  %v10300 = vunpack.c.h.b16 %v10141
  %v10301 = vunpack.c.l.b16 %v10142
  %v10302 = vunpack.c.h.b16 %v10142
  %v10303 = vunpack.c.l.b16 %v10143
  %v10304 = vunpack.c.h.b16 %v10143
  %v10305 = vunpack.c.l.b16 %v10144
  %v10306 = vunpack.c.h.b16 %v10144
  %v10307 = vunpack.c.l.b16 %v10145
  %v10308 = vunpack.c.h.b16 %v10145
  %v10309 = vunpack.c.l.b16 %v10146
  %v10310 = vunpack.c.h.b16 %v10146
  %v10311 = vunpack.c.l.b16 %v10147
  %v10312 = vunpack.c.h.b16 %v10147
  %v10313 = vunpack.c.l.b16 %v10148
  %v10314 = vunpack.c.h.b16 %v10148
  %v10315 = vunpack.c.l.b16 %v10149
  %v10316 = vunpack.c.h.b16 %v10149
  %v10317 = vunpack.c.l.b16 %v10150
  %v10318 = vunpack.c.h.b16 %v10150
  %v10319 = vunpack.c.l.b16 %v10151
  %v10320 = vunpack.c.h.b16 %v10151
  %v10321 = vunpack.c.l.b16 %v10152
  %v10322 = vunpack.c.h.b16 %v10152
  %v10323 = vunpack.c.l.b16 %v10153
  %v10324 = vunpack.c.h.b16 %v10153
  %v10325 = vunpack.c.l.b16 %v10154
  %v10326 = vunpack.c.h.b16 %v10154
  %v10327 = vunpack.c.l.b16 %v10155
  %v10328 = vunpack.c.h.b16 %v10155
  %v10329 = vunpack.c.l.b16 %v10156
  %v10330 = vunpack.c.h.b16 %v10156
  %v10331 = vunpack.c.l.b16 %v10157
  %v10332 = vunpack.c.h.b16 %v10157
  %v10333 = vunpack.c.l.b16 %v10158
  %v10334 = vunpack.c.h.b16 %v10158
  %v10335 = vunpack.c.l.b16 %v10159
  %v10336 = vunpack.c.h.b16 %v10159
  %v10337 = vunpack.c.l.b16 %v10160
  %v10338 = vunpack.c.h.b16 %v10160
  %v10339 = vunpack.c.l.b16 %v10161
  %v10340 = vunpack.c.h.b16 %v10161
  %v10341 = vunpack.c.l.b16 %v10162
  %v10342 = vunpack.c.h.b16 %v10162
  %v10343 = vunpack.c.l.b16 %v10163
  %v10344 = vunpack.c.h.b16 %v10163
  %v10345 = vunpack.c.l.b16 %v10164
  %v10346 = vunpack.c.h.b16 %v10164
  %v10347 = vunpack.c.l.b16 %v10165
  %v10348 = vunpack.c.h.b16 %v10165
  %v10349 = vunpack.c.l.b16 %v10166
  %v10350 = vunpack.c.h.b16 %v10166
  %v10351 = vunpack.c.l.b16 %v10167
  %v10352 = vunpack.c.h.b16 %v10167
  %v10353 = vunpack.c.l.b16 %v10168
  %v10354 = vunpack.c.h.b16 %v10168
  %v10355 = vunpack.c.l.b16 %v10169
  %v10356 = vunpack.c.h.b16 %v10169
  %v10357 = vunpack.c.l.b16 %v10170
  %v10358 = vunpack.c.h.b16 %v10170
  %v10359 = vunpack.c.l.b16 %v10171
  %v10360 = vunpack.c.h.b16 %v10171
  %v10361 = vunpack.c.l.b16 %v10172
  %v10362 = vunpack.c.h.b16 %v10172
  %v10363 = vunpack.c.l.b16 %v10173
  %v10364 = vunpack.c.h.b16 %v10173
  %v10365 = vunpack.c.l.b16 %v10174
  %v10366 = vunpack.c.h.b16 %v10174
  %v10367 = vpack.c.b16 %v10243, %v10239
  %v10368 = vpack.c.b16 %v10244, %v10240
  %v10369 = vpack.c.b16 %v10245, %v10241
  %v10370 = vpack.c.b16 %v10246, %v10242
  %v10371 = vpack.c.b16 %v10251, %v10247
  %v10372 = vpack.c.b16 %v10252, %v10248
  %v10373 = vpack.c.b16 %v10253, %v10249
  %v10374 = vpack.c.b16 %v10254, %v10250
  %v10375 = vpack.c.b16 %v10259, %v10255
  %v10376 = vpack.c.b16 %v10260, %v10256
  %v10377 = vpack.c.b16 %v10261, %v10257
  %v10378 = vpack.c.b16 %v10262, %v10258
  %v10379 = vpack.c.b16 %v10267, %v10263
  %v10380 = vpack.c.b16 %v10268, %v10264
  %v10381 = vpack.c.b16 %v10269, %v10265
  %v10382 = vpack.c.b16 %v10270, %v10266
  %v10383 = vpack.c.b16 %v10275, %v10271
  %v10384 = vpack.c.b16 %v10276, %v10272
  %v10385 = vpack.c.b16 %v10277, %v10273
  %v10386 = vpack.c.b16 %v10278, %v10274
  %v10387 = vpack.c.b16 %v10283, %v10279
  %v10388 = vpack.c.b16 %v10284, %v10280
  %v10389 = vpack.c.b16 %v10285, %v10281
  %v10390 = vpack.c.b16 %v10286, %v10282
  %v10391 = vpack.c.b16 %v10291, %v10287
  %v10392 = vpack.c.b16 %v10292, %v10288
  %v10393 = vpack.c.b16 %v10293, %v10289
  %v10394 = vpack.c.b16 %v10294, %v10290
  %v10395 = vpack.c.b16 %v10299, %v10295
  %v10396 = vpack.c.b16 %v10300, %v10296
  %v10397 = vpack.c.b16 %v10301, %v10297
  %v10398 = vpack.c.b16 %v10302, %v10298
  %v10399 = vpack.c.b16 %v10307, %v10303
  %v10400 = vpack.c.b16 %v10308, %v10304
  %v10401 = vpack.c.b16 %v10309, %v10305
  %v10402 = vpack.c.b16 %v10310, %v10306
  %v10403 = vpack.c.b16 %v10315, %v10311
  %v10404 = vpack.c.b16 %v10316, %v10312
  %v10405 = vpack.c.b16 %v10317, %v10313
  %v10406 = vpack.c.b16 %v10318, %v10314
  %v10407 = vpack.c.b16 %v10323, %v10319
  %v10408 = vpack.c.b16 %v10324, %v10320
  %v10409 = vpack.c.b16 %v10325, %v10321
  %v10410 = vpack.c.b16 %v10326, %v10322
  %v10411 = vpack.c.b16 %v10331, %v10327
  %v10412 = vpack.c.b16 %v10332, %v10328
  %v10413 = vpack.c.b16 %v10333, %v10329
  %v10414 = vpack.c.b16 %v10334, %v10330
  %v10415 = vpack.c.b16 %v10339, %v10335
  %v10416 = vpack.c.b16 %v10340, %v10336
  %v10417 = vpack.c.b16 %v10341, %v10337
  %v10418 = vpack.c.b16 %v10342, %v10338
  %v10419 = vpack.c.b16 %v10347, %v10343
  %v10420 = vpack.c.b16 %v10348, %v10344
  %v10421 = vpack.c.b16 %v10349, %v10345
  %v10422 = vpack.c.b16 %v10350, %v10346
  %v10423 = vpack.c.b16 %v10355, %v10351
  %v10424 = vpack.c.b16 %v10356, %v10352
  %v10425 = vpack.c.b16 %v10357, %v10353
  %v10426 = vpack.c.b16 %v10358, %v10354
  %v10427 = vpack.c.b16 %v10363, %v10359
  %v10428 = vpack.c.b16 %v10364, %v10360
  %v10429 = vpack.c.b16 %v10365, %v10361
  %v10430 = vpack.c.b16 %v10366, %v10362
  %vm10479 = vcmask 392192
  %v10481 = vsel %vm10479, %v10370, 0
  %v10484 = vsel %vm10479, %v10374, 0
  %v10487 = vsel %vm10479, %v10378, 0
  %v10490 = vsel %vm10479, %v10382, 0
  %v10493 = vsel %vm10479, %v10386, 0
  %v10496 = vsel %vm10479, %v10390, 0
  %v10499 = vsel %vm10479, %v10394, 0
  %v10502 = vsel %vm10479, %v10398, 0
  %v10505 = vsel %vm10479, %v10402, 0
  %v10508 = vsel %vm10479, %v10406, 0
  %v10511 = vsel %vm10479, %v10410, 0
  %v10514 = vsel %vm10479, %v10414, 0
  %v10517 = vsel %vm10479, %v10418, 0
  %v10520 = vsel %vm10479, %v10422, 0
  %v10523 = vsel %vm10479, %v10426, 0
  %v10526 = vsel %vm10479, %v10430, 0
  %10528 = vmatprep.subr.bf16.mxu0 0
  %10529 = vmatpush1.bf16.msra.mxu0 %v10084
  %10530 = vmatprep.subr.bf16.mxu0 0
  %10531 = vmatpush1.bf16.msra.mxu0 %v10085
  %10532 = vmatprep.subr.bf16.mxu0 0
  %10533 = vmatpush1.bf16.msra.mxu0 %v10086
  %10534 = vmatprep.subr.bf16.mxu0 0
  %10535 = vmatpush1.bf16.msra.mxu0 %v10087
  %10536 = vmatprep.subr.bf16.mxu0 0
  %10537 = vmatpush1.bf16.msra.mxu0 %v10088
  %10538 = vmatprep.subr.bf16.mxu0 0
  %10539 = vmatpush1.bf16.msra.mxu0 %v10089
  %10540 = vmatprep.subr.bf16.mxu0 0
  %10541 = vmatpush1.bf16.msra.mxu0 %v10090
  %10542 = vmatprep.subr.bf16.mxu0 0
  %10543 = vmatpush1.bf16.msra.mxu0 %v10091
  %10544 = vmatprep.subr.bf16.mxu0 0
  %10545 = vmatpush1.bf16.msra.mxu0 %v10092
  %10546 = vmatprep.subr.bf16.mxu0 0
  %10547 = vmatpush1.bf16.msra.mxu0 %v10093
  %10548 = vmatprep.subr.bf16.mxu0 0
  %10549 = vmatpush1.bf16.msra.mxu0 %v10094
  %10550 = vmatprep.subr.bf16.mxu0 0
  %10551 = vmatpush1.bf16.msra.mxu0 %v10095
  %10552 = vmatprep.subr.bf16.mxu0 0
  %10553 = vmatpush1.bf16.msra.mxu0 %v10096
  %10554 = vmatprep.subr.bf16.mxu0 0
  %10555 = vmatpush1.bf16.msra.mxu0 %v10097
  %10556 = vmatprep.subr.bf16.mxu0 0
  %10557 = vmatpush1.bf16.msra.mxu0 %v10098
  %10558 = vmatprep.subr.bf16.mxu0 0
  %10559 = vmatpush1.bf16.msra.mxu0 %v10099
  %10560 = vmatprep.mubr.bf16.mxu0 %v10368
  %10561 = vmatmul.mubr.bf16.gmra.mrb[0].mxu0 %v10367
  %v10562 = vpop.f32.mrb[0].mxu0
  %v10563 = vadd.f32 0.0, %v10562
  %v10564 = vpop.f32.mrb[0].mxu0
  %v10565 = vpop.f32.mrb[0].mxu0
  %v10566 = vadd.f32 0.0, %v10565
  %v10567 = vpop.f32.mrb[0].mxu0
  %10568 = vmatprep.mubr.bf16.mxu0 %v10372
  %10569 = vmatmul.mubr.bf16.gmra.mrb[0].mxu0 %v10371
  %v10570 = vpop.f32.mrb[0].mxu0
  %v10571 = vadd.f32 0.0, %v10570
  %v10572 = vpop.f32.mrb[0].mxu0
  %v10573 = vpop.f32.mrb[0].mxu0
  %v10574 = vadd.f32 0.0, %v10573
  %v10575 = vpop.f32.mrb[0].mxu0
  %10576 = vmatprep.mubr.bf16.mxu0 %v10376
  %10577 = vmatmul.mubr.bf16.gmra.mrb[0].mxu0 %v10375
  %v10578 = vpop.f32.mrb[0].mxu0
  %v10579 = vadd.f32 0.0, %v10578
  %v10580 = vpop.f32.mrb[0].mxu0
  %v10581 = vpop.f32.mrb[0].mxu0
  %v10582 = vadd.f32 0.0, %v10581
  %v10583 = vpop.f32.mrb[0].mxu0
  %10584 = vmatprep.mubr.bf16.mxu0 %v10380
  %10585 = vmatmul.mubr.bf16.gmra.mrb[0].mxu0 %v10379
  %v10586 = vpop.f32.mrb[0].mxu0
  %v10587 = vadd.f32 0.0, %v10586
  %v10588 = vpop.f32.mrb[0].mxu0
  %v10589 = vpop.f32.mrb[0].mxu0
  %v10590 = vadd.f32 0.0, %v10589
  %v10591 = vpop.f32.mrb[0].mxu0
  %10592 = vmatprep.mubr.bf16.mxu0 %v10384
  %10593 = vmatmul.mubr.bf16.gmra.mrb[0].mxu0 %v10383
  %v10594 = vpop.f32.mrb[0].mxu0
  %v10595 = vadd.f32 0.0, %v10594
  %v10596 = vpop.f32.mrb[0].mxu0
  %v10597 = vpop.f32.mrb[0].mxu0
  %v10598 = vadd.f32 0.0, %v10597
  %v10599 = vpop.f32.mrb[0].mxu0
  %10600 = vmatprep.mubr.bf16.mxu0 %v10388
  %10601 = vmatmul.mubr.bf16.gmra.mrb[0].mxu0 %v10387
  %v10602 = vpop.f32.mrb[0].mxu0
  %v10603 = vadd.f32 0.0, %v10602
  %v10604 = vpop.f32.mrb[0].mxu0
  %v10605 = vpop.f32.mrb[0].mxu0
  %v10606 = vadd.f32 0.0, %v10605
  %v10607 = vpop.f32.mrb[0].mxu0
  %10608 = vmatprep.mubr.bf16.mxu0 %v10392
  %10609 = vmatmul.mubr.bf16.gmra.mrb[0].mxu0 %v10391
  %v10610 = vpop.f32.mrb[0].mxu0
  %v10611 = vadd.f32 0.0, %v10610
  %v10612 = vpop.f32.mrb[0].mxu0
  %v10613 = vpop.f32.mrb[0].mxu0
  %v10614 = vadd.f32 0.0, %v10613
  %v10615 = vpop.f32.mrb[0].mxu0
  %10616 = vmatprep.mubr.bf16.mxu0 %v10396
  %10617 = vmatmul.mubr.bf16.gmra.mrb[0].mxu0 %v10395
  %v10618 = vpop.f32.mrb[0].mxu0
  %v10619 = vadd.f32 0.0, %v10618
  %v10620 = vpop.f32.mrb[0].mxu0
  %v10621 = vpop.f32.mrb[0].mxu0
  %v10622 = vadd.f32 0.0, %v10621
  %v10623 = vpop.f32.mrb[0].mxu0
  %10624 = vmatprep.mubr.bf16.mxu0 %v10400
  %10625 = vmatmul.mubr.bf16.gmra.mrb[0].mxu0 %v10399
  %v10626 = vpop.f32.mrb[0].mxu0
  %v10627 = vadd.f32 0.0, %v10626
  %v10628 = vpop.f32.mrb[0].mxu0
  %v10629 = vpop.f32.mrb[0].mxu0
  %v10630 = vadd.f32 0.0, %v10629
  %v10631 = vpop.f32.mrb[0].mxu0
  %10632 = vmatprep.mubr.bf16.mxu0 %v10404
  %10633 = vmatmul.mubr.bf16.gmra.mrb[0].mxu0 %v10403
  %v10634 = vpop.f32.mrb[0].mxu0
  %v10635 = vadd.f32 0.0, %v10634
  %v10636 = vpop.f32.mrb[0].mxu0
  %v10637 = vpop.f32.mrb[0].mxu0
  %v10638 = vadd.f32 0.0, %v10637
  %v10639 = vpop.f32.mrb[0].mxu0
  %10640 = vmatprep.mubr.bf16.mxu0 %v10408
  %10641 = vmatmul.mubr.bf16.gmra.mrb[0].mxu0 %v10407
  %v10642 = vpop.f32.mrb[0].mxu0
  %v10643 = vadd.f32 0.0, %v10642
  %v10644 = vpop.f32.mrb[0].mxu0
  %v10645 = vpop.f32.mrb[0].mxu0
  %v10646 = vadd.f32 0.0, %v10645
  %v10647 = vpop.f32.mrb[0].mxu0
  %10648 = vmatprep.mubr.bf16.mxu0 %v10412
  %10649 = vmatmul.mubr.bf16.gmra.mrb[0].mxu0 %v10411
  %v10650 = vpop.f32.mrb[0].mxu0
  %v10651 = vadd.f32 0.0, %v10650
  %v10652 = vpop.f32.mrb[0].mxu0
  %v10653 = vpop.f32.mrb[0].mxu0
  %v10654 = vadd.f32 0.0, %v10653
  %v10655 = vpop.f32.mrb[0].mxu0
  %10656 = vmatprep.mubr.bf16.mxu0 %v10416
  %10657 = vmatmul.mubr.bf16.gmra.mrb[0].mxu0 %v10415
  %v10658 = vpop.f32.mrb[0].mxu0
  %v10659 = vadd.f32 0.0, %v10658
  %v10660 = vpop.f32.mrb[0].mxu0
  %v10661 = vpop.f32.mrb[0].mxu0
  %v10662 = vadd.f32 0.0, %v10661
  %v10663 = vpop.f32.mrb[0].mxu0
  %10664 = vmatprep.mubr.bf16.mxu0 %v10420
  %10665 = vmatmul.mubr.bf16.gmra.mrb[0].mxu0 %v10419
  %v10666 = vpop.f32.mrb[0].mxu0
  %v10667 = vadd.f32 0.0, %v10666
  %v10668 = vpop.f32.mrb[0].mxu0
  %v10669 = vpop.f32.mrb[0].mxu0
  %v10670 = vadd.f32 0.0, %v10669
  %v10671 = vpop.f32.mrb[0].mxu0
  %10672 = vmatprep.mubr.bf16.mxu0 %v10424
  %10673 = vmatmul.mubr.bf16.gmra.mrb[0].mxu0 %v10423
  %v10674 = vpop.f32.mrb[0].mxu0
  %v10675 = vadd.f32 0.0, %v10674
  %v10676 = vpop.f32.mrb[0].mxu0
  %v10677 = vpop.f32.mrb[0].mxu0
  %v10678 = vadd.f32 0.0, %v10677
  %v10679 = vpop.f32.mrb[0].mxu0
  %10680 = vmatprep.mubr.bf16.mxu0 %v10428
  %10681 = vmatmul.mubr.bf16.gmra.mrb[0].mxu0 %v10427
  %v10682 = vpop.f32.mrb[0].mxu0
  %v10683 = vadd.f32 0.0, %v10682
  %v10684 = vpop.f32.mrb[0].mxu0
  %v10685 = vpop.f32.mrb[0].mxu0
  %v10686 = vadd.f32 0.0, %v10685
  %v10687 = vpop.f32.mrb[0].mxu0
  %10688 = vdwg.mxu0
  %10689 = vmatprep.subr.bf16.mxu0 0
  %10690 = vmatpush1.bf16.msra.mxu0 %v10100
  %10691 = vmatprep.subr.bf16.mxu0 0
  %10692 = vmatpush1.bf16.msra.mxu0 %v10101
  %10693 = vmatprep.subr.bf16.mxu0 0
  %10694 = vmatpush1.bf16.msra.mxu0 %v10102
  %10695 = vmatprep.subr.bf16.mxu0 0
  %10696 = vmatpush1.bf16.msra.mxu0 %v10103
  %10697 = vmatprep.subr.bf16.mxu0 0
  %10698 = vmatpush1.bf16.msra.mxu0 %v10104
  %10699 = vmatprep.subr.bf16.mxu0 0
  %10700 = vmatpush1.bf16.msra.mxu0 %v10105
  %10701 = vmatprep.subr.bf16.mxu0 0
  %10702 = vmatpush1.bf16.msra.mxu0 %v10106
  %10703 = vmatprep.subr.bf16.mxu0 0
  %10704 = vmatpush1.bf16.msra.mxu0 %v10107
  %10705 = vmatprep.subr.bf16.mxu0 0
  %10706 = vmatpush1.bf16.msra.mxu0 %v10108
  %10707 = vmatprep.subr.bf16.mxu0 0
  %10708 = vmatpush1.bf16.msra.mxu0 %v10109
  %10709 = vmatprep.subr.bf16.mxu0 0
  %10710 = vmatpush1.bf16.msra.mxu0 %v10110
  %10711 = vmatprep.subr.bf16.mxu0 0
  %10712 = vmatpush1.bf16.msra.mxu0 0
  %10713 = vmatprep.subr.bf16.mxu0 0
  %10714 = vmatpush1.bf16.msra.mxu0 0
  %10715 = vmatprep.subr.bf16.mxu0 0
  %10716 = vmatpush1.bf16.msra.mxu0 0
  %10717 = vmatprep.subr.bf16.mxu0 0
  %10718 = vmatpush1.bf16.msra.mxu0 0
  %10719 = vmatprep.subr.bf16.mxu0 0
  %10720 = vmatpush1.bf16.msra.mxu0 0
  %10721 = vmatprep.mubr.bf16.mxu0 %v10481
  %10722 = vmatmul.mubr.bf16.gmra.mrb[0].mxu0 %v10369
  %v10723 = vpop.f32.mrb[0].mxu0
  %v10724 = vadd.f32 %v10563, %v10723
  %v10725 = vpop.f32.mrb[0].mxu0
  %v10726 = vpop.f32.mrb[0].mxu0
  %v10727 = vadd.f32 %v10566, %v10726
  %v10728 = vpop.f32.mrb[0].mxu0
  %10729 = vmatprep.mubr.bf16.mxu0 %v10484
  %10730 = vmatmul.mubr.bf16.gmra.mrb[0].mxu0 %v10373
  %v10731 = vpop.f32.mrb[0].mxu0
  %v10732 = vadd.f32 %v10571, %v10731
  %v10733 = vpop.f32.mrb[0].mxu0
  %v10734 = vpop.f32.mrb[0].mxu0
  %v10735 = vadd.f32 %v10574, %v10734
  %v10736 = vpop.f32.mrb[0].mxu0
  %10737 = vmatprep.mubr.bf16.mxu0 %v10487
  %10738 = vmatmul.mubr.bf16.gmra.mrb[0].mxu0 %v10377
  %v10739 = vpop.f32.mrb[0].mxu0
  %v10740 = vadd.f32 %v10579, %v10739
  %v10741 = vpop.f32.mrb[0].mxu0
  %v10742 = vpop.f32.mrb[0].mxu0
  %v10743 = vadd.f32 %v10582, %v10742
  %v10744 = vpop.f32.mrb[0].mxu0
  %10745 = vmatprep.mubr.bf16.mxu0 %v10490
  %10746 = vmatmul.mubr.bf16.gmra.mrb[0].mxu0 %v10381
  %v10747 = vpop.f32.mrb[0].mxu0
  %v10748 = vadd.f32 %v10587, %v10747
  %v10749 = vpop.f32.mrb[0].mxu0
  %v10750 = vpop.f32.mrb[0].mxu0
  %v10751 = vadd.f32 %v10590, %v10750
  %v10752 = vpop.f32.mrb[0].mxu0
  %10753 = vmatprep.mubr.bf16.mxu0 %v10493
  %10754 = vmatmul.mubr.bf16.gmra.mrb[0].mxu0 %v10385
  %v10755 = vpop.f32.mrb[0].mxu0
  %v10756 = vadd.f32 %v10595, %v10755
  %v10757 = vpop.f32.mrb[0].mxu0
  %v10758 = vpop.f32.mrb[0].mxu0
  %v10759 = vadd.f32 %v10598, %v10758
  %v10760 = vpop.f32.mrb[0].mxu0
  %10761 = vmatprep.mubr.bf16.mxu0 %v10496
  %10762 = vmatmul.mubr.bf16.gmra.mrb[0].mxu0 %v10389
  %v10763 = vpop.f32.mrb[0].mxu0
  %v10764 = vadd.f32 %v10603, %v10763
  %v10765 = vpop.f32.mrb[0].mxu0
  %v10766 = vpop.f32.mrb[0].mxu0
  %v10767 = vadd.f32 %v10606, %v10766
  %v10768 = vpop.f32.mrb[0].mxu0
  %10769 = vmatprep.mubr.bf16.mxu0 %v10499
  %10770 = vmatmul.mubr.bf16.gmra.mrb[0].mxu0 %v10393
  %v10771 = vpop.f32.mrb[0].mxu0
  %v10772 = vadd.f32 %v10611, %v10771
  %v10773 = vpop.f32.mrb[0].mxu0
  %v10774 = vpop.f32.mrb[0].mxu0
  %v10775 = vadd.f32 %v10614, %v10774
  %v10776 = vpop.f32.mrb[0].mxu0
  %10777 = vmatprep.mubr.bf16.mxu0 %v10502
  %10778 = vmatmul.mubr.bf16.gmra.mrb[0].mxu0 %v10397
  %v10779 = vpop.f32.mrb[0].mxu0
  %v10780 = vadd.f32 %v10619, %v10779
  %v10781 = vpop.f32.mrb[0].mxu0
  %v10782 = vpop.f32.mrb[0].mxu0
  %v10783 = vadd.f32 %v10622, %v10782
  %v10784 = vpop.f32.mrb[0].mxu0
  %10785 = vmatprep.mubr.bf16.mxu0 %v10505
  %10786 = vmatmul.mubr.bf16.gmra.mrb[0].mxu0 %v10401
  %v10787 = vpop.f32.mrb[0].mxu0
  %v10788 = vadd.f32 %v10627, %v10787
  %v10789 = vpop.f32.mrb[0].mxu0
  %v10790 = vpop.f32.mrb[0].mxu0
  %v10791 = vadd.f32 %v10630, %v10790
  %v10792 = vpop.f32.mrb[0].mxu0
  %10793 = vmatprep.mubr.bf16.mxu0 %v10508
  %10794 = vmatmul.mubr.bf16.gmra.mrb[0].mxu0 %v10405
  %v10795 = vpop.f32.mrb[0].mxu0
  %v10796 = vadd.f32 %v10635, %v10795
  %v10797 = vpop.f32.mrb[0].mxu0
  %v10798 = vpop.f32.mrb[0].mxu0
  %v10799 = vadd.f32 %v10638, %v10798
  %v10800 = vpop.f32.mrb[0].mxu0
  %10801 = vmatprep.mubr.bf16.mxu0 %v10511
  %10802 = vmatmul.mubr.bf16.gmra.mrb[0].mxu0 %v10409
  %v10803 = vpop.f32.mrb[0].mxu0
  %v10804 = vadd.f32 %v10643, %v10803
  %v10805 = vpop.f32.mrb[0].mxu0
  %v10806 = vpop.f32.mrb[0].mxu0
  %v10807 = vadd.f32 %v10646, %v10806
  %v10808 = vpop.f32.mrb[0].mxu0
  %10809 = vmatprep.mubr.bf16.mxu0 %v10514
  %10810 = vmatmul.mubr.bf16.gmra.mrb[0].mxu0 %v10413
  %v10811 = vpop.f32.mrb[0].mxu0
  %v10812 = vadd.f32 %v10651, %v10811
  %v10813 = vpop.f32.mrb[0].mxu0
  %v10814 = vpop.f32.mrb[0].mxu0
  %v10815 = vadd.f32 %v10654, %v10814
  %v10816 = vpop.f32.mrb[0].mxu0
  %10817 = vmatprep.mubr.bf16.mxu0 %v10517
  %10818 = vmatmul.mubr.bf16.gmra.mrb[0].mxu0 %v10417
  %v10819 = vpop.f32.mrb[0].mxu0
  %v10820 = vadd.f32 %v10659, %v10819
  %v10821 = vpop.f32.mrb[0].mxu0
  %v10822 = vpop.f32.mrb[0].mxu0
  %v10823 = vadd.f32 %v10662, %v10822
  %v10824 = vpop.f32.mrb[0].mxu0
  %10825 = vmatprep.mubr.bf16.mxu0 %v10520
  %10826 = vmatmul.mubr.bf16.gmra.mrb[0].mxu0 %v10421
  %v10827 = vpop.f32.mrb[0].mxu0
  %v10828 = vadd.f32 %v10667, %v10827
  %v10829 = vpop.f32.mrb[0].mxu0
  %v10830 = vpop.f32.mrb[0].mxu0
  %v10831 = vadd.f32 %v10670, %v10830
  %v10832 = vpop.f32.mrb[0].mxu0
  %10833 = vmatprep.mubr.bf16.mxu0 %v10523
  %10834 = vmatmul.mubr.bf16.gmra.mrb[0].mxu0 %v10425
  %v10835 = vpop.f32.mrb[0].mxu0
  %v10836 = vadd.f32 %v10675, %v10835
  %v10837 = vpop.f32.mrb[0].mxu0
  %v10838 = vpop.f32.mrb[0].mxu0
  %v10839 = vadd.f32 %v10678, %v10838
  %v10840 = vpop.f32.mrb[0].mxu0
  %10841 = vmatprep.mubr.bf16.mxu0 %v10526
  %10842 = vmatmul.mubr.bf16.gmra.mrb[0].mxu0 %v10429
  %v10843 = vpop.f32.mrb[0].mxu0
  %v10844 = vadd.f32 %v10683, %v10843
  %v10845 = vpop.f32.mrb[0].mxu0
  %v10846 = vpop.f32.mrb[0].mxu0
  %v10847 = vadd.f32 %v10686, %v10846
  %v10848 = vpop.f32.mrb[0].mxu0
  %10849 = vdwg.mxu0
  %v10850 = vmax.f32 %v10724, %v10756
  %v10851 = vmax.f32 %v10727, %v10759
  %v10852 = vmax.f32 %v10732, %v10764
  %v10853 = vmax.f32 %v10735, %v10767
  %v10854 = vmax.f32 %v10740, %v10772
  %v10855 = vmax.f32 %v10743, %v10775
  %v10856 = vmax.f32 %v10748, %v10780
  %v10857 = vmax.f32 %v10751, %v10783
  %v10858 = vmax.f32 %v10788, %v10820
  %v10859 = vmax.f32 %v10791, %v10823
  %v10860 = vmax.f32 %v10796, %v10828
  %v10861 = vmax.f32 %v10799, %v10831
  %v10862 = vmax.f32 %v10804, %v10836
  %v10863 = vmax.f32 %v10807, %v10839
  %v10864 = vmax.f32 %v10812, %v10844
  %v10865 = vmax.f32 %v10815, %v10847
  %v10866 = vmax.f32 %v10850, %v10858
  %v10867 = vmax.f32 %v10851, %v10859
  %v10868 = vmax.f32 %v10852, %v10860
  %v10869 = vmax.f32 %v10853, %v10861
  %v10870 = vmax.f32 %v10854, %v10862
  %v10871 = vmax.f32 %v10855, %v10863
  %v10872 = vmax.f32 %v10856, %v10864
  %v10873 = vmax.f32 %v10857, %v10865
  %v10874 = vld [vmem:[%s4] sm:$0xff]
  %v10875 = vld [vmem:[%s4 + $0x8] sm:$0xff]
  %v10876 = vld [vmem:[%s4 + $0x10] sm:$0xff]
  %v10877 = vld [vmem:[%s4 + $0x18] sm:$0xff]
  %v10878 = vld [vmem:[%s4 + $0x20] sm:$0xff]
  %v10879 = vld [vmem:[%s4 + $0x28] sm:$0xff]
  %v10880 = vld [vmem:[%s4 + $0x30] sm:$0xff]
  %v10881 = vld [vmem:[%s4 + $0x38] sm:$0xff]
  %10883 = vset.pattern.permute.xlu0 0
  %10884 = vperm.xlu0 %10883, %v10874
  %v10885 = vpop.permute.xlu0 %10884
  %10888 = vset.pattern.permute.xlu0 0
  %10889 = vperm.xlu0 %10888, %v10875
  %v10890 = vpop.permute.xlu0 %10889
  %10893 = vset.pattern.permute.xlu0 0
  %10894 = vperm.xlu0 %10893, %v10876
  %v10895 = vpop.permute.xlu0 %10894
  %10898 = vset.pattern.permute.xlu0 0
  %10899 = vperm.xlu0 %10898, %v10877
  %v10900 = vpop.permute.xlu0 %10899
  %10903 = vset.pattern.permute.xlu0 0
  %10904 = vperm.xlu0 %10903, %v10878
  %v10905 = vpop.permute.xlu0 %10904
  %10908 = vset.pattern.permute.xlu0 0
  %10909 = vperm.xlu0 %10908, %v10879
  %v10910 = vpop.permute.xlu0 %10909
  %10913 = vset.pattern.permute.xlu0 0
  %10914 = vperm.xlu0 %10913, %v10880
  %v10915 = vpop.permute.xlu0 %10914
  %10918 = vset.pattern.permute.xlu0 0
  %10919 = vperm.xlu0 %10918, %v10881
  %v10920 = vpop.permute.xlu0 %10919
  %v10922 = vadd.f32 %v10866, %v10885
  %v10923 = vadd.f32 %v10867, %v10890
  %v10924 = vadd.f32 %v10868, %v10895
  %v10925 = vadd.f32 %v10869, %v10900
  %v10926 = vadd.f32 %v10870, %v10905
  %v10927 = vadd.f32 %v10871, %v10910
  %v10928 = vadd.f32 %v10872, %v10915
  %v10929 = vadd.f32 %v10873, %v10920
  %v10930 = vmax.f32 %v10922, 0.0
  %v10931 = vmax.f32 %v10923, 0.0
  %v10932 = vmax.f32 %v10924, 0.0
  %v10933 = vmax.f32 %v10925, 0.0
  %v10934 = vmax.f32 %v10926, 0.0
  %v10935 = vmax.f32 %v10927, 0.0
  %v10936 = vmax.f32 %v10928, 0.0
  %v10937 = vmax.f32 %v10929, 0.0
  %10938 = vst [vmem:[#allocation3] sm:$0xff] %v10930
  %10939 = vst [vmem:[#allocation3 + $0x8] sm:$0xff] %v10931
  %10940 = vst [vmem:[#allocation3 + $0x10] sm:$0xff] %v10932
  %10941 = vst [vmem:[#allocation3 + $0x18] sm:$0xff] %v10933
  %10942 = vst [vmem:[#allocation3 + $0x20] sm:$0xff] %v10934
  %10943 = vst [vmem:[#allocation3 + $0x28] sm:$0xff] %v10935
  %10944 = vst [vmem:[#allocation3 + $0x30] sm:$0xff] %v10936
  %10945 = vst [vmem:[#allocation3 + $0x38] sm:$0xff] %v10937
  %v10946 = vld [vmem:[#allocation2 + $0x90] sm:$0xff]
  %v10947 = vld [vmem:[#allocation2 + $0x98] sm:$0xff]
  %v10948 = vld [vmem:[#allocation2 + $0xa0] sm:$0xff]
  %v10949 = vld [vmem:[#allocation2 + $0xa8] sm:$0xff]
  %v10950 = vld [vmem:[#allocation2 + $0xb0] sm:$0xff]
  %v10951 = vld [vmem:[#allocation2 + $0xb8] sm:$0xff]
  %v10952 = vld [vmem:[#allocation2 + $0xc0] sm:$0xff]
  %v10953 = vld [vmem:[#allocation2 + $0xc8] sm:$0xff]
  %v10954 = vld [vmem:[#allocation2 + $0xd0] sm:$0xff]
  %v10955 = vld [vmem:[#allocation2 + $0xd8] sm:$0xff]
  %v10956 = vld [vmem:[#allocation2 + $0xe0] sm:$0xff]
  %v10957 = vld [vmem:[#allocation2 + $0xe8] sm:$0xff]
  %v10958 = vld [vmem:[#allocation2 + $0xf0] sm:$0xff]
  %v10959 = vld [vmem:[#allocation2 + $0xf8] sm:$0xff]
  %v10960 = vld [vmem:[#allocation2 + $0x100] sm:$0xff]
  %v10961 = vld [vmem:[#allocation2 + $0x108] sm:$0xff]
  %v10962 = vld [vmem:[#allocation2 + $0x110] sm:$0xff]
  %v10963 = vld [vmem:[#allocation2 + $0x118] sm:$0xff]
  %v10964 = vld [vmem:[#allocation2 + $0x120] sm:$0xff]
  %v10965 = vld [vmem:[#allocation2 + $0x128] sm:$0xff]
  %v10966 = vld [vmem:[#allocation2 + $0x130] sm:$0xff]
  %v10967 = vld [vmem:[#allocation2 + $0x138] sm:$0xff]
  %v10968 = vld [vmem:[#allocation2 + $0x140] sm:$0xff]
  %v10969 = vld [vmem:[#allocation2 + $0x148] sm:$0xff]
  %v10970 = vld [vmem:[#allocation2 + $0x150] sm:$0xff]
  %v10971 = vld [vmem:[#allocation2 + $0x158] sm:$0xff]
  %v10972 = vld [vmem:[#allocation2 + $0x160] sm:$0xff]
  %v10973 = vld [vmem:[#allocation2 + $0x168] sm:$0xff]
  %v10974 = vld [vmem:[#allocation2 + $0x170] sm:$0xff]
  %v10975 = vld [vmem:[#allocation2 + $0x178] sm:$0xff]
  %v10976 = vld [vmem:[#allocation2 + $0x180] sm:$0xff]
  %v10977 = vld [vmem:[#allocation2 + $0x188] sm:$0xff]
  %v10978 = vld [vmem:[#allocation2 + $0x190] sm:$0xff]
  %v10979 = vld [vmem:[#allocation2 + $0x198] sm:$0xff]
  %v10980 = vld [vmem:[#allocation2 + $0x1a0] sm:$0xff]
  %v10981 = vld [vmem:[#allocation2 + $0x1a8] sm:$0xff]
  %v10982 = vld [vmem:[#allocation2 + $0x1b0] sm:$0xff]
  %v10983 = vld [vmem:[#allocation2 + $0x1b8] sm:$0xff]
  %v10984 = vld [vmem:[#allocation2 + $0x1c0] sm:$0xff]
  %v10985 = vld [vmem:[#allocation2 + $0x1c8] sm:$0xff]
  %v10986 = vld [vmem:[#allocation2 + $0x1d0] sm:$0xff]
  %v10987 = vld [vmem:[#allocation2 + $0x1d8] sm:$0xff]
  %v10988 = vld [vmem:[#allocation2 + $0x1e0] sm:$0xff]
  %v10989 = vld [vmem:[#allocation2 + $0x1e8] sm:$0xff]
  %v10990 = vld [vmem:[#allocation2 + $0x1f0] sm:$0xff]
  %v10991 = vld [vmem:[#allocation2 + $0x1f8] sm:$0xff]
  %v10992 = vld [vmem:[#allocation2 + $0x200] sm:$0xff]
  %v10993 = vld [vmem:[#allocation2 + $0x208] sm:$0xff]
  %v10994 = vld [vmem:[#allocation2 + $0x210] sm:$0xff]
  %v10995 = vld [vmem:[#allocation2 + $0x218] sm:$0xff]
  %v10996 = vld [vmem:[#allocation2 + $0x220] sm:$0xff]
  %v10997 = vld [vmem:[#allocation2 + $0x228] sm:$0xff]
  %v10998 = vld [vmem:[#allocation2 + $0x230] sm:$0xff]
  %v10999 = vld [vmem:[#allocation2 + $0x238] sm:$0xff]
  %v11000 = vpack.c.bf16 %v10947, %v10946
  %v11001 = vpack.c.bf16 %v10949, %v10948
  %v11002 = vpack.c.bf16 %v10951, %v10950
  %v11003 = vpack.c.bf16 %v10953, %v10952
  %v11004 = vpack.c.bf16 %v10955, %v10954
  %v11005 = vpack.c.bf16 %v10957, %v10956
  %v11006 = vpack.c.bf16 %v10959, %v10958
  %v11007 = vpack.c.bf16 %v10961, %v10960
  %v11008 = vpack.c.bf16 %v10963, %v10962
  %v11009 = vpack.c.bf16 %v10965, %v10964
  %v11010 = vpack.c.bf16 %v10967, %v10966
  %v11011 = vpack.c.bf16 %v10969, %v10968
  %v11012 = vpack.c.bf16 %v10971, %v10970
  %v11013 = vpack.c.bf16 %v10973, %v10972
  %v11014 = vpack.c.bf16 %v10975, %v10974
  %v11015 = vpack.c.bf16 %v10977, %v10976
  %v11016 = vpack.c.bf16 %v10979, %v10978
  %v11017 = vpack.c.bf16 %v10981, %v10980
  %v11018 = vpack.c.bf16 %v10983, %v10982
  %v11019 = vpack.c.bf16 %v10985, %v10984
  %v11020 = vpack.c.bf16 %v10987, %v10986
  %v11021 = vpack.c.bf16 %v10989, %v10988
  %v11022 = vpack.c.bf16 %v10991, %v10990
  %v11023 = vpack.c.bf16 %v10993, %v10992
  %v11024 = vpack.c.bf16 %v10995, %v10994
  %v11025 = vpack.c.bf16 %v10997, %v10996
  %v11026 = vpack.c.bf16 %v10999, %v10998
  %s11027 = scalar_lea.vmem %s3, 512
  %v11028 = vld [vmem:[%s11027] sm:$0xff]
  %v11029 = vld [vmem:[%s11027 + $0x8] sm:$0xff]
  %v11030 = vld [vmem:[%s11027 + $0x10] sm:$0xff]
  %v11031 = vld [vmem:[%s11027 + $0x18] sm:$0xff]
  %v11032 = vld [vmem:[%s11027 + $0x20] sm:$0xff]
  %v11033 = vld [vmem:[%s11027 + $0x28] sm:$0xff]
  %v11034 = vld [vmem:[%s11027 + $0x30] sm:$0xff]
  %v11035 = vld [vmem:[%s11027 + $0x38] sm:$0xff]
  %v11036 = vld [vmem:[%s11027 + $0x40] sm:$0xff]
  %v11037 = vld [vmem:[%s11027 + $0x48] sm:$0xff]
  %v11038 = vld [vmem:[%s11027 + $0x50] sm:$0xff]
  %v11039 = vld [vmem:[%s11027 + $0x58] sm:$0xff]
  %v11040 = vld [vmem:[%s11027 + $0x60] sm:$0xff]
  %v11041 = vld [vmem:[%s11027 + $0x68] sm:$0xff]
  %v11042 = vld [vmem:[%s11027 + $0x70] sm:$0xff]
  %v11043 = vld [vmem:[%s11027 + $0x78] sm:$0xff]
  %v11044 = vld [vmem:[%s11027 + $0x80] sm:$0xff]
  %v11045 = vld [vmem:[%s11027 + $0x88] sm:$0xff]
  %v11046 = vld [vmem:[%s11027 + $0x90] sm:$0xff]
  %v11047 = vld [vmem:[%s11027 + $0x98] sm:$0xff]
  %v11048 = vld [vmem:[%s11027 + $0xa0] sm:$0xff]
  %v11049 = vld [vmem:[%s11027 + $0xa8] sm:$0xff]
  %v11050 = vld [vmem:[%s11027 + $0xb0] sm:$0xff]
  %v11051 = vld [vmem:[%s11027 + $0xb8] sm:$0xff]
  %v11052 = vld [vmem:[%s11027 + $0xc0] sm:$0xff]
  %v11053 = vld [vmem:[%s11027 + $0xc8] sm:$0xff]
  %v11054 = vld [vmem:[%s11027 + $0xd0] sm:$0xff]
  %v11055 = vld [vmem:[%s11027 + $0xd8] sm:$0xff]
  %v11056 = vld [vmem:[%s11027 + $0xe0] sm:$0xff]
  %v11057 = vld [vmem:[%s11027 + $0xe8] sm:$0xff]
  %v11058 = vld [vmem:[%s11027 + $0xf0] sm:$0xff]
  %v11059 = vld [vmem:[%s11027 + $0xf8] sm:$0xff]
  %v11060 = vld [vmem:[%s11027 + $0x100] sm:$0xff]
  %v11061 = vld [vmem:[%s11027 + $0x108] sm:$0xff]
  %v11062 = vld [vmem:[%s11027 + $0x110] sm:$0xff]
  %v11063 = vld [vmem:[%s11027 + $0x118] sm:$0xff]
  %v11064 = vld [vmem:[%s11027 + $0x120] sm:$0xff]
  %v11065 = vld [vmem:[%s11027 + $0x128] sm:$0xff]
  %v11066 = vld [vmem:[%s11027 + $0x130] sm:$0xff]
  %v11067 = vld [vmem:[%s11027 + $0x138] sm:$0xff]
  %v11068 = vld [vmem:[%s11027 + $0x140] sm:$0xff]
  %v11069 = vld [vmem:[%s11027 + $0x148] sm:$0xff]
  %v11070 = vld [vmem:[%s11027 + $0x150] sm:$0xff]
  %v11071 = vld [vmem:[%s11027 + $0x158] sm:$0xff]
  %v11072 = vld [vmem:[%s11027 + $0x160] sm:$0xff]
  %v11073 = vld [vmem:[%s11027 + $0x168] sm:$0xff]
  %v11074 = vld [vmem:[%s11027 + $0x170] sm:$0xff]
  %v11075 = vld [vmem:[%s11027 + $0x178] sm:$0xff]
  %v11076 = vld [vmem:[%s11027 + $0x180] sm:$0xff]
  %v11077 = vld [vmem:[%s11027 + $0x188] sm:$0xff]
  %v11078 = vld [vmem:[%s11027 + $0x190] sm:$0xff]
  %v11079 = vld [vmem:[%s11027 + $0x198] sm:$0xff]
  %v11080 = vld [vmem:[%s11027 + $0x1a0] sm:$0xff]
  %v11081 = vld [vmem:[%s11027 + $0x1a8] sm:$0xff]
  %v11082 = vld [vmem:[%s11027 + $0x1b0] sm:$0xff]
  %v11083 = vld [vmem:[%s11027 + $0x1b8] sm:$0xff]
  %v11084 = vld [vmem:[%s11027 + $0x1c0] sm:$0xff]
  %v11085 = vld [vmem:[%s11027 + $0x1c8] sm:$0xff]
  %v11086 = vld [vmem:[%s11027 + $0x1d0] sm:$0xff]
  %v11087 = vld [vmem:[%s11027 + $0x1d8] sm:$0xff]
  %v11088 = vld [vmem:[%s11027 + $0x1e0] sm:$0xff]
  %v11089 = vld [vmem:[%s11027 + $0x1e8] sm:$0xff]
  %v11090 = vld [vmem:[%s11027 + $0x1f0] sm:$0xff]
  %v11091 = vld [vmem:[%s11027 + $0x1f8] sm:$0xff]
  %v11156 = vunpack.c.l.b16 %v11028
  %v11157 = vunpack.c.h.b16 %v11028
  %v11158 = vunpack.c.l.b16 %v11029
  %v11159 = vunpack.c.h.b16 %v11029
  %v11160 = vunpack.c.l.b16 %v11030
  %v11161 = vunpack.c.h.b16 %v11030
  %v11162 = vunpack.c.l.b16 %v11031
  %v11163 = vunpack.c.h.b16 %v11031
  %v11164 = vunpack.c.l.b16 %v11032
  %v11165 = vunpack.c.h.b16 %v11032
  %v11166 = vunpack.c.l.b16 %v11033
  %v11167 = vunpack.c.h.b16 %v11033
  %v11168 = vunpack.c.l.b16 %v11034
  %v11169 = vunpack.c.h.b16 %v11034
  %v11170 = vunpack.c.l.b16 %v11035
  %v11171 = vunpack.c.h.b16 %v11035
  %v11172 = vunpack.c.l.b16 %v11036
  %v11173 = vunpack.c.h.b16 %v11036
  %v11174 = vunpack.c.l.b16 %v11037
  %v11175 = vunpack.c.h.b16 %v11037
  %v11176 = vunpack.c.l.b16 %v11038
  %v11177 = vunpack.c.h.b16 %v11038
  %v11178 = vunpack.c.l.b16 %v11039
  %v11179 = vunpack.c.h.b16 %v11039
  %v11180 = vunpack.c.l.b16 %v11040
  %v11181 = vunpack.c.h.b16 %v11040
  %v11182 = vunpack.c.l.b16 %v11041
  %v11183 = vunpack.c.h.b16 %v11041
  %v11184 = vunpack.c.l.b16 %v11042
  %v11185 = vunpack.c.h.b16 %v11042
  %v11186 = vunpack.c.l.b16 %v11043
  %v11187 = vunpack.c.h.b16 %v11043
  %v11188 = vunpack.c.l.b16 %v11044
  %v11189 = vunpack.c.h.b16 %v11044
  %v11190 = vunpack.c.l.b16 %v11045
  %v11191 = vunpack.c.h.b16 %v11045
  %v11192 = vunpack.c.l.b16 %v11046
  %v11193 = vunpack.c.h.b16 %v11046
  %v11194 = vunpack.c.l.b16 %v11047
  %v11195 = vunpack.c.h.b16 %v11047
  %v11196 = vunpack.c.l.b16 %v11048
  %v11197 = vunpack.c.h.b16 %v11048
  %v11198 = vunpack.c.l.b16 %v11049
  %v11199 = vunpack.c.h.b16 %v11049
  %v11200 = vunpack.c.l.b16 %v11050
  %v11201 = vunpack.c.h.b16 %v11050
  %v11202 = vunpack.c.l.b16 %v11051
  %v11203 = vunpack.c.h.b16 %v11051
  %v11204 = vunpack.c.l.b16 %v11052
  %v11205 = vunpack.c.h.b16 %v11052
  %v11206 = vunpack.c.l.b16 %v11053
  %v11207 = vunpack.c.h.b16 %v11053
  %v11208 = vunpack.c.l.b16 %v11054
  %v11209 = vunpack.c.h.b16 %v11054
  %v11210 = vunpack.c.l.b16 %v11055
  %v11211 = vunpack.c.h.b16 %v11055
  %v11212 = vunpack.c.l.b16 %v11056
  %v11213 = vunpack.c.h.b16 %v11056
  %v11214 = vunpack.c.l.b16 %v11057
  %v11215 = vunpack.c.h.b16 %v11057
  %v11216 = vunpack.c.l.b16 %v11058
  %v11217 = vunpack.c.h.b16 %v11058
  %v11218 = vunpack.c.l.b16 %v11059
  %v11219 = vunpack.c.h.b16 %v11059
  %v11220 = vunpack.c.l.b16 %v11060
  %v11221 = vunpack.c.h.b16 %v11060
  %v11222 = vunpack.c.l.b16 %v11061
  %v11223 = vunpack.c.h.b16 %v11061
  %v11224 = vunpack.c.l.b16 %v11062
  %v11225 = vunpack.c.h.b16 %v11062
  %v11226 = vunpack.c.l.b16 %v11063
  %v11227 = vunpack.c.h.b16 %v11063
  %v11228 = vunpack.c.l.b16 %v11064
  %v11229 = vunpack.c.h.b16 %v11064
  %v11230 = vunpack.c.l.b16 %v11065
  %v11231 = vunpack.c.h.b16 %v11065
  %v11232 = vunpack.c.l.b16 %v11066
  %v11233 = vunpack.c.h.b16 %v11066
  %v11234 = vunpack.c.l.b16 %v11067
  %v11235 = vunpack.c.h.b16 %v11067
  %v11236 = vunpack.c.l.b16 %v11068
  %v11237 = vunpack.c.h.b16 %v11068
  %v11238 = vunpack.c.l.b16 %v11069
  %v11239 = vunpack.c.h.b16 %v11069
  %v11240 = vunpack.c.l.b16 %v11070
  %v11241 = vunpack.c.h.b16 %v11070
  %v11242 = vunpack.c.l.b16 %v11071
  %v11243 = vunpack.c.h.b16 %v11071
  %v11244 = vunpack.c.l.b16 %v11072
  %v11245 = vunpack.c.h.b16 %v11072
  %v11246 = vunpack.c.l.b16 %v11073
  %v11247 = vunpack.c.h.b16 %v11073
  %v11248 = vunpack.c.l.b16 %v11074
  %v11249 = vunpack.c.h.b16 %v11074
  %v11250 = vunpack.c.l.b16 %v11075
  %v11251 = vunpack.c.h.b16 %v11075
  %v11252 = vunpack.c.l.b16 %v11076
  %v11253 = vunpack.c.h.b16 %v11076
  %v11254 = vunpack.c.l.b16 %v11077
  %v11255 = vunpack.c.h.b16 %v11077
  %v11256 = vunpack.c.l.b16 %v11078
  %v11257 = vunpack.c.h.b16 %v11078
  %v11258 = vunpack.c.l.b16 %v11079
  %v11259 = vunpack.c.h.b16 %v11079
  %v11260 = vunpack.c.l.b16 %v11080
  %v11261 = vunpack.c.h.b16 %v11080
  %v11262 = vunpack.c.l.b16 %v11081
  %v11263 = vunpack.c.h.b16 %v11081
  %v11264 = vunpack.c.l.b16 %v11082
  %v11265 = vunpack.c.h.b16 %v11082
  %v11266 = vunpack.c.l.b16 %v11083
  %v11267 = vunpack.c.h.b16 %v11083
  %v11268 = vunpack.c.l.b16 %v11084
  %v11269 = vunpack.c.h.b16 %v11084
  %v11270 = vunpack.c.l.b16 %v11085
  %v11271 = vunpack.c.h.b16 %v11085
  %v11272 = vunpack.c.l.b16 %v11086
  %v11273 = vunpack.c.h.b16 %v11086
  %v11274 = vunpack.c.l.b16 %v11087
  %v11275 = vunpack.c.h.b16 %v11087
  %v11276 = vunpack.c.l.b16 %v11088
  %v11277 = vunpack.c.h.b16 %v11088
  %v11278 = vunpack.c.l.b16 %v11089
  %v11279 = vunpack.c.h.b16 %v11089
  %v11280 = vunpack.c.l.b16 %v11090
  %v11281 = vunpack.c.h.b16 %v11090
  %v11282 = vunpack.c.l.b16 %v11091
  %v11283 = vunpack.c.h.b16 %v11091
  %v11284 = vpack.c.b16 %v11160, %v11156
  %v11285 = vpack.c.b16 %v11161, %v11157
  %v11286 = vpack.c.b16 %v11162, %v11158
  %v11287 = vpack.c.b16 %v11163, %v11159
  %v11288 = vpack.c.b16 %v11168, %v11164
  %v11289 = vpack.c.b16 %v11169, %v11165
  %v11290 = vpack.c.b16 %v11170, %v11166
  %v11291 = vpack.c.b16 %v11171, %v11167
  %v11292 = vpack.c.b16 %v11176, %v11172
  %v11293 = vpack.c.b16 %v11177, %v11173
  %v11294 = vpack.c.b16 %v11178, %v11174
  %v11295 = vpack.c.b16 %v11179, %v11175
  %v11296 = vpack.c.b16 %v11184, %v11180
  %v11297 = vpack.c.b16 %v11185, %v11181
  %v11298 = vpack.c.b16 %v11186, %v11182
  %v11299 = vpack.c.b16 %v11187, %v11183
  %v11300 = vpack.c.b16 %v11192, %v11188
  %v11301 = vpack.c.b16 %v11193, %v11189
  %v11302 = vpack.c.b16 %v11194, %v11190
  %v11303 = vpack.c.b16 %v11195, %v11191
  %v11304 = vpack.c.b16 %v11200, %v11196
  %v11305 = vpack.c.b16 %v11201, %v11197
  %v11306 = vpack.c.b16 %v11202, %v11198
  %v11307 = vpack.c.b16 %v11203, %v11199
  %v11308 = vpack.c.b16 %v11208, %v11204
  %v11309 = vpack.c.b16 %v11209, %v11205
  %v11310 = vpack.c.b16 %v11210, %v11206
  %v11311 = vpack.c.b16 %v11211, %v11207
  %v11312 = vpack.c.b16 %v11216, %v11212
  %v11313 = vpack.c.b16 %v11217, %v11213
  %v11314 = vpack.c.b16 %v11218, %v11214
  %v11315 = vpack.c.b16 %v11219, %v11215
  %v11316 = vpack.c.b16 %v11224, %v11220
  %v11317 = vpack.c.b16 %v11225, %v11221
  %v11318 = vpack.c.b16 %v11226, %v11222
  %v11319 = vpack.c.b16 %v11227, %v11223
  %v11320 = vpack.c.b16 %v11232, %v11228
  %v11321 = vpack.c.b16 %v11233, %v11229
  %v11322 = vpack.c.b16 %v11234, %v11230
  %v11323 = vpack.c.b16 %v11235, %v11231
  %v11324 = vpack.c.b16 %v11240, %v11236
  %v11325 = vpack.c.b16 %v11241, %v11237
  %v11326 = vpack.c.b16 %v11242, %v11238
  %v11327 = vpack.c.b16 %v11243, %v11239
  %v11328 = vpack.c.b16 %v11248, %v11244
  %v11329 = vpack.c.b16 %v11249, %v11245
  %v11330 = vpack.c.b16 %v11250, %v11246
  %v11331 = vpack.c.b16 %v11251, %v11247
  %v11332 = vpack.c.b16 %v11256, %v11252
  %v11333 = vpack.c.b16 %v11257, %v11253
  %v11334 = vpack.c.b16 %v11258, %v11254
  %v11335 = vpack.c.b16 %v11259, %v11255
  %v11336 = vpack.c.b16 %v11264, %v11260
  %v11337 = vpack.c.b16 %v11265, %v11261
  %v11338 = vpack.c.b16 %v11266, %v11262
  %v11339 = vpack.c.b16 %v11267, %v11263
  %v11340 = vpack.c.b16 %v11272, %v11268
  %v11341 = vpack.c.b16 %v11273, %v11269
  %v11342 = vpack.c.b16 %v11274, %v11270
  %v11343 = vpack.c.b16 %v11275, %v11271
  %v11344 = vpack.c.b16 %v11280, %v11276
  %v11345 = vpack.c.b16 %v11281, %v11277
  %v11346 = vpack.c.b16 %v11282, %v11278
  %v11347 = vpack.c.b16 %v11283, %v11279
  %v11397 = vsel %vm10479, %v11287, 0
  %v11400 = vsel %vm10479, %v11291, 0
  %v11403 = vsel %vm10479, %v11295, 0
  %v11406 = vsel %vm10479, %v11299, 0
  %v11409 = vsel %vm10479, %v11303, 0
  %v11412 = vsel %vm10479, %v11307, 0
  %v11415 = vsel %vm10479, %v11311, 0
  %v11418 = vsel %vm10479, %v11315, 0
  %v11421 = vsel %vm10479, %v11319, 0
  %v11424 = vsel %vm10479, %v11323, 0
  %v11427 = vsel %vm10479, %v11327, 0
  %v11430 = vsel %vm10479, %v11331, 0
  %v11433 = vsel %vm10479, %v11335, 0
  %v11436 = vsel %vm10479, %v11339, 0
  %v11439 = vsel %vm10479, %v11343, 0
  %v11442 = vsel %vm10479, %v11347, 0
  %11444 = vmatprep.subr.bf16.mxu0 0
  %11445 = vmatpush1.bf16.msra.mxu0 %v11000
  %11446 = vmatprep.subr.bf16.mxu0 0
  %11447 = vmatpush1.bf16.msra.mxu0 %v11001
  %11448 = vmatprep.subr.bf16.mxu0 0
  %11449 = vmatpush1.bf16.msra.mxu0 %v11002
  %11450 = vmatprep.subr.bf16.mxu0 0
  %11451 = vmatpush1.bf16.msra.mxu0 %v11003
  %11452 = vmatprep.subr.bf16.mxu0 0
  %11453 = vmatpush1.bf16.msra.mxu0 %v11004
  %11454 = vmatprep.subr.bf16.mxu0 0
  %11455 = vmatpush1.bf16.msra.mxu0 %v11005
  %11456 = vmatprep.subr.bf16.mxu0 0
  %11457 = vmatpush1.bf16.msra.mxu0 %v11006
  %11458 = vmatprep.subr.bf16.mxu0 0
  %11459 = vmatpush1.bf16.msra.mxu0 %v11007
  %11460 = vmatprep.subr.bf16.mxu0 0
  %11461 = vmatpush1.bf16.msra.mxu0 %v11008
  %11462 = vmatprep.subr.bf16.mxu0 0
  %11463 = vmatpush1.bf16.msra.mxu0 %v11009
  %11464 = vmatprep.subr.bf16.mxu0 0
  %11465 = vmatpush1.bf16.msra.mxu0 %v11010
  %11466 = vmatprep.subr.bf16.mxu0 0
  %11467 = vmatpush1.bf16.msra.mxu0 %v11011
  %11468 = vmatprep.subr.bf16.mxu0 0
  %11469 = vmatpush1.bf16.msra.mxu0 %v11012
  %11470 = vmatprep.subr.bf16.mxu0 0
  %11471 = vmatpush1.bf16.msra.mxu0 %v11013
  %11472 = vmatprep.subr.bf16.mxu0 0
  %11473 = vmatpush1.bf16.msra.mxu0 %v11014
  %11474 = vmatprep.subr.bf16.mxu0 0
  %11475 = vmatpush1.bf16.msra.mxu0 %v11015
  %11476 = vmatprep.mubr.bf16.mxu0 %v11285
  %11477 = vmatmul.mubr.bf16.gmra.mrb[0].mxu0 %v11284
  %v11478 = vpop.f32.mrb[0].mxu0
  %v11479 = vadd.f32 0.0, %v11478
  %v11480 = vpop.f32.mrb[0].mxu0
  %v11481 = vpop.f32.mrb[0].mxu0
  %v11482 = vadd.f32 0.0, %v11481
  %v11483 = vpop.f32.mrb[0].mxu0
  %11484 = vmatprep.mubr.bf16.mxu0 %v11289
  %11485 = vmatmul.mubr.bf16.gmra.mrb[0].mxu0 %v11288
  %v11486 = vpop.f32.mrb[0].mxu0
  %v11487 = vadd.f32 0.0, %v11486
  %v11488 = vpop.f32.mrb[0].mxu0
  %v11489 = vpop.f32.mrb[0].mxu0
  %v11490 = vadd.f32 0.0, %v11489
  %v11491 = vpop.f32.mrb[0].mxu0
  %11492 = vmatprep.mubr.bf16.mxu0 %v11293
  %11493 = vmatmul.mubr.bf16.gmra.mrb[0].mxu0 %v11292
  %v11494 = vpop.f32.mrb[0].mxu0
  %v11495 = vadd.f32 0.0, %v11494
  %v11496 = vpop.f32.mrb[0].mxu0
  %v11497 = vpop.f32.mrb[0].mxu0
  %v11498 = vadd.f32 0.0, %v11497
  %v11499 = vpop.f32.mrb[0].mxu0
  %11500 = vmatprep.mubr.bf16.mxu0 %v11297
  %11501 = vmatmul.mubr.bf16.gmra.mrb[0].mxu0 %v11296
  %v11502 = vpop.f32.mrb[0].mxu0
  %v11503 = vadd.f32 0.0, %v11502
  %v11504 = vpop.f32.mrb[0].mxu0
  %v11505 = vpop.f32.mrb[0].mxu0
  %v11506 = vadd.f32 0.0, %v11505
  %v11507 = vpop.f32.mrb[0].mxu0
  %11508 = vmatprep.mubr.bf16.mxu0 %v11301
  %11509 = vmatmul.mubr.bf16.gmra.mrb[0].mxu0 %v11300
  %v11510 = vpop.f32.mrb[0].mxu0
  %v11511 = vadd.f32 0.0, %v11510
  %v11512 = vpop.f32.mrb[0].mxu0
  %v11513 = vpop.f32.mrb[0].mxu0
  %v11514 = vadd.f32 0.0, %v11513
  %v11515 = vpop.f32.mrb[0].mxu0
  %11516 = vmatprep.mubr.bf16.mxu0 %v11305
  %11517 = vmatmul.mubr.bf16.gmra.mrb[0].mxu0 %v11304
  %v11518 = vpop.f32.mrb[0].mxu0
  %v11519 = vadd.f32 0.0, %v11518
  %v11520 = vpop.f32.mrb[0].mxu0
  %v11521 = vpop.f32.mrb[0].mxu0
  %v11522 = vadd.f32 0.0, %v11521
  %v11523 = vpop.f32.mrb[0].mxu0
  %11524 = vmatprep.mubr.bf16.mxu0 %v11309
  %11525 = vmatmul.mubr.bf16.gmra.mrb[0].mxu0 %v11308
  %v11526 = vpop.f32.mrb[0].mxu0
  %v11527 = vadd.f32 0.0, %v11526
  %v11528 = vpop.f32.mrb[0].mxu0
  %v11529 = vpop.f32.mrb[0].mxu0
  %v11530 = vadd.f32 0.0, %v11529
  %v11531 = vpop.f32.mrb[0].mxu0
  %11532 = vmatprep.mubr.bf16.mxu0 %v11313
  %11533 = vmatmul.mubr.bf16.gmra.mrb[0].mxu0 %v11312
  %v11534 = vpop.f32.mrb[0].mxu0
  %v11535 = vadd.f32 0.0, %v11534
  %v11536 = vpop.f32.mrb[0].mxu0
  %v11537 = vpop.f32.mrb[0].mxu0
  %v11538 = vadd.f32 0.0, %v11537
  %v11539 = vpop.f32.mrb[0].mxu0
  %11540 = vmatprep.mubr.bf16.mxu0 %v11317
  %11541 = vmatmul.mubr.bf16.gmra.mrb[0].mxu0 %v11316
  %v11542 = vpop.f32.mrb[0].mxu0
  %v11543 = vadd.f32 0.0, %v11542
  %v11544 = vpop.f32.mrb[0].mxu0
  %v11545 = vpop.f32.mrb[0].mxu0
  %v11546 = vadd.f32 0.0, %v11545
  %v11547 = vpop.f32.mrb[0].mxu0
  %11548 = vmatprep.mubr.bf16.mxu0 %v11321
  %11549 = vmatmul.mubr.bf16.gmra.mrb[0].mxu0 %v11320
  %v11550 = vpop.f32.mrb[0].mxu0
  %v11551 = vadd.f32 0.0, %v11550
  %v11552 = vpop.f32.mrb[0].mxu0
  %v11553 = vpop.f32.mrb[0].mxu0
  %v11554 = vadd.f32 0.0, %v11553
  %v11555 = vpop.f32.mrb[0].mxu0
  %11556 = vmatprep.mubr.bf16.mxu0 %v11325
  %11557 = vmatmul.mubr.bf16.gmra.mrb[0].mxu0 %v11324
  %v11558 = vpop.f32.mrb[0].mxu0
  %v11559 = vadd.f32 0.0, %v11558
  %v11560 = vpop.f32.mrb[0].mxu0
  %v11561 = vpop.f32.mrb[0].mxu0
  %v11562 = vadd.f32 0.0, %v11561
  %v11563 = vpop.f32.mrb[0].mxu0
  %11564 = vmatprep.mubr.bf16.mxu0 %v11329
  %11565 = vmatmul.mubr.bf16.gmra.mrb[0].mxu0 %v11328
  %v11566 = vpop.f32.mrb[0].mxu0
  %v11567 = vadd.f32 0.0, %v11566
  %v11568 = vpop.f32.mrb[0].mxu0
  %v11569 = vpop.f32.mrb[0].mxu0
  %v11570 = vadd.f32 0.0, %v11569
  %v11571 = vpop.f32.mrb[0].mxu0
  %11572 = vmatprep.mubr.bf16.mxu0 %v11333
  %11573 = vmatmul.mubr.bf16.gmra.mrb[0].mxu0 %v11332
  %v11574 = vpop.f32.mrb[0].mxu0
  %v11575 = vadd.f32 0.0, %v11574
  %v11576 = vpop.f32.mrb[0].mxu0
  %v11577 = vpop.f32.mrb[0].mxu0
  %v11578 = vadd.f32 0.0, %v11577
  %v11579 = vpop.f32.mrb[0].mxu0
  %11580 = vmatprep.mubr.bf16.mxu0 %v11337
  %11581 = vmatmul.mubr.bf16.gmra.mrb[0].mxu0 %v11336
  %v11582 = vpop.f32.mrb[0].mxu0
  %v11583 = vadd.f32 0.0, %v11582
  %v11584 = vpop.f32.mrb[0].mxu0
  %v11585 = vpop.f32.mrb[0].mxu0
  %v11586 = vadd.f32 0.0, %v11585
  %v11587 = vpop.f32.mrb[0].mxu0
  %11588 = vmatprep.mubr.bf16.mxu0 %v11341
  %11589 = vmatmul.mubr.bf16.gmra.mrb[0].mxu0 %v11340
  %v11590 = vpop.f32.mrb[0].mxu0
  %v11591 = vadd.f32 0.0, %v11590
  %v11592 = vpop.f32.mrb[0].mxu0
  %v11593 = vpop.f32.mrb[0].mxu0
  %v11594 = vadd.f32 0.0, %v11593
  %v11595 = vpop.f32.mrb[0].mxu0
  %11596 = vmatprep.mubr.bf16.mxu0 %v11345
  %11597 = vmatmul.mubr.bf16.gmra.mrb[0].mxu0 %v11344
  %v11598 = vpop.f32.mrb[0].mxu0
  %v11599 = vadd.f32 0.0, %v11598
  %v11600 = vpop.f32.mrb[0].mxu0
  %v11601 = vpop.f32.mrb[0].mxu0
  %v11602 = vadd.f32 0.0, %v11601
  %v11603 = vpop.f32.mrb[0].mxu0
  %11604 = vdwg.mxu0
  %11605 = vmatprep.subr.bf16.mxu0 0
  %11606 = vmatpush1.bf16.msra.mxu0 %v11016
  %11607 = vmatprep.subr.bf16.mxu0 0
  %11608 = vmatpush1.bf16.msra.mxu0 %v11017
  %11609 = vmatprep.subr.bf16.mxu0 0
  %11610 = vmatpush1.bf16.msra.mxu0 %v11018
  %11611 = vmatprep.subr.bf16.mxu0 0
  %11612 = vmatpush1.bf16.msra.mxu0 %v11019
  %11613 = vmatprep.subr.bf16.mxu0 0
  %11614 = vmatpush1.bf16.msra.mxu0 %v11020
  %11615 = vmatprep.subr.bf16.mxu0 0
  %11616 = vmatpush1.bf16.msra.mxu0 %v11021
  %11617 = vmatprep.subr.bf16.mxu0 0
  %11618 = vmatpush1.bf16.msra.mxu0 %v11022
  %11619 = vmatprep.subr.bf16.mxu0 0
  %11620 = vmatpush1.bf16.msra.mxu0 %v11023
  %11621 = vmatprep.subr.bf16.mxu0 0
  %11622 = vmatpush1.bf16.msra.mxu0 %v11024
  %11623 = vmatprep.subr.bf16.mxu0 0
  %11624 = vmatpush1.bf16.msra.mxu0 %v11025
  %11625 = vmatprep.subr.bf16.mxu0 0
  %11626 = vmatpush1.bf16.msra.mxu0 %v11026
  %11627 = vmatprep.subr.bf16.mxu0 0
  %11628 = vmatpush1.bf16.msra.mxu0 0
  %11629 = vmatprep.subr.bf16.mxu0 0
  %11630 = vmatpush1.bf16.msra.mxu0 0
  %11631 = vmatprep.subr.bf16.mxu0 0
  %11632 = vmatpush1.bf16.msra.mxu0 0
  %11633 = vmatprep.subr.bf16.mxu0 0
  %11634 = vmatpush1.bf16.msra.mxu0 0
  %11635 = vmatprep.subr.bf16.mxu0 0
  %11636 = vmatpush1.bf16.msra.mxu0 0
  %11637 = vmatprep.mubr.bf16.mxu0 %v11397
  %11638 = vmatmul.mubr.bf16.gmra.mrb[0].mxu0 %v11286
  %v11639 = vpop.f32.mrb[0].mxu0
  %v11640 = vadd.f32 %v11479, %v11639
  %v11641 = vpop.f32.mrb[0].mxu0
  %v11642 = vpop.f32.mrb[0].mxu0
  %v11643 = vadd.f32 %v11482, %v11642
  %v11644 = vpop.f32.mrb[0].mxu0
  %11645 = vmatprep.mubr.bf16.mxu0 %v11400
  %11646 = vmatmul.mubr.bf16.gmra.mrb[0].mxu0 %v11290
  %v11647 = vpop.f32.mrb[0].mxu0
  %v11648 = vadd.f32 %v11487, %v11647
  %v11649 = vpop.f32.mrb[0].mxu0
  %v11650 = vpop.f32.mrb[0].mxu0
  %v11651 = vadd.f32 %v11490, %v11650
  %v11652 = vpop.f32.mrb[0].mxu0
  %11653 = vmatprep.mubr.bf16.mxu0 %v11403
  %11654 = vmatmul.mubr.bf16.gmra.mrb[0].mxu0 %v11294
  %v11655 = vpop.f32.mrb[0].mxu0
  %v11656 = vadd.f32 %v11495, %v11655
  %v11657 = vpop.f32.mrb[0].mxu0
  %v11658 = vpop.f32.mrb[0].mxu0
  %v11659 = vadd.f32 %v11498, %v11658
  %v11660 = vpop.f32.mrb[0].mxu0
  %11661 = vmatprep.mubr.bf16.mxu0 %v11406
  %11662 = vmatmul.mubr.bf16.gmra.mrb[0].mxu0 %v11298
  %v11663 = vpop.f32.mrb[0].mxu0
  %v11664 = vadd.f32 %v11503, %v11663
  %v11665 = vpop.f32.mrb[0].mxu0
  %v11666 = vpop.f32.mrb[0].mxu0
  %v11667 = vadd.f32 %v11506, %v11666
  %v11668 = vpop.f32.mrb[0].mxu0
  %11669 = vmatprep.mubr.bf16.mxu0 %v11409
  %11670 = vmatmul.mubr.bf16.gmra.mrb[0].mxu0 %v11302
  %v11671 = vpop.f32.mrb[0].mxu0
  %v11672 = vadd.f32 %v11511, %v11671
  %v11673 = vpop.f32.mrb[0].mxu0
  %v11674 = vpop.f32.mrb[0].mxu0
  %v11675 = vadd.f32 %v11514, %v11674
  %v11676 = vpop.f32.mrb[0].mxu0
  %11677 = vmatprep.mubr.bf16.mxu0 %v11412
  %11678 = vmatmul.mubr.bf16.gmra.mrb[0].mxu0 %v11306
  %v11679 = vpop.f32.mrb[0].mxu0
  %v11680 = vadd.f32 %v11519, %v11679
  %v11681 = vpop.f32.mrb[0].mxu0
  %v11682 = vpop.f32.mrb[0].mxu0
  %v11683 = vadd.f32 %v11522, %v11682
  %v11684 = vpop.f32.mrb[0].mxu0
  %11685 = vmatprep.mubr.bf16.mxu0 %v11415
  %11686 = vmatmul.mubr.bf16.gmra.mrb[0].mxu0 %v11310
  %v11687 = vpop.f32.mrb[0].mxu0
  %v11688 = vadd.f32 %v11527, %v11687
  %v11689 = vpop.f32.mrb[0].mxu0
  %v11690 = vpop.f32.mrb[0].mxu0
  %v11691 = vadd.f32 %v11530, %v11690
  %v11692 = vpop.f32.mrb[0].mxu0
  %11693 = vmatprep.mubr.bf16.mxu0 %v11418
  %11694 = vmatmul.mubr.bf16.gmra.mrb[0].mxu0 %v11314
  %v11695 = vpop.f32.mrb[0].mxu0
  %v11696 = vadd.f32 %v11535, %v11695
  %v11697 = vpop.f32.mrb[0].mxu0
  %v11698 = vpop.f32.mrb[0].mxu0
  %v11699 = vadd.f32 %v11538, %v11698
  %v11700 = vpop.f32.mrb[0].mxu0
  %11701 = vmatprep.mubr.bf16.mxu0 %v11421
  %11702 = vmatmul.mubr.bf16.gmra.mrb[0].mxu0 %v11318
  %v11703 = vpop.f32.mrb[0].mxu0
  %v11704 = vadd.f32 %v11543, %v11703
  %v11705 = vpop.f32.mrb[0].mxu0
  %v11706 = vpop.f32.mrb[0].mxu0
  %v11707 = vadd.f32 %v11546, %v11706
  %v11708 = vpop.f32.mrb[0].mxu0
  %11709 = vmatprep.mubr.bf16.mxu0 %v11424
  %11710 = vmatmul.mubr.bf16.gmra.mrb[0].mxu0 %v11322
  %v11711 = vpop.f32.mrb[0].mxu0
  %v11712 = vadd.f32 %v11551, %v11711
  %v11713 = vpop.f32.mrb[0].mxu0
  %v11714 = vpop.f32.mrb[0].mxu0
  %v11715 = vadd.f32 %v11554, %v11714
  %v11716 = vpop.f32.mrb[0].mxu0
  %11717 = vmatprep.mubr.bf16.mxu0 %v11427
  %11718 = vmatmul.mubr.bf16.gmra.mrb[0].mxu0 %v11326
  %v11719 = vpop.f32.mrb[0].mxu0
  %v11720 = vadd.f32 %v11559, %v11719
  %v11721 = vpop.f32.mrb[0].mxu0
  %v11722 = vpop.f32.mrb[0].mxu0
  %v11723 = vadd.f32 %v11562, %v11722
  %v11724 = vpop.f32.mrb[0].mxu0
  %11725 = vmatprep.mubr.bf16.mxu0 %v11430
  %11726 = vmatmul.mubr.bf16.gmra.mrb[0].mxu0 %v11330
  %v11727 = vpop.f32.mrb[0].mxu0
  %v11728 = vadd.f32 %v11567, %v11727
  %v11729 = vpop.f32.mrb[0].mxu0
  %v11730 = vpop.f32.mrb[0].mxu0
  %v11731 = vadd.f32 %v11570, %v11730
  %v11732 = vpop.f32.mrb[0].mxu0
  %11733 = vmatprep.mubr.bf16.mxu0 %v11433
  %11734 = vmatmul.mubr.bf16.gmra.mrb[0].mxu0 %v11334
  %v11735 = vpop.f32.mrb[0].mxu0
  %v11736 = vadd.f32 %v11575, %v11735
  %v11737 = vpop.f32.mrb[0].mxu0
  %v11738 = vpop.f32.mrb[0].mxu0
  %v11739 = vadd.f32 %v11578, %v11738
  %v11740 = vpop.f32.mrb[0].mxu0
  %11741 = vmatprep.mubr.bf16.mxu0 %v11436
  %11742 = vmatmul.mubr.bf16.gmra.mrb[0].mxu0 %v11338
  %v11743 = vpop.f32.mrb[0].mxu0
  %v11744 = vadd.f32 %v11583, %v11743
  %v11745 = vpop.f32.mrb[0].mxu0
  %v11746 = vpop.f32.mrb[0].mxu0
  %v11747 = vadd.f32 %v11586, %v11746
  %v11748 = vpop.f32.mrb[0].mxu0
  %11749 = vmatprep.mubr.bf16.mxu0 %v11439
  %11750 = vmatmul.mubr.bf16.gmra.mrb[0].mxu0 %v11342
  %v11751 = vpop.f32.mrb[0].mxu0
  %v11752 = vadd.f32 %v11591, %v11751
  %v11753 = vpop.f32.mrb[0].mxu0
  %v11754 = vpop.f32.mrb[0].mxu0
  %v11755 = vadd.f32 %v11594, %v11754
  %v11756 = vpop.f32.mrb[0].mxu0
  %11757 = vmatprep.mubr.bf16.mxu0 %v11442
  %11758 = vmatmul.mubr.bf16.gmra.mrb[0].mxu0 %v11346
  %v11759 = vpop.f32.mrb[0].mxu0
  %v11760 = vadd.f32 %v11599, %v11759
  %v11761 = vpop.f32.mrb[0].mxu0
  %v11762 = vpop.f32.mrb[0].mxu0
  %v11763 = vadd.f32 %v11602, %v11762
  %v11764 = vpop.f32.mrb[0].mxu0
  %11765 = vdwg.mxu0
  %v11766 = vmax.f32 %v11640, %v11672
  %v11767 = vmax.f32 %v11643, %v11675
  %v11768 = vmax.f32 %v11648, %v11680
  %v11769 = vmax.f32 %v11651, %v11683
  %v11770 = vmax.f32 %v11656, %v11688
  %v11771 = vmax.f32 %v11659, %v11691
  %v11772 = vmax.f32 %v11664, %v11696
  %v11773 = vmax.f32 %v11667, %v11699
  %v11774 = vmax.f32 %v11704, %v11736
  %v11775 = vmax.f32 %v11707, %v11739
  %v11776 = vmax.f32 %v11712, %v11744
  %v11777 = vmax.f32 %v11715, %v11747
  %v11778 = vmax.f32 %v11720, %v11752
  %v11779 = vmax.f32 %v11723, %v11755
  %v11780 = vmax.f32 %v11728, %v11760
  %v11781 = vmax.f32 %v11731, %v11763
  %v11782 = vmax.f32 %v11766, %v11774
  %v11783 = vmax.f32 %v11767, %v11775
  %v11784 = vmax.f32 %v11768, %v11776
  %v11785 = vmax.f32 %v11769, %v11777
  %v11786 = vmax.f32 %v11770, %v11778
  %v11787 = vmax.f32 %v11771, %v11779
  %v11788 = vmax.f32 %v11772, %v11780
  %v11789 = vmax.f32 %v11773, %v11781
  %v11790 = vld [vmem:[%s4 + $0x40] sm:$0xff]
  %v11791 = vld [vmem:[%s4 + $0x48] sm:$0xff]
  %v11792 = vld [vmem:[%s4 + $0x50] sm:$0xff]
  %v11793 = vld [vmem:[%s4 + $0x58] sm:$0xff]
  %v11794 = vld [vmem:[%s4 + $0x60] sm:$0xff]
  %v11795 = vld [vmem:[%s4 + $0x68] sm:$0xff]
  %v11796 = vld [vmem:[%s4 + $0x70] sm:$0xff]
  %v11797 = vld [vmem:[%s4 + $0x78] sm:$0xff]
  %11799 = vset.pattern.permute.xlu0 0
  %11800 = vperm.xlu0 %11799, %v11790
  %v11801 = vpop.permute.xlu0 %11800
  %11804 = vset.pattern.permute.xlu0 0
  %11805 = vperm.xlu0 %11804, %v11791
  %v11806 = vpop.permute.xlu0 %11805
  %11809 = vset.pattern.permute.xlu0 0
  %11810 = vperm.xlu0 %11809, %v11792
  %v11811 = vpop.permute.xlu0 %11810
  %11814 = vset.pattern.permute.xlu0 0
  %11815 = vperm.xlu0 %11814, %v11793
  %v11816 = vpop.permute.xlu0 %11815
  %11819 = vset.pattern.permute.xlu0 0
  %11820 = vperm.xlu0 %11819, %v11794
  %v11821 = vpop.permute.xlu0 %11820
  %11824 = vset.pattern.permute.xlu0 0
  %11825 = vperm.xlu0 %11824, %v11795
  %v11826 = vpop.permute.xlu0 %11825
  %11829 = vset.pattern.permute.xlu0 0
  %11830 = vperm.xlu0 %11829, %v11796
  %v11831 = vpop.permute.xlu0 %11830
  %11834 = vset.pattern.permute.xlu0 0
  %11835 = vperm.xlu0 %11834, %v11797
  %v11836 = vpop.permute.xlu0 %11835
  %v11838 = vadd.f32 %v11782, %v11801
  %v11839 = vadd.f32 %v11783, %v11806
  %v11840 = vadd.f32 %v11784, %v11811
  %v11841 = vadd.f32 %v11785, %v11816
  %v11842 = vadd.f32 %v11786, %v11821
  %v11843 = vadd.f32 %v11787, %v11826
  %v11844 = vadd.f32 %v11788, %v11831
  %v11845 = vadd.f32 %v11789, %v11836
  %v11846 = vmax.f32 %v11838, 0.0
  %v11847 = vmax.f32 %v11839, 0.0
  %v11848 = vmax.f32 %v11840, 0.0
  %v11849 = vmax.f32 %v11841, 0.0
  %v11850 = vmax.f32 %v11842, 0.0
  %v11851 = vmax.f32 %v11843, 0.0
  %v11852 = vmax.f32 %v11844, 0.0
  %v11853 = vmax.f32 %v11845, 0.0
  %11854 = vst [vmem:[#allocation3 + $0x40] sm:$0xff] %v11846
  %11855 = vst [vmem:[#allocation3 + $0x48] sm:$0xff] %v11847
  %11856 = vst [vmem:[#allocation3 + $0x50] sm:$0xff] %v11848
  %11857 = vst [vmem:[#allocation3 + $0x58] sm:$0xff] %v11849
  %11858 = vst [vmem:[#allocation3 + $0x60] sm:$0xff] %v11850
  %11859 = vst [vmem:[#allocation3 + $0x68] sm:$0xff] %v11851
  %11860 = vst [vmem:[#allocation3 + $0x70] sm:$0xff] %v11852
  %11861 = vst [vmem:[#allocation3 + $0x78] sm:$0xff] %v11853
  %v11862 = vld [vmem:[#allocation2 + $0x120] sm:$0xff]
  %v11863 = vld [vmem:[#allocation2 + $0x128] sm:$0xff]
  %v11864 = vld [vmem:[#allocation2 + $0x130] sm:$0xff]
  %v11865 = vld [vmem:[#allocation2 + $0x138] sm:$0xff]
  %v11866 = vld [vmem:[#allocation2 + $0x140] sm:$0xff]
  %v11867 = vld [vmem:[#allocation2 + $0x148] sm:$0xff]
  %v11868 = vld [vmem:[#allocation2 + $0x150] sm:$0xff]
  %v11869 = vld [vmem:[#allocation2 + $0x158] sm:$0xff]
  %v11870 = vld [vmem:[#allocation2 + $0x160] sm:$0xff]
  %v11871 = vld [vmem:[#allocation2 + $0x168] sm:$0xff]
  %v11872 = vld [vmem:[#allocation2 + $0x170] sm:$0xff]
  %v11873 = vld [vmem:[#allocation2 + $0x178] sm:$0xff]
  %v11874 = vld [vmem:[#allocation2 + $0x180] sm:$0xff]
  %v11875 = vld [vmem:[#allocation2 + $0x188] sm:$0xff]
  %v11876 = vld [vmem:[#allocation2 + $0x190] sm:$0xff]
  %v11877 = vld [vmem:[#allocation2 + $0x198] sm:$0xff]
  %v11878 = vld [vmem:[#allocation2 + $0x1a0] sm:$0xff]
  %v11879 = vld [vmem:[#allocation2 + $0x1a8] sm:$0xff]
  %v11880 = vld [vmem:[#allocation2 + $0x1b0] sm:$0xff]
  %v11881 = vld [vmem:[#allocation2 + $0x1b8] sm:$0xff]
  %v11882 = vld [vmem:[#allocation2 + $0x1c0] sm:$0xff]
  %v11883 = vld [vmem:[#allocation2 + $0x1c8] sm:$0xff]
  %v11884 = vld [vmem:[#allocation2 + $0x1d0] sm:$0xff]
  %v11885 = vld [vmem:[#allocation2 + $0x1d8] sm:$0xff]
  %v11886 = vld [vmem:[#allocation2 + $0x1e0] sm:$0xff]
  %v11887 = vld [vmem:[#allocation2 + $0x1e8] sm:$0xff]
  %v11888 = vld [vmem:[#allocation2 + $0x1f0] sm:$0xff]
  %v11889 = vld [vmem:[#allocation2 + $0x1f8] sm:$0xff]
  %v11890 = vld [vmem:[#allocation2 + $0x200] sm:$0xff]
  %v11891 = vld [vmem:[#allocation2 + $0x208] sm:$0xff]
  %v11892 = vld [vmem:[#allocation2 + $0x210] sm:$0xff]
  %v11893 = vld [vmem:[#allocation2 + $0x218] sm:$0xff]
  %v11894 = vld [vmem:[#allocation2 + $0x220] sm:$0xff]
  %v11895 = vld [vmem:[#allocation2 + $0x228] sm:$0xff]
  %v11896 = vld [vmem:[#allocation2 + $0x230] sm:$0xff]
  %v11897 = vld [vmem:[#allocation2 + $0x238] sm:$0xff]
  %v11898 = vld [vmem:[#allocation2 + $0x240] sm:$0xff]
  %v11899 = vld [vmem:[#allocation2 + $0x248] sm:$0xff]
  %v11900 = vld [vmem:[#allocation2 + $0x250] sm:$0xff]
  %v11901 = vld [vmem:[#allocation2 + $0x258] sm:$0xff]
  %v11902 = vld [vmem:[#allocation2 + $0x260] sm:$0xff]
  %v11903 = vld [vmem:[#allocation2 + $0x268] sm:$0xff]
  %v11904 = vld [vmem:[#allocation2 + $0x270] sm:$0xff]
  %v11905 = vld [vmem:[#allocation2 + $0x278] sm:$0xff]
  %v11906 = vld [vmem:[#allocation2 + $0x280] sm:$0xff]
  %v11907 = vld [vmem:[#allocation2 + $0x288] sm:$0xff]
  %v11908 = vld [vmem:[#allocation2 + $0x290] sm:$0xff]
  %v11909 = vld [vmem:[#allocation2 + $0x298] sm:$0xff]
  %v11910 = vld [vmem:[#allocation2 + $0x2a0] sm:$0xff]
  %v11911 = vld [vmem:[#allocation2 + $0x2a8] sm:$0xff]
  %v11912 = vld [vmem:[#allocation2 + $0x2b0] sm:$0xff]
  %v11913 = vld [vmem:[#allocation2 + $0x2b8] sm:$0xff]
  %v11914 = vld [vmem:[#allocation2 + $0x2c0] sm:$0xff]
  %v11915 = vld [vmem:[#allocation2 + $0x2c8] sm:$0xff]
  %v11916 = vpack.c.bf16 %v11863, %v11862
  %v11917 = vpack.c.bf16 %v11865, %v11864
  %v11918 = vpack.c.bf16 %v11867, %v11866
  %v11919 = vpack.c.bf16 %v11869, %v11868
  %v11920 = vpack.c.bf16 %v11871, %v11870
  %v11921 = vpack.c.bf16 %v11873, %v11872
  %v11922 = vpack.c.bf16 %v11875, %v11874
  %v11923 = vpack.c.bf16 %v11877, %v11876
  %v11924 = vpack.c.bf16 %v11879, %v11878
  %v11925 = vpack.c.bf16 %v11881, %v11880
  %v11926 = vpack.c.bf16 %v11883, %v11882
  %v11927 = vpack.c.bf16 %v11885, %v11884
  %v11928 = vpack.c.bf16 %v11887, %v11886
  %v11929 = vpack.c.bf16 %v11889, %v11888
  %v11930 = vpack.c.bf16 %v11891, %v11890
  %v11931 = vpack.c.bf16 %v11893, %v11892
  %v11932 = vpack.c.bf16 %v11895, %v11894
  %v11933 = vpack.c.bf16 %v11897, %v11896
  %v11934 = vpack.c.bf16 %v11899, %v11898
  %v11935 = vpack.c.bf16 %v11901, %v11900
  %v11936 = vpack.c.bf16 %v11903, %v11902
  %v11937 = vpack.c.bf16 %v11905, %v11904
  %v11938 = vpack.c.bf16 %v11907, %v11906
  %v11939 = vpack.c.bf16 %v11909, %v11908
  %v11940 = vpack.c.bf16 %v11911, %v11910
  %v11941 = vpack.c.bf16 %v11913, %v11912
  %v11942 = vpack.c.bf16 %v11915, %v11914
  %s11943 = scalar_lea.vmem %s3, 1024
  %v11944 = vld [vmem:[%s11943] sm:$0xff]
  %v11945 = vld [vmem:[%s11943 + $0x8] sm:$0xff]
  %v11946 = vld [vmem:[%s11943 + $0x10] sm:$0xff]
  %v11947 = vld [vmem:[%s11943 + $0x18] sm:$0xff]
  %v11948 = vld [vmem:[%s11943 + $0x20] sm:$0xff]
  %v11949 = vld [vmem:[%s11943 + $0x28] sm:$0xff]
  %v11950 = vld [vmem:[%s11943 + $0x30] sm:$0xff]
  %v11951 = vld [vmem:[%s11943 + $0x38] sm:$0xff]
  %v11952 = vld [vmem:[%s11943 + $0x40] sm:$0xff]
  %v11953 = vld [vmem:[%s11943 + $0x48] sm:$0xff]
  %v11954 = vld [vmem:[%s11943 + $0x50] sm:$0xff]
  %v11955 = vld [vmem:[%s11943 + $0x58] sm:$0xff]
  %v11956 = vld [vmem:[%s11943 + $0x60] sm:$0xff]
  %v11957 = vld [vmem:[%s11943 + $0x68] sm:$0xff]
  %v11958 = vld [vmem:[%s11943 + $0x70] sm:$0xff]
  %v11959 = vld [vmem:[%s11943 + $0x78] sm:$0xff]
  %v11960 = vld [vmem:[%s11943 + $0x80] sm:$0xff]
  %v11961 = vld [vmem:[%s11943 + $0x88] sm:$0xff]
  %v11962 = vld [vmem:[%s11943 + $0x90] sm:$0xff]
  %v11963 = vld [vmem:[%s11943 + $0x98] sm:$0xff]
  %v11964 = vld [vmem:[%s11943 + $0xa0] sm:$0xff]
  %v11965 = vld [vmem:[%s11943 + $0xa8] sm:$0xff]
  %v11966 = vld [vmem:[%s11943 + $0xb0] sm:$0xff]
  %v11967 = vld [vmem:[%s11943 + $0xb8] sm:$0xff]
  %v11968 = vld [vmem:[%s11943 + $0xc0] sm:$0xff]
  %v11969 = vld [vmem:[%s11943 + $0xc8] sm:$0xff]
  %v11970 = vld [vmem:[%s11943 + $0xd0] sm:$0xff]
  %v11971 = vld [vmem:[%s11943 + $0xd8] sm:$0xff]
  %v11972 = vld [vmem:[%s11943 + $0xe0] sm:$0xff]
  %v11973 = vld [vmem:[%s11943 + $0xe8] sm:$0xff]
  %v11974 = vld [vmem:[%s11943 + $0xf0] sm:$0xff]
  %v11975 = vld [vmem:[%s11943 + $0xf8] sm:$0xff]
  %v11976 = vld [vmem:[%s11943 + $0x100] sm:$0xff]
  %v11977 = vld [vmem:[%s11943 + $0x108] sm:$0xff]
  %v11978 = vld [vmem:[%s11943 + $0x110] sm:$0xff]
  %v11979 = vld [vmem:[%s11943 + $0x118] sm:$0xff]
  %v11980 = vld [vmem:[%s11943 + $0x120] sm:$0xff]
  %v11981 = vld [vmem:[%s11943 + $0x128] sm:$0xff]
  %v11982 = vld [vmem:[%s11943 + $0x130] sm:$0xff]
  %v11983 = vld [vmem:[%s11943 + $0x138] sm:$0xff]
  %v11984 = vld [vmem:[%s11943 + $0x140] sm:$0xff]
  %v11985 = vld [vmem:[%s11943 + $0x148] sm:$0xff]
  %v11986 = vld [vmem:[%s11943 + $0x150] sm:$0xff]
  %v11987 = vld [vmem:[%s11943 + $0x158] sm:$0xff]
  %v11988 = vld [vmem:[%s11943 + $0x160] sm:$0xff]
  %v11989 = vld [vmem:[%s11943 + $0x168] sm:$0xff]
  %v11990 = vld [vmem:[%s11943 + $0x170] sm:$0xff]
  %v11991 = vld [vmem:[%s11943 + $0x178] sm:$0xff]
  %v11992 = vld [vmem:[%s11943 + $0x180] sm:$0xff]
  %v11993 = vld [vmem:[%s11943 + $0x188] sm:$0xff]
  %v11994 = vld [vmem:[%s11943 + $0x190] sm:$0xff]
  %v11995 = vld [vmem:[%s11943 + $0x198] sm:$0xff]
  %v11996 = vld [vmem:[%s11943 + $0x1a0] sm:$0xff]
  %v11997 = vld [vmem:[%s11943 + $0x1a8] sm:$0xff]
  %v11998 = vld [vmem:[%s11943 + $0x1b0] sm:$0xff]
  %v11999 = vld [vmem:[%s11943 + $0x1b8] sm:$0xff]
  %v12000 = vld [vmem:[%s11943 + $0x1c0] sm:$0xff]
  %v12001 = vld [vmem:[%s11943 + $0x1c8] sm:$0xff]
  %v12002 = vld [vmem:[%s11943 + $0x1d0] sm:$0xff]
  %v12003 = vld [vmem:[%s11943 + $0x1d8] sm:$0xff]
  %v12004 = vld [vmem:[%s11943 + $0x1e0] sm:$0xff]
  %v12005 = vld [vmem:[%s11943 + $0x1e8] sm:$0xff]
  %v12006 = vld [vmem:[%s11943 + $0x1f0] sm:$0xff]
  %v12007 = vld [vmem:[%s11943 + $0x1f8] sm:$0xff]
  %v12072 = vunpack.c.l.b16 %v11944
  %v12073 = vunpack.c.h.b16 %v11944
  %v12074 = vunpack.c.l.b16 %v11945
  %v12075 = vunpack.c.h.b16 %v11945
  %v12076 = vunpack.c.l.b16 %v11946
  %v12077 = vunpack.c.h.b16 %v11946
  %v12078 = vunpack.c.l.b16 %v11947
  %v12079 = vunpack.c.h.b16 %v11947
  %v12080 = vunpack.c.l.b16 %v11948
  %v12081 = vunpack.c.h.b16 %v11948
  %v12082 = vunpack.c.l.b16 %v11949
  %v12083 = vunpack.c.h.b16 %v11949
  %v12084 = vunpack.c.l.b16 %v11950
  %v12085 = vunpack.c.h.b16 %v11950
  %v12086 = vunpack.c.l.b16 %v11951
  %v12087 = vunpack.c.h.b16 %v11951
  %v12088 = vunpack.c.l.b16 %v11952
  %v12089 = vunpack.c.h.b16 %v11952
  %v12090 = vunpack.c.l.b16 %v11953
  %v12091 = vunpack.c.h.b16 %v11953
  %v12092 = vunpack.c.l.b16 %v11954
  %v12093 = vunpack.c.h.b16 %v11954
  %v12094 = vunpack.c.l.b16 %v11955
  %v12095 = vunpack.c.h.b16 %v11955
  %v12096 = vunpack.c.l.b16 %v11956
  %v12097 = vunpack.c.h.b16 %v11956
  %v12098 = vunpack.c.l.b16 %v11957
  %v12099 = vunpack.c.h.b16 %v11957
  %v12100 = vunpack.c.l.b16 %v11958
  %v12101 = vunpack.c.h.b16 %v11958
  %v12102 = vunpack.c.l.b16 %v11959
  %v12103 = vunpack.c.h.b16 %v11959
  %v12104 = vunpack.c.l.b16 %v11960
  %v12105 = vunpack.c.h.b16 %v11960
  %v12106 = vunpack.c.l.b16 %v11961
  %v12107 = vunpack.c.h.b16 %v11961
  %v12108 = vunpack.c.l.b16 %v11962
  %v12109 = vunpack.c.h.b16 %v11962
  %v12110 = vunpack.c.l.b16 %v11963
  %v12111 = vunpack.c.h.b16 %v11963
  %v12112 = vunpack.c.l.b16 %v11964
  %v12113 = vunpack.c.h.b16 %v11964
  %v12114 = vunpack.c.l.b16 %v11965
  %v12115 = vunpack.c.h.b16 %v11965
  %v12116 = vunpack.c.l.b16 %v11966
  %v12117 = vunpack.c.h.b16 %v11966
  %v12118 = vunpack.c.l.b16 %v11967
  %v12119 = vunpack.c.h.b16 %v11967
  %v12120 = vunpack.c.l.b16 %v11968
  %v12121 = vunpack.c.h.b16 %v11968
  %v12122 = vunpack.c.l.b16 %v11969
  %v12123 = vunpack.c.h.b16 %v11969
  %v12124 = vunpack.c.l.b16 %v11970
  %v12125 = vunpack.c.h.b16 %v11970
  %v12126 = vunpack.c.l.b16 %v11971
  %v12127 = vunpack.c.h.b16 %v11971
  %v12128 = vunpack.c.l.b16 %v11972
  %v12129 = vunpack.c.h.b16 %v11972
  %v12130 = vunpack.c.l.b16 %v11973
  %v12131 = vunpack.c.h.b16 %v11973
  %v12132 = vunpack.c.l.b16 %v11974
  %v12133 = vunpack.c.h.b16 %v11974
  %v12134 = vunpack.c.l.b16 %v11975
  %v12135 = vunpack.c.h.b16 %v11975
  %v12136 = vunpack.c.l.b16 %v11976
  %v12137 = vunpack.c.h.b16 %v11976
  %v12138 = vunpack.c.l.b16 %v11977
  %v12139 = vunpack.c.h.b16 %v11977
  %v12140 = vunpack.c.l.b16 %v11978
  %v12141 = vunpack.c.h.b16 %v11978
  %v12142 = vunpack.c.l.b16 %v11979
  %v12143 = vunpack.c.h.b16 %v11979
  %v12144 = vunpack.c.l.b16 %v11980
  %v12145 = vunpack.c.h.b16 %v11980
  %v12146 = vunpack.c.l.b16 %v11981
  %v12147 = vunpack.c.h.b16 %v11981
  %v12148 = vunpack.c.l.b16 %v11982
  %v12149 = vunpack.c.h.b16 %v11982
  %v12150 = vunpack.c.l.b16 %v11983
  %v12151 = vunpack.c.h.b16 %v11983
  %v12152 = vunpack.c.l.b16 %v11984
  %v12153 = vunpack.c.h.b16 %v11984
  %v12154 = vunpack.c.l.b16 %v11985
  %v12155 = vunpack.c.h.b16 %v11985
  %v12156 = vunpack.c.l.b16 %v11986
  %v12157 = vunpack.c.h.b16 %v11986
  %v12158 = vunpack.c.l.b16 %v11987
  %v12159 = vunpack.c.h.b16 %v11987
  %v12160 = vunpack.c.l.b16 %v11988
  %v12161 = vunpack.c.h.b16 %v11988
  %v12162 = vunpack.c.l.b16 %v11989
  %v12163 = vunpack.c.h.b16 %v11989
  %v12164 = vunpack.c.l.b16 %v11990
  %v12165 = vunpack.c.h.b16 %v11990
  %v12166 = vunpack.c.l.b16 %v11991
  %v12167 = vunpack.c.h.b16 %v11991
  %v12168 = vunpack.c.l.b16 %v11992
  %v12169 = vunpack.c.h.b16 %v11992
  %v12170 = vunpack.c.l.b16 %v11993
  %v12171 = vunpack.c.h.b16 %v11993
  %v12172 = vunpack.c.l.b16 %v11994
  %v12173 = vunpack.c.h.b16 %v11994
  %v12174 = vunpack.c.l.b16 %v11995
  %v12175 = vunpack.c.h.b16 %v11995
  %v12176 = vunpack.c.l.b16 %v11996
  %v12177 = vunpack.c.h.b16 %v11996
  %v12178 = vunpack.c.l.b16 %v11997
  %v12179 = vunpack.c.h.b16 %v11997
  %v12180 = vunpack.c.l.b16 %v11998
  %v12181 = vunpack.c.h.b16 %v11998
  %v12182 = vunpack.c.l.b16 %v11999
  %v12183 = vunpack.c.h.b16 %v11999
  %v12184 = vunpack.c.l.b16 %v12000
  %v12185 = vunpack.c.h.b16 %v12000
  %v12186 = vunpack.c.l.b16 %v12001
  %v12187 = vunpack.c.h.b16 %v12001
  %v12188 = vunpack.c.l.b16 %v12002
  %v12189 = vunpack.c.h.b16 %v12002
  %v12190 = vunpack.c.l.b16 %v12003
  %v12191 = vunpack.c.h.b16 %v12003
  %v12192 = vunpack.c.l.b16 %v12004
  %v12193 = vunpack.c.h.b16 %v12004
  %v12194 = vunpack.c.l.b16 %v12005
  %v12195 = vunpack.c.h.b16 %v12005
  %v12196 = vunpack.c.l.b16 %v12006
  %v12197 = vunpack.c.h.b16 %v12006
  %v12198 = vunpack.c.l.b16 %v12007
  %v12199 = vunpack.c.h.b16 %v12007
  %v12200 = vpack.c.b16 %v12076, %v12072
  %v12201 = vpack.c.b16 %v12077, %v12073
  %v12202 = vpack.c.b16 %v12078, %v12074
  %v12203 = vpack.c.b16 %v12079, %v12075
  %v12204 = vpack.c.b16 %v12084, %v12080
  %v12205 = vpack.c.b16 %v12085, %v12081
  %v12206 = vpack.c.b16 %v12086, %v12082
  %v12207 = vpack.c.b16 %v12087, %v12083
  %v12208 = vpack.c.b16 %v12092, %v12088
  %v12209 = vpack.c.b16 %v12093, %v12089
  %v12210 = vpack.c.b16 %v12094, %v12090
  %v12211 = vpack.c.b16 %v12095, %v12091
  %v12212 = vpack.c.b16 %v12100, %v12096
  %v12213 = vpack.c.b16 %v12101, %v12097
  %v12214 = vpack.c.b16 %v12102, %v12098
  %v12215 = vpack.c.b16 %v12103, %v12099
  %v12216 = vpack.c.b16 %v12108, %v12104
  %v12217 = vpack.c.b16 %v12109, %v12105
  %v12218 = vpack.c.b16 %v12110, %v12106
  %v12219 = vpack.c.b16 %v12111, %v12107
  %v12220 = vpack.c.b16 %v12116, %v12112
  %v12221 = vpack.c.b16 %v12117, %v12113
  %v12222 = vpack.c.b16 %v12118, %v12114
  %v12223 = vpack.c.b16 %v12119, %v12115
  %v12224 = vpack.c.b16 %v12124, %v12120
  %v12225 = vpack.c.b16 %v12125, %v12121
  %v12226 = vpack.c.b16 %v12126, %v12122
  %v12227 = vpack.c.b16 %v12127, %v12123
  %v12228 = vpack.c.b16 %v12132, %v12128
  %v12229 = vpack.c.b16 %v12133, %v12129
  %v12230 = vpack.c.b16 %v12134, %v12130
  %v12231 = vpack.c.b16 %v12135, %v12131
  %v12232 = vpack.c.b16 %v12140, %v12136
  %v12233 = vpack.c.b16 %v12141, %v12137
  %v12234 = vpack.c.b16 %v12142, %v12138
  %v12235 = vpack.c.b16 %v12143, %v12139
  %v12236 = vpack.c.b16 %v12148, %v12144
  %v12237 = vpack.c.b16 %v12149, %v12145
  %v12238 = vpack.c.b16 %v12150, %v12146
  %v12239 = vpack.c.b16 %v12151, %v12147
  %v12240 = vpack.c.b16 %v12156, %v12152
  %v12241 = vpack.c.b16 %v12157, %v12153
  %v12242 = vpack.c.b16 %v12158, %v12154
  %v12243 = vpack.c.b16 %v12159, %v12155
  %v12244 = vpack.c.b16 %v12164, %v12160
  %v12245 = vpack.c.b16 %v12165, %v12161
  %v12246 = vpack.c.b16 %v12166, %v12162
  %v12247 = vpack.c.b16 %v12167, %v12163
  %v12248 = vpack.c.b16 %v12172, %v12168
  %v12249 = vpack.c.b16 %v12173, %v12169
  %v12250 = vpack.c.b16 %v12174, %v12170
  %v12251 = vpack.c.b16 %v12175, %v12171
  %v12252 = vpack.c.b16 %v12180, %v12176
  %v12253 = vpack.c.b16 %v12181, %v12177
  %v12254 = vpack.c.b16 %v12182, %v12178
  %v12255 = vpack.c.b16 %v12183, %v12179
  %v12256 = vpack.c.b16 %v12188, %v12184
  %v12257 = vpack.c.b16 %v12189, %v12185
  %v12258 = vpack.c.b16 %v12190, %v12186
  %v12259 = vpack.c.b16 %v12191, %v12187
  %v12260 = vpack.c.b16 %v12196, %v12192
  %v12261 = vpack.c.b16 %v12197, %v12193
  %v12262 = vpack.c.b16 %v12198, %v12194
  %v12263 = vpack.c.b16 %v12199, %v12195
  %v12313 = vsel %vm10479, %v12203, 0
  %v12316 = vsel %vm10479, %v12207, 0
  %v12319 = vsel %vm10479, %v12211, 0
  %v12322 = vsel %vm10479, %v12215, 0
  %v12325 = vsel %vm10479, %v12219, 0
  %v12328 = vsel %vm10479, %v12223, 0
  %v12331 = vsel %vm10479, %v12227, 0
  %v12334 = vsel %vm10479, %v12231, 0
  %v12337 = vsel %vm10479, %v12235, 0
  %v12340 = vsel %vm10479, %v12239, 0
  %v12343 = vsel %vm10479, %v12243, 0
  %v12346 = vsel %vm10479, %v12247, 0
  %v12349 = vsel %vm10479, %v12251, 0
  %v12352 = vsel %vm10479, %v12255, 0
  %v12355 = vsel %vm10479, %v12259, 0
  %v12358 = vsel %vm10479, %v12263, 0
  %12360 = vmatprep.subr.bf16.mxu0 0
  %12361 = vmatpush1.bf16.msra.mxu0 %v11916
  %12362 = vmatprep.subr.bf16.mxu0 0
  %12363 = vmatpush1.bf16.msra.mxu0 %v11917
  %12364 = vmatprep.subr.bf16.mxu0 0
  %12365 = vmatpush1.bf16.msra.mxu0 %v11918
  %12366 = vmatprep.subr.bf16.mxu0 0
  %12367 = vmatpush1.bf16.msra.mxu0 %v11919
  %12368 = vmatprep.subr.bf16.mxu0 0
  %12369 = vmatpush1.bf16.msra.mxu0 %v11920
  %12370 = vmatprep.subr.bf16.mxu0 0
  %12371 = vmatpush1.bf16.msra.mxu0 %v11921
  %12372 = vmatprep.subr.bf16.mxu0 0
  %12373 = vmatpush1.bf16.msra.mxu0 %v11922
  %12374 = vmatprep.subr.bf16.mxu0 0
  %12375 = vmatpush1.bf16.msra.mxu0 %v11923
  %12376 = vmatprep.subr.bf16.mxu0 0
  %12377 = vmatpush1.bf16.msra.mxu0 %v11924
  %12378 = vmatprep.subr.bf16.mxu0 0
  %12379 = vmatpush1.bf16.msra.mxu0 %v11925
  %12380 = vmatprep.subr.bf16.mxu0 0
  %12381 = vmatpush1.bf16.msra.mxu0 %v11926
  %12382 = vmatprep.subr.bf16.mxu0 0
  %12383 = vmatpush1.bf16.msra.mxu0 %v11927
  %12384 = vmatprep.subr.bf16.mxu0 0
  %12385 = vmatpush1.bf16.msra.mxu0 %v11928
  %12386 = vmatprep.subr.bf16.mxu0 0
  %12387 = vmatpush1.bf16.msra.mxu0 %v11929
  %12388 = vmatprep.subr.bf16.mxu0 0
  %12389 = vmatpush1.bf16.msra.mxu0 %v11930
  %12390 = vmatprep.subr.bf16.mxu0 0
  %12391 = vmatpush1.bf16.msra.mxu0 %v11931
  %12392 = vmatprep.mubr.bf16.mxu0 %v12201
  %12393 = vmatmul.mubr.bf16.gmra.mrb[0].mxu0 %v12200
  %v12394 = vpop.f32.mrb[0].mxu0
  %v12395 = vadd.f32 0.0, %v12394
  %v12396 = vpop.f32.mrb[0].mxu0
  %v12397 = vpop.f32.mrb[0].mxu0
  %v12398 = vadd.f32 0.0, %v12397
  %v12399 = vpop.f32.mrb[0].mxu0
  %12400 = vmatprep.mubr.bf16.mxu0 %v12205
  %12401 = vmatmul.mubr.bf16.gmra.mrb[0].mxu0 %v12204
  %v12402 = vpop.f32.mrb[0].mxu0
  %v12403 = vadd.f32 0.0, %v12402
  %v12404 = vpop.f32.mrb[0].mxu0
  %v12405 = vpop.f32.mrb[0].mxu0
  %v12406 = vadd.f32 0.0, %v12405
  %v12407 = vpop.f32.mrb[0].mxu0
  %12408 = vmatprep.mubr.bf16.mxu0 %v12209
  %12409 = vmatmul.mubr.bf16.gmra.mrb[0].mxu0 %v12208
  %v12410 = vpop.f32.mrb[0].mxu0
  %v12411 = vadd.f32 0.0, %v12410
  %v12412 = vpop.f32.mrb[0].mxu0
  %v12413 = vpop.f32.mrb[0].mxu0
  %v12414 = vadd.f32 0.0, %v12413
  %v12415 = vpop.f32.mrb[0].mxu0
  %12416 = vmatprep.mubr.bf16.mxu0 %v12213
  %12417 = vmatmul.mubr.bf16.gmra.mrb[0].mxu0 %v12212
  %v12418 = vpop.f32.mrb[0].mxu0
  %v12419 = vadd.f32 0.0, %v12418
  %v12420 = vpop.f32.mrb[0].mxu0
  %v12421 = vpop.f32.mrb[0].mxu0
  %v12422 = vadd.f32 0.0, %v12421
  %v12423 = vpop.f32.mrb[0].mxu0
  %12424 = vmatprep.mubr.bf16.mxu0 %v12217
  %12425 = vmatmul.mubr.bf16.gmra.mrb[0].mxu0 %v12216
  %v12426 = vpop.f32.mrb[0].mxu0
  %v12427 = vadd.f32 0.0, %v12426
  %v12428 = vpop.f32.mrb[0].mxu0
  %v12429 = vpop.f32.mrb[0].mxu0
  %v12430 = vadd.f32 0.0, %v12429
  %v12431 = vpop.f32.mrb[0].mxu0
  %12432 = vmatprep.mubr.bf16.mxu0 %v12221
  %12433 = vmatmul.mubr.bf16.gmra.mrb[0].mxu0 %v12220
  %v12434 = vpop.f32.mrb[0].mxu0
  %v12435 = vadd.f32 0.0, %v12434
  %v12436 = vpop.f32.mrb[0].mxu0
  %v12437 = vpop.f32.mrb[0].mxu0
  %v12438 = vadd.f32 0.0, %v12437
  %v12439 = vpop.f32.mrb[0].mxu0
  %12440 = vmatprep.mubr.bf16.mxu0 %v12225
  %12441 = vmatmul.mubr.bf16.gmra.mrb[0].mxu0 %v12224
  %v12442 = vpop.f32.mrb[0].mxu0
  %v12443 = vadd.f32 0.0, %v12442
  %v12444 = vpop.f32.mrb[0].mxu0
  %v12445 = vpop.f32.mrb[0].mxu0
  %v12446 = vadd.f32 0.0, %v12445
  %v12447 = vpop.f32.mrb[0].mxu0
  %12448 = vmatprep.mubr.bf16.mxu0 %v12229
  %12449 = vmatmul.mubr.bf16.gmra.mrb[0].mxu0 %v12228
  %v12450 = vpop.f32.mrb[0].mxu0
  %v12451 = vadd.f32 0.0, %v12450
  %v12452 = vpop.f32.mrb[0].mxu0
  %v12453 = vpop.f32.mrb[0].mxu0
  %v12454 = vadd.f32 0.0, %v12453
  %v12455 = vpop.f32.mrb[0].mxu0
  %12456 = vmatprep.mubr.bf16.mxu0 %v12233
  %12457 = vmatmul.mubr.bf16.gmra.mrb[0].mxu0 %v12232
  %v12458 = vpop.f32.mrb[0].mxu0
  %v12459 = vadd.f32 0.0, %v12458
  %v12460 = vpop.f32.mrb[0].mxu0
  %v12461 = vpop.f32.mrb[0].mxu0
  %v12462 = vadd.f32 0.0, %v12461
  %v12463 = vpop.f32.mrb[0].mxu0
  %12464 = vmatprep.mubr.bf16.mxu0 %v12237
  %12465 = vmatmul.mubr.bf16.gmra.mrb[0].mxu0 %v12236
  %v12466 = vpop.f32.mrb[0].mxu0
  %v12467 = vadd.f32 0.0, %v12466
  %v12468 = vpop.f32.mrb[0].mxu0
  %v12469 = vpop.f32.mrb[0].mxu0
  %v12470 = vadd.f32 0.0, %v12469
  %v12471 = vpop.f32.mrb[0].mxu0
  %12472 = vmatprep.mubr.bf16.mxu0 %v12241
  %12473 = vmatmul.mubr.bf16.gmra.mrb[0].mxu0 %v12240
  %v12474 = vpop.f32.mrb[0].mxu0
  %v12475 = vadd.f32 0.0, %v12474
  %v12476 = vpop.f32.mrb[0].mxu0
  %v12477 = vpop.f32.mrb[0].mxu0
  %v12478 = vadd.f32 0.0, %v12477
  %v12479 = vpop.f32.mrb[0].mxu0
  %12480 = vmatprep.mubr.bf16.mxu0 %v12245
  %12481 = vmatmul.mubr.bf16.gmra.mrb[0].mxu0 %v12244
  %v12482 = vpop.f32.mrb[0].mxu0
  %v12483 = vadd.f32 0.0, %v12482
  %v12484 = vpop.f32.mrb[0].mxu0
  %v12485 = vpop.f32.mrb[0].mxu0
  %v12486 = vadd.f32 0.0, %v12485
  %v12487 = vpop.f32.mrb[0].mxu0
  %12488 = vmatprep.mubr.bf16.mxu0 %v12249
  %12489 = vmatmul.mubr.bf16.gmra.mrb[0].mxu0 %v12248
  %v12490 = vpop.f32.mrb[0].mxu0
  %v12491 = vadd.f32 0.0, %v12490
  %v12492 = vpop.f32.mrb[0].mxu0
  %v12493 = vpop.f32.mrb[0].mxu0
  %v12494 = vadd.f32 0.0, %v12493
  %v12495 = vpop.f32.mrb[0].mxu0
  %12496 = vmatprep.mubr.bf16.mxu0 %v12253
  %12497 = vmatmul.mubr.bf16.gmra.mrb[0].mxu0 %v12252
  %v12498 = vpop.f32.mrb[0].mxu0
  %v12499 = vadd.f32 0.0, %v12498
  %v12500 = vpop.f32.mrb[0].mxu0
  %v12501 = vpop.f32.mrb[0].mxu0
  %v12502 = vadd.f32 0.0, %v12501
  %v12503 = vpop.f32.mrb[0].mxu0
  %12504 = vmatprep.mubr.bf16.mxu0 %v12257
  %12505 = vmatmul.mubr.bf16.gmra.mrb[0].mxu0 %v12256
  %v12506 = vpop.f32.mrb[0].mxu0
  %v12507 = vadd.f32 0.0, %v12506
  %v12508 = vpop.f32.mrb[0].mxu0
  %v12509 = vpop.f32.mrb[0].mxu0
  %v12510 = vadd.f32 0.0, %v12509
  %v12511 = vpop.f32.mrb[0].mxu0
  %12512 = vmatprep.mubr.bf16.mxu0 %v12261
  %12513 = vmatmul.mubr.bf16.gmra.mrb[0].mxu0 %v12260
  %v12514 = vpop.f32.mrb[0].mxu0
  %v12515 = vadd.f32 0.0, %v12514
  %v12516 = vpop.f32.mrb[0].mxu0
  %v12517 = vpop.f32.mrb[0].mxu0
  %v12518 = vadd.f32 0.0, %v12517
  %v12519 = vpop.f32.mrb[0].mxu0
  %12520 = vdwg.mxu0
  %12521 = vmatprep.subr.bf16.mxu0 0
  %12522 = vmatpush1.bf16.msra.mxu0 %v11932
  %12523 = vmatprep.subr.bf16.mxu0 0
  %12524 = vmatpush1.bf16.msra.mxu0 %v11933
  %12525 = vmatprep.subr.bf16.mxu0 0
  %12526 = vmatpush1.bf16.msra.mxu0 %v11934
  %12527 = vmatprep.subr.bf16.mxu0 0
  %12528 = vmatpush1.bf16.msra.mxu0 %v11935
  %12529 = vmatprep.subr.bf16.mxu0 0
  %12530 = vmatpush1.bf16.msra.mxu0 %v11936
  %12531 = vmatprep.subr.bf16.mxu0 0
  %12532 = vmatpush1.bf16.msra.mxu0 %v11937
  %12533 = vmatprep.subr.bf16.mxu0 0
  %12534 = vmatpush1.bf16.msra.mxu0 %v11938
  %12535 = vmatprep.subr.bf16.mxu0 0
  %12536 = vmatpush1.bf16.msra.mxu0 %v11939
  %12537 = vmatprep.subr.bf16.mxu0 0
  %12538 = vmatpush1.bf16.msra.mxu0 %v11940
  %12539 = vmatprep.subr.bf16.mxu0 0
  %12540 = vmatpush1.bf16.msra.mxu0 %v11941
  %12541 = vmatprep.subr.bf16.mxu0 0
  %12542 = vmatpush1.bf16.msra.mxu0 %v11942
  %12543 = vmatprep.subr.bf16.mxu0 0
  %12544 = vmatpush1.bf16.msra.mxu0 0
  %12545 = vmatprep.subr.bf16.mxu0 0
  %12546 = vmatpush1.bf16.msra.mxu0 0
  %12547 = vmatprep.subr.bf16.mxu0 0
  %12548 = vmatpush1.bf16.msra.mxu0 0
  %12549 = vmatprep.subr.bf16.mxu0 0
  %12550 = vmatpush1.bf16.msra.mxu0 0
  %12551 = vmatprep.subr.bf16.mxu0 0
  %12552 = vmatpush1.bf16.msra.mxu0 0
  %12553 = vmatprep.mubr.bf16.mxu0 %v12313
  %12554 = vmatmul.mubr.bf16.gmra.mrb[0].mxu0 %v12202
  %v12555 = vpop.f32.mrb[0].mxu0
  %v12556 = vadd.f32 %v12395, %v12555
  %v12557 = vpop.f32.mrb[0].mxu0
  %v12558 = vpop.f32.mrb[0].mxu0
  %v12559 = vadd.f32 %v12398, %v12558
  %v12560 = vpop.f32.mrb[0].mxu0
  %12561 = vmatprep.mubr.bf16.mxu0 %v12316
  %12562 = vmatmul.mubr.bf16.gmra.mrb[0].mxu0 %v12206
  %v12563 = vpop.f32.mrb[0].mxu0
  %v12564 = vadd.f32 %v12403, %v12563
  %v12565 = vpop.f32.mrb[0].mxu0
  %v12566 = vpop.f32.mrb[0].mxu0
  %v12567 = vadd.f32 %v12406, %v12566
  %v12568 = vpop.f32.mrb[0].mxu0
  %12569 = vmatprep.mubr.bf16.mxu0 %v12319
  %12570 = vmatmul.mubr.bf16.gmra.mrb[0].mxu0 %v12210
  %v12571 = vpop.f32.mrb[0].mxu0
  %v12572 = vadd.f32 %v12411, %v12571
  %v12573 = vpop.f32.mrb[0].mxu0
  %v12574 = vpop.f32.mrb[0].mxu0
  %v12575 = vadd.f32 %v12414, %v12574
  %v12576 = vpop.f32.mrb[0].mxu0
  %12577 = vmatprep.mubr.bf16.mxu0 %v12322
  %12578 = vmatmul.mubr.bf16.gmra.mrb[0].mxu0 %v12214
  %v12579 = vpop.f32.mrb[0].mxu0
  %v12580 = vadd.f32 %v12419, %v12579
  %v12581 = vpop.f32.mrb[0].mxu0
  %v12582 = vpop.f32.mrb[0].mxu0
  %v12583 = vadd.f32 %v12422, %v12582
  %v12584 = vpop.f32.mrb[0].mxu0
  %12585 = vmatprep.mubr.bf16.mxu0 %v12325
  %12586 = vmatmul.mubr.bf16.gmra.mrb[0].mxu0 %v12218
  %v12587 = vpop.f32.mrb[0].mxu0
  %v12588 = vadd.f32 %v12427, %v12587
  %v12589 = vpop.f32.mrb[0].mxu0
  %v12590 = vpop.f32.mrb[0].mxu0
  %v12591 = vadd.f32 %v12430, %v12590
  %v12592 = vpop.f32.mrb[0].mxu0
  %12593 = vmatprep.mubr.bf16.mxu0 %v12328
  %12594 = vmatmul.mubr.bf16.gmra.mrb[0].mxu0 %v12222
  %v12595 = vpop.f32.mrb[0].mxu0
  %v12596 = vadd.f32 %v12435, %v12595
  %v12597 = vpop.f32.mrb[0].mxu0
  %v12598 = vpop.f32.mrb[0].mxu0
  %v12599 = vadd.f32 %v12438, %v12598
  %v12600 = vpop.f32.mrb[0].mxu0
  %12601 = vmatprep.mubr.bf16.mxu0 %v12331
  %12602 = vmatmul.mubr.bf16.gmra.mrb[0].mxu0 %v12226
  %v12603 = vpop.f32.mrb[0].mxu0
  %v12604 = vadd.f32 %v12443, %v12603
  %v12605 = vpop.f32.mrb[0].mxu0
  %v12606 = vpop.f32.mrb[0].mxu0
  %v12607 = vadd.f32 %v12446, %v12606
  %v12608 = vpop.f32.mrb[0].mxu0
  %12609 = vmatprep.mubr.bf16.mxu0 %v12334
  %12610 = vmatmul.mubr.bf16.gmra.mrb[0].mxu0 %v12230
  %v12611 = vpop.f32.mrb[0].mxu0
  %v12612 = vadd.f32 %v12451, %v12611
  %v12613 = vpop.f32.mrb[0].mxu0
  %v12614 = vpop.f32.mrb[0].mxu0
  %v12615 = vadd.f32 %v12454, %v12614
  %v12616 = vpop.f32.mrb[0].mxu0
  %12617 = vmatprep.mubr.bf16.mxu0 %v12337
  %12618 = vmatmul.mubr.bf16.gmra.mrb[0].mxu0 %v12234
  %v12619 = vpop.f32.mrb[0].mxu0
  %v12620 = vadd.f32 %v12459, %v12619
  %v12621 = vpop.f32.mrb[0].mxu0
  %v12622 = vpop.f32.mrb[0].mxu0
  %v12623 = vadd.f32 %v12462, %v12622
  %v12624 = vpop.f32.mrb[0].mxu0
  %12625 = vmatprep.mubr.bf16.mxu0 %v12340
  %12626 = vmatmul.mubr.bf16.gmra.mrb[0].mxu0 %v12238
  %v12627 = vpop.f32.mrb[0].mxu0
  %v12628 = vadd.f32 %v12467, %v12627
  %v12629 = vpop.f32.mrb[0].mxu0
  %v12630 = vpop.f32.mrb[0].mxu0
  %v12631 = vadd.f32 %v12470, %v12630
  %v12632 = vpop.f32.mrb[0].mxu0
  %12633 = vmatprep.mubr.bf16.mxu0 %v12343
  %12634 = vmatmul.mubr.bf16.gmra.mrb[0].mxu0 %v12242
  %v12635 = vpop.f32.mrb[0].mxu0
  %v12636 = vadd.f32 %v12475, %v12635
  %v12637 = vpop.f32.mrb[0].mxu0
  %v12638 = vpop.f32.mrb[0].mxu0
  %v12639 = vadd.f32 %v12478, %v12638
  %v12640 = vpop.f32.mrb[0].mxu0
  %12641 = vmatprep.mubr.bf16.mxu0 %v12346
  %12642 = vmatmul.mubr.bf16.gmra.mrb[0].mxu0 %v12246
  %v12643 = vpop.f32.mrb[0].mxu0
  %v12644 = vadd.f32 %v12483, %v12643
  %v12645 = vpop.f32.mrb[0].mxu0
  %v12646 = vpop.f32.mrb[0].mxu0
  %v12647 = vadd.f32 %v12486, %v12646
  %v12648 = vpop.f32.mrb[0].mxu0
  %12649 = vmatprep.mubr.bf16.mxu0 %v12349
  %12650 = vmatmul.mubr.bf16.gmra.mrb[0].mxu0 %v12250
  %v12651 = vpop.f32.mrb[0].mxu0
  %v12652 = vadd.f32 %v12491, %v12651
  %v12653 = vpop.f32.mrb[0].mxu0
  %v12654 = vpop.f32.mrb[0].mxu0
  %v12655 = vadd.f32 %v12494, %v12654
  %v12656 = vpop.f32.mrb[0].mxu0
  %12657 = vmatprep.mubr.bf16.mxu0 %v12352
  %12658 = vmatmul.mubr.bf16.gmra.mrb[0].mxu0 %v12254
  %v12659 = vpop.f32.mrb[0].mxu0
  %v12660 = vadd.f32 %v12499, %v12659
  %v12661 = vpop.f32.mrb[0].mxu0
  %v12662 = vpop.f32.mrb[0].mxu0
  %v12663 = vadd.f32 %v12502, %v12662
  %v12664 = vpop.f32.mrb[0].mxu0
  %12665 = vmatprep.mubr.bf16.mxu0 %v12355
  %12666 = vmatmul.mubr.bf16.gmra.mrb[0].mxu0 %v12258
  %v12667 = vpop.f32.mrb[0].mxu0
  %v12668 = vadd.f32 %v12507, %v12667
  %v12669 = vpop.f32.mrb[0].mxu0
  %v12670 = vpop.f32.mrb[0].mxu0
  %v12671 = vadd.f32 %v12510, %v12670
  %v12672 = vpop.f32.mrb[0].mxu0
  %12673 = vmatprep.mubr.bf16.mxu0 %v12358
  %12674 = vmatmul.mubr.bf16.gmra.mrb[0].mxu0 %v12262
  %v12675 = vpop.f32.mrb[0].mxu0
  %v12676 = vadd.f32 %v12515, %v12675
  %v12677 = vpop.f32.mrb[0].mxu0
  %v12678 = vpop.f32.mrb[0].mxu0
  %v12679 = vadd.f32 %v12518, %v12678
  %v12680 = vpop.f32.mrb[0].mxu0
  %12681 = vdwg.mxu0
  %v12682 = vmax.f32 %v12556, %v12588
  %v12683 = vmax.f32 %v12559, %v12591
  %v12684 = vmax.f32 %v12564, %v12596
  %v12685 = vmax.f32 %v12567, %v12599
  %v12686 = vmax.f32 %v12572, %v12604
  %v12687 = vmax.f32 %v12575, %v12607
  %v12688 = vmax.f32 %v12580, %v12612
  %v12689 = vmax.f32 %v12583, %v12615
  %v12690 = vmax.f32 %v12620, %v12652
  %v12691 = vmax.f32 %v12623, %v12655
  %v12692 = vmax.f32 %v12628, %v12660
  %v12693 = vmax.f32 %v12631, %v12663
  %v12694 = vmax.f32 %v12636, %v12668
  %v12695 = vmax.f32 %v12639, %v12671
  %v12696 = vmax.f32 %v12644, %v12676
  %v12697 = vmax.f32 %v12647, %v12679
  %v12698 = vmax.f32 %v12682, %v12690
  %v12699 = vmax.f32 %v12683, %v12691
  %v12700 = vmax.f32 %v12684, %v12692
  %v12701 = vmax.f32 %v12685, %v12693
  %v12702 = vmax.f32 %v12686, %v12694
  %v12703 = vmax.f32 %v12687, %v12695
  %v12704 = vmax.f32 %v12688, %v12696
  %v12705 = vmax.f32 %v12689, %v12697
  %v12706 = vld [vmem:[%s4 + $0x80] sm:$0xff]
  %v12707 = vld [vmem:[%s4 + $0x88] sm:$0xff]
  %v12708 = vld [vmem:[%s4 + $0x90] sm:$0xff]
  %v12709 = vld [vmem:[%s4 + $0x98] sm:$0xff]
  %v12710 = vld [vmem:[%s4 + $0xa0] sm:$0xff]
  %v12711 = vld [vmem:[%s4 + $0xa8] sm:$0xff]
  %v12712 = vld [vmem:[%s4 + $0xb0] sm:$0xff]
  %v12713 = vld [vmem:[%s4 + $0xb8] sm:$0xff]
  %12715 = vset.pattern.permute.xlu0 0
  %12716 = vperm.xlu0 %12715, %v12706
  %v12717 = vpop.permute.xlu0 %12716
  %12720 = vset.pattern.permute.xlu0 0
  %12721 = vperm.xlu0 %12720, %v12707
  %v12722 = vpop.permute.xlu0 %12721
  %12725 = vset.pattern.permute.xlu0 0
  %12726 = vperm.xlu0 %12725, %v12708
  %v12727 = vpop.permute.xlu0 %12726
  %12730 = vset.pattern.permute.xlu0 0
  %12731 = vperm.xlu0 %12730, %v12709
  %v12732 = vpop.permute.xlu0 %12731
  %12735 = vset.pattern.permute.xlu0 0
  %12736 = vperm.xlu0 %12735, %v12710
  %v12737 = vpop.permute.xlu0 %12736
  %12740 = vset.pattern.permute.xlu0 0
  %12741 = vperm.xlu0 %12740, %v12711
  %v12742 = vpop.permute.xlu0 %12741
  %12745 = vset.pattern.permute.xlu0 0
  %12746 = vperm.xlu0 %12745, %v12712
  %v12747 = vpop.permute.xlu0 %12746
  %12750 = vset.pattern.permute.xlu0 0
  %12751 = vperm.xlu0 %12750, %v12713
  %v12752 = vpop.permute.xlu0 %12751
  %v12754 = vadd.f32 %v12698, %v12717
  %v12755 = vadd.f32 %v12699, %v12722
  %v12756 = vadd.f32 %v12700, %v12727
  %v12757 = vadd.f32 %v12701, %v12732
  %v12758 = vadd.f32 %v12702, %v12737
  %v12759 = vadd.f32 %v12703, %v12742
  %v12760 = vadd.f32 %v12704, %v12747
  %v12761 = vadd.f32 %v12705, %v12752
  %v12762 = vmax.f32 %v12754, 0.0
  %v12763 = vmax.f32 %v12755, 0.0
  %v12764 = vmax.f32 %v12756, 0.0
  %v12765 = vmax.f32 %v12757, 0.0
  %v12766 = vmax.f32 %v12758, 0.0
  %v12767 = vmax.f32 %v12759, 0.0
  %v12768 = vmax.f32 %v12760, 0.0
  %v12769 = vmax.f32 %v12761, 0.0
  %12770 = vst [vmem:[#allocation3 + $0x80] sm:$0xff] %v12762
  %12771 = vst [vmem:[#allocation3 + $0x88] sm:$0xff] %v12763
  %12772 = vst [vmem:[#allocation3 + $0x90] sm:$0xff] %v12764
  %12773 = vst [vmem:[#allocation3 + $0x98] sm:$0xff] %v12765
  %12774 = vst [vmem:[#allocation3 + $0xa0] sm:$0xff] %v12766
  %12775 = vst [vmem:[#allocation3 + $0xa8] sm:$0xff] %v12767
  %12776 = vst [vmem:[#allocation3 + $0xb0] sm:$0xff] %v12768
  %12777 = vst [vmem:[#allocation3 + $0xb8] sm:$0xff] %v12769
  %v12778 = vld [vmem:[#allocation2 + $0x1b0] sm:$0xff]
  %v12779 = vld [vmem:[#allocation2 + $0x1b8] sm:$0xff]
  %v12780 = vld [vmem:[#allocation2 + $0x1c0] sm:$0xff]
  %v12781 = vld [vmem:[#allocation2 + $0x1c8] sm:$0xff]
  %v12782 = vld [vmem:[#allocation2 + $0x1d0] sm:$0xff]
  %v12783 = vld [vmem:[#allocation2 + $0x1d8] sm:$0xff]
  %v12784 = vld [vmem:[#allocation2 + $0x1e0] sm:$0xff]
  %v12785 = vld [vmem:[#allocation2 + $0x1e8] sm:$0xff]
  %v12786 = vld [vmem:[#allocation2 + $0x1f0] sm:$0xff]
  %v12787 = vld [vmem:[#allocation2 + $0x1f8] sm:$0xff]
  %v12788 = vld [vmem:[#allocation2 + $0x200] sm:$0xff]
  %v12789 = vld [vmem:[#allocation2 + $0x208] sm:$0xff]
  %v12790 = vld [vmem:[#allocation2 + $0x210] sm:$0xff]
  %v12791 = vld [vmem:[#allocation2 + $0x218] sm:$0xff]
  %v12792 = vld [vmem:[#allocation2 + $0x220] sm:$0xff]
  %v12793 = vld [vmem:[#allocation2 + $0x228] sm:$0xff]
  %v12794 = vld [vmem:[#allocation2 + $0x230] sm:$0xff]
  %v12795 = vld [vmem:[#allocation2 + $0x238] sm:$0xff]
  %v12796 = vld [vmem:[#allocation2 + $0x240] sm:$0xff]
  %v12797 = vld [vmem:[#allocation2 + $0x248] sm:$0xff]
  %v12798 = vld [vmem:[#allocation2 + $0x250] sm:$0xff]
  %v12799 = vld [vmem:[#allocation2 + $0x258] sm:$0xff]
  %v12800 = vld [vmem:[#allocation2 + $0x260] sm:$0xff]
  %v12801 = vld [vmem:[#allocation2 + $0x268] sm:$0xff]
  %v12802 = vld [vmem:[#allocation2 + $0x270] sm:$0xff]
  %v12803 = vld [vmem:[#allocation2 + $0x278] sm:$0xff]
  %v12804 = vld [vmem:[#allocation2 + $0x280] sm:$0xff]
  %v12805 = vld [vmem:[#allocation2 + $0x288] sm:$0xff]
  %v12806 = vld [vmem:[#allocation2 + $0x290] sm:$0xff]
  %v12807 = vld [vmem:[#allocation2 + $0x298] sm:$0xff]
  %v12808 = vld [vmem:[#allocation2 + $0x2a0] sm:$0xff]
  %v12809 = vld [vmem:[#allocation2 + $0x2a8] sm:$0xff]
  %v12810 = vld [vmem:[#allocation2 + $0x2b0] sm:$0xff]
  %v12811 = vld [vmem:[#allocation2 + $0x2b8] sm:$0xff]
  %v12812 = vld [vmem:[#allocation2 + $0x2c0] sm:$0xff]
  %v12813 = vld [vmem:[#allocation2 + $0x2c8] sm:$0xff]
  %v12814 = vld [vmem:[#allocation2 + $0x2d0] sm:$0xff]
  %v12815 = vld [vmem:[#allocation2 + $0x2d8] sm:$0xff]
  %v12816 = vld [vmem:[#allocation2 + $0x2e0] sm:$0xff]
  %v12817 = vld [vmem:[#allocation2 + $0x2e8] sm:$0xff]
  %v12818 = vld [vmem:[#allocation2 + $0x2f0] sm:$0xff]
  %v12819 = vld [vmem:[#allocation2 + $0x2f8] sm:$0xff]
  %v12820 = vld [vmem:[#allocation2 + $0x300] sm:$0xff]
  %v12821 = vld [vmem:[#allocation2 + $0x308] sm:$0xff]
  %v12822 = vld [vmem:[#allocation2 + $0x310] sm:$0xff]
  %v12823 = vld [vmem:[#allocation2 + $0x318] sm:$0xff]
  %v12824 = vld [vmem:[#allocation2 + $0x320] sm:$0xff]
  %v12825 = vld [vmem:[#allocation2 + $0x328] sm:$0xff]
  %v12826 = vld [vmem:[#allocation2 + $0x330] sm:$0xff]
  %v12827 = vld [vmem:[#allocation2 + $0x338] sm:$0xff]
  %v12828 = vld [vmem:[#allocation2 + $0x340] sm:$0xff]
  %v12829 = vld [vmem:[#allocation2 + $0x348] sm:$0xff]
  %v12830 = vld [vmem:[#allocation2 + $0x350] sm:$0xff]
  %v12831 = vld [vmem:[#allocation2 + $0x358] sm:$0xff]
  %v12832 = vpack.c.bf16 %v12779, %v12778
  %v12833 = vpack.c.bf16 %v12781, %v12780
  %v12834 = vpack.c.bf16 %v12783, %v12782
  %v12835 = vpack.c.bf16 %v12785, %v12784
  %v12836 = vpack.c.bf16 %v12787, %v12786
  %v12837 = vpack.c.bf16 %v12789, %v12788
  %v12838 = vpack.c.bf16 %v12791, %v12790
  %v12839 = vpack.c.bf16 %v12793, %v12792
  %v12840 = vpack.c.bf16 %v12795, %v12794
  %v12841 = vpack.c.bf16 %v12797, %v12796
  %v12842 = vpack.c.bf16 %v12799, %v12798
  %v12843 = vpack.c.bf16 %v12801, %v12800
  %v12844 = vpack.c.bf16 %v12803, %v12802
  %v12845 = vpack.c.bf16 %v12805, %v12804
  %v12846 = vpack.c.bf16 %v12807, %v12806
  %v12847 = vpack.c.bf16 %v12809, %v12808
  %v12848 = vpack.c.bf16 %v12811, %v12810
  %v12849 = vpack.c.bf16 %v12813, %v12812
  %v12850 = vpack.c.bf16 %v12815, %v12814
  %v12851 = vpack.c.bf16 %v12817, %v12816
  %v12852 = vpack.c.bf16 %v12819, %v12818
  %v12853 = vpack.c.bf16 %v12821, %v12820
  %v12854 = vpack.c.bf16 %v12823, %v12822
  %v12855 = vpack.c.bf16 %v12825, %v12824
  %v12856 = vpack.c.bf16 %v12827, %v12826
  %v12857 = vpack.c.bf16 %v12829, %v12828
  %v12858 = vpack.c.bf16 %v12831, %v12830
  %s12859 = scalar_lea.vmem %s3, 1536
  %v12860 = vld [vmem:[%s12859] sm:$0xff]
  %v12861 = vld [vmem:[%s12859 + $0x8] sm:$0xff]
  %v12862 = vld [vmem:[%s12859 + $0x10] sm:$0xff]
  %v12863 = vld [vmem:[%s12859 + $0x18] sm:$0xff]
  %v12864 = vld [vmem:[%s12859 + $0x20] sm:$0xff]
  %v12865 = vld [vmem:[%s12859 + $0x28] sm:$0xff]
  %v12866 = vld [vmem:[%s12859 + $0x30] sm:$0xff]
  %v12867 = vld [vmem:[%s12859 + $0x38] sm:$0xff]
  %v12868 = vld [vmem:[%s12859 + $0x40] sm:$0xff]
  %v12869 = vld [vmem:[%s12859 + $0x48] sm:$0xff]
  %v12870 = vld [vmem:[%s12859 + $0x50] sm:$0xff]
  %v12871 = vld [vmem:[%s12859 + $0x58] sm:$0xff]
  %v12872 = vld [vmem:[%s12859 + $0x60] sm:$0xff]
  %v12873 = vld [vmem:[%s12859 + $0x68] sm:$0xff]
  %v12874 = vld [vmem:[%s12859 + $0x70] sm:$0xff]
  %v12875 = vld [vmem:[%s12859 + $0x78] sm:$0xff]
  %v12876 = vld [vmem:[%s12859 + $0x80] sm:$0xff]
  %v12877 = vld [vmem:[%s12859 + $0x88] sm:$0xff]
  %v12878 = vld [vmem:[%s12859 + $0x90] sm:$0xff]
  %v12879 = vld [vmem:[%s12859 + $0x98] sm:$0xff]
  %v12880 = vld [vmem:[%s12859 + $0xa0] sm:$0xff]
  %v12881 = vld [vmem:[%s12859 + $0xa8] sm:$0xff]
  %v12882 = vld [vmem:[%s12859 + $0xb0] sm:$0xff]
  %v12883 = vld [vmem:[%s12859 + $0xb8] sm:$0xff]
  %v12884 = vld [vmem:[%s12859 + $0xc0] sm:$0xff]
  %v12885 = vld [vmem:[%s12859 + $0xc8] sm:$0xff]
  %v12886 = vld [vmem:[%s12859 + $0xd0] sm:$0xff]
  %v12887 = vld [vmem:[%s12859 + $0xd8] sm:$0xff]
  %v12888 = vld [vmem:[%s12859 + $0xe0] sm:$0xff]
  %v12889 = vld [vmem:[%s12859 + $0xe8] sm:$0xff]
  %v12890 = vld [vmem:[%s12859 + $0xf0] sm:$0xff]
  %v12891 = vld [vmem:[%s12859 + $0xf8] sm:$0xff]
  %v12892 = vld [vmem:[%s12859 + $0x100] sm:$0xff]
  %v12893 = vld [vmem:[%s12859 + $0x108] sm:$0xff]
  %v12894 = vld [vmem:[%s12859 + $0x110] sm:$0xff]
  %v12895 = vld [vmem:[%s12859 + $0x118] sm:$0xff]
  %v12896 = vld [vmem:[%s12859 + $0x120] sm:$0xff]
  %v12897 = vld [vmem:[%s12859 + $0x128] sm:$0xff]
  %v12898 = vld [vmem:[%s12859 + $0x130] sm:$0xff]
  %v12899 = vld [vmem:[%s12859 + $0x138] sm:$0xff]
  %v12900 = vld [vmem:[%s12859 + $0x140] sm:$0xff]
  %v12901 = vld [vmem:[%s12859 + $0x148] sm:$0xff]
  %v12902 = vld [vmem:[%s12859 + $0x150] sm:$0xff]
  %v12903 = vld [vmem:[%s12859 + $0x158] sm:$0xff]
  %v12904 = vld [vmem:[%s12859 + $0x160] sm:$0xff]
  %v12905 = vld [vmem:[%s12859 + $0x168] sm:$0xff]
  %v12906 = vld [vmem:[%s12859 + $0x170] sm:$0xff]
  %v12907 = vld [vmem:[%s12859 + $0x178] sm:$0xff]
  %v12908 = vld [vmem:[%s12859 + $0x180] sm:$0xff]
  %v12909 = vld [vmem:[%s12859 + $0x188] sm:$0xff]
  %v12910 = vld [vmem:[%s12859 + $0x190] sm:$0xff]
  %v12911 = vld [vmem:[%s12859 + $0x198] sm:$0xff]
  %v12912 = vld [vmem:[%s12859 + $0x1a0] sm:$0xff]
  %v12913 = vld [vmem:[%s12859 + $0x1a8] sm:$0xff]
  %v12914 = vld [vmem:[%s12859 + $0x1b0] sm:$0xff]
  %v12915 = vld [vmem:[%s12859 + $0x1b8] sm:$0xff]
  %v12916 = vld [vmem:[%s12859 + $0x1c0] sm:$0xff]
  %v12917 = vld [vmem:[%s12859 + $0x1c8] sm:$0xff]
  %v12918 = vld [vmem:[%s12859 + $0x1d0] sm:$0xff]
  %v12919 = vld [vmem:[%s12859 + $0x1d8] sm:$0xff]
  %v12920 = vld [vmem:[%s12859 + $0x1e0] sm:$0xff]
  %v12921 = vld [vmem:[%s12859 + $0x1e8] sm:$0xff]
  %v12922 = vld [vmem:[%s12859 + $0x1f0] sm:$0xff]
  %v12923 = vld [vmem:[%s12859 + $0x1f8] sm:$0xff]
  %v12988 = vunpack.c.l.b16 %v12860
  %v12989 = vunpack.c.h.b16 %v12860
  %v12990 = vunpack.c.l.b16 %v12861
  %v12991 = vunpack.c.h.b16 %v12861
  %v12992 = vunpack.c.l.b16 %v12862
  %v12993 = vunpack.c.h.b16 %v12862
  %v12994 = vunpack.c.l.b16 %v12863
  %v12995 = vunpack.c.h.b16 %v12863
  %v12996 = vunpack.c.l.b16 %v12864
  %v12997 = vunpack.c.h.b16 %v12864
  %v12998 = vunpack.c.l.b16 %v12865
  %v12999 = vunpack.c.h.b16 %v12865
  %v13000 = vunpack.c.l.b16 %v12866
  %v13001 = vunpack.c.h.b16 %v12866
  %v13002 = vunpack.c.l.b16 %v12867
  %v13003 = vunpack.c.h.b16 %v12867
  %v13004 = vunpack.c.l.b16 %v12868
  %v13005 = vunpack.c.h.b16 %v12868
  %v13006 = vunpack.c.l.b16 %v12869
  %v13007 = vunpack.c.h.b16 %v12869
  %v13008 = vunpack.c.l.b16 %v12870
  %v13009 = vunpack.c.h.b16 %v12870
  %v13010 = vunpack.c.l.b16 %v12871
  %v13011 = vunpack.c.h.b16 %v12871
  %v13012 = vunpack.c.l.b16 %v12872
  %v13013 = vunpack.c.h.b16 %v12872
  %v13014 = vunpack.c.l.b16 %v12873
  %v13015 = vunpack.c.h.b16 %v12873
  %v13016 = vunpack.c.l.b16 %v12874
  %v13017 = vunpack.c.h.b16 %v12874
  %v13018 = vunpack.c.l.b16 %v12875
  %v13019 = vunpack.c.h.b16 %v12875
  %v13020 = vunpack.c.l.b16 %v12876
  %v13021 = vunpack.c.h.b16 %v12876
  %v13022 = vunpack.c.l.b16 %v12877
  %v13023 = vunpack.c.h.b16 %v12877
  %v13024 = vunpack.c.l.b16 %v12878
  %v13025 = vunpack.c.h.b16 %v12878
  %v13026 = vunpack.c.l.b16 %v12879
  %v13027 = vunpack.c.h.b16 %v12879
  %v13028 = vunpack.c.l.b16 %v12880
  %v13029 = vunpack.c.h.b16 %v12880
  %v13030 = vunpack.c.l.b16 %v12881
  %v13031 = vunpack.c.h.b16 %v12881
  %v13032 = vunpack.c.l.b16 %v12882
  %v13033 = vunpack.c.h.b16 %v12882
  %v13034 = vunpack.c.l.b16 %v12883
  %v13035 = vunpack.c.h.b16 %v12883
  %v13036 = vunpack.c.l.b16 %v12884
  %v13037 = vunpack.c.h.b16 %v12884
  %v13038 = vunpack.c.l.b16 %v12885
  %v13039 = vunpack.c.h.b16 %v12885
  %v13040 = vunpack.c.l.b16 %v12886
  %v13041 = vunpack.c.h.b16 %v12886
  %v13042 = vunpack.c.l.b16 %v12887
  %v13043 = vunpack.c.h.b16 %v12887
  %v13044 = vunpack.c.l.b16 %v12888
  %v13045 = vunpack.c.h.b16 %v12888
  %v13046 = vunpack.c.l.b16 %v12889
  %v13047 = vunpack.c.h.b16 %v12889
  %v13048 = vunpack.c.l.b16 %v12890
  %v13049 = vunpack.c.h.b16 %v12890
  %v13050 = vunpack.c.l.b16 %v12891
  %v13051 = vunpack.c.h.b16 %v12891
  %v13052 = vunpack.c.l.b16 %v12892
  %v13053 = vunpack.c.h.b16 %v12892
  %v13054 = vunpack.c.l.b16 %v12893
  %v13055 = vunpack.c.h.b16 %v12893
  %v13056 = vunpack.c.l.b16 %v12894
  %v13057 = vunpack.c.h.b16 %v12894
  %v13058 = vunpack.c.l.b16 %v12895
  %v13059 = vunpack.c.h.b16 %v12895
  %v13060 = vunpack.c.l.b16 %v12896
  %v13061 = vunpack.c.h.b16 %v12896
  %v13062 = vunpack.c.l.b16 %v12897
  %v13063 = vunpack.c.h.b16 %v12897
  %v13064 = vunpack.c.l.b16 %v12898
  %v13065 = vunpack.c.h.b16 %v12898
  %v13066 = vunpack.c.l.b16 %v12899
  %v13067 = vunpack.c.h.b16 %v12899
  %v13068 = vunpack.c.l.b16 %v12900
  %v13069 = vunpack.c.h.b16 %v12900
  %v13070 = vunpack.c.l.b16 %v12901
  %v13071 = vunpack.c.h.b16 %v12901
  %v13072 = vunpack.c.l.b16 %v12902
  %v13073 = vunpack.c.h.b16 %v12902
  %v13074 = vunpack.c.l.b16 %v12903
  %v13075 = vunpack.c.h.b16 %v12903
  %v13076 = vunpack.c.l.b16 %v12904
  %v13077 = vunpack.c.h.b16 %v12904
  %v13078 = vunpack.c.l.b16 %v12905
  %v13079 = vunpack.c.h.b16 %v12905
  %v13080 = vunpack.c.l.b16 %v12906
  %v13081 = vunpack.c.h.b16 %v12906
  %v13082 = vunpack.c.l.b16 %v12907
  %v13083 = vunpack.c.h.b16 %v12907
  %v13084 = vunpack.c.l.b16 %v12908
  %v13085 = vunpack.c.h.b16 %v12908
  %v13086 = vunpack.c.l.b16 %v12909
  %v13087 = vunpack.c.h.b16 %v12909
  %v13088 = vunpack.c.l.b16 %v12910
  %v13089 = vunpack.c.h.b16 %v12910
  %v13090 = vunpack.c.l.b16 %v12911
  %v13091 = vunpack.c.h.b16 %v12911
  %v13092 = vunpack.c.l.b16 %v12912
  %v13093 = vunpack.c.h.b16 %v12912
  %v13094 = vunpack.c.l.b16 %v12913
  %v13095 = vunpack.c.h.b16 %v12913
  %v13096 = vunpack.c.l.b16 %v12914
  %v13097 = vunpack.c.h.b16 %v12914
  %v13098 = vunpack.c.l.b16 %v12915
  %v13099 = vunpack.c.h.b16 %v12915
  %v13100 = vunpack.c.l.b16 %v12916
  %v13101 = vunpack.c.h.b16 %v12916
  %v13102 = vunpack.c.l.b16 %v12917
  %v13103 = vunpack.c.h.b16 %v12917
  %v13104 = vunpack.c.l.b16 %v12918
  %v13105 = vunpack.c.h.b16 %v12918
  %v13106 = vunpack.c.l.b16 %v12919
  %v13107 = vunpack.c.h.b16 %v12919
  %v13108 = vunpack.c.l.b16 %v12920
  %v13109 = vunpack.c.h.b16 %v12920
  %v13110 = vunpack.c.l.b16 %v12921
  %v13111 = vunpack.c.h.b16 %v12921
  %v13112 = vunpack.c.l.b16 %v12922
  %v13113 = vunpack.c.h.b16 %v12922
  %v13114 = vunpack.c.l.b16 %v12923
  %v13115 = vunpack.c.h.b16 %v12923
  %v13116 = vpack.c.b16 %v12992, %v12988
  %v13117 = vpack.c.b16 %v12993, %v12989
  %v13118 = vpack.c.b16 %v12994, %v12990
  %v13119 = vpack.c.b16 %v12995, %v12991
  %v13120 = vpack.c.b16 %v13000, %v12996
  %v13121 = vpack.c.b16 %v13001, %v12997
  %v13122 = vpack.c.b16 %v13002, %v12998
  %v13123 = vpack.c.b16 %v13003, %v12999
  %v13124 = vpack.c.b16 %v13008, %v13004
  %v13125 = vpack.c.b16 %v13009, %v13005
  %v13126 = vpack.c.b16 %v13010, %v13006
  %v13127 = vpack.c.b16 %v13011, %v13007
  %v13128 = vpack.c.b16 %v13016, %v13012
  %v13129 = vpack.c.b16 %v13017, %v13013
  %v13130 = vpack.c.b16 %v13018, %v13014
  %v13131 = vpack.c.b16 %v13019, %v13015
  %v13132 = vpack.c.b16 %v13024, %v13020
  %v13133 = vpack.c.b16 %v13025, %v13021
  %v13134 = vpack.c.b16 %v13026, %v13022
  %v13135 = vpack.c.b16 %v13027, %v13023
  %v13136 = vpack.c.b16 %v13032, %v13028
  %v13137 = vpack.c.b16 %v13033, %v13029
  %v13138 = vpack.c.b16 %v13034, %v13030
  %v13139 = vpack.c.b16 %v13035, %v13031
  %v13140 = vpack.c.b16 %v13040, %v13036
  %v13141 = vpack.c.b16 %v13041, %v13037
  %v13142 = vpack.c.b16 %v13042, %v13038
  %v13143 = vpack.c.b16 %v13043, %v13039
  %v13144 = vpack.c.b16 %v13048, %v13044
  %v13145 = vpack.c.b16 %v13049, %v13045
  %v13146 = vpack.c.b16 %v13050, %v13046
  %v13147 = vpack.c.b16 %v13051, %v13047
  %v13148 = vpack.c.b16 %v13056, %v13052
  %v13149 = vpack.c.b16 %v13057, %v13053
  %v13150 = vpack.c.b16 %v13058, %v13054
  %v13151 = vpack.c.b16 %v13059, %v13055
  %v13152 = vpack.c.b16 %v13064, %v13060
  %v13153 = vpack.c.b16 %v13065, %v13061
  %v13154 = vpack.c.b16 %v13066, %v13062
  %v13155 = vpack.c.b16 %v13067, %v13063
  %v13156 = vpack.c.b16 %v13072, %v13068
  %v13157 = vpack.c.b16 %v13073, %v13069
  %v13158 = vpack.c.b16 %v13074, %v13070
  %v13159 = vpack.c.b16 %v13075, %v13071
  %v13160 = vpack.c.b16 %v13080, %v13076
  %v13161 = vpack.c.b16 %v13081, %v13077
  %v13162 = vpack.c.b16 %v13082, %v13078
  %v13163 = vpack.c.b16 %v13083, %v13079
  %v13164 = vpack.c.b16 %v13088, %v13084
  %v13165 = vpack.c.b16 %v13089, %v13085
  %v13166 = vpack.c.b16 %v13090, %v13086
  %v13167 = vpack.c.b16 %v13091, %v13087
  %v13168 = vpack.c.b16 %v13096, %v13092
  %v13169 = vpack.c.b16 %v13097, %v13093
  %v13170 = vpack.c.b16 %v13098, %v13094
  %v13171 = vpack.c.b16 %v13099, %v13095
  %v13172 = vpack.c.b16 %v13104, %v13100
  %v13173 = vpack.c.b16 %v13105, %v13101
  %v13174 = vpack.c.b16 %v13106, %v13102
  %v13175 = vpack.c.b16 %v13107, %v13103
  %v13176 = vpack.c.b16 %v13112, %v13108
  %v13177 = vpack.c.b16 %v13113, %v13109
  %v13178 = vpack.c.b16 %v13114, %v13110
  %v13179 = vpack.c.b16 %v13115, %v13111
  %v13229 = vsel %vm10479, %v13119, 0
  %v13232 = vsel %vm10479, %v13123, 0
  %v13235 = vsel %vm10479, %v13127, 0
  %v13238 = vsel %vm10479, %v13131, 0
  %v13241 = vsel %vm10479, %v13135, 0
  %v13244 = vsel %vm10479, %v13139, 0
  %v13247 = vsel %vm10479, %v13143, 0
  %v13250 = vsel %vm10479, %v13147, 0
  %v13253 = vsel %vm10479, %v13151, 0
  %v13256 = vsel %vm10479, %v13155, 0
  %v13259 = vsel %vm10479, %v13159, 0
  %v13262 = vsel %vm10479, %v13163, 0
  %v13265 = vsel %vm10479, %v13167, 0
  %v13268 = vsel %vm10479, %v13171, 0
  %v13271 = vsel %vm10479, %v13175, 0
  %v13274 = vsel %vm10479, %v13179, 0
  %13276 = vmatprep.subr.bf16.mxu0 0
  %13277 = vmatpush1.bf16.msra.mxu0 %v12832
  %13278 = vmatprep.subr.bf16.mxu0 0
  %13279 = vmatpush1.bf16.msra.mxu0 %v12833
  %13280 = vmatprep.subr.bf16.mxu0 0
  %13281 = vmatpush1.bf16.msra.mxu0 %v12834
  %13282 = vmatprep.subr.bf16.mxu0 0
  %13283 = vmatpush1.bf16.msra.mxu0 %v12835
  %13284 = vmatprep.subr.bf16.mxu0 0
  %13285 = vmatpush1.bf16.msra.mxu0 %v12836
  %13286 = vmatprep.subr.bf16.mxu0 0
  %13287 = vmatpush1.bf16.msra.mxu0 %v12837
  %13288 = vmatprep.subr.bf16.mxu0 0
  %13289 = vmatpush1.bf16.msra.mxu0 %v12838
  %13290 = vmatprep.subr.bf16.mxu0 0
  %13291 = vmatpush1.bf16.msra.mxu0 %v12839
  %13292 = vmatprep.subr.bf16.mxu0 0
  %13293 = vmatpush1.bf16.msra.mxu0 %v12840
  %13294 = vmatprep.subr.bf16.mxu0 0
  %13295 = vmatpush1.bf16.msra.mxu0 %v12841
  %13296 = vmatprep.subr.bf16.mxu0 0
  %13297 = vmatpush1.bf16.msra.mxu0 %v12842
  %13298 = vmatprep.subr.bf16.mxu0 0
  %13299 = vmatpush1.bf16.msra.mxu0 %v12843
  %13300 = vmatprep.subr.bf16.mxu0 0
  %13301 = vmatpush1.bf16.msra.mxu0 %v12844
  %13302 = vmatprep.subr.bf16.mxu0 0
  %13303 = vmatpush1.bf16.msra.mxu0 %v12845
  %13304 = vmatprep.subr.bf16.mxu0 0
  %13305 = vmatpush1.bf16.msra.mxu0 %v12846
  %13306 = vmatprep.subr.bf16.mxu0 0
  %13307 = vmatpush1.bf16.msra.mxu0 %v12847
  %13308 = vmatprep.mubr.bf16.mxu0 %v13117
  %13309 = vmatmul.mubr.bf16.gmra.mrb[0].mxu0 %v13116
  %v13310 = vpop.f32.mrb[0].mxu0
  %v13311 = vadd.f32 0.0, %v13310
  %v13312 = vpop.f32.mrb[0].mxu0
  %v13313 = vpop.f32.mrb[0].mxu0
  %v13314 = vadd.f32 0.0, %v13313
  %v13315 = vpop.f32.mrb[0].mxu0
  %13316 = vmatprep.mubr.bf16.mxu0 %v13121
  %13317 = vmatmul.mubr.bf16.gmra.mrb[0].mxu0 %v13120
  %v13318 = vpop.f32.mrb[0].mxu0
  %v13319 = vadd.f32 0.0, %v13318
  %v13320 = vpop.f32.mrb[0].mxu0
  %v13321 = vpop.f32.mrb[0].mxu0
  %v13322 = vadd.f32 0.0, %v13321
  %v13323 = vpop.f32.mrb[0].mxu0
  %13324 = vmatprep.mubr.bf16.mxu0 %v13125
  %13325 = vmatmul.mubr.bf16.gmra.mrb[0].mxu0 %v13124
  %v13326 = vpop.f32.mrb[0].mxu0
  %v13327 = vadd.f32 0.0, %v13326
  %v13328 = vpop.f32.mrb[0].mxu0
  %v13329 = vpop.f32.mrb[0].mxu0
  %v13330 = vadd.f32 0.0, %v13329
  %v13331 = vpop.f32.mrb[0].mxu0
  %13332 = vmatprep.mubr.bf16.mxu0 %v13129
  %13333 = vmatmul.mubr.bf16.gmra.mrb[0].mxu0 %v13128
  %v13334 = vpop.f32.mrb[0].mxu0
  %v13335 = vadd.f32 0.0, %v13334
  %v13336 = vpop.f32.mrb[0].mxu0
  %v13337 = vpop.f32.mrb[0].mxu0
  %v13338 = vadd.f32 0.0, %v13337
  %v13339 = vpop.f32.mrb[0].mxu0
  %13340 = vmatprep.mubr.bf16.mxu0 %v13133
  %13341 = vmatmul.mubr.bf16.gmra.mrb[0].mxu0 %v13132
  %v13342 = vpop.f32.mrb[0].mxu0
  %v13343 = vadd.f32 0.0, %v13342
  %v13344 = vpop.f32.mrb[0].mxu0
  %v13345 = vpop.f32.mrb[0].mxu0
  %v13346 = vadd.f32 0.0, %v13345
  %v13347 = vpop.f32.mrb[0].mxu0
  %13348 = vmatprep.mubr.bf16.mxu0 %v13137
  %13349 = vmatmul.mubr.bf16.gmra.mrb[0].mxu0 %v13136
  %v13350 = vpop.f32.mrb[0].mxu0
  %v13351 = vadd.f32 0.0, %v13350
  %v13352 = vpop.f32.mrb[0].mxu0
  %v13353 = vpop.f32.mrb[0].mxu0
  %v13354 = vadd.f32 0.0, %v13353
  %v13355 = vpop.f32.mrb[0].mxu0
  %13356 = vmatprep.mubr.bf16.mxu0 %v13141
  %13357 = vmatmul.mubr.bf16.gmra.mrb[0].mxu0 %v13140
  %v13358 = vpop.f32.mrb[0].mxu0
  %v13359 = vadd.f32 0.0, %v13358
  %v13360 = vpop.f32.mrb[0].mxu0
  %v13361 = vpop.f32.mrb[0].mxu0
  %v13362 = vadd.f32 0.0, %v13361
  %v13363 = vpop.f32.mrb[0].mxu0
  %13364 = vmatprep.mubr.bf16.mxu0 %v13145
  %13365 = vmatmul.mubr.bf16.gmra.mrb[0].mxu0 %v13144
  %v13366 = vpop.f32.mrb[0].mxu0
  %v13367 = vadd.f32 0.0, %v13366
  %v13368 = vpop.f32.mrb[0].mxu0
  %v13369 = vpop.f32.mrb[0].mxu0
  %v13370 = vadd.f32 0.0, %v13369
  %v13371 = vpop.f32.mrb[0].mxu0
  %13372 = vmatprep.mubr.bf16.mxu0 %v13149
  %13373 = vmatmul.mubr.bf16.gmra.mrb[0].mxu0 %v13148
  %v13374 = vpop.f32.mrb[0].mxu0
  %v13375 = vadd.f32 0.0, %v13374
  %v13376 = vpop.f32.mrb[0].mxu0
  %v13377 = vpop.f32.mrb[0].mxu0
  %v13378 = vadd.f32 0.0, %v13377
  %v13379 = vpop.f32.mrb[0].mxu0
  %13380 = vmatprep.mubr.bf16.mxu0 %v13153
  %13381 = vmatmul.mubr.bf16.gmra.mrb[0].mxu0 %v13152
  %v13382 = vpop.f32.mrb[0].mxu0
  %v13383 = vadd.f32 0.0, %v13382
  %v13384 = vpop.f32.mrb[0].mxu0
  %v13385 = vpop.f32.mrb[0].mxu0
  %v13386 = vadd.f32 0.0, %v13385
  %v13387 = vpop.f32.mrb[0].mxu0
  %13388 = vmatprep.mubr.bf16.mxu0 %v13157
  %13389 = vmatmul.mubr.bf16.gmra.mrb[0].mxu0 %v13156
  %v13390 = vpop.f32.mrb[0].mxu0
  %v13391 = vadd.f32 0.0, %v13390
  %v13392 = vpop.f32.mrb[0].mxu0
  %v13393 = vpop.f32.mrb[0].mxu0
  %v13394 = vadd.f32 0.0, %v13393
  %v13395 = vpop.f32.mrb[0].mxu0
  %13396 = vmatprep.mubr.bf16.mxu0 %v13161
  %13397 = vmatmul.mubr.bf16.gmra.mrb[0].mxu0 %v13160
  %v13398 = vpop.f32.mrb[0].mxu0
  %v13399 = vadd.f32 0.0, %v13398
  %v13400 = vpop.f32.mrb[0].mxu0
  %v13401 = vpop.f32.mrb[0].mxu0
  %v13402 = vadd.f32 0.0, %v13401
  %v13403 = vpop.f32.mrb[0].mxu0
  %13404 = vmatprep.mubr.bf16.mxu0 %v13165
  %13405 = vmatmul.mubr.bf16.gmra.mrb[0].mxu0 %v13164
  %v13406 = vpop.f32.mrb[0].mxu0
  %v13407 = vadd.f32 0.0, %v13406
  %v13408 = vpop.f32.mrb[0].mxu0
  %v13409 = vpop.f32.mrb[0].mxu0
  %v13410 = vadd.f32 0.0, %v13409
  %v13411 = vpop.f32.mrb[0].mxu0
  %13412 = vmatprep.mubr.bf16.mxu0 %v13169
  %13413 = vmatmul.mubr.bf16.gmra.mrb[0].mxu0 %v13168
  %v13414 = vpop.f32.mrb[0].mxu0
  %v13415 = vadd.f32 0.0, %v13414
  %v13416 = vpop.f32.mrb[0].mxu0
  %v13417 = vpop.f32.mrb[0].mxu0
  %v13418 = vadd.f32 0.0, %v13417
  %v13419 = vpop.f32.mrb[0].mxu0
  %13420 = vmatprep.mubr.bf16.mxu0 %v13173
  %13421 = vmatmul.mubr.bf16.gmra.mrb[0].mxu0 %v13172
  %v13422 = vpop.f32.mrb[0].mxu0
  %v13423 = vadd.f32 0.0, %v13422
  %v13424 = vpop.f32.mrb[0].mxu0
  %v13425 = vpop.f32.mrb[0].mxu0
  %v13426 = vadd.f32 0.0, %v13425
  %v13427 = vpop.f32.mrb[0].mxu0
  %13428 = vmatprep.mubr.bf16.mxu0 %v13177
  %13429 = vmatmul.mubr.bf16.gmra.mrb[0].mxu0 %v13176
  %v13430 = vpop.f32.mrb[0].mxu0
  %v13431 = vadd.f32 0.0, %v13430
  %v13432 = vpop.f32.mrb[0].mxu0
  %v13433 = vpop.f32.mrb[0].mxu0
  %v13434 = vadd.f32 0.0, %v13433
  %v13435 = vpop.f32.mrb[0].mxu0
  %13436 = vdwg.mxu0
  %13437 = vmatprep.subr.bf16.mxu0 0
  %13438 = vmatpush1.bf16.msra.mxu0 %v12848
  %13439 = vmatprep.subr.bf16.mxu0 0
  %13440 = vmatpush1.bf16.msra.mxu0 %v12849
  %13441 = vmatprep.subr.bf16.mxu0 0
  %13442 = vmatpush1.bf16.msra.mxu0 %v12850
  %13443 = vmatprep.subr.bf16.mxu0 0
  %13444 = vmatpush1.bf16.msra.mxu0 %v12851
  %13445 = vmatprep.subr.bf16.mxu0 0
  %13446 = vmatpush1.bf16.msra.mxu0 %v12852
  %13447 = vmatprep.subr.bf16.mxu0 0
  %13448 = vmatpush1.bf16.msra.mxu0 %v12853
  %13449 = vmatprep.subr.bf16.mxu0 0
  %13450 = vmatpush1.bf16.msra.mxu0 %v12854
  %13451 = vmatprep.subr.bf16.mxu0 0
  %13452 = vmatpush1.bf16.msra.mxu0 %v12855
  %13453 = vmatprep.subr.bf16.mxu0 0
  %13454 = vmatpush1.bf16.msra.mxu0 %v12856
  %13455 = vmatprep.subr.bf16.mxu0 0
  %13456 = vmatpush1.bf16.msra.mxu0 %v12857
  %13457 = vmatprep.subr.bf16.mxu0 0
  %13458 = vmatpush1.bf16.msra.mxu0 %v12858
  %13459 = vmatprep.subr.bf16.mxu0 0
  %13460 = vmatpush1.bf16.msra.mxu0 0
  %13461 = vmatprep.subr.bf16.mxu0 0
  %13462 = vmatpush1.bf16.msra.mxu0 0
  %13463 = vmatprep.subr.bf16.mxu0 0
  %13464 = vmatpush1.bf16.msra.mxu0 0
  %13465 = vmatprep.subr.bf16.mxu0 0
  %13466 = vmatpush1.bf16.msra.mxu0 0
  %13467 = vmatprep.subr.bf16.mxu0 0
  %13468 = vmatpush1.bf16.msra.mxu0 0
  %13469 = vmatprep.mubr.bf16.mxu0 %v13229
  %13470 = vmatmul.mubr.bf16.gmra.mrb[0].mxu0 %v13118
  %v13471 = vpop.f32.mrb[0].mxu0
  %v13472 = vadd.f32 %v13311, %v13471
  %v13473 = vpop.f32.mrb[0].mxu0
  %v13474 = vpop.f32.mrb[0].mxu0
  %v13475 = vadd.f32 %v13314, %v13474
  %v13476 = vpop.f32.mrb[0].mxu0
  %13477 = vmatprep.mubr.bf16.mxu0 %v13232
  %13478 = vmatmul.mubr.bf16.gmra.mrb[0].mxu0 %v13122
  %v13479 = vpop.f32.mrb[0].mxu0
  %v13480 = vadd.f32 %v13319, %v13479
  %v13481 = vpop.f32.mrb[0].mxu0
  %v13482 = vpop.f32.mrb[0].mxu0
  %v13483 = vadd.f32 %v13322, %v13482
  %v13484 = vpop.f32.mrb[0].mxu0
  %13485 = vmatprep.mubr.bf16.mxu0 %v13235
  %13486 = vmatmul.mubr.bf16.gmra.mrb[0].mxu0 %v13126
  %v13487 = vpop.f32.mrb[0].mxu0
  %v13488 = vadd.f32 %v13327, %v13487
  %v13489 = vpop.f32.mrb[0].mxu0
  %v13490 = vpop.f32.mrb[0].mxu0
  %v13491 = vadd.f32 %v13330, %v13490
  %v13492 = vpop.f32.mrb[0].mxu0
  %13493 = vmatprep.mubr.bf16.mxu0 %v13238
  %13494 = vmatmul.mubr.bf16.gmra.mrb[0].mxu0 %v13130
  %v13495 = vpop.f32.mrb[0].mxu0
  %v13496 = vadd.f32 %v13335, %v13495
  %v13497 = vpop.f32.mrb[0].mxu0
  %v13498 = vpop.f32.mrb[0].mxu0
  %v13499 = vadd.f32 %v13338, %v13498
  %v13500 = vpop.f32.mrb[0].mxu0
  %13501 = vmatprep.mubr.bf16.mxu0 %v13241
  %13502 = vmatmul.mubr.bf16.gmra.mrb[0].mxu0 %v13134
  %v13503 = vpop.f32.mrb[0].mxu0
  %v13504 = vadd.f32 %v13343, %v13503
  %v13505 = vpop.f32.mrb[0].mxu0
  %v13506 = vpop.f32.mrb[0].mxu0
  %v13507 = vadd.f32 %v13346, %v13506
  %v13508 = vpop.f32.mrb[0].mxu0
  %13509 = vmatprep.mubr.bf16.mxu0 %v13244
  %13510 = vmatmul.mubr.bf16.gmra.mrb[0].mxu0 %v13138
  %v13511 = vpop.f32.mrb[0].mxu0
  %v13512 = vadd.f32 %v13351, %v13511
  %v13513 = vpop.f32.mrb[0].mxu0
  %v13514 = vpop.f32.mrb[0].mxu0
  %v13515 = vadd.f32 %v13354, %v13514
  %v13516 = vpop.f32.mrb[0].mxu0
  %13517 = vmatprep.mubr.bf16.mxu0 %v13247
  %13518 = vmatmul.mubr.bf16.gmra.mrb[0].mxu0 %v13142
  %v13519 = vpop.f32.mrb[0].mxu0
  %v13520 = vadd.f32 %v13359, %v13519
  %v13521 = vpop.f32.mrb[0].mxu0
  %v13522 = vpop.f32.mrb[0].mxu0
  %v13523 = vadd.f32 %v13362, %v13522
  %v13524 = vpop.f32.mrb[0].mxu0
  %13525 = vmatprep.mubr.bf16.mxu0 %v13250
  %13526 = vmatmul.mubr.bf16.gmra.mrb[0].mxu0 %v13146
  %v13527 = vpop.f32.mrb[0].mxu0
  %v13528 = vadd.f32 %v13367, %v13527
  %v13529 = vpop.f32.mrb[0].mxu0
  %v13530 = vpop.f32.mrb[0].mxu0
  %v13531 = vadd.f32 %v13370, %v13530
  %v13532 = vpop.f32.mrb[0].mxu0
  %13533 = vmatprep.mubr.bf16.mxu0 %v13253
  %13534 = vmatmul.mubr.bf16.gmra.mrb[0].mxu0 %v13150
  %v13535 = vpop.f32.mrb[0].mxu0
  %v13536 = vadd.f32 %v13375, %v13535
  %v13537 = vpop.f32.mrb[0].mxu0
  %v13538 = vpop.f32.mrb[0].mxu0
  %v13539 = vadd.f32 %v13378, %v13538
  %v13540 = vpop.f32.mrb[0].mxu0
  %13541 = vmatprep.mubr.bf16.mxu0 %v13256
  %13542 = vmatmul.mubr.bf16.gmra.mrb[0].mxu0 %v13154
  %v13543 = vpop.f32.mrb[0].mxu0
  %v13544 = vadd.f32 %v13383, %v13543
  %v13545 = vpop.f32.mrb[0].mxu0
  %v13546 = vpop.f32.mrb[0].mxu0
  %v13547 = vadd.f32 %v13386, %v13546
  %v13548 = vpop.f32.mrb[0].mxu0
  %13549 = vmatprep.mubr.bf16.mxu0 %v13259
  %13550 = vmatmul.mubr.bf16.gmra.mrb[0].mxu0 %v13158
  %v13551 = vpop.f32.mrb[0].mxu0
  %v13552 = vadd.f32 %v13391, %v13551
  %v13553 = vpop.f32.mrb[0].mxu0
  %v13554 = vpop.f32.mrb[0].mxu0
  %v13555 = vadd.f32 %v13394, %v13554
  %v13556 = vpop.f32.mrb[0].mxu0
  %13557 = vmatprep.mubr.bf16.mxu0 %v13262
  %13558 = vmatmul.mubr.bf16.gmra.mrb[0].mxu0 %v13162
  %v13559 = vpop.f32.mrb[0].mxu0
  %v13560 = vadd.f32 %v13399, %v13559
  %v13561 = vpop.f32.mrb[0].mxu0
  %v13562 = vpop.f32.mrb[0].mxu0
  %v13563 = vadd.f32 %v13402, %v13562
  %v13564 = vpop.f32.mrb[0].mxu0
  %13565 = vmatprep.mubr.bf16.mxu0 %v13265
  %13566 = vmatmul.mubr.bf16.gmra.mrb[0].mxu0 %v13166
  %v13567 = vpop.f32.mrb[0].mxu0
  %v13568 = vadd.f32 %v13407, %v13567
  %v13569 = vpop.f32.mrb[0].mxu0
  %v13570 = vpop.f32.mrb[0].mxu0
  %v13571 = vadd.f32 %v13410, %v13570
  %v13572 = vpop.f32.mrb[0].mxu0
  %13573 = vmatprep.mubr.bf16.mxu0 %v13268
  %13574 = vmatmul.mubr.bf16.gmra.mrb[0].mxu0 %v13170
  %v13575 = vpop.f32.mrb[0].mxu0
  %v13576 = vadd.f32 %v13415, %v13575
  %v13577 = vpop.f32.mrb[0].mxu0
  %v13578 = vpop.f32.mrb[0].mxu0
  %v13579 = vadd.f32 %v13418, %v13578
  %v13580 = vpop.f32.mrb[0].mxu0
  %13581 = vmatprep.mubr.bf16.mxu0 %v13271
  %13582 = vmatmul.mubr.bf16.gmra.mrb[0].mxu0 %v13174
  %v13583 = vpop.f32.mrb[0].mxu0
  %v13584 = vadd.f32 %v13423, %v13583
  %v13585 = vpop.f32.mrb[0].mxu0
  %v13586 = vpop.f32.mrb[0].mxu0
  %v13587 = vadd.f32 %v13426, %v13586
  %v13588 = vpop.f32.mrb[0].mxu0
  %13589 = vmatprep.mubr.bf16.mxu0 %v13274
  %13590 = vmatmul.mubr.bf16.gmra.mrb[0].mxu0 %v13178
  %v13591 = vpop.f32.mrb[0].mxu0
  %v13592 = vadd.f32 %v13431, %v13591
  %v13593 = vpop.f32.mrb[0].mxu0
  %v13594 = vpop.f32.mrb[0].mxu0
  %v13595 = vadd.f32 %v13434, %v13594
  %v13596 = vpop.f32.mrb[0].mxu0
  %13597 = vdwg.mxu0
  %v13598 = vmax.f32 %v13472, %v13504
  %v13599 = vmax.f32 %v13475, %v13507
  %v13600 = vmax.f32 %v13480, %v13512
  %v13601 = vmax.f32 %v13483, %v13515
  %v13602 = vmax.f32 %v13488, %v13520
  %v13603 = vmax.f32 %v13491, %v13523
  %v13604 = vmax.f32 %v13496, %v13528
  %v13605 = vmax.f32 %v13499, %v13531
  %v13606 = vmax.f32 %v13536, %v13568
  %v13607 = vmax.f32 %v13539, %v13571
  %v13608 = vmax.f32 %v13544, %v13576
  %v13609 = vmax.f32 %v13547, %v13579
  %v13610 = vmax.f32 %v13552, %v13584
  %v13611 = vmax.f32 %v13555, %v13587
  %v13612 = vmax.f32 %v13560, %v13592
  %v13613 = vmax.f32 %v13563, %v13595
  %v13614 = vmax.f32 %v13598, %v13606
  %v13615 = vmax.f32 %v13599, %v13607
  %v13616 = vmax.f32 %v13600, %v13608
  %v13617 = vmax.f32 %v13601, %v13609
  %v13618 = vmax.f32 %v13602, %v13610
  %v13619 = vmax.f32 %v13603, %v13611
  %v13620 = vmax.f32 %v13604, %v13612
  %v13621 = vmax.f32 %v13605, %v13613
  %v13622 = vld [vmem:[%s4 + $0xc0] sm:$0xff]
  %v13623 = vld [vmem:[%s4 + $0xc8] sm:$0xff]
  %v13624 = vld [vmem:[%s4 + $0xd0] sm:$0xff]
  %v13625 = vld [vmem:[%s4 + $0xd8] sm:$0xff]
  %v13626 = vld [vmem:[%s4 + $0xe0] sm:$0xff]
  %v13627 = vld [vmem:[%s4 + $0xe8] sm:$0xff]
  %v13628 = vld [vmem:[%s4 + $0xf0] sm:$0xff]
  %v13629 = vld [vmem:[%s4 + $0xf8] sm:$0xff]
  %13631 = vset.pattern.permute.xlu0 0
  %13632 = vperm.xlu0 %13631, %v13622
  %v13633 = vpop.permute.xlu0 %13632
  %13636 = vset.pattern.permute.xlu0 0
  %13637 = vperm.xlu0 %13636, %v13623
  %v13638 = vpop.permute.xlu0 %13637
  %13641 = vset.pattern.permute.xlu0 0
  %13642 = vperm.xlu0 %13641, %v13624
  %v13643 = vpop.permute.xlu0 %13642
  %13646 = vset.pattern.permute.xlu0 0
  %13647 = vperm.xlu0 %13646, %v13625
  %v13648 = vpop.permute.xlu0 %13647
  %13651 = vset.pattern.permute.xlu0 0
  %13652 = vperm.xlu0 %13651, %v13626
  %v13653 = vpop.permute.xlu0 %13652
  %13656 = vset.pattern.permute.xlu0 0
  %13657 = vperm.xlu0 %13656, %v13627
  %v13658 = vpop.permute.xlu0 %13657
  %13661 = vset.pattern.permute.xlu0 0
  %13662 = vperm.xlu0 %13661, %v13628
  %v13663 = vpop.permute.xlu0 %13662
  %13666 = vset.pattern.permute.xlu0 0
  %13667 = vperm.xlu0 %13666, %v13629
  %v13668 = vpop.permute.xlu0 %13667
  %v13670 = vadd.f32 %v13614, %v13633
  %v13671 = vadd.f32 %v13615, %v13638
  %v13672 = vadd.f32 %v13616, %v13643
  %v13673 = vadd.f32 %v13617, %v13648
  %v13674 = vadd.f32 %v13618, %v13653
  %v13675 = vadd.f32 %v13619, %v13658
  %v13676 = vadd.f32 %v13620, %v13663
  %v13677 = vadd.f32 %v13621, %v13668
  %v13678 = vmax.f32 %v13670, 0.0
  %v13679 = vmax.f32 %v13671, 0.0
  %v13680 = vmax.f32 %v13672, 0.0
  %v13681 = vmax.f32 %v13673, 0.0
  %v13682 = vmax.f32 %v13674, 0.0
  %v13683 = vmax.f32 %v13675, 0.0
  %v13684 = vmax.f32 %v13676, 0.0
  %v13685 = vmax.f32 %v13677, 0.0
  %13686 = vst [vmem:[#allocation3 + $0xc0] sm:$0xff] %v13678
  %13687 = vst [vmem:[#allocation3 + $0xc8] sm:$0xff] %v13679
  %13688 = vst [vmem:[#allocation3 + $0xd0] sm:$0xff] %v13680
  %13689 = vst [vmem:[#allocation3 + $0xd8] sm:$0xff] %v13681
  %13690 = vst [vmem:[#allocation3 + $0xe0] sm:$0xff] %v13682
  %13691 = vst [vmem:[#allocation3 + $0xe8] sm:$0xff] %v13683
  %13692 = vst [vmem:[#allocation3 + $0xf0] sm:$0xff] %v13684
  %13693 = vst [vmem:[#allocation3 + $0xf8] sm:$0xff] %v13685
  %v13694 = vld [vmem:[#allocation3] sm:$0xff]
  %v13695 = vld [vmem:[#allocation3 + $0x8] sm:$0xff]
  %v13696 = vld [vmem:[#allocation3 + $0x10] sm:$0xff]
  %v13697 = vld [vmem:[#allocation3 + $0x18] sm:$0xff]
  %v13698 = vld [vmem:[#allocation3 + $0x20] sm:$0xff]
  %v13699 = vld [vmem:[#allocation3 + $0x28] sm:$0xff]
  %v13700 = vld [vmem:[#allocation3 + $0x30] sm:$0xff]
  %v13701 = vld [vmem:[#allocation3 + $0x38] sm:$0xff]
  %v13702 = vld [vmem:[#allocation3 + $0x40] sm:$0xff]
  %v13703 = vld [vmem:[#allocation3 + $0x48] sm:$0xff]
  %v13704 = vld [vmem:[#allocation3 + $0x50] sm:$0xff]
  %v13705 = vld [vmem:[#allocation3 + $0x58] sm:$0xff]
  %v13706 = vld [vmem:[#allocation3 + $0x60] sm:$0xff]
  %v13707 = vld [vmem:[#allocation3 + $0x68] sm:$0xff]
  %v13708 = vld [vmem:[#allocation3 + $0x70] sm:$0xff]
  %v13709 = vld [vmem:[#allocation3 + $0x78] sm:$0xff]
  %v13710 = vld [vmem:[#allocation3 + $0x80] sm:$0xff]
  %v13711 = vld [vmem:[#allocation3 + $0x88] sm:$0xff]
  %v13712 = vld [vmem:[#allocation3 + $0x90] sm:$0xff]
  %v13713 = vld [vmem:[#allocation3 + $0x98] sm:$0xff]
  %v13714 = vld [vmem:[#allocation3 + $0xa0] sm:$0xff]
  %v13715 = vld [vmem:[#allocation3 + $0xa8] sm:$0xff]
  %v13716 = vld [vmem:[#allocation3 + $0xb0] sm:$0xff]
  %v13717 = vld [vmem:[#allocation3 + $0xb8] sm:$0xff]
  %v13718 = vld [vmem:[#allocation3 + $0xc0] sm:$0xff]
  %v13719 = vld [vmem:[#allocation3 + $0xc8] sm:$0xff]
  %v13720 = vld [vmem:[#allocation3 + $0xd0] sm:$0xff]
  %v13721 = vld [vmem:[#allocation3 + $0xd8] sm:$0xff]
  %v13722 = vld [vmem:[#allocation3 + $0xe0] sm:$0xff]
  %v13723 = vld [vmem:[#allocation3 + $0xe8] sm:$0xff]
  %v13724 = vld [vmem:[#allocation3 + $0xf0] sm:$0xff]
  %v13725 = vld [vmem:[#allocation3 + $0xf8] sm:$0xff]
  %v13726 = vpack.c.bf16 %v13695, %v13694
  %v13727 = vpack.c.bf16 %v13697, %v13696
  %v13728 = vpack.c.bf16 %v13699, %v13698
  %v13729 = vpack.c.bf16 %v13701, %v13700
  %v13730 = vpack.c.bf16 %v13703, %v13702
  %v13731 = vpack.c.bf16 %v13705, %v13704
  %v13732 = vpack.c.bf16 %v13707, %v13706
  %v13733 = vpack.c.bf16 %v13709, %v13708
  %v13734 = vpack.c.bf16 %v13711, %v13710
  %v13735 = vpack.c.bf16 %v13713, %v13712
  %v13736 = vpack.c.bf16 %v13715, %v13714
  %v13737 = vpack.c.bf16 %v13717, %v13716
  %v13738 = vpack.c.bf16 %v13719, %v13718
  %v13739 = vpack.c.bf16 %v13721, %v13720
  %v13740 = vpack.c.bf16 %v13723, %v13722
  %v13741 = vpack.c.bf16 %v13725, %v13724
  %v13742 = vld [vmem:[%s5] sm:$0xff]
  %v13743 = vld [vmem:[%s5 + $0x8] sm:$0xff]
  %v13744 = vld [vmem:[%s5 + $0x10] sm:$0xff]
  %v13745 = vld [vmem:[%s5 + $0x18] sm:$0xff]
  %v13746 = vld [vmem:[%s5 + $0x20] sm:$0xff]
  %v13747 = vld [vmem:[%s5 + $0x28] sm:$0xff]
  %v13748 = vld [vmem:[%s5 + $0x30] sm:$0xff]
  %v13749 = vld [vmem:[%s5 + $0x38] sm:$0xff]
  %v13750 = vld [vmem:[%s5 + $0x40] sm:$0xff]
  %v13751 = vld [vmem:[%s5 + $0x48] sm:$0xff]
  %v13752 = vld [vmem:[%s5 + $0x50] sm:$0xff]
  %v13753 = vld [vmem:[%s5 + $0x58] sm:$0xff]
  %v13754 = vld [vmem:[%s5 + $0x60] sm:$0xff]
  %v13755 = vld [vmem:[%s5 + $0x68] sm:$0xff]
  %v13756 = vld [vmem:[%s6] sm:$0xff]
  %v13757 = vld [vmem:[%s6 + $0x8] sm:$0xff]
  %v13758 = vld [vmem:[%s6 + $0x10] sm:$0xff]
  %v13759 = vld [vmem:[%s6 + $0x18] sm:$0xff]
  %v13760 = vld [vmem:[%s6 + $0x20] sm:$0xff]
  %v13761 = vld [vmem:[%s6 + $0x28] sm:$0xff]
  %v13762 = vld [vmem:[%s6 + $0x30] sm:$0xff]
  %v13763 = vld [vmem:[%s6 + $0x38] sm:$0xff]
  %v13764 = vld [vmem:[%s6 + $0x40] sm:$0xff]
  %v13765 = vld [vmem:[%s6 + $0x48] sm:$0xff]
  %v13766 = vld [vmem:[%s6 + $0x50] sm:$0xff]
  %v13767 = vld [vmem:[%s6 + $0x58] sm:$0xff]
  %v13768 = vld [vmem:[%s6 + $0x60] sm:$0xff]
  %v13769 = vld [vmem:[%s6 + $0x68] sm:$0xff]
  %13771 = vset.pattern.permute.xlu0 0
  %13772 = vperm.xlu0 %13771, %v13756
  %v13773 = vpop.permute.xlu0 %13772
  %13776 = vset.pattern.permute.xlu0 0
  %13777 = vperm.xlu0 %13776, %v13757
  %v13778 = vpop.permute.xlu0 %13777
  %13781 = vset.pattern.permute.xlu0 0
  %13782 = vperm.xlu0 %13781, %v13758
  %v13783 = vpop.permute.xlu0 %13782
  %13786 = vset.pattern.permute.xlu0 0
  %13787 = vperm.xlu0 %13786, %v13759
  %v13788 = vpop.permute.xlu0 %13787
  %13791 = vset.pattern.permute.xlu0 0
  %13792 = vperm.xlu0 %13791, %v13760
  %v13793 = vpop.permute.xlu0 %13792
  %13796 = vset.pattern.permute.xlu0 0
  %13797 = vperm.xlu0 %13796, %v13761
  %v13798 = vpop.permute.xlu0 %13797
  %13801 = vset.pattern.permute.xlu0 0
  %13802 = vperm.xlu0 %13801, %v13762
  %v13803 = vpop.permute.xlu0 %13802
  %13806 = vset.pattern.permute.xlu0 0
  %13807 = vperm.xlu0 %13806, %v13763
  %v13808 = vpop.permute.xlu0 %13807
  %13811 = vset.pattern.permute.xlu0 0
  %13812 = vperm.xlu0 %13811, %v13764
  %v13813 = vpop.permute.xlu0 %13812
  %13816 = vset.pattern.permute.xlu0 0
  %13817 = vperm.xlu0 %13816, %v13765
  %v13818 = vpop.permute.xlu0 %13817
  %13821 = vset.pattern.permute.xlu0 0
  %13822 = vperm.xlu0 %13821, %v13766
  %v13823 = vpop.permute.xlu0 %13822
  %13826 = vset.pattern.permute.xlu0 0
  %13827 = vperm.xlu0 %13826, %v13767
  %v13828 = vpop.permute.xlu0 %13827
  %13831 = vset.pattern.permute.xlu0 0
  %13832 = vperm.xlu0 %13831, %v13768
  %v13833 = vpop.permute.xlu0 %13832
  %13836 = vset.pattern.permute.xlu0 0
  %13837 = vperm.xlu0 %13836, %v13769
  %v13838 = vpop.permute.xlu0 %13837
  %v13854 = vunpack.c.l.b16 %v13742
  %v13855 = vunpack.c.h.b16 %v13742
  %v13856 = vunpack.c.l.b16 %v13743
  %v13857 = vunpack.c.h.b16 %v13743
  %v13858 = vunpack.c.l.b16 %v13744
  %v13859 = vunpack.c.h.b16 %v13744
  %v13860 = vunpack.c.l.b16 %v13745
  %v13861 = vunpack.c.h.b16 %v13745
  %v13862 = vunpack.c.l.b16 %v13746
  %v13863 = vunpack.c.h.b16 %v13746
  %v13864 = vunpack.c.l.b16 %v13747
  %v13865 = vunpack.c.h.b16 %v13747
  %v13866 = vunpack.c.l.b16 %v13748
  %v13867 = vunpack.c.h.b16 %v13748
  %v13868 = vunpack.c.l.b16 %v13749
  %v13869 = vunpack.c.h.b16 %v13749
  %v13870 = vunpack.c.l.b16 %v13750
  %v13871 = vunpack.c.h.b16 %v13750
  %v13872 = vunpack.c.l.b16 %v13751
  %v13873 = vunpack.c.h.b16 %v13751
  %v13874 = vunpack.c.l.b16 %v13752
  %v13875 = vunpack.c.h.b16 %v13752
  %v13876 = vunpack.c.l.b16 %v13753
  %v13877 = vunpack.c.h.b16 %v13753
  %v13878 = vunpack.c.l.b16 %v13754
  %v13879 = vunpack.c.h.b16 %v13754
  %v13880 = vunpack.c.l.b16 %v13755
  %v13881 = vunpack.c.h.b16 %v13755
  %v13882 = vpack.c.b16 %v13856, %v13854
  %v13883 = vpack.c.b16 %v13857, %v13855
  %v13884 = vpack.c.b16 %v13860, %v13858
  %v13885 = vpack.c.b16 %v13861, %v13859
  %v13886 = vpack.c.b16 %v13864, %v13862
  %v13887 = vpack.c.b16 %v13865, %v13863
  %v13888 = vpack.c.b16 %v13868, %v13866
  %v13889 = vpack.c.b16 %v13869, %v13867
  %v13890 = vpack.c.b16 %v13872, %v13870
  %v13891 = vpack.c.b16 %v13873, %v13871
  %v13892 = vpack.c.b16 %v13876, %v13874
  %v13893 = vpack.c.b16 %v13877, %v13875
  %v13894 = vpack.c.b16 %v13880, %v13878
  %v13895 = vpack.c.b16 %v13881, %v13879
  %13910 = vmatprep.subr.bf16.mxu0 0
  %13911 = vmatpush1.bf16.msra.mxu0 %v13726
  %13912 = vmatprep.subr.bf16.mxu0 0
  %13913 = vmatpush1.bf16.msra.mxu0 %v13727
  %13914 = vmatprep.subr.bf16.mxu0 0
  %13915 = vmatpush1.bf16.msra.mxu0 %v13728
  %13916 = vmatprep.subr.bf16.mxu0 0
  %13917 = vmatpush1.bf16.msra.mxu0 %v13729
  %13918 = vmatprep.subr.bf16.mxu0 0
  %13919 = vmatpush1.bf16.msra.mxu0 %v13730
  %13920 = vmatprep.subr.bf16.mxu0 0
  %13921 = vmatpush1.bf16.msra.mxu0 %v13731
  %13922 = vmatprep.subr.bf16.mxu0 0
  %13923 = vmatpush1.bf16.msra.mxu0 %v13732
  %13924 = vmatprep.subr.bf16.mxu0 0
  %13925 = vmatpush1.bf16.msra.mxu0 %v13733
  %13926 = vmatprep.subr.bf16.mxu0 0
  %13927 = vmatpush1.bf16.msra.mxu0 %v13734
  %13928 = vmatprep.subr.bf16.mxu0 0
  %13929 = vmatpush1.bf16.msra.mxu0 %v13735
  %13930 = vmatprep.subr.bf16.mxu0 0
  %13931 = vmatpush1.bf16.msra.mxu0 %v13736
  %13932 = vmatprep.subr.bf16.mxu0 0
  %13933 = vmatpush1.bf16.msra.mxu0 %v13737
  %13934 = vmatprep.subr.bf16.mxu0 0
  %13935 = vmatpush1.bf16.msra.mxu0 %v13738
  %13936 = vmatprep.subr.bf16.mxu0 0
  %13937 = vmatpush1.bf16.msra.mxu0 %v13739
  %13938 = vmatprep.subr.bf16.mxu0 0
  %13939 = vmatpush1.bf16.msra.mxu0 %v13740
  %13940 = vmatprep.subr.bf16.mxu0 0
  %13941 = vmatpush1.bf16.msra.mxu0 %v13741
  %13942 = vmatprep.mubr.bf16.mxu0 %v13883
  %13943 = vmatmul.mubr.bf16.gmra.mrb[0].mxu0 %v13882
  %v13944 = vpop.f32.mrb[0].mxu0
  %v13945 = vadd.f32 %v13773, %v13944
  %v13946 = vpop.f32.mrb[0].mxu0
  %v13947 = vpop.f32.mrb[0].mxu0
  %v13948 = vadd.f32 %v13778, %v13947
  %v13949 = vpop.f32.mrb[0].mxu0
  %13950 = vmatprep.mubr.bf16.mxu0 %v13885
  %13951 = vmatmul.mubr.bf16.gmra.mrb[0].mxu0 %v13884
  %v13952 = vpop.f32.mrb[0].mxu0
  %v13953 = vadd.f32 %v13783, %v13952
  %v13954 = vpop.f32.mrb[0].mxu0
  %v13955 = vpop.f32.mrb[0].mxu0
  %v13956 = vadd.f32 %v13788, %v13955
  %v13957 = vpop.f32.mrb[0].mxu0
  %13958 = vmatprep.mubr.bf16.mxu0 %v13887
  %13959 = vmatmul.mubr.bf16.gmra.mrb[0].mxu0 %v13886
  %v13960 = vpop.f32.mrb[0].mxu0
  %v13961 = vadd.f32 %v13793, %v13960
  %v13962 = vpop.f32.mrb[0].mxu0
  %v13963 = vpop.f32.mrb[0].mxu0
  %v13964 = vadd.f32 %v13798, %v13963
  %v13965 = vpop.f32.mrb[0].mxu0
  %13966 = vmatprep.mubr.bf16.mxu0 %v13889
  %13967 = vmatmul.mubr.bf16.gmra.mrb[0].mxu0 %v13888
  %v13968 = vpop.f32.mrb[0].mxu0
  %v13969 = vadd.f32 %v13803, %v13968
  %v13970 = vpop.f32.mrb[0].mxu0
  %v13971 = vpop.f32.mrb[0].mxu0
  %v13972 = vadd.f32 %v13808, %v13971
  %v13973 = vpop.f32.mrb[0].mxu0
  %13974 = vmatprep.mubr.bf16.mxu0 %v13891
  %13975 = vmatmul.mubr.bf16.gmra.mrb[0].mxu0 %v13890
  %v13976 = vpop.f32.mrb[0].mxu0
  %v13977 = vadd.f32 %v13813, %v13976
  %v13978 = vpop.f32.mrb[0].mxu0
  %v13979 = vpop.f32.mrb[0].mxu0
  %v13980 = vadd.f32 %v13818, %v13979
  %v13981 = vpop.f32.mrb[0].mxu0
  %13982 = vmatprep.mubr.bf16.mxu0 %v13893
  %13983 = vmatmul.mubr.bf16.gmra.mrb[0].mxu0 %v13892
  %v13984 = vpop.f32.mrb[0].mxu0
  %v13985 = vadd.f32 %v13823, %v13984
  %v13986 = vpop.f32.mrb[0].mxu0
  %v13987 = vpop.f32.mrb[0].mxu0
  %v13988 = vadd.f32 %v13828, %v13987
  %v13989 = vpop.f32.mrb[0].mxu0
  %13990 = vmatprep.mubr.bf16.mxu0 %v13895
  %13991 = vmatmul.mubr.bf16.gmra.mrb[0].mxu0 %v13894
  %v13992 = vpop.f32.mrb[0].mxu0
  %v13993 = vadd.f32 %v13833, %v13992
  %v13994 = vpop.f32.mrb[0].mxu0
  %v13995 = vpop.f32.mrb[0].mxu0
  %v13996 = vadd.f32 %v13838, %v13995
  %v13997 = vpop.f32.mrb[0].mxu0
  %13998 = vdwg.mxu0
  %v13999 = vmax.f32 %v13945, 0.0
  %v14000 = vmax.f32 %v13948, 0.0
  %v14001 = vmax.f32 %v13953, 0.0
  %v14002 = vmax.f32 %v13956, 0.0
  %v14003 = vmax.f32 %v13961, 0.0
  %v14004 = vmax.f32 %v13964, 0.0
  %v14005 = vmax.f32 %v13969, 0.0
  %v14006 = vmax.f32 %v13972, 0.0
  %v14007 = vmax.f32 %v13977, 0.0
  %v14008 = vmax.f32 %v13980, 0.0
  %v14009 = vmax.f32 %v13985, 0.0
  %v14010 = vmax.f32 %v13988, 0.0
  %v14011 = vmax.f32 %v13993, 0.0
  %v14012 = vmax.f32 %v13996, 0.0
  %v14013 = vpack.c.bf16 %v14000, %v13999
  %v14014 = vpack.c.bf16 %v14002, %v14001
  %v14015 = vpack.c.bf16 %v14004, %v14003
  %v14016 = vpack.c.bf16 %v14006, %v14005
  %v14017 = vpack.c.bf16 %v14008, %v14007
  %v14018 = vpack.c.bf16 %v14010, %v14009
  %v14019 = vpack.c.bf16 %v14012, %v14011
  %v14020 = vld [vmem:[%s7] sm:$0xf]
  %v14021 = vld [vmem:[%s7 + $0x4] sm:$0xf]
  %v14022 = vld [vmem:[%s8] sm:$0xff]
  %v14023 = vld [vmem:[%s8 + $0x8] sm:$0xff]
  %14025 = vset.pattern.permute.xlu0 0
  %14026 = vperm.xlu0 %14025, %v14022
  %v14027 = vpop.permute.xlu0 %14026
  %14030 = vset.pattern.permute.xlu0 0
  %14031 = vperm.xlu0 %14030, %v14023
  %v14032 = vpop.permute.xlu0 %14031
  %v14036 = vunpack.c.l.b16 %v14020
  %v14037 = vunpack.c.l.b16 %v14021
  %v14038 = vpack.c.b16 %v14037, %v14036
  %vm14039 = vcmask 916480
  %v14041 = vsel %vm14039, %v14038, 0
  %14043 = vmatprep.subr.bf16.mxu0 0
  %14044 = vmatpush1.bf16.msra.mxu0 %v14013
  %14045 = vmatprep.subr.bf16.mxu0 0
  %14046 = vmatpush1.bf16.msra.mxu0 %v14014
  %14047 = vmatprep.subr.bf16.mxu0 0
  %14048 = vmatpush1.bf16.msra.mxu0 %v14015
  %14049 = vmatprep.subr.bf16.mxu0 0
  %14050 = vmatpush1.bf16.msra.mxu0 %v14016
  %14051 = vmatprep.subr.bf16.mxu0 0
  %14052 = vmatpush1.bf16.msra.mxu0 %v14017
  %14053 = vmatprep.subr.bf16.mxu0 0
  %14054 = vmatpush1.bf16.msra.mxu0 %v14018
  %14055 = vmatprep.subr.bf16.mxu0 0
  %14056 = vmatpush1.bf16.msra.mxu0 %v14019
  %14057 = vmatprep.subr.bf16.mxu0 0
  %14058 = vmatpush1.bf16.msra.mxu0 0
  %14059 = vmatprep.subr.bf16.mxu0 0
  %14060 = vmatpush1.bf16.msra.mxu0 0
  %14061 = vmatprep.subr.bf16.mxu0 0
  %14062 = vmatpush1.bf16.msra.mxu0 0
  %14063 = vmatprep.subr.bf16.mxu0 0
  %14064 = vmatpush1.bf16.msra.mxu0 0
  %14065 = vmatprep.subr.bf16.mxu0 0
  %14066 = vmatpush1.bf16.msra.mxu0 0
  %14067 = vmatprep.subr.bf16.mxu0 0
  %14068 = vmatpush1.bf16.msra.mxu0 0
  %14069 = vmatprep.subr.bf16.mxu0 0
  %14070 = vmatpush1.bf16.msra.mxu0 0
  %14071 = vmatprep.subr.bf16.mxu0 0
  %14072 = vmatpush1.bf16.msra.mxu0 0
  %14073 = vmatprep.subr.bf16.mxu0 0
  %14074 = vmatpush1.bf16.msra.mxu0 0
  %14075 = vmatprep.mubr.bf16.mxu0 0
  %14076 = vmatmul.mubr.bf16.gmra.mrb[0].mxu0 %v14041
  %v14077 = vpop.f32.mrb[0].mxu0
  %v14078 = vadd.f32 %v14027, %v14077
  %v14079 = vpop.f32.mrb[0].mxu0
  %v14080 = vpop.f32.mrb[0].mxu0
  %v14081 = vadd.f32 %v14032, %v14080
  %v14082 = vpop.f32.mrb[0].mxu0
  %14083 = vdwg.mxu0
  %14084 = vst [vmem:[%s9] sm:$0xff] %v14078
  %14085 = vst [vmem:[%s9 + $0x8] sm:$0xff] %v14081
  // Predicated region
  $region38: #{cnn_forward.1} parent=0 // pred_check
    _
  $region39: #{cnn_forward.1} parent=0 // pred_check_branch
    %14087 = sbr.rel (0) target = $region41
  $region40: #{cnn_forward.1} parent=0 // pred_region
    _
  $region41: #{cnn_forward.1} parent=0 // pred_fallthru
    _
  // Predicated region
  $region42: #{cnn_forward.1} parent=0 // pred_check
    _
  $region43: #{cnn_forward.1} parent=0 // pred_check_branch
    %14089 = sbr.rel (0) target = $region45
  $region44: #{cnn_forward.1} parent=0 // pred_region
    _
  $region45: #{cnn_forward.1} parent=0 // pred_fallthru
    _

</llo_original>
